<compile_context>
chip_gen: v7x
topology: tpu7x:2x2x1
jax: 0.10.0
libtpu: 0.0.40
codegen_flags: <defaults>
</compile_context>

<pallas_src>
import functools

import jax
import jax.numpy as jnp
from jax.experimental import pallas as pl
from jax.experimental.pallas import tpu as pltpu


def _round_up(n, m):
    return ((n + m - 1) // m) * m


def _attention_kernel(x_ref, wq_ref, bq_ref, wkv_ref, bkv_ref, wproj_ref,
                      bproj_ref, out_ref, *rest, n_heads, head_size, scale,
                      n_valid, with_wavg):
    cdt = x_ref.dtype                      # MXU input dtype (bf16 if caller was f32)
    t_pad = x_ref.shape[1]                 # padded token count (Tp)
    tq = out_ref.shape[1]                  # q-tile rows
    dim = n_heads * head_size

    j = pl.program_id(1)
    row0 = pl.multiple_of(j * tq, tq)
    # q rows of x for this tile, sliced from the single per-sample block:
    # x is DMA'd from HBM once per sample, not once per q tile.
    x_q = x_ref[0, pl.ds(row0, tq), :]     # (tq, D)

    # --- proj(x): independent of the attention path; emitted first so its MXU
    # pushes interleave with the softmax VPU/EUP work.  (Reference bug
    # reproduced: proj is applied to the ORIGINAL x, not to weighted_avg.)
    out_ref[0] = (jnp.dot(x_q, wproj_ref[...], preferred_element_type=jnp.float32)
                  + bproj_ref[...]).astype(out_ref.dtype)

    if not with_wavg:
        return                             # caller only consumes proj(x)

    wavg_ref, k_scr, v_scr = rest

    # --- k/v projection + head relayout, once per sample (j == 0).  Scratch
    # is stored head-major with k pre-transposed to (H, hs, Tp): the per-tile
    # score matmul then needs no RHS transpose and is lane-dense on Tp.
    @pl.when(j == 0)
    def _():
        kv = (jnp.dot(x_ref[0], wkv_ref[...], preferred_element_type=jnp.float32)
              + bkv_ref[...]).astype(cdt)                        # (Tp, 2D)
        k = kv[:, :dim].reshape(t_pad, n_heads, head_size)
        v = kv[:, dim:].reshape(t_pad, n_heads, head_size)
        k_scr[...] = pltpu.einshape("khd->hdk", k)               # (H, hs, Tp)
        v_scr[...] = pltpu.einshape("khd->hkd", v)               # (H, Tp, hs)

    # --- q projection for this tile; softmax scale folded into q.
    q = (jnp.dot(x_q, wq_ref[...], preferred_element_type=jnp.float32)
         + bq_ref[...]) * scale
    qh = pltpu.einshape("qhd->hqd",
                        q.astype(cdt).reshape(tq, n_heads, head_size))  # (H, tq, hs)

    # --- scores + softmax (full key axis resident in VMEM scratch).
    s = jnp.einsum("hqd,hdk->hqk", qh, k_scr[...],
                   preferred_element_type=jnp.float32)           # (H, tq, Tp) f32
    if n_valid < t_pad:                    # ragged T: mask padded keys
        key_id = jax.lax.broadcasted_iota(jnp.int32, (1, 1, t_pad), 2)
        s = jnp.where(key_id < n_valid, s, -jnp.inf)
    s = s - jnp.max(s, axis=-1, keepdims=True)
    p = jnp.exp(s)
    inv = pl.reciprocal(jnp.sum(p, axis=-1, keepdims=True), approx=True)
    # TODO(synk): attn_p dropout not implemented (identity / eval mode).

    # --- PV matmul first, normalisation AFTER (H*tq*hs mults, not H*tq*Tp).
    wa = jnp.einsum("hqk,hkd->hqd", p.astype(cdt), v_scr[...],
                    preferred_element_type=jnp.float32)          # (H, tq, hs) f32
    wa = wa * inv
    wa = pltpu.einshape("hqd->qhd", wa).reshape(tq, dim)
    wavg_ref[0] = wa.astype(wavg_ref.dtype)                      # lane-dense store


def attention_forward(x, wqkv, bqkv, wproj, bproj, *, n_heads, q_tile=None,
                      compute_dtype=None, return_weighted_avg=True):
    """ViT Attention forward.

    x: (B, T, D); wqkv: (D, 3D); bqkv: (1, 3D); wproj: (D, D); bproj: (1, D).
    Returns proj(x) (the module's output — reference bug preserved) and, if
    `return_weighted_avg`, also the multi-head attention weighted average.
    """
    B, T, D = x.shape
    head_size = D // n_heads
    scale = head_size ** (-0.5)

    # MXU compute dtype: bf16 when the caller hands in f32 (f32 accumulation
    # is kept via preferred_element_type), otherwise the input dtype.
    if compute_dtype is None:
        compute_dtype = jnp.bfloat16 if x.dtype == jnp.float32 else x.dtype
    cdt = jnp.dtype(compute_dtype)
    csize = cdt.itemsize
    osize = jnp.dtype(x.dtype).itemsize

    # Generation-aware q tile: v6e (2x256 MXU, 128 MiB VMEM) likes 256-row
    # tiles; v5e (128-wide MXU) and v7x (64 MiB VMEM) stay at 128.
    if q_tile is None:
        kind = jax.devices()[0].device_kind.lower()
        q_tile = 256 if "v6" in kind else 128

    # Token-axis tiling/padding: tq is a multiple of 8; T is padded up to a
    # multiple of tq and padded keys are masked in-kernel (no tq = T fallback).
    if T <= q_tile:
        tq = _round_up(T, 8)
    else:
        tq = q_tile
    t_pad = _round_up(T, tq)

    # VMEM budget: never request the full physical capacity (critical on the
    # 64 MiB v7x); shrink tq if the f32 score temporaries would not fit.
    try:
        vmem_cap = int(pltpu.get_tpu_info().vmem_capacity_bytes)
    except Exception:
        vmem_cap = 64 * 1024 * 1024
    headroom = 16 * 1024 * 1024 if vmem_cap <= 64 * 1024 * 1024 else 32 * 1024 * 1024
    vmem_budget = vmem_cap - headroom
    n_out = 2 if return_weighted_avg else 1

    def vmem_need(tq_, tp_):
        blocks = 2 * tp_ * D * csize                     # x block (double buffered)
        blocks += (4 * D * D + 4 * D) * csize            # weights / biases
        blocks += n_out * 2 * tq_ * D * osize            # outputs (double buffered)
        scratch = 2 * tp_ * D * csize                    # k / v head-major scratch
        tmp = 4 * (3 * n_heads * tq_ * tp_               # f32 score temporaries
                   + 2 * tp_ * D + 2 * tq_ * D)          # f32 kv / q temporaries
        return blocks + scratch + tmp

    while vmem_need(tq, t_pad) > vmem_budget and tq > 8:
        tq = max(8, _round_up(tq // 2, 8))
        t_pad = _round_up(T, tq)
    # TODO(synk): key-axis tiling for very long sequences (only the query axis
    #             is tiled; k/v for one sample must fit in VMEM).
    vmem_limit = int(min(vmem_budget,
                         max(32 * 1024 * 1024, 2 * vmem_need(tq, t_pad))))
    num_q = t_pad // tq

    # Layout plumbing (outside the kernel): split the fused qkv weight so the
    # kernel never slices weight columns at runtime; cast MXU inputs to the
    # compute dtype.  Biases stay in their original dtype (added to f32 accums).
    x_p = x.astype(cdt)
    if t_pad != T:
        x_p = jnp.pad(x_p, ((0, 0), (0, t_pad - T), (0, 0)))
    wq, wkv = wqkv[:, :D].astype(cdt), wqkv[:, D:].astype(cdt)
    bq, bkv = bqkv[:, :D], bqkv[:, D:]
    wp = wproj.astype(cdt)
    # TODO(synk): fp8 weight quantisation for the v7x MXU not implemented.

    kernel = functools.partial(
        _attention_kernel, n_heads=n_heads, head_size=head_size, scale=scale,
        n_valid=T, with_wavg=return_weighted_avg)

    flops = 2 * B * t_pad * D * D                                    # proj
    if return_weighted_avg:
        flops += (2 * B * t_pad * D * 3 * D                          # qkv
                  + 4 * B * n_heads * t_pad * t_pad * head_size)     # scores + PV
    cost = pl.CostEstimate(
        flops=int(flops),
        transcendentals=int(B * n_heads * t_pad * t_pad) if return_weighted_avg else 0,
        bytes_accessed=int(csize * (B * t_pad * D + 4 * D * D + 4 * D)
                           + osize * n_out * B * t_pad * D))

    def run(single_buffer_weights):
        # Weights / biases are grid-invariant: single-buffer them if supported.
        wkw = {"pipeline_mode": pl.Buffered(1)} if single_buffer_weights else {}
        in_specs = [
            pl.BlockSpec((1, t_pad, D), lambda b, j: (b, 0, 0)),      # x, once/sample
            pl.BlockSpec((D, D), lambda b, j: (0, 0), **wkw),         # wq
            pl.BlockSpec((1, D), lambda b, j: (0, 0), **wkw),         # bq
            pl.BlockSpec((D, 2 * D), lambda b, j: (0, 0), **wkw),     # wkv
            pl.BlockSpec((1, 2 * D), lambda b, j: (0, 0), **wkw),     # bkv
            pl.BlockSpec((D, D), lambda b, j: (0, 0), **wkw),         # wproj
            pl.BlockSpec((1, D), lambda b, j: (0, 0), **wkw),         # bproj
        ]
        out_shape = [jax.ShapeDtypeStruct((B, t_pad, D), x.dtype)]
        out_specs = [pl.BlockSpec((1, tq, D), lambda b, j: (b, j, 0))]
        scratch_shapes = []
        if return_weighted_avg:
            out_shape.append(jax.ShapeDtypeStruct((B, t_pad, D), x.dtype))
            out_specs.append(pl.BlockSpec((1, tq, D), lambda b, j: (b, j, 0)))
            scratch_shapes = [pltpu.VMEM((n_heads, head_size, t_pad), cdt),   # k^T
                              pltpu.VMEM((n_heads, t_pad, head_size), cdt)]   # v
        return pl.pallas_call(
            kernel,
            out_shape=tuple(out_shape),
            grid_spec=pltpu.PrefetchScalarGridSpec(
                num_scalar_prefetch=0,
                grid=(B, num_q),
                in_specs=in_specs,
                out_specs=out_specs,
                scratch_shapes=scratch_shapes),
            compiler_params=pltpu.CompilerParams(
                # TODO(synk): with B == 1 on v7x (2 TensorCores) the inner
                # 'arbitrary' axis serialises on one core (no megacore split).
                dimension_semantics=("parallel", "arbitrary"),
                vmem_limit_bytes=vmem_limit),
            cost_estimate=cost,
        )(x_p, wq, bq, wkv, bkv, wp, bproj)

    try:
        results = run(single_buffer_weights=True)
    except Exception:
        # pipeline_mode=pl.Buffered(1) not supported on this jax version:
        # fall back to default (double-buffered) weight blocks.
        results = run(single_buffer_weights=False)

    out = results[0]
    if t_pad != T:
        out = out[:, :T, :]
    if not return_weighted_avg:
        return out
    wavg = results[1]
    if t_pad != T:
        wavg = wavg[:, :T, :]
    return out, wavg


def _reference(x, wqkv, bqkv, wproj, bproj, n_heads):
    """Pure-JAX replica of the PyTorch forward (eval mode)."""
    B, T, D = x.shape
    hs = D // n_heads
    scale = hs ** (-0.5)
    qkv = x @ wqkv + bqkv[0]                                   # (B, T, 3D)
    qkv = qkv.reshape(B, T, 3, n_heads, hs)
    qkv = jnp.transpose(qkv, (2, 0, 3, 1, 4))                  # (3, B, H, T, hs)
    q, k, v = qkv[0], qkv[1], qkv[2]
    dp = jnp.einsum("bhqd,bhkd->bhqk", q, k) * scale
    attn = jax.nn.softmax(dp, axis=-1)
    wa = jnp.einsum("bhqk,bhkd->bhqd", attn, v)
    wa = jnp.transpose(wa, (0, 2, 1, 3)).reshape(B, T, D)
    out = x @ wproj + bproj[0]                                 # proj applied to x (bug preserved)
    return out, wa


if __name__ == "__main__":
    B, T, D, H = 2, 16, 128, 4   # small, lane-friendly shapes (hs = 32)

    key = jax.random.PRNGKey(0)
    k_x, k_wqkv, k_bqkv, k_wproj, k_bproj, k_x2 = jax.random.split(key, 6)

    x = jax.random.normal(k_x, (B, T, D), dtype=jnp.float32)
    wqkv = jax.random.normal(k_wqkv, (D, 3 * D), dtype=jnp.float32) * 0.05
    bqkv = jax.random.normal(k_bqkv, (1, 3 * D), dtype=jnp.float32) * 0.05
    wproj = jax.random.normal(k_wproj, (D, D), dtype=jnp.float32) * 0.05
    bproj = jax.random.normal(k_bproj, (1, D), dtype=jnp.float32) * 0.05

    out, wavg = attention_forward(x, wqkv, bqkv, wproj, bproj, n_heads=H)
    out = jax.block_until_ready(out)
    wavg = jax.block_until_ready(wavg)

    ref_out, ref_wavg = _reference(x, wqkv, bqkv, wproj, bproj, H)
    # bf16 MXU inputs (f32 accumulation) + approx EUP reciprocal => loose-ish
    # tolerances versus the pure-f32 reference.
    assert jnp.allclose(out, ref_out, atol=3e-2, rtol=3e-2), "proj(x) mismatch"
    assert jnp.allclose(wavg, ref_wavg, atol=3e-2, rtol=3e-2), "weighted_avg mismatch"

    # Ragged token count: exercises the pad + key-mask path (ViT has T=197/577).
    T2 = 20
    x2 = jax.random.normal(k_x2, (B, T2, D), dtype=jnp.float32)
    out2, wavg2 = attention_forward(x2, wqkv, bqkv, wproj, bproj, n_heads=H)
    out2 = jax.block_until_ready(out2)
    wavg2 = jax.block_until_ready(wavg2)
    ref_out2, ref_wavg2 = _reference(x2, wqkv, bqkv, wproj, bproj, H)
    assert jnp.allclose(out2, ref_out2, atol=3e-2, rtol=3e-2), "ragged proj(x) mismatch"
    assert jnp.allclose(wavg2, ref_wavg2, atol=3e-2, rtol=3e-2), "ragged weighted_avg mismatch"

    print("KERNEL_OK")
</pallas_src>

<mosaic_0001>
module attributes {stable_mosaic.version = 11 : i64} {
  func.func @_attention_kernel(%arg0: i32, %arg1: i32, %arg2: memref<1x16x128xbf16, #tpu.memory_space<vmem>>, %arg3: memref<128x128xbf16, #tpu.memory_space<vmem>>, %arg4: memref<1x128xf32, #tpu.memory_space<vmem>>, %arg5: memref<128x256xbf16, #tpu.memory_space<vmem>>, %arg6: memref<1x256xf32, #tpu.memory_space<vmem>>, %arg7: memref<128x128xbf16, #tpu.memory_space<vmem>>, %arg8: memref<1x128xf32, #tpu.memory_space<vmem>>, %arg9: memref<1x16x128xf32, #tpu.memory_space<vmem>>, %arg10: memref<1x16x128xf32, #tpu.memory_space<vmem>>, %arg11: memref<4x32x16xbf16, #tpu.memory_space<vmem>>, %arg12: memref<4x16x32xbf16, #tpu.memory_space<vmem>>) attributes {dimension_semantics = [#tpu.dimension_semantics<parallel>, #tpu.dimension_semantics<arbitrary>], iteration_bounds = array<i64: 2, 1>, scalar_prefetch = 0 : i64, scratch_operands = 2 : i64, tpu.core_type = #tpu.core_type<tc>, window_params = [{transform_indices = @transform_0, window_bounds = array<i64: 1, 16, 128>}, {pipeline_mode = #tpu.pipeline_mode<synchronous>, transform_indices = @transform_1, window_bounds = array<i64: 128, 128>}, {pipeline_mode = #tpu.pipeline_mode<synchronous>, transform_indices = @transform_2, window_bounds = array<i64: 1, 128>}, {pipeline_mode = #tpu.pipeline_mode<synchronous>, transform_indices = @transform_3, window_bounds = array<i64: 128, 256>}, {pipeline_mode = #tpu.pipeline_mode<synchronous>, transform_indices = @transform_4, window_bounds = array<i64: 1, 256>}, {pipeline_mode = #tpu.pipeline_mode<synchronous>, transform_indices = @transform_5, window_bounds = array<i64: 128, 128>}, {pipeline_mode = #tpu.pipeline_mode<synchronous>, transform_indices = @transform_6, window_bounds = array<i64: 1, 128>}, {transform_indices = @transform_7, window_bounds = array<i64: 1, 16, 128>}, {transform_indices = @transform_8, window_bounds = array<i64: 1, 16, 128>}]} {
    %c16_i32 = arith.constant 16 : i32
    %0 = arith.muli %arg1, %c16_i32 : i32
    %1 = tpu.assume_multiple %0, 16 : i32
    %c0 = arith.constant 0 : index
    %2 = arith.index_cast %1 : i32 to index
    %c0_0 = arith.constant 0 : index
    %3 = vector.load %arg2[%c0, %2, %c0_0] : memref<1x16x128xbf16, #tpu.memory_space<vmem>>, vector<1x16x128xbf16>
    %4 = vector.shape_cast %3 : vector<1x16x128xbf16> to vector<16x128xbf16>
    %c0_1 = arith.constant 0 : index
    %c0_2 = arith.constant 0 : index
    %5 = vector.load %arg7[%c0_1, %c0_2] : memref<128x128xbf16, #tpu.memory_space<vmem>>, vector<128x128xbf16>
    %cst = arith.constant dense<0.000000e+00> : vector<16x128xf32>
    %6 = tpu.matmul %4, %5, %cst {dimension_numbers = #tpu.dot_dimension_numbers<[1], [0], [0], [1], [0, 0, 1, 1], [], []>} : vector<16x128xbf16>, vector<128x128xbf16>, vector<16x128xf32> -> vector<16x128xf32>
    %c0_3 = arith.constant 0 : index
    %c0_4 = arith.constant 0 : index
    %7 = vector.load %arg8[%c0_3, %c0_4] : memref<1x128xf32, #tpu.memory_space<vmem>>, vector<1x128xf32>
    %8 = vector.broadcast %7 : vector<1x128xf32> to vector<16x128xf32>
    %9 = arith.addf %6, %8 : vector<16x128xf32>
    %c0_5 = arith.constant 0 : index
    %c0_6 = arith.constant 0 : index
    %c0_7 = arith.constant 0 : index
    %10 = vector.load %arg9[%c0_5, %c0_6, %c0_7] : memref<1x16x128xf32, #tpu.memory_space<vmem>>, vector<1x16x128xf32>
    %11 = vector.shape_cast %10 : vector<1x16x128xf32> to vector<16x128xf32>
    %12 = vector.shape_cast %9 : vector<16x128xf32> to vector<1x16x128xf32>
    tpu.vector_store %arg9[%c0_5, %c0_6, %c0_7], %12 {strides = array<i32>} : memref<1x16x128xf32, #tpu.memory_space<vmem>>, vector<1x16x128xf32>,
    %c0_i32 = arith.constant 0 : i32
    %13 = arith.cmpi eq, %arg1, %c0_i32 : i32
    %14 = arith.extui %13 : i1 to i32
    %c0_i32_8 = arith.constant 0 : i32
    %15 = arith.cmpi ne, %14, %c0_i32_8 : i32
    scf.if %15 {
      %c0_28 = arith.constant 0 : index
      %c0_29 = arith.constant 0 : index
      %c0_30 = arith.constant 0 : index
      %46 = vector.load %arg2[%c0_28, %c0_29, %c0_30] : memref<1x16x128xbf16, #tpu.memory_space<vmem>>, vector<1x16x128xbf16>
      %47 = vector.shape_cast %46 : vector<1x16x128xbf16> to vector<16x128xbf16>
      %c0_31 = arith.constant 0 : index
      %c0_32 = arith.constant 0 : index
      %48 = vector.load %arg5[%c0_31, %c0_32] : memref<128x256xbf16, #tpu.memory_space<vmem>>, vector<128x256xbf16>
      %cst_33 = arith.constant dense<0.000000e+00> : vector<16x256xf32>
      %49 = tpu.matmul %47, %48, %cst_33 {dimension_numbers = #tpu.dot_dimension_numbers<[1], [0], [0], [1], [0, 0, 1, 1], [], []>} : vector<16x128xbf16>, vector<128x256xbf16>, vector<16x256xf32> -> vector<16x256xf32>
      %c0_34 = arith.constant 0 : index
      %c0_35 = arith.constant 0 : index
      %50 = vector.load %arg6[%c0_34, %c0_35] : memref<1x256xf32, #tpu.memory_space<vmem>>, vector<1x256xf32>
      %51 = vector.broadcast %50 : vector<1x256xf32> to vector<16x256xf32>
      %52 = arith.addf %49, %51 : vector<16x256xf32>
      %53 = arith.truncf %52 : vector<16x256xf32> to vector<16x256xbf16>
      %54 = vector.extract_strided_slice %53 {offsets = [0, 0], sizes = [16, 128], strides = [1, 1]} : vector<16x256xbf16> to vector<16x128xbf16>
      %55 = vector.shape_cast %54 : vector<16x128xbf16> to vector<16x4x32xbf16>
      %56 = vector.extract_strided_slice %53 {offsets = [0, 128], sizes = [16, 128], strides = [1, 1]} : vector<16x256xbf16> to vector<16x128xbf16>
      %57 = vector.shape_cast %56 : vector<16x128xbf16> to vector<16x4x32xbf16>
      %58 = tpu.transpose %55, [1, 2, 0] : vector<16x4x32xbf16> -> vector<4x32x16xbf16>
      %c0_36 = arith.constant 0 : index
      %c0_37 = arith.constant 0 : index
      %c0_38 = arith.constant 0 : index
      %59 = vector.load %arg11[%c0_36, %c0_37, %c0_38] : memref<4x32x16xbf16, #tpu.memory_space<vmem>>, vector<4x32x16xbf16>
      tpu.vector_store %arg11[%c0_36, %c0_37, %c0_38], %58 {strides = array<i32>} : memref<4x32x16xbf16, #tpu.memory_space<vmem>>, vector<4x32x16xbf16>,
      %60 = tpu.transpose %57, [1, 0, 2] : vector<16x4x32xbf16> -> vector<4x16x32xbf16>
      %c0_39 = arith.constant 0 : index
      %c0_40 = arith.constant 0 : index
      %c0_41 = arith.constant 0 : index
      %61 = vector.load %arg12[%c0_39, %c0_40, %c0_41] : memref<4x16x32xbf16, #tpu.memory_space<vmem>>, vector<4x16x32xbf16>
      tpu.vector_store %arg12[%c0_39, %c0_40, %c0_41], %60 {strides = array<i32>} : memref<4x16x32xbf16, #tpu.memory_space<vmem>>, vector<4x16x32xbf16>,
    } else {
    }
    %c0_9 = arith.constant 0 : index
    %c0_10 = arith.constant 0 : index
    %16 = vector.load %arg3[%c0_9, %c0_10] : memref<128x128xbf16, #tpu.memory_space<vmem>>, vector<128x128xbf16>
    %cst_11 = arith.constant dense<0.000000e+00> : vector<16x128xf32>
    %17 = tpu.matmul %4, %16, %cst_11 {dimension_numbers = #tpu.dot_dimension_numbers<[1], [0], [0], [1], [0, 0, 1, 1], [], []>} : vector<16x128xbf16>, vector<128x128xbf16>, vector<16x128xf32> -> vector<16x128xf32>
    %c0_12 = arith.constant 0 : index
    %c0_13 = arith.constant 0 : index
    %18 = vector.load %arg4[%c0_12, %c0_13] : memref<1x128xf32, #tpu.memory_space<vmem>>, vector<1x128xf32>
    %19 = vector.broadcast %18 : vector<1x128xf32> to vector<16x128xf32>
    %20 = arith.addf %17, %19 : vector<16x128xf32>
    %cst_14 = arith.constant 0.176776692 : f32
    %21 = vector.broadcast %cst_14 : f32 to vector<16x128xf32>
    %22 = arith.mulf %20, %21 : vector<16x128xf32>
    %23 = arith.truncf %22 : vector<16x128xf32> to vector<16x128xbf16>
    %24 = vector.shape_cast %23 : vector<16x128xbf16> to vector<16x4x32xbf16>
    %25 = tpu.transpose %24, [1, 0, 2] : vector<16x4x32xbf16> -> vector<4x16x32xbf16>
    %c0_15 = arith.constant 0 : index
    %c0_16 = arith.constant 0 : index
    %c0_17 = arith.constant 0 : index
    %26 = vector.load %arg11[%c0_15, %c0_16, %c0_17] : memref<4x32x16xbf16, #tpu.memory_space<vmem>>, vector<4x32x16xbf16>
    "tpu.trace_start"() <{level = 10 : i32, message = "hqd,hdk->hqk"}> : () -> ()
    %cst_18 = arith.constant dense<0.000000e+00> : vector<4x16x16xf32>
    %27 = tpu.matmul %25, %26, %cst_18 {dimension_numbers = #tpu.dot_dimension_numbers<[2], [1], [1], [2], [0, 0, 0, 1, 1, 2], [0], [0]>} : vector<4x16x32xbf16>, vector<4x32x16xbf16>, vector<4x16x16xf32> -> vector<4x16x16xf32>
    "tpu.trace_stop"() : () -> ()
    %cst_19 = arith.constant dense<0xFF800000> : vector<4x16xf32>
    %28 = vector.multi_reduction <maximumf>, %27, %cst_19 [2] : vector<4x16x16xf32> to vector<4x16xf32>
    %29 = vector.shape_cast %28 : vector<4x16xf32> to vector<4x16x1xf32>
    %30 = vector.broadcast %29 : vector<4x16x1xf32> to vector<4x16x16xf32>
    %31 = arith.subf %27, %30 : vector<4x16x16xf32>
    %32 = math.exp %31 : vector<4x16x16xf32>
    %cst_20 = arith.constant dense<0.000000e+00> : vector<4x16xf32>
    %33 = vector.multi_reduction <add>, %32, %cst_20 [2] : vector<4x16x16xf32> to vector<4x16xf32>
    %34 = vector.shape_cast %33 : vector<4x16xf32> to vector<4x16x1xf32>
    %35 = tpu.reciprocal %34 {approx = true} : vector<4x16x1xf32> -> vector<4x16x1xf32>
    %36 = arith.truncf %32 : vector<4x16x16xf32> to vector<4x16x16xbf16>
    %c0_21 = arith.constant 0 : index
    %c0_22 = arith.constant 0 : index
    %c0_23 = arith.constant 0 : index
    %37 = vector.load %arg12[%c0_21, %c0_22, %c0_23] : memref<4x16x32xbf16, #tpu.memory_space<vmem>>, vector<4x16x32xbf16>
    "tpu.trace_start"() <{level = 10 : i32, message = "hqk,hkd->hqd"}> : () -> ()
    %cst_24 = arith.constant dense<0.000000e+00> : vector<4x16x32xf32>
    %38 = tpu.matmul %36, %37, %cst_24 {dimension_numbers = #tpu.dot_dimension_numbers<[2], [1], [1], [2], [0, 0, 0, 1, 1, 2], [0], [0]>} : vector<4x16x16xbf16>, vector<4x16x32xbf16>, vector<4x16x32xf32> -> vector<4x16x32xf32>
    "tpu.trace_stop"() : () -> ()
    %39 = vector.broadcast %35 : vector<4x16x1xf32> to vector<4x16x32xf32>
    %40 = arith.mulf %38, %39 : vector<4x16x32xf32>
    %41 = tpu.transpose %40, [1, 0, 2] : vector<4x16x32xf32> -> vector<16x4x32xf32>
    %42 = vector.shape_cast %41 : vector<16x4x32xf32> to vector<16x128xf32>
    %c0_25 = arith.constant 0 : index
    %c0_26 = arith.constant 0 : index
    %c0_27 = arith.constant 0 : index
    %43 = vector.load %arg10[%c0_25, %c0_26, %c0_27] : memref<1x16x128xf32, #tpu.memory_space<vmem>>, vector<1x16x128xf32>
    %44 = vector.shape_cast %43 : vector<1x16x128xf32> to vector<16x128xf32>
    %45 = vector.shape_cast %42 : vector<16x128xf32> to vector<1x16x128xf32>
    tpu.vector_store %arg10[%c0_25, %c0_26, %c0_27], %45 {strides = array<i32>} : memref<1x16x128xf32, #tpu.memory_space<vmem>>, vector<1x16x128xf32>,
    return
  }
  func.func @transform_0(%arg0: i32, %arg1: i32) -> (i32, i32, i32) {
    %c0_i32 = arith.constant 0 : i32
    %c0_i32_0 = arith.constant 0 : i32
    %c0_i32_1 = arith.constant 0 : i32
    return %arg0, %c0_i32, %c0_i32_0 : i32, i32, i32
  }
  func.func @transform_1(%arg0: i32, %arg1: i32) -> (i32, i32) {
    %c0_i32 = arith.constant 0 : i32
    %c0_i32_0 = arith.constant 0 : i32
    %c0_i32_1 = arith.constant 0 : i32
    return %c0_i32, %c0_i32_0 : i32, i32
  }
  func.func @transform_2(%arg0: i32, %arg1: i32) -> (i32, i32) {
    %c0_i32 = arith.constant 0 : i32
    %c0_i32_0 = arith.constant 0 : i32
    %c0_i32_1 = arith.constant 0 : i32
    return %c0_i32, %c0_i32_0 : i32, i32
  }
  func.func @transform_3(%arg0: i32, %arg1: i32) -> (i32, i32) {
    %c0_i32 = arith.constant 0 : i32
    %c0_i32_0 = arith.constant 0 : i32
    %c0_i32_1 = arith.constant 0 : i32
    return %c0_i32, %c0_i32_0 : i32, i32
  }
  func.func @transform_4(%arg0: i32, %arg1: i32) -> (i32, i32) {
    %c0_i32 = arith.constant 0 : i32
    %c0_i32_0 = arith.constant 0 : i32
    %c0_i32_1 = arith.constant 0 : i32
    return %c0_i32, %c0_i32_0 : i32, i32
  }
  func.func @transform_5(%arg0: i32, %arg1: i32) -> (i32, i32) {
    %c0_i32 = arith.constant 0 : i32
    %c0_i32_0 = arith.constant 0 : i32
    %c0_i32_1 = arith.constant 0 : i32
    return %c0_i32, %c0_i32_0 : i32, i32
  }
  func.func @transform_6(%arg0: i32, %arg1: i32) -> (i32, i32) {
    %c0_i32 = arith.constant 0 : i32
    %c0_i32_0 = arith.constant 0 : i32
    %c0_i32_1 = arith.constant 0 : i32
    return %c0_i32, %c0_i32_0 : i32, i32
  }
  func.func @transform_7(%arg0: i32, %arg1: i32) -> (i32, i32, i32) {
    %c0_i32 = arith.constant 0 : i32
    %c0_i32_0 = arith.constant 0 : i32
    return %arg0, %arg1, %c0_i32 : i32, i32, i32
  }
  func.func @transform_8(%arg0: i32, %arg1: i32) -> (i32, i32, i32) {
    %c0_i32 = arith.constant 0 : i32
    %c0_i32_0 = arith.constant 0 : i32
    return %arg0, %arg1, %c0_i32 : i32, i32, i32
  }
}

module attributes {stable_mosaic.version = 11 : i64} {
  func.func @_attention_kernel(%arg0: i32, %arg1: i32, %arg2: memref<1x16x128xbf16, #tpu.memory_space<vmem>>, %arg3: memref<128x128xbf16, #tpu.memory_space<vmem>>, %arg4: memref<1x128xf32, #tpu.memory_space<vmem>>, %arg5: memref<128x256xbf16, #tpu.memory_space<vmem>>, %arg6: memref<1x256xf32, #tpu.memory_space<vmem>>, %arg7: memref<128x128xbf16, #tpu.memory_space<vmem>>, %arg8: memref<1x128xf32, #tpu.memory_space<vmem>>, %arg9: memref<1x16x128xf32, #tpu.memory_space<vmem>>, %arg10: memref<1x16x128xf32, #tpu.memory_space<vmem>>, %arg11: memref<4x32x16xbf16, #tpu.memory_space<vmem>>, %arg12: memref<4x16x32xbf16, #tpu.memory_space<vmem>>) attributes {dimension_semantics = [#tpu.dimension_semantics<parallel>, #tpu.dimension_semantics<arbitrary>], iteration_bounds = array<i64: 2, 1>, scalar_prefetch = 0 : i64, scratch_operands = 2 : i64, tpu.core_type = #tpu.core_type<tc>, window_params = [{transform_indices = @transform_0, window_bounds = array<i64: 1, 16, 128>}, {pipeline_mode = #tpu.pipeline_mode<synchronous>, transform_indices = @transform_1, window_bounds = array<i64: 128, 128>}, {pipeline_mode = #tpu.pipeline_mode<synchronous>, transform_indices = @transform_2, window_bounds = array<i64: 1, 128>}, {pipeline_mode = #tpu.pipeline_mode<synchronous>, transform_indices = @transform_3, window_bounds = array<i64: 128, 256>}, {pipeline_mode = #tpu.pipeline_mode<synchronous>, transform_indices = @transform_4, window_bounds = array<i64: 1, 256>}, {pipeline_mode = #tpu.pipeline_mode<synchronous>, transform_indices = @transform_5, window_bounds = array<i64: 128, 128>}, {pipeline_mode = #tpu.pipeline_mode<synchronous>, transform_indices = @transform_6, window_bounds = array<i64: 1, 128>}, {transform_indices = @transform_7, window_bounds = array<i64: 1, 16, 128>}, {transform_indices = @transform_8, window_bounds = array<i64: 1, 16, 128>}]} {
    %c16_i32 = arith.constant 16 : i32
    %0 = arith.muli %arg1, %c16_i32 : i32
    %1 = tpu.assume_multiple %0, 16 : i32
    %c0 = arith.constant 0 : index
    %2 = arith.index_cast %1 : i32 to index
    %c0_0 = arith.constant 0 : index
    %3 = vector.load %arg2[%c0, %2, %c0_0] : memref<1x16x128xbf16, #tpu.memory_space<vmem>>, vector<1x16x128xbf16>
    %4 = vector.shape_cast %3 : vector<1x16x128xbf16> to vector<16x128xbf16>
    %c0_1 = arith.constant 0 : index
    %c0_2 = arith.constant 0 : index
    %5 = vector.load %arg7[%c0_1, %c0_2] : memref<128x128xbf16, #tpu.memory_space<vmem>>, vector<128x128xbf16>
    %cst = arith.constant dense<0.000000e+00> : vector<16x128xf32>
    %6 = tpu.matmul %4, %5, %cst {dimension_numbers = #tpu.dot_dimension_numbers<[1], [0], [0], [1], [0, 0, 1, 1], [], []>} : vector<16x128xbf16>, vector<128x128xbf16>, vector<16x128xf32> -> vector<16x128xf32>
    %c0_3 = arith.constant 0 : index
    %c0_4 = arith.constant 0 : index
    %7 = vector.load %arg8[%c0_3, %c0_4] : memref<1x128xf32, #tpu.memory_space<vmem>>, vector<1x128xf32>
    %8 = vector.broadcast %7 : vector<1x128xf32> to vector<16x128xf32>
    %9 = arith.addf %6, %8 : vector<16x128xf32>
    %c0_5 = arith.constant 0 : index
    %c0_6 = arith.constant 0 : index
    %c0_7 = arith.constant 0 : index
    %10 = vector.load %arg9[%c0_5, %c0_6, %c0_7] : memref<1x16x128xf32, #tpu.memory_space<vmem>>, vector<1x16x128xf32>
    %11 = vector.shape_cast %10 : vector<1x16x128xf32> to vector<16x128xf32>
    %12 = vector.shape_cast %9 : vector<16x128xf32> to vector<1x16x128xf32>
    tpu.vector_store %arg9[%c0_5, %c0_6, %c0_7], %12 {strides = array<i32>} : memref<1x16x128xf32, #tpu.memory_space<vmem>>, vector<1x16x128xf32>,
    %c0_i32 = arith.constant 0 : i32
    %13 = arith.cmpi eq, %arg1, %c0_i32 : i32
    %14 = arith.extui %13 : i1 to i32
    %c0_i32_8 = arith.constant 0 : i32
    %15 = arith.cmpi ne, %14, %c0_i32_8 : i32
    scf.if %15 {
      %c0_28 = arith.constant 0 : index
      %c0_29 = arith.constant 0 : index
      %c0_30 = arith.constant 0 : index
      %46 = vector.load %arg2[%c0_28, %c0_29, %c0_30] : memref<1x16x128xbf16, #tpu.memory_space<vmem>>, vector<1x16x128xbf16>
      %47 = vector.shape_cast %46 : vector<1x16x128xbf16> to vector<16x128xbf16>
      %c0_31 = arith.constant 0 : index
      %c0_32 = arith.constant 0 : index
      %48 = vector.load %arg5[%c0_31, %c0_32] : memref<128x256xbf16, #tpu.memory_space<vmem>>, vector<128x256xbf16>
      %cst_33 = arith.constant dense<0.000000e+00> : vector<16x256xf32>
      %49 = tpu.matmul %47, %48, %cst_33 {dimension_numbers = #tpu.dot_dimension_numbers<[1], [0], [0], [1], [0, 0, 1, 1], [], []>} : vector<16x128xbf16>, vector<128x256xbf16>, vector<16x256xf32> -> vector<16x256xf32>
      %c0_34 = arith.constant 0 : index
      %c0_35 = arith.constant 0 : index
      %50 = vector.load %arg6[%c0_34, %c0_35] : memref<1x256xf32, #tpu.memory_space<vmem>>, vector<1x256xf32>
      %51 = vector.broadcast %50 : vector<1x256xf32> to vector<16x256xf32>
      %52 = arith.addf %49, %51 : vector<16x256xf32>
      %53 = arith.truncf %52 : vector<16x256xf32> to vector<16x256xbf16>
      %54 = vector.extract_strided_slice %53 {offsets = [0, 0], sizes = [16, 128], strides = [1, 1]} : vector<16x256xbf16> to vector<16x128xbf16>
      %55 = vector.shape_cast %54 : vector<16x128xbf16> to vector<16x4x32xbf16>
      %56 = vector.extract_strided_slice %53 {offsets = [0, 128], sizes = [16, 128], strides = [1, 1]} : vector<16x256xbf16> to vector<16x128xbf16>
      %57 = vector.shape_cast %56 : vector<16x128xbf16> to vector<16x4x32xbf16>
      %58 = tpu.transpose %55, [1, 2, 0] : vector<16x4x32xbf16> -> vector<4x32x16xbf16>
      %c0_36 = arith.constant 0 : index
      %c0_37 = arith.constant 0 : index
      %c0_38 = arith.constant 0 : index
      %59 = vector.load %arg11[%c0_36, %c0_37, %c0_38] : memref<4x32x16xbf16, #tpu.memory_space<vmem>>, vector<4x32x16xbf16>
      tpu.vector_store %arg11[%c0_36, %c0_37, %c0_38], %58 {strides = array<i32>} : memref<4x32x16xbf16, #tpu.memory_space<vmem>>, vector<4x32x16xbf16>,
      %60 = tpu.transpose %57, [1, 0, 2] : vector<16x4x32xbf16> -> vector<4x16x32xbf16>
      %c0_39 = arith.constant 0 : index
      %c0_40 = arith.constant 0 : index
      %c0_41 = arith.constant 0 : index
      %61 = vector.load %arg12[%c0_39, %c0_40, %c0_41] : memref<4x16x32xbf16, #tpu.memory_space<vmem>>, vector<4x16x32xbf16>
      tpu.vector_store %arg12[%c0_39, %c0_40, %c0_41], %60 {strides = array<i32>} : memref<4x16x32xbf16, #tpu.memory_space<vmem>>, vector<4x16x32xbf16>,
    } else {
    }
    %c0_9 = arith.constant 0 : index
    %c0_10 = arith.constant 0 : index
    %16 = vector.load %arg3[%c0_9, %c0_10] : memref<128x128xbf16, #tpu.memory_space<vmem>>, vector<128x128xbf16>
    %cst_11 = arith.constant dense<0.000000e+00> : vector<16x128xf32>
    %17 = tpu.matmul %4, %16, %cst_11 {dimension_numbers = #tpu.dot_dimension_numbers<[1], [0], [0], [1], [0, 0, 1, 1], [], []>} : vector<16x128xbf16>, vector<128x128xbf16>, vector<16x128xf32> -> vector<16x128xf32>
    %c0_12 = arith.constant 0 : index
    %c0_13 = arith.constant 0 : index
    %18 = vector.load %arg4[%c0_12, %c0_13] : memref<1x128xf32, #tpu.memory_space<vmem>>, vector<1x128xf32>
    %19 = vector.broadcast %18 : vector<1x128xf32> to vector<16x128xf32>
    %20 = arith.addf %17, %19 : vector<16x128xf32>
    %cst_14 = arith.constant 0.176776692 : f32
    %21 = vector.broadcast %cst_14 : f32 to vector<16x128xf32>
    %22 = arith.mulf %20, %21 : vector<16x128xf32>
    %23 = arith.truncf %22 : vector<16x128xf32> to vector<16x128xbf16>
    %24 = vector.shape_cast %23 : vector<16x128xbf16> to vector<16x4x32xbf16>
    %25 = tpu.transpose %24, [1, 0, 2] : vector<16x4x32xbf16> -> vector<4x16x32xbf16>
    %c0_15 = arith.constant 0 : index
    %c0_16 = arith.constant 0 : index
    %c0_17 = arith.constant 0 : index
    %26 = vector.load %arg11[%c0_15, %c0_16, %c0_17] : memref<4x32x16xbf16, #tpu.memory_space<vmem>>, vector<4x32x16xbf16>
    "tpu.trace_start"() <{level = 10 : i32, message = "hqd,hdk->hqk"}> : () -> ()
    %cst_18 = arith.constant dense<0.000000e+00> : vector<4x16x16xf32>
    %27 = tpu.matmul %25, %26, %cst_18 {dimension_numbers = #tpu.dot_dimension_numbers<[2], [1], [1], [2], [0, 0, 0, 1, 1, 2], [0], [0]>} : vector<4x16x32xbf16>, vector<4x32x16xbf16>, vector<4x16x16xf32> -> vector<4x16x16xf32>
    "tpu.trace_stop"() : () -> ()
    %cst_19 = arith.constant dense<0xFF800000> : vector<4x16xf32>
    %28 = vector.multi_reduction <maximumf>, %27, %cst_19 [2] : vector<4x16x16xf32> to vector<4x16xf32>
    %29 = vector.shape_cast %28 : vector<4x16xf32> to vector<4x16x1xf32>
    %30 = vector.broadcast %29 : vector<4x16x1xf32> to vector<4x16x16xf32>
    %31 = arith.subf %27, %30 : vector<4x16x16xf32>
    %32 = math.exp %31 : vector<4x16x16xf32>
    %cst_20 = arith.constant dense<0.000000e+00> : vector<4x16xf32>
    %33 = vector.multi_reduction <add>, %32, %cst_20 [2] : vector<4x16x16xf32> to vector<4x16xf32>
    %34 = vector.shape_cast %33 : vector<4x16xf32> to vector<4x16x1xf32>
    %35 = tpu.reciprocal %34 {approx = true} : vector<4x16x1xf32> -> vector<4x16x1xf32>
    %36 = arith.truncf %32 : vector<4x16x16xf32> to vector<4x16x16xbf16>
    %c0_21 = arith.constant 0 : index
    %c0_22 = arith.constant 0 : index
    %c0_23 = arith.constant 0 : index
    %37 = vector.load %arg12[%c0_21, %c0_22, %c0_23] : memref<4x16x32xbf16, #tpu.memory_space<vmem>>, vector<4x16x32xbf16>
    "tpu.trace_start"() <{level = 10 : i32, message = "hqk,hkd->hqd"}> : () -> ()
    %cst_24 = arith.constant dense<0.000000e+00> : vector<4x16x32xf32>
    %38 = tpu.matmul %36, %37, %cst_24 {dimension_numbers = #tpu.dot_dimension_numbers<[2], [1], [1], [2], [0, 0, 0, 1, 1, 2], [0], [0]>} : vector<4x16x16xbf16>, vector<4x16x32xbf16>, vector<4x16x32xf32> -> vector<4x16x32xf32>
    "tpu.trace_stop"() : () -> ()
    %39 = vector.broadcast %35 : vector<4x16x1xf32> to vector<4x16x32xf32>
    %40 = arith.mulf %38, %39 : vector<4x16x32xf32>
    %41 = tpu.transpose %40, [1, 0, 2] : vector<4x16x32xf32> -> vector<16x4x32xf32>
    %42 = vector.shape_cast %41 : vector<16x4x32xf32> to vector<16x128xf32>
    %c0_25 = arith.constant 0 : index
    %c0_26 = arith.constant 0 : index
    %c0_27 = arith.constant 0 : index
    %43 = vector.load %arg10[%c0_25, %c0_26, %c0_27] : memref<1x16x128xf32, #tpu.memory_space<vmem>>, vector<1x16x128xf32>
    %44 = vector.shape_cast %43 : vector<1x16x128xf32> to vector<16x128xf32>
    %45 = vector.shape_cast %42 : vector<16x128xf32> to vector<1x16x128xf32>
    tpu.vector_store %arg10[%c0_25, %c0_26, %c0_27], %45 {strides = array<i32>} : memref<1x16x128xf32, #tpu.memory_space<vmem>>, vector<1x16x128xf32>,
    return
  }
  func.func @transform_0(%arg0: i32, %arg1: i32) -> (i32, i32, i32) {
    %c0_i32 = arith.constant 0 : i32
    %c0_i32_0 = arith.constant 0 : i32
    %c0_i32_1 = arith.constant 0 : i32
    return %arg0, %c0_i32, %c0_i32_0 : i32, i32, i32
  }
  func.func @transform_1(%arg0: i32, %arg1: i32) -> (i32, i32) {
    %c0_i32 = arith.constant 0 : i32
    %c0_i32_0 = arith.constant 0 : i32
    %c0_i32_1 = arith.constant 0 : i32
    return %c0_i32, %c0_i32_0 : i32, i32
  }
  func.func @transform_2(%arg0: i32, %arg1: i32) -> (i32, i32) {
    %c0_i32 = arith.constant 0 : i32
    %c0_i32_0 = arith.constant 0 : i32
    %c0_i32_1 = arith.constant 0 : i32
    return %c0_i32, %c0_i32_0 : i32, i32
  }
  func.func @transform_3(%arg0: i32, %arg1: i32) -> (i32, i32) {
    %c0_i32 = arith.constant 0 : i32
    %c0_i32_0 = arith.constant 0 : i32
    %c0_i32_1 = arith.constant 0 : i32
    return %c0_i32, %c0_i32_0 : i32, i32
  }
  func.func @transform_4(%arg0: i32, %arg1: i32) -> (i32, i32) {
    %c0_i32 = arith.constant 0 : i32
    %c0_i32_0 = arith.constant 0 : i32
    %c0_i32_1 = arith.constant 0 : i32
    return %c0_i32, %c0_i32_0 : i32, i32
  }
  func.func @transform_5(%arg0: i32, %arg1: i32) -> (i32, i32) {
    %c0_i32 = arith.constant 0 : i32
    %c0_i32_0 = arith.constant 0 : i32
    %c0_i32_1 = arith.constant 0 : i32
    return %c0_i32, %c0_i32_0 : i32, i32
  }
  func.func @transform_6(%arg0: i32, %arg1: i32) -> (i32, i32) {
    %c0_i32 = arith.constant 0 : i32
    %c0_i32_0 = arith.constant 0 : i32
    %c0_i32_1 = arith.constant 0 : i32
    return %c0_i32, %c0_i32_0 : i32, i32
  }
  func.func @transform_7(%arg0: i32, %arg1: i32) -> (i32, i32, i32) {
    %c0_i32 = arith.constant 0 : i32
    %c0_i32_0 = arith.constant 0 : i32
    return %arg0, %arg1, %c0_i32 : i32, i32, i32
  }
  func.func @transform_8(%arg0: i32, %arg1: i32) -> (i32, i32, i32) {
    %c0_i32 = arith.constant 0 : i32
    %c0_i32_0 = arith.constant 0 : i32
    return %arg0, %arg1, %c0_i32 : i32, i32, i32
  }
}

</mosaic_0001>

<llo_original>
// kernel: tpu_custom_call.1
$region0: #{tpu_custom_call.1}
  #allocation0 [shape = 'u32[]', space=smem, size = 0x4, offset = 0x4, fixed_abs, tag = 'smem constant byte address 0x4 - core index']
  #allocation1 [shape = 'u32[144,128]{1,0:T(1,128)}', space=vmem, size = 0x12000, scoped, tag = 'internal scratch']
  #allocation2 [shape = 'bf16[4,32,16]{2,1,0:T(16,128)(2,1)}', space=vmem, size = 0x8000, scoped, tag = 'scratch operand']
  #allocation3 [shape = 'bf16[4,16,32]{2,1,0:T(16,128)(2,1)}', space=vmem, size = 0x4000, scoped, tag = 'scratch operand']
  %s0 = inlined_call_operand.hbm [shape: bf16[2,16,128], index: 0, kind: input, shape index: {}]
  %s1 = inlined_call_operand.hbm [shape: bf16[128,128], index: 1, kind: input, shape index: {}]
  %s2 = inlined_call_operand.vmem [shape: f32[1,128], index: 2, kind: input, shape index: {}]
  %s3 = inlined_call_operand.hbm [shape: bf16[128,256], index: 3, kind: input, shape index: {}]
  %s4 = inlined_call_operand.vmem [shape: f32[1,256], index: 4, kind: input, shape index: {}]
  %s5 = inlined_call_operand.hbm [shape: bf16[128,128], index: 5, kind: input, shape index: {}]
  %s6 = inlined_call_operand.vmem [shape: f32[1,128], index: 6, kind: input, shape index: {}]
  %s7 = inlined_call_operand.hbm [shape: f32[2,16,128], index: 7, kind: output, shape index: {0}]
  %s8 = inlined_call_operand.hbm [shape: f32[2,16,128], index: 8, kind: output, shape index: {1}]
  %9 = xla_tuple %s7, %s8
  %s10 = sld [smem:[#allocation0]]
  $region89: #{tpu_custom_call.1} parent=0
    _
  %s12 = ssub.s32 1, %s10
  %s13 = scalar_select 0, %s12, %s10
  $region1: #{tpu_custom_call.1} parent=0
    #allocation4 [shape = 'u8[8192]{0}', space=vmem, size = 0x2000, scoped, tag = 'input window, operand 0']
    #allocation5 [shape = 's32[2]{0}', space=sflag, size = 0x8, scoped, tag = 'scoped memory for tpu_custom_call.1']
    #allocation6 [shape = 's32[2]{0}', space=sflag, size = 0x8, scoped, tag = 'scoped memory for tpu_custom_call.1']
    #allocation7 [shape = 'u8[32768]{0}', space=vmem, size = 0x8000, scoped, tag = 'input window, operand 1, single buffered']
    #allocation8 [shape = 's32[1]{0}', space=sflag, size = 0x4, scoped, tag = 'scoped memory for tpu_custom_call.1']
    #allocation9 [shape = 'u8[65536]{0}', space=vmem, size = 0x10000, scoped, tag = 'input window, operand 3, single buffered']
    #allocation10 [shape = 'u8[32768]{0}', space=vmem, size = 0x8000, scoped, tag = 'input window, operand 5, single buffered']
    #allocation11 [shape = 's32[1]{0}', space=sflag, size = 0x4, scoped, tag = 'scoped memory for tpu_custom_call.1']
    #allocation12 [shape = 'u8[16384]{0}', space=vmem, size = 0x4000, scoped, tag = 'output window, operand 0']
    #allocation13 [shape = 'u8[16384]{0}', space=vmem, size = 0x4000, scoped, tag = 'output window, operand 1']
    #allocation14 [shape = 's32[2]{0}', space=sflag, size = 0x8, scoped, tag = 'scoped memory for tpu_custom_call.1']
    %14 = vsyncpa [#allocation5], 0
    %s15 = scalar_lea.sflag [#allocation5], 1
    %16 = vsyncpa %s15, 0
    %17 = vsyncpa [#allocation8], 0
    %18 = vsyncpa [#allocation11], 0
    %19 = vsyncpa [#allocation6], 0
    %s20 = scalar_lea.sflag [#allocation6], 1
    %21 = vsyncpa %s20, 0
    %22 = vsyncpa [#allocation14], 0
    %s23 = scalar_lea.sflag [#allocation14], 1
    %24 = vsyncpa %s23, 0
    loop: start=0, step=1, limit=4
    $region2: #{tpu_custom_call.1} parent=1 // loop_pre_header
      _
    $region3: #{tpu_custom_call.1} parent=1 // loop_header
      %s26 = sphi 0, %s30
      %p27 = scmp.ge.s32.totalorder %s26, 4
      %s33 = sphi 0, %s45
      %s34 = sphi 0, %s41
      %s35 = sphi 0, %s33
      %s36 = sphi 0, %s34
      %s37 = sphi 0, %s35
      %s38 = sphi 0, %s36
      %s48 = sphi 0, %s50
      %s51 = sphi 0, %s48
      %s52 = sphi 0, %s51
      %s68 = sphi 0, %s52
      %s72 = sphi 0, %s72
      %s74 = sphi 0, %s72
      %s75 = sphi 0, %s74
      %s89 = sphi 0, %s75
      %s93 = sphi 0, %s93
      %s95 = sphi 0, %s93
      %s96 = sphi 0, %s95
      %s110 = sphi 0, %s96
      %s114 = sphi 0, %s114
      %s116 = sphi 0, %s114
      %s117 = sphi 0, %s116
      %s131 = sphi 0, %s117
      %s135 = sphi 0, %s135
      %s137 = sphi 0, %s135
      %s138 = sphi 0, %s137
      %s152 = sphi 0, %s138
      %s156 = sphi 0, %s156
      %s158 = sphi 0, %s156
      %s159 = sphi 0, %s158
      %s173 = sphi 0, %s159
      %s177 = sphi 0, %s177
      %s179 = sphi 0, %s177
      %s180 = sphi 0, %s179
      %s194 = sphi 0, %s180
      %s202 = sphi 0, %s204
      %s205 = sphi 0, %s202
      %s206 = sphi 0, %s205
      %s222 = sphi 0, %s206
      %s230 = sphi 0, %s232
      %s233 = sphi 0, %s230
      %s234 = sphi 0, %s233
      %s250 = sphi 0, %s234
    $region4: #{tpu_custom_call.1} parent=1 // loop_header_branch
      %29 = sbr.rel (%p27) target = $region8
    $region5: #{tpu_custom_call.1} parent=1 // loop_body
      %s31 = ssub.s32 %s26, 1
      %s32 = ssub.s32 %s26, 2
      %s39 = sadd.s32 1, %s34
      %p40 = scmp.ge.s32.totalorder %s39, 1
      %s41 = scalar_select %p40, 0, %s39
      %s42 = sadd.s32 1, %s33
      %s43 = scalar_select %p40, %s42, %s33
      %p44 = scmp.ge.s32.totalorder %s43, 2
      %s45 = scalar_select %p44, 0, %s43
      %s46 = ssub.s32 %s33, %s45
      %p47 = scmp.eq.s32.totalorder %s46, 0
      %s49 = sadd.s32 %s48, 1
      %s50 = scalar_select %p47, %s48, %s49
      %p53 = pneg %p47
      %p54 = scmp.eq.s32.totalorder %s26, 1
      %p55 = por %p53, %p54
      %p56 = scmp.ne.s32.totalorder %s48, %s51
      %p57 = scmp.eq.s32.totalorder %s26, 0
      %p58 = por %p56, %p57
      %p59 = scmp.ne.s32.totalorder %s48, %s51
      %p60 = scmp.eq.s32.totalorder %s31, 1
      %p61 = por %p59, %p60
      %p62 = scmp.ne.s32.totalorder %s51, %s52
      %p63 = scmp.eq.s32.totalorder %s31, 0
      %p64 = por %p62, %p63
      %p65 = scmp.ne.s32.totalorder %s51, %s52
      %p66 = scmp.eq.s32.totalorder %s32, 1
      %p67 = por %p65, %p66
      %p69 = scmp.ne.s32.totalorder %s52, %s68
      %p70 = scmp.eq.s32.totalorder %s32, 0
      %p71 = por %p69, %p70
      %s73 = sadd.s32 %s72, 1
      %p76 = scmp.eq.s32.totalorder %s26, 1
      %p77 = scmp.ne.s32.totalorder %s72, %s74
      %p78 = scmp.eq.s32.totalorder %s26, 0
      %p79 = por %p77, %p78
      %p80 = scmp.ne.s32.totalorder %s72, %s74
      %p81 = scmp.eq.s32.totalorder %s31, 1
      %p82 = por %p80, %p81
      %p83 = scmp.ne.s32.totalorder %s74, %s75
      %p84 = scmp.eq.s32.totalorder %s31, 0
      %p85 = por %p83, %p84
      %p86 = scmp.ne.s32.totalorder %s74, %s75
      %p87 = scmp.eq.s32.totalorder %s32, 1
      %p88 = por %p86, %p87
      %p90 = scmp.ne.s32.totalorder %s75, %s89
      %p91 = scmp.eq.s32.totalorder %s32, 0
      %p92 = por %p90, %p91
      %s94 = sadd.s32 %s93, 1
      %p97 = scmp.eq.s32.totalorder %s26, 1
      %p98 = scmp.ne.s32.totalorder %s93, %s95
      %p99 = scmp.eq.s32.totalorder %s26, 0
      %p100 = por %p98, %p99
      %p101 = scmp.ne.s32.totalorder %s93, %s95
      %p102 = scmp.eq.s32.totalorder %s31, 1
      %p103 = por %p101, %p102
      %p104 = scmp.ne.s32.totalorder %s95, %s96
      %p105 = scmp.eq.s32.totalorder %s31, 0
      %p106 = por %p104, %p105
      %p107 = scmp.ne.s32.totalorder %s95, %s96
      %p108 = scmp.eq.s32.totalorder %s32, 1
      %p109 = por %p107, %p108
      %p111 = scmp.ne.s32.totalorder %s96, %s110
      %p112 = scmp.eq.s32.totalorder %s32, 0
      %p113 = por %p111, %p112
      %s115 = sadd.s32 %s114, 1
      %p118 = scmp.eq.s32.totalorder %s26, 1
      %p119 = scmp.ne.s32.totalorder %s114, %s116
      %p120 = scmp.eq.s32.totalorder %s26, 0
      %p121 = por %p119, %p120
      %p122 = scmp.ne.s32.totalorder %s114, %s116
      %p123 = scmp.eq.s32.totalorder %s31, 1
      %p124 = por %p122, %p123
      %p125 = scmp.ne.s32.totalorder %s116, %s117
      %p126 = scmp.eq.s32.totalorder %s31, 0
      %p127 = por %p125, %p126
      %p128 = scmp.ne.s32.totalorder %s116, %s117
      %p129 = scmp.eq.s32.totalorder %s32, 1
      %p130 = por %p128, %p129
      %p132 = scmp.ne.s32.totalorder %s117, %s131
      %p133 = scmp.eq.s32.totalorder %s32, 0
      %p134 = por %p132, %p133
      %s136 = sadd.s32 %s135, 1
      %p139 = scmp.eq.s32.totalorder %s26, 1
      %p140 = scmp.ne.s32.totalorder %s135, %s137
      %p141 = scmp.eq.s32.totalorder %s26, 0
      %p142 = por %p140, %p141
      %p143 = scmp.ne.s32.totalorder %s135, %s137
      %p144 = scmp.eq.s32.totalorder %s31, 1
      %p145 = por %p143, %p144
      %p146 = scmp.ne.s32.totalorder %s137, %s138
      %p147 = scmp.eq.s32.totalorder %s31, 0
      %p148 = por %p146, %p147
      %p149 = scmp.ne.s32.totalorder %s137, %s138
      %p150 = scmp.eq.s32.totalorder %s32, 1
      %p151 = por %p149, %p150
      %p153 = scmp.ne.s32.totalorder %s138, %s152
      %p154 = scmp.eq.s32.totalorder %s32, 0
      %p155 = por %p153, %p154
      %s157 = sadd.s32 %s156, 1
      %p160 = scmp.eq.s32.totalorder %s26, 1
      %p161 = scmp.ne.s32.totalorder %s156, %s158
      %p162 = scmp.eq.s32.totalorder %s26, 0
      %p163 = por %p161, %p162
      %p164 = scmp.ne.s32.totalorder %s156, %s158
      %p165 = scmp.eq.s32.totalorder %s31, 1
      %p166 = por %p164, %p165
      %p167 = scmp.ne.s32.totalorder %s158, %s159
      %p168 = scmp.eq.s32.totalorder %s31, 0
      %p169 = por %p167, %p168
      %p170 = scmp.ne.s32.totalorder %s158, %s159
      %p171 = scmp.eq.s32.totalorder %s32, 1
      %p172 = por %p170, %p171
      %p174 = scmp.ne.s32.totalorder %s159, %s173
      %p175 = scmp.eq.s32.totalorder %s32, 0
      %p176 = por %p174, %p175
      %s178 = sadd.s32 %s177, 1
      %p181 = scmp.eq.s32.totalorder %s26, 1
      %p182 = scmp.ne.s32.totalorder %s177, %s179
      %p183 = scmp.eq.s32.totalorder %s26, 0
      %p184 = por %p182, %p183
      %p185 = scmp.ne.s32.totalorder %s177, %s179
      %p186 = scmp.eq.s32.totalorder %s31, 1
      %p187 = por %p185, %p186
      %p188 = scmp.ne.s32.totalorder %s179, %s180
      %p189 = scmp.eq.s32.totalorder %s31, 0
      %p190 = por %p188, %p189
      %p191 = scmp.ne.s32.totalorder %s179, %s180
      %p192 = scmp.eq.s32.totalorder %s32, 1
      %p193 = por %p191, %p192
      %p195 = scmp.ne.s32.totalorder %s180, %s194
      %p196 = scmp.eq.s32.totalorder %s32, 0
      %p197 = por %p195, %p196
      %s198 = ssub.s32 %s33, %s45
      %s199 = ssub.s32 %s34, %s41
      %s200 = sor.u32 %s198, %s199
      %p201 = scmp.eq.s32.totalorder %s200, 0
      %s203 = sadd.s32 %s202, 1
      %s204 = scalar_select %p201, %s202, %s203
      %p207 = pneg %p201
      %p208 = scmp.eq.s32.totalorder %s26, 1
      %p209 = por %p207, %p208
      %p210 = scmp.ne.s32.totalorder %s202, %s205
      %p211 = scmp.eq.s32.totalorder %s26, 0
      %p212 = por %p210, %p211
      %p213 = scmp.ne.s32.totalorder %s202, %s205
      %p214 = scmp.eq.s32.totalorder %s31, 1
      %p215 = por %p213, %p214
      %p216 = scmp.ne.s32.totalorder %s205, %s206
      %p217 = scmp.eq.s32.totalorder %s31, 0
      %p218 = por %p216, %p217
      %p219 = scmp.ne.s32.totalorder %s205, %s206
      %p220 = scmp.eq.s32.totalorder %s32, 1
      %p221 = por %p219, %p220
      %p223 = scmp.ne.s32.totalorder %s206, %s222
      %p224 = scmp.eq.s32.totalorder %s32, 0
      %p225 = por %p223, %p224
      %s226 = ssub.s32 %s33, %s45
      %s227 = ssub.s32 %s34, %s41
      %s228 = sor.u32 %s226, %s227
      %p229 = scmp.eq.s32.totalorder %s228, 0
      %s231 = sadd.s32 %s230, 1
      %s232 = scalar_select %p229, %s230, %s231
      %p235 = pneg %p229
      %p236 = scmp.eq.s32.totalorder %s26, 1
      %p237 = por %p235, %p236
      %p238 = scmp.ne.s32.totalorder %s230, %s233
      %p239 = scmp.eq.s32.totalorder %s26, 0
      %p240 = por %p238, %p239
      %p241 = scmp.ne.s32.totalorder %s230, %s233
      %p242 = scmp.eq.s32.totalorder %s31, 1
      %p243 = por %p241, %p242
      %p244 = scmp.ne.s32.totalorder %s233, %s234
      %p245 = scmp.eq.s32.totalorder %s31, 0
      %p246 = por %p244, %p245
      %p247 = scmp.ne.s32.totalorder %s233, %s234
      %p248 = scmp.eq.s32.totalorder %s32, 1
      %p249 = por %p247, %p248
      %p251 = scmp.ne.s32.totalorder %s234, %s250
      %p252 = scmp.eq.s32.totalorder %s32, 0
      %p253 = por %p251, %p252
      %p254 = scmp.le.s32.totalorder 1, %s26
      %p255 = scmp.lt.s32.totalorder %s26, 3
      %p256 = pnand %p254, %p255
      %p257 = pneg %p256
      // Predicated region
      $region9: #{tpu_custom_call.1} parent=5 // pred_check
        _
      $region10: #{tpu_custom_call.1} parent=5 // pred_check_branch
        %259 = sbr.rel (%p256) target = $region12
      $region11: #{tpu_custom_call.1} parent=5 // pred_region
        %s260 = ssub.s32 %s26, 1
        // Predicated region
        $region13: #{tpu_custom_call.1} parent=11 // pred_check
          %p261 = pneg %p85
        $region14: #{tpu_custom_call.1} parent=11 // pred_check_branch
          %263 = sbr.rel (%p261) target = $region16
        $region15: #{tpu_custom_call.1} parent=11 // pred_region
          %s265 = ssub.s32 1024, 1024
          %266 = vsyncadd [#allocation8], %s265
          %s267 = sshll.u32 [#allocation7], 4
          %s268 = int_to_ptr.vmem [resolvable:$true] %s267
          %273 = dma.hbm_to_vmem [thread:$0]  %s1, 1024, %s268, [#allocation8], 64, 64, 4
        $region16: #{tpu_custom_call.1} parent=11 // pred_fallthru
          _
        // Predicated region
        $region17: #{tpu_custom_call.1} parent=11 // pred_check
          %p274 = pneg %p106
        $region18: #{tpu_custom_call.1} parent=11 // pred_check_branch
          %276 = sbr.rel (%p274) target = $region20
        $region19: #{tpu_custom_call.1} parent=11 // pred_region
          _
        $region20: #{tpu_custom_call.1} parent=11 // pred_fallthru
          _
        // Predicated region
        $region21: #{tpu_custom_call.1} parent=11 // pred_check
          %p277 = pneg %p127
        $region22: #{tpu_custom_call.1} parent=11 // pred_check_branch
          %279 = sbr.rel (%p277) target = $region24
        $region23: #{tpu_custom_call.1} parent=11 // pred_region
          %s281 = ssub.s32 2048, 2048
          %282 = vsyncadd [#allocation8], %s281
          %s283 = sshll.u32 [#allocation9], 4
          %s284 = int_to_ptr.vmem [resolvable:$true] %s283
          %289 = dma.hbm_to_vmem [thread:$0]  %s3, 2048, %s284, [#allocation8], 128, 128, 8
        $region24: #{tpu_custom_call.1} parent=11 // pred_fallthru
          _
        // Predicated region
        $region25: #{tpu_custom_call.1} parent=11 // pred_check
          %p290 = pneg %p148
        $region26: #{tpu_custom_call.1} parent=11 // pred_check_branch
          %292 = sbr.rel (%p290) target = $region28
        $region27: #{tpu_custom_call.1} parent=11 // pred_region
          _
        $region28: #{tpu_custom_call.1} parent=11 // pred_fallthru
          _
        // Predicated region
        $region29: #{tpu_custom_call.1} parent=11 // pred_check
          %p293 = pneg %p169
        $region30: #{tpu_custom_call.1} parent=11 // pred_check_branch
          %295 = sbr.rel (%p293) target = $region32
        $region31: #{tpu_custom_call.1} parent=11 // pred_region
          %s297 = ssub.s32 1024, 1024
          %298 = vsyncadd [#allocation11], %s297
          %s299 = sshll.u32 [#allocation10], 4
          %s300 = int_to_ptr.vmem [resolvable:$true] %s299
          %305 = dma.hbm_to_vmem [thread:$0]  %s5, 1024, %s300, [#allocation11], 64, 64, 4
        $region32: #{tpu_custom_call.1} parent=11 // pred_fallthru
          _
        // Predicated region
        $region33: #{tpu_custom_call.1} parent=11 // pred_check
          %p306 = pneg %p190
        $region34: #{tpu_custom_call.1} parent=11 // pred_check_branch
          %308 = sbr.rel (%p306) target = $region36
        $region35: #{tpu_custom_call.1} parent=11 // pred_region
          _
        $region36: #{tpu_custom_call.1} parent=11 // pred_fallthru
          _
      $region12: #{tpu_custom_call.1} parent=5 // pred_fallthru
        _
      %p309 = scmp.lt.s32.totalorder %s26, 2
      // Predicated region
      $region37: #{tpu_custom_call.1} parent=5 // pred_check
        %p310 = pneg %p309
      $region38: #{tpu_custom_call.1} parent=5 // pred_check_branch
        %312 = sbr.rel (%p310) target = $region40
      $region39: #{tpu_custom_call.1} parent=5 // pred_region
        // Predicated region
        $region41: #{tpu_custom_call.1} parent=39 // pred_check
          %p313 = pneg %p58
        $region42: #{tpu_custom_call.1} parent=39 // pred_check_branch
          %315 = sbr.rel (%p313) target = $region44
        $region43: #{tpu_custom_call.1} parent=39 // pred_region
          %s316 = sand.u32 %s48, 1
          %s317 = scalar_lea.sflag [#allocation5], %s316
          %s318 = sand.u32 %s48, 1
          %s319 = smul.addr %s318, 8
          %s320 = scalar_lea.vmem [#allocation4], %s319
          %s322 = ssub.s32 128, 128
          %323 = vsyncadd %s317, %s322
          %s324 = smul.addr %s33, 2
          %s325 = smul.addr %s324, 64
          %s326 = scalar_lea.hbm %s0, %s325
          %s327 = sshll.u32 %s320, 4
          %s328 = int_to_ptr.vmem [resolvable:$true] %s327
          %333 = dma.hbm_to_vmem [thread:$0]  %s326, 128, %s328, %s317, 64, 64, 4
        $region44: #{tpu_custom_call.1} parent=39 // pred_fallthru
          _
      $region40: #{tpu_custom_call.1} parent=5 // pred_fallthru
        _
      %p334 = scmp.le.s32.totalorder 1, %s26
      %p335 = scmp.lt.s32.totalorder %s26, 3
      %p336 = pnand %p334, %p335
      %p337 = pneg %p336
      // Predicated region
      $region45: #{tpu_custom_call.1} parent=5 // pred_check
        _
      $region46: #{tpu_custom_call.1} parent=5 // pred_check_branch
        %339 = sbr.rel (%p336) target = $region48
      $region47: #{tpu_custom_call.1} parent=5 // pred_region
        %s340 = ssub.s32 %s26, 1
        %s341 = sand.u32 %s51, 1
        %s342 = scalar_lea.sflag [#allocation5], %s341
        %s343 = sand.u32 %s51, 1
        %s344 = smul.addr %s343, 8
        %s345 = scalar_lea.vmem [#allocation4], %s344
        // Predicated region
        $region49: #{tpu_custom_call.1} parent=47 // pred_check
          %p346 = pneg %p64
        $region50: #{tpu_custom_call.1} parent=47 // pred_check_branch
          %348 = sbr.rel (%p346) target = $region52
        $region51: #{tpu_custom_call.1} parent=47 // pred_region
          %349 = dma.done %s342, 128
        $region52: #{tpu_custom_call.1} parent=47 // pred_fallthru
          _
        // Predicated region
        $region53: #{tpu_custom_call.1} parent=47 // pred_check
          %p350 = pneg %p85
        $region54: #{tpu_custom_call.1} parent=47 // pred_check_branch
          %352 = sbr.rel (%p350) target = $region56
        $region55: #{tpu_custom_call.1} parent=47 // pred_region
          %353 = dma.done [#allocation8], 1024
        $region56: #{tpu_custom_call.1} parent=47 // pred_fallthru
          _
        // Predicated region
        $region57: #{tpu_custom_call.1} parent=47 // pred_check
          %p354 = pneg %p127
        $region58: #{tpu_custom_call.1} parent=47 // pred_check_branch
          %356 = sbr.rel (%p354) target = $region60
        $region59: #{tpu_custom_call.1} parent=47 // pred_region
          %357 = dma.done [#allocation8], 2048
        $region60: #{tpu_custom_call.1} parent=47 // pred_fallthru
          _
        // Predicated region
        $region61: #{tpu_custom_call.1} parent=47 // pred_check
          %p358 = pneg %p169
        $region62: #{tpu_custom_call.1} parent=47 // pred_check_branch
          %360 = sbr.rel (%p358) target = $region64
        $region63: #{tpu_custom_call.1} parent=47 // pred_region
          %361 = dma.done [#allocation11], 1024
        $region64: #{tpu_custom_call.1} parent=47 // pred_fallthru
          _
        %s362 = sand.u32 %s51, 1
        %s363 = scalar_lea.sflag [#allocation5], %s362
        %s364 = sand.u32 %s51, 1
        %s365 = smul.addr %s364, 8
        %s366 = scalar_lea.vmem [#allocation4], %s365
        %p367 = pneg %p64
        %p368 = pneg %p61
        %p369 = pneg %p85
        %p370 = pneg %p82
        %p371 = pneg %p106
        %p372 = pneg %p103
        %p373 = pneg %p127
        %p374 = pneg %p124
        %p375 = pneg %p148
        %p376 = pneg %p145
        %p377 = pneg %p169
        %p378 = pneg %p166
        %p379 = pneg %p190
        %p380 = pneg %p187
        %p381 = pneg %p218
        %p382 = pneg %p215
        %s383 = sand.u32 %s205, 1
        %s384 = scalar_lea.sflag [#allocation6], %s383
        %s385 = sand.u32 %s205, 1
        %s386 = smul.addr %s385, 16
        %s387 = scalar_lea.vmem [#allocation12], %s386
        %p388 = pneg %p246
        %p389 = pneg %p243
        %s390 = sand.u32 %s233, 1
        %s391 = scalar_lea.sflag [#allocation14], %s390
        %s392 = sand.u32 %s233, 1
        %s393 = smul.addr %s392, 16
        %s394 = scalar_lea.vmem [#allocation13], %s393
        %s395 = smul.u32 2, %s36
        %s396 = smul.u32 2, %s36
        %s398 = smul.u32 %s36, 16
        %s399 = sshra.s32 %s398, 3
        %s400 = sand.u32 %s398, 7
        %s401 = smul.addr %s399, 4
        %s402 = scalar_lea.vmem %s345, %s401 [#allocation4]
        %v403 = vld [vmem:[%s402] sm:$0xf]
        %v404 = vld [vmem:[%s402 + $0x4] sm:$0xf]
        %v405 = vld [vmem:[#allocation10] sm:$0xf]
        %v406 = vld [vmem:[#allocation10 + $0x4] sm:$0xf]
        %v407 = vld [vmem:[#allocation10 + $0x8] sm:$0xf]
        %v408 = vld [vmem:[#allocation10 + $0xc] sm:$0xf]
        %v409 = vld [vmem:[#allocation10 + $0x10] sm:$0xf]
        %v410 = vld [vmem:[#allocation10 + $0x14] sm:$0xf]
        %v411 = vld [vmem:[#allocation10 + $0x18] sm:$0xf]
        %v412 = vld [vmem:[#allocation10 + $0x1c] sm:$0xf]
        %v413 = vld [vmem:[#allocation10 + $0x20] sm:$0xf]
        %v414 = vld [vmem:[#allocation10 + $0x24] sm:$0xf]
        %v415 = vld [vmem:[#allocation10 + $0x28] sm:$0xf]
        %v416 = vld [vmem:[#allocation10 + $0x2c] sm:$0xf]
        %v417 = vld [vmem:[#allocation10 + $0x30] sm:$0xf]
        %v418 = vld [vmem:[#allocation10 + $0x34] sm:$0xf]
        %v419 = vld [vmem:[#allocation10 + $0x38] sm:$0xf]
        %v420 = vld [vmem:[#allocation10 + $0x3c] sm:$0xf]
        %v421 = vld [vmem:[%s6] sm:$0x1]
        %v423 = vlaneseq
        %v424 = vshrl.u32 %v423, 7
        %v425 = vsub.s32 0, %v424
        %v426 = vrot.slane %v421, %v425
        %v430 = vunpack.c.l.b16 %v403
        %v431 = vunpack.c.l.b16 %v404
        %v432 = vpack.c.b16 %v431, %v430
        %v450 = vunpack.c.l.b16 %v405
        %v451 = vunpack.c.l.b16 %v406
        %v452 = vunpack.c.l.b16 %v407
        %v453 = vunpack.c.l.b16 %v408
        %v454 = vunpack.c.l.b16 %v409
        %v455 = vunpack.c.l.b16 %v410
        %v456 = vunpack.c.l.b16 %v411
        %v457 = vunpack.c.l.b16 %v412
        %v458 = vunpack.c.l.b16 %v413
        %v459 = vunpack.c.l.b16 %v414
        %v460 = vunpack.c.l.b16 %v415
        %v461 = vunpack.c.l.b16 %v416
        %v462 = vunpack.c.l.b16 %v417
        %v463 = vunpack.c.l.b16 %v418
        %v464 = vunpack.c.l.b16 %v419
        %v465 = vunpack.c.l.b16 %v420
        %v466 = vpack.c.b16 %v451, %v450
        %v467 = vpack.c.b16 %v453, %v452
        %v468 = vpack.c.b16 %v455, %v454
        %v469 = vpack.c.b16 %v457, %v456
        %v470 = vpack.c.b16 %v459, %v458
        %v471 = vpack.c.b16 %v461, %v460
        %v472 = vpack.c.b16 %v463, %v462
        %v473 = vpack.c.b16 %v465, %v464
        %482 = vmatprep.subr.bf16.mxu0 0
        %483 = vmatpush1.bf16.msra.mxu0 %v466
        %484 = vmatprep.subr.bf16.mxu0 0
        %485 = vmatpush1.bf16.msra.mxu0 %v467
        %486 = vmatprep.subr.bf16.mxu0 0
        %487 = vmatpush1.bf16.msra.mxu0 %v468
        %488 = vmatprep.subr.bf16.mxu0 0
        %489 = vmatpush1.bf16.msra.mxu0 %v469
        %490 = vmatprep.subr.bf16.mxu0 0
        %491 = vmatpush1.bf16.msra.mxu0 %v470
        %492 = vmatprep.subr.bf16.mxu0 0
        %493 = vmatpush1.bf16.msra.mxu0 %v471
        %494 = vmatprep.subr.bf16.mxu0 0
        %495 = vmatpush1.bf16.msra.mxu0 %v472
        %496 = vmatprep.subr.bf16.mxu0 0
        %497 = vmatpush1.bf16.msra.mxu0 %v473
        %498 = vmatprep.subr.bf16.mxu0 0
        %499 = vmatpush1.bf16.msra.mxu0 0
        %500 = vmatprep.subr.bf16.mxu0 0
        %501 = vmatpush1.bf16.msra.mxu0 0
        %502 = vmatprep.subr.bf16.mxu0 0
        %503 = vmatpush1.bf16.msra.mxu0 0
        %504 = vmatprep.subr.bf16.mxu0 0
        %505 = vmatpush1.bf16.msra.mxu0 0
        %506 = vmatprep.subr.bf16.mxu0 0
        %507 = vmatpush1.bf16.msra.mxu0 0
        %508 = vmatprep.subr.bf16.mxu0 0
        %509 = vmatpush1.bf16.msra.mxu0 0
        %510 = vmatprep.subr.bf16.mxu0 0
        %511 = vmatpush1.bf16.msra.mxu0 0
        %512 = vmatprep.subr.bf16.mxu0 0
        %513 = vmatpush1.bf16.msra.mxu0 0
        %514 = vmatprep.mubr.bf16.mxu0 0
        %515 = vmatmul.mubr.bf16.gmra.mrb[0].mxu0 %v432
        %v516 = vpop.f32.mrb[0].mxu0
        %v517 = vadd.f32 %v426, %v516
        %v518 = vpop.f32.mrb[0].mxu0
        %v519 = vpop.f32.mrb[0].mxu0
        %v520 = vadd.f32 %v426, %v519
        %v521 = vpop.f32.mrb[0].mxu0
        %522 = vdwg.mxu0
        %523 = vst [vmem:[%s387] sm:$0xff] %v517
        %524 = vst [vmem:[%s387 + $0x8] sm:$0xff] %v520
        %p525 = scmp.eq.s32.totalorder %s36, 0
        // Predicated region
        $region65: #{tpu_custom_call.1} parent=47 // pred_check
          %p526 = pneg %p525
        $region66: #{tpu_custom_call.1} parent=47 // pred_check_branch
          %528 = sbr.rel (%p526) target = $region68
        $region67: #{tpu_custom_call.1} parent=47 // pred_region
          %v529 = vld [vmem:[%s345] sm:$0xf]
          %v530 = vld [vmem:[%s345 + $0x4] sm:$0xf]
          %v531 = vld [vmem:[#allocation9] sm:$0xff]
          %v532 = vld [vmem:[#allocation9 + $0x8] sm:$0xff]
          %v533 = vld [vmem:[#allocation9 + $0x10] sm:$0xff]
          %v534 = vld [vmem:[#allocation9 + $0x18] sm:$0xff]
          %v535 = vld [vmem:[#allocation9 + $0x20] sm:$0xff]
          %v536 = vld [vmem:[#allocation9 + $0x28] sm:$0xff]
          %v537 = vld [vmem:[#allocation9 + $0x30] sm:$0xff]
          %v538 = vld [vmem:[#allocation9 + $0x38] sm:$0xff]
          %v539 = vld [vmem:[#allocation9 + $0x40] sm:$0xff]
          %v540 = vld [vmem:[#allocation9 + $0x48] sm:$0xff]
          %v541 = vld [vmem:[#allocation9 + $0x50] sm:$0xff]
          %v542 = vld [vmem:[#allocation9 + $0x58] sm:$0xff]
          %v543 = vld [vmem:[#allocation9 + $0x60] sm:$0xff]
          %v544 = vld [vmem:[#allocation9 + $0x68] sm:$0xff]
          %v545 = vld [vmem:[#allocation9 + $0x70] sm:$0xff]
          %v546 = vld [vmem:[#allocation9 + $0x78] sm:$0xff]
          %v547 = vld [vmem:[%s4] sm:$0x3]
          %v549 = vlaneseq
          %v550 = vshrl.u32 %v549, 7
          %v551 = vsub.s32 0, %v550
          %v552 = vrot.slane %v547, %v551
          %v553 = vlaneseq
          %v554 = vshrl.u32 %v553, 7
          %v555 = vsub.s32 1, %v554
          %v556 = vrot.slane %v547, %v555
          %v561 = vunpack.c.l.b16 %v529
          %v562 = vunpack.c.l.b16 %v530
          %v563 = vpack.c.b16 %v562, %v561
          %v581 = vunpack.c.l.b16 %v531
          %v582 = vunpack.c.h.b16 %v531
          %v583 = vunpack.c.l.b16 %v532
          %v584 = vunpack.c.h.b16 %v532
          %v585 = vunpack.c.l.b16 %v533
          %v586 = vunpack.c.h.b16 %v533
          %v587 = vunpack.c.l.b16 %v534
          %v588 = vunpack.c.h.b16 %v534
          %v589 = vunpack.c.l.b16 %v535
          %v590 = vunpack.c.h.b16 %v535
          %v591 = vunpack.c.l.b16 %v536
          %v592 = vunpack.c.h.b16 %v536
          %v593 = vunpack.c.l.b16 %v537
          %v594 = vunpack.c.h.b16 %v537
          %v595 = vunpack.c.l.b16 %v538
          %v596 = vunpack.c.h.b16 %v538
          %v597 = vunpack.c.l.b16 %v539
          %v598 = vunpack.c.h.b16 %v539
          %v599 = vunpack.c.l.b16 %v540
          %v600 = vunpack.c.h.b16 %v540
          %v601 = vunpack.c.l.b16 %v541
          %v602 = vunpack.c.h.b16 %v541
          %v603 = vunpack.c.l.b16 %v542
          %v604 = vunpack.c.h.b16 %v542
          %v605 = vunpack.c.l.b16 %v543
          %v606 = vunpack.c.h.b16 %v543
          %v607 = vunpack.c.l.b16 %v544
          %v608 = vunpack.c.h.b16 %v544
          %v609 = vunpack.c.l.b16 %v545
          %v610 = vunpack.c.h.b16 %v545
          %v611 = vunpack.c.l.b16 %v546
          %v612 = vunpack.c.h.b16 %v546
          %v613 = vpack.c.b16 %v583, %v581
          %v614 = vpack.c.b16 %v584, %v582
          %v615 = vpack.c.b16 %v587, %v585
          %v616 = vpack.c.b16 %v588, %v586
          %v617 = vpack.c.b16 %v591, %v589
          %v618 = vpack.c.b16 %v592, %v590
          %v619 = vpack.c.b16 %v595, %v593
          %v620 = vpack.c.b16 %v596, %v594
          %v621 = vpack.c.b16 %v599, %v597
          %v622 = vpack.c.b16 %v600, %v598
          %v623 = vpack.c.b16 %v603, %v601
          %v624 = vpack.c.b16 %v604, %v602
          %v625 = vpack.c.b16 %v607, %v605
          %v626 = vpack.c.b16 %v608, %v606
          %v627 = vpack.c.b16 %v611, %v609
          %v628 = vpack.c.b16 %v612, %v610
          %645 = vmatprep.subr.bf16.mxu0 %v614
          %646 = vmatpush1.bf16.msra.mxu0 %v613
          %647 = vmatprep.subr.bf16.mxu0 %v616
          %648 = vmatpush1.bf16.msra.mxu0 %v615
          %649 = vmatprep.subr.bf16.mxu0 %v618
          %650 = vmatpush1.bf16.msra.mxu0 %v617
          %651 = vmatprep.subr.bf16.mxu0 %v620
          %652 = vmatpush1.bf16.msra.mxu0 %v619
          %653 = vmatprep.subr.bf16.mxu0 %v622
          %654 = vmatpush1.bf16.msra.mxu0 %v621
          %655 = vmatprep.subr.bf16.mxu0 %v624
          %656 = vmatpush1.bf16.msra.mxu0 %v623
          %657 = vmatprep.subr.bf16.mxu0 %v626
          %658 = vmatpush1.bf16.msra.mxu0 %v625
          %659 = vmatprep.subr.bf16.mxu0 %v628
          %660 = vmatpush1.bf16.msra.mxu0 %v627
          %661 = vmatprep.subr.bf16.mxu0 0
          %662 = vmatpush1.bf16.msra.mxu0 0
          %663 = vmatprep.subr.bf16.mxu0 0
          %664 = vmatpush1.bf16.msra.mxu0 0
          %665 = vmatprep.subr.bf16.mxu0 0
          %666 = vmatpush1.bf16.msra.mxu0 0
          %667 = vmatprep.subr.bf16.mxu0 0
          %668 = vmatpush1.bf16.msra.mxu0 0
          %669 = vmatprep.subr.bf16.mxu0 0
          %670 = vmatpush1.bf16.msra.mxu0 0
          %671 = vmatprep.subr.bf16.mxu0 0
          %672 = vmatpush1.bf16.msra.mxu0 0
          %673 = vmatprep.subr.bf16.mxu0 0
          %674 = vmatpush1.bf16.msra.mxu0 0
          %675 = vmatprep.subr.bf16.mxu0 0
          %676 = vmatpush1.bf16.msra.mxu0 0
          %677 = vmatprep.mubr.bf16.mxu0 0
          %678 = vmatmul.mubr.bf16.gmra.mrb[0].mxu0 %v563
          %v679 = vpop.f32.mrb[0].mxu0
          %v680 = vadd.f32 %v552, %v679
          %v681 = vpop.f32.mrb[0].mxu0
          %v682 = vadd.f32 %v556, %v681
          %v683 = vpop.f32.mrb[0].mxu0
          %v684 = vadd.f32 %v552, %v683
          %v685 = vpop.f32.mrb[0].mxu0
          %v686 = vadd.f32 %v556, %v685
          %687 = vdwg.mxu0
          %v688 = vpack.c.bf16 %v684, %v680
          %v689 = vpack.c.bf16 %v686, %v682
          %691 = vrot.lane.b32.xlu0 %v688, 96
          %v692 = vpop.permute.xlu0 %691
          %693 = vrot.lane.b32.xlu0 %v688, 64
          %v694 = vpop.permute.xlu0 %693
          %695 = vrot.lane.b32.xlu0 %v688, 32
          %v696 = vpop.permute.xlu0 %695
          %v699 = vpack.i.b16 %v692, %v688
          %v701 = vshrl.u32 %v688, 16
          %v702 = vshrl.u32 %v692, 16
          %v703 = vpack.i.b16 %v702, %v701
          %v707 = vpack.i.b16 %v696, %v694
          %v709 = vshrl.u32 %v694, 16
          %v710 = vshrl.u32 %v696, 16
          %v711 = vpack.i.b16 %v710, %v709
          %v714 = vpack.i.b16 0, 0
          %v716 = vshrl.u32 0, 16
          %v717 = vpack.i.b16 %v716, %v716
          %v719 = vcombine.high %v699, %v714
          %v721 = vunpack.c.l.s4 1983009808
          %v722 = vunpack.c.0.s8 %v721
          %v723 = vlaneseq
          %v724 = vshrl.u32 %v723, 7
          %v725 = vsub.s32 %v722, %v724
          %v726 = vrot.slane %v699, %v725
          %v728 = vunpack.c.l.s4 1983009808
          %v729 = vunpack.c.0.s8 %v728
          %v730 = vlaneseq
          %v731 = vshrl.u32 %v730, 7
          %v732 = vsub.s32 %v729, %v731
          %v733 = vrot.slane %v719, %v732
          %v734 = vcombine.high %v707, %v714
          %v736 = vunpack.c.l.s4 1983009808
          %v737 = vunpack.c.0.s8 %v736
          %v738 = vlaneseq
          %v739 = vshrl.u32 %v738, 7
          %v740 = vsub.s32 %v737, %v739
          %v741 = vrot.slane %v707, %v740
          %v743 = vunpack.c.l.s4 1983009808
          %v744 = vunpack.c.0.s8 %v743
          %v745 = vlaneseq
          %v746 = vshrl.u32 %v745, 7
          %v747 = vsub.s32 %v744, %v746
          %v748 = vrot.slane %v734, %v747
          %v749 = vcombine.low %v726, %v741
          %v750 = vcombine.high %v726, %v741
          %v752 = vunpack.c.l.s4 1934713408
          %v753 = vunpack.c.0.s8 %v752
          %v754 = vlaneseq
          %v755 = vshrl.u32 %v754, 7
          %v756 = vsub.s32 %v753, %v755
          %v757 = vrot.slane %v749, %v756
          %v759 = vunpack.c.l.s4 1934713408
          %v760 = vunpack.c.0.s8 %v759
          %v761 = vlaneseq
          %v762 = vshrl.u32 %v761, 7
          %v763 = vsub.s32 %v760, %v762
          %v764 = vrot.slane %v750, %v763
          %v765 = vcombine.low %v733, %v748
          %v766 = vcombine.high %v733, %v748
          %v768 = vunpack.c.l.s4 1934713408
          %v769 = vunpack.c.0.s8 %v768
          %v770 = vlaneseq
          %v771 = vshrl.u32 %v770, 7
          %v772 = vsub.s32 %v769, %v771
          %v773 = vrot.slane %v765, %v772
          %v775 = vunpack.c.l.s4 1934713408
          %v776 = vunpack.c.0.s8 %v775
          %v777 = vlaneseq
          %v778 = vshrl.u32 %v777, 7
          %v779 = vsub.s32 %v776, %v778
          %v780 = vrot.slane %v766, %v779
          %v781 = vcombine.high %v757, 0
          %v782 = vcombine.high %v764, 0
          %v783 = vcombine.high %v773, 0
          %v784 = vcombine.high %v780, 0
          %v785 = vcombine.high %v703, %v717
          %v787 = vunpack.c.l.s4 1983009808
          %v788 = vunpack.c.0.s8 %v787
          %v789 = vlaneseq
          %v790 = vshrl.u32 %v789, 7
          %v791 = vsub.s32 %v788, %v790
          %v792 = vrot.slane %v703, %v791
          %v794 = vunpack.c.l.s4 1983009808
          %v795 = vunpack.c.0.s8 %v794
          %v796 = vlaneseq
          %v797 = vshrl.u32 %v796, 7
          %v798 = vsub.s32 %v795, %v797
          %v799 = vrot.slane %v785, %v798
          %v800 = vcombine.high %v711, %v717
          %v802 = vunpack.c.l.s4 1983009808
          %v803 = vunpack.c.0.s8 %v802
          %v804 = vlaneseq
          %v805 = vshrl.u32 %v804, 7
          %v806 = vsub.s32 %v803, %v805
          %v807 = vrot.slane %v711, %v806
          %v809 = vunpack.c.l.s4 1983009808
          %v810 = vunpack.c.0.s8 %v809
          %v811 = vlaneseq
          %v812 = vshrl.u32 %v811, 7
          %v813 = vsub.s32 %v810, %v812
          %v814 = vrot.slane %v800, %v813
          %v815 = vcombine.low %v792, %v807
          %v816 = vcombine.high %v792, %v807
          %v818 = vunpack.c.l.s4 1934713408
          %v819 = vunpack.c.0.s8 %v818
          %v820 = vlaneseq
          %v821 = vshrl.u32 %v820, 7
          %v822 = vsub.s32 %v819, %v821
          %v823 = vrot.slane %v815, %v822
          %v825 = vunpack.c.l.s4 1934713408
          %v826 = vunpack.c.0.s8 %v825
          %v827 = vlaneseq
          %v828 = vshrl.u32 %v827, 7
          %v829 = vsub.s32 %v826, %v828
          %v830 = vrot.slane %v816, %v829
          %v831 = vcombine.low %v799, %v814
          %v832 = vcombine.high %v799, %v814
          %v834 = vunpack.c.l.s4 1934713408
          %v835 = vunpack.c.0.s8 %v834
          %v836 = vlaneseq
          %v837 = vshrl.u32 %v836, 7
          %v838 = vsub.s32 %v835, %v837
          %v839 = vrot.slane %v831, %v838
          %v841 = vunpack.c.l.s4 1934713408
          %v842 = vunpack.c.0.s8 %v841
          %v843 = vlaneseq
          %v844 = vshrl.u32 %v843, 7
          %v845 = vsub.s32 %v842, %v844
          %v846 = vrot.slane %v832, %v845
          %v847 = vcombine.high %v823, 0
          %v848 = vcombine.high %v830, 0
          %v849 = vcombine.high %v839, 0
          %v850 = vcombine.high %v846, 0
          %852 = vrot.lane.b32.xlu0 %v689, 96
          %v853 = vpop.permute.xlu0 %852
          %854 = vrot.lane.b32.xlu0 %v689, 64
          %v855 = vpop.permute.xlu0 %854
          %856 = vrot.lane.b32.xlu0 %v689, 32
          %v857 = vpop.permute.xlu0 %856
          %v860 = vpack.i.b16 %v853, %v689
          %v862 = vshrl.u32 %v689, 16
          %v863 = vshrl.u32 %v853, 16
          %v864 = vpack.i.b16 %v863, %v862
          %v868 = vpack.i.b16 %v857, %v855
          %v870 = vshrl.u32 %v855, 16
          %v871 = vshrl.u32 %v857, 16
          %v872 = vpack.i.b16 %v871, %v870
          %v874 = vcombine.high %v860, %v714
          %v876 = vunpack.c.l.s4 1983009808
          %v877 = vunpack.c.0.s8 %v876
          %v878 = vlaneseq
          %v879 = vshrl.u32 %v878, 7
          %v880 = vsub.s32 %v877, %v879
          %v881 = vrot.slane %v860, %v880
          %v883 = vunpack.c.l.s4 1983009808
          %v884 = vunpack.c.0.s8 %v883
          %v885 = vlaneseq
          %v886 = vshrl.u32 %v885, 7
          %v887 = vsub.s32 %v884, %v886
          %v888 = vrot.slane %v874, %v887
          %v889 = vcombine.high %v868, %v714
          %v891 = vunpack.c.l.s4 1983009808
          %v892 = vunpack.c.0.s8 %v891
          %v893 = vlaneseq
          %v894 = vshrl.u32 %v893, 7
          %v895 = vsub.s32 %v892, %v894
          %v896 = vrot.slane %v868, %v895
          %v898 = vunpack.c.l.s4 1983009808
          %v899 = vunpack.c.0.s8 %v898
          %v900 = vlaneseq
          %v901 = vshrl.u32 %v900, 7
          %v902 = vsub.s32 %v899, %v901
          %v903 = vrot.slane %v889, %v902
          %v904 = vcombine.low %v881, %v896
          %v905 = vcombine.high %v881, %v896
          %v907 = vunpack.c.l.s4 1934713408
          %v908 = vunpack.c.0.s8 %v907
          %v909 = vlaneseq
          %v910 = vshrl.u32 %v909, 7
          %v911 = vsub.s32 %v908, %v910
          %v912 = vrot.slane %v904, %v911
          %v914 = vunpack.c.l.s4 1934713408
          %v915 = vunpack.c.0.s8 %v914
          %v916 = vlaneseq
          %v917 = vshrl.u32 %v916, 7
          %v918 = vsub.s32 %v915, %v917
          %v919 = vrot.slane %v905, %v918
          %v920 = vcombine.low %v888, %v903
          %v921 = vcombine.high %v888, %v903
          %v923 = vunpack.c.l.s4 1934713408
          %v924 = vunpack.c.0.s8 %v923
          %v925 = vlaneseq
          %v926 = vshrl.u32 %v925, 7
          %v927 = vsub.s32 %v924, %v926
          %v928 = vrot.slane %v920, %v927
          %v930 = vunpack.c.l.s4 1934713408
          %v931 = vunpack.c.0.s8 %v930
          %v932 = vlaneseq
          %v933 = vshrl.u32 %v932, 7
          %v934 = vsub.s32 %v931, %v933
          %v935 = vrot.slane %v921, %v934
          %v936 = vcombine.high %v912, 0
          %v937 = vcombine.high %v919, 0
          %v938 = vcombine.high %v928, 0
          %v939 = vcombine.high %v935, 0
          %v940 = vcombine.high %v864, %v717
          %v942 = vunpack.c.l.s4 1983009808
          %v943 = vunpack.c.0.s8 %v942
          %v944 = vlaneseq
          %v945 = vshrl.u32 %v944, 7
          %v946 = vsub.s32 %v943, %v945
          %v947 = vrot.slane %v864, %v946
          %v949 = vunpack.c.l.s4 1983009808
          %v950 = vunpack.c.0.s8 %v949
          %v951 = vlaneseq
          %v952 = vshrl.u32 %v951, 7
          %v953 = vsub.s32 %v950, %v952
          %v954 = vrot.slane %v940, %v953
          %v955 = vcombine.high %v872, %v717
          %v957 = vunpack.c.l.s4 1983009808
          %v958 = vunpack.c.0.s8 %v957
          %v959 = vlaneseq
          %v960 = vshrl.u32 %v959, 7
          %v961 = vsub.s32 %v958, %v960
          %v962 = vrot.slane %v872, %v961
          %v964 = vunpack.c.l.s4 1983009808
          %v965 = vunpack.c.0.s8 %v964
          %v966 = vlaneseq
          %v967 = vshrl.u32 %v966, 7
          %v968 = vsub.s32 %v965, %v967
          %v969 = vrot.slane %v955, %v968
          %v970 = vcombine.low %v947, %v962
          %v971 = vcombine.high %v947, %v962
          %v973 = vunpack.c.l.s4 1934713408
          %v974 = vunpack.c.0.s8 %v973
          %v975 = vlaneseq
          %v976 = vshrl.u32 %v975, 7
          %v977 = vsub.s32 %v974, %v976
          %v978 = vrot.slane %v970, %v977
          %v980 = vunpack.c.l.s4 1934713408
          %v981 = vunpack.c.0.s8 %v980
          %v982 = vlaneseq
          %v983 = vshrl.u32 %v982, 7
          %v984 = vsub.s32 %v981, %v983
          %v985 = vrot.slane %v971, %v984
          %v986 = vcombine.low %v954, %v969
          %v987 = vcombine.high %v954, %v969
          %v989 = vunpack.c.l.s4 1934713408
          %v990 = vunpack.c.0.s8 %v989
          %v991 = vlaneseq
          %v992 = vshrl.u32 %v991, 7
          %v993 = vsub.s32 %v990, %v992
          %v994 = vrot.slane %v986, %v993
          %v996 = vunpack.c.l.s4 1934713408
          %v997 = vunpack.c.0.s8 %v996
          %v998 = vlaneseq
          %v999 = vshrl.u32 %v998, 7
          %v1000 = vsub.s32 %v997, %v999
          %v1001 = vrot.slane %v987, %v1000
          %v1002 = vcombine.high %v978, 0
          %v1003 = vcombine.high %v985, 0
          %v1004 = vcombine.high %v994, 0
          %v1005 = vcombine.high %v1001, 0
          %1006 = vxpose.xlu0.c.b16.start [1/8] %v757, 128
          %1007 = vxpose.xlu0.c.b16.cont [2/8] 0, 128
          %1008 = vxpose.xlu0.c.b16.cont [3/8] 0, 128
          %1009 = vxpose.xlu0.c.b16.cont [4/8] 0, 128
          %1010 = vxpose.xlu0.c.b16.cont [5/8] 0, 128
          %1011 = vxpose.xlu0.c.b16.cont [6/8] 0, 128
          %1012 = vxpose.xlu0.c.b16.cont [7/8] 0, 128
          %1013 = vxpose.xlu0.c.b16.end [8/8] 0, 128
          %v1014 = vpop.trf.xlu0
          %v1015 = vpop.trf.xlu0
          %v1016 = vpop.trf.xlu0
          %v1017 = vpop.trf.xlu0
          %v1018 = vpop.trf.xlu0
          %v1019 = vpop.trf.xlu0
          %v1020 = vpop.trf.xlu0
          %v1021 = vpop.trf.xlu0
          %1022 = vxpose.xlu0.c.b16.start [1/8] %v823, 128
          %1023 = vxpose.xlu0.c.b16.cont [2/8] 0, 128
          %1024 = vxpose.xlu0.c.b16.cont [3/8] 0, 128
          %1025 = vxpose.xlu0.c.b16.cont [4/8] 0, 128
          %1026 = vxpose.xlu0.c.b16.cont [5/8] 0, 128
          %1027 = vxpose.xlu0.c.b16.cont [6/8] 0, 128
          %1028 = vxpose.xlu0.c.b16.cont [7/8] 0, 128
          %1029 = vxpose.xlu0.c.b16.end [8/8] 0, 128
          %v1030 = vpop.trf.xlu0
          %v1031 = vpop.trf.xlu0
          %v1032 = vpop.trf.xlu0
          %v1033 = vpop.trf.xlu0
          %v1034 = vpop.trf.xlu0
          %v1035 = vpop.trf.xlu0
          %v1036 = vpop.trf.xlu0
          %v1037 = vpop.trf.xlu0
          %1038 = vxpose.xlu0.c.b16.start [1/8] %v781, 128
          %1039 = vxpose.xlu0.c.b16.cont [2/8] 0, 128
          %1040 = vxpose.xlu0.c.b16.cont [3/8] 0, 128
          %1041 = vxpose.xlu0.c.b16.cont [4/8] 0, 128
          %1042 = vxpose.xlu0.c.b16.cont [5/8] 0, 128
          %1043 = vxpose.xlu0.c.b16.cont [6/8] 0, 128
          %1044 = vxpose.xlu0.c.b16.cont [7/8] 0, 128
          %1045 = vxpose.xlu0.c.b16.end [8/8] 0, 128
          %v1046 = vpop.trf.xlu0
          %v1047 = vpop.trf.xlu0
          %v1048 = vpop.trf.xlu0
          %v1049 = vpop.trf.xlu0
          %v1050 = vpop.trf.xlu0
          %v1051 = vpop.trf.xlu0
          %v1052 = vpop.trf.xlu0
          %v1053 = vpop.trf.xlu0
          %1054 = vxpose.xlu0.c.b16.start [1/8] %v847, 128
          %1055 = vxpose.xlu0.c.b16.cont [2/8] 0, 128
          %1056 = vxpose.xlu0.c.b16.cont [3/8] 0, 128
          %1057 = vxpose.xlu0.c.b16.cont [4/8] 0, 128
          %1058 = vxpose.xlu0.c.b16.cont [5/8] 0, 128
          %1059 = vxpose.xlu0.c.b16.cont [6/8] 0, 128
          %1060 = vxpose.xlu0.c.b16.cont [7/8] 0, 128
          %1061 = vxpose.xlu0.c.b16.end [8/8] 0, 128
          %v1062 = vpop.trf.xlu0
          %v1063 = vpop.trf.xlu0
          %v1064 = vpop.trf.xlu0
          %v1065 = vpop.trf.xlu0
          %v1066 = vpop.trf.xlu0
          %v1067 = vpop.trf.xlu0
          %v1068 = vpop.trf.xlu0
          %v1069 = vpop.trf.xlu0
          %1070 = vxpose.xlu0.c.b16.start [1/8] %v764, 128
          %1071 = vxpose.xlu0.c.b16.cont [2/8] 0, 128
          %1072 = vxpose.xlu0.c.b16.cont [3/8] 0, 128
          %1073 = vxpose.xlu0.c.b16.cont [4/8] 0, 128
          %1074 = vxpose.xlu0.c.b16.cont [5/8] 0, 128
          %1075 = vxpose.xlu0.c.b16.cont [6/8] 0, 128
          %1076 = vxpose.xlu0.c.b16.cont [7/8] 0, 128
          %1077 = vxpose.xlu0.c.b16.end [8/8] 0, 128
          %v1078 = vpop.trf.xlu0
          %v1079 = vpop.trf.xlu0
          %v1080 = vpop.trf.xlu0
          %v1081 = vpop.trf.xlu0
          %v1082 = vpop.trf.xlu0
          %v1083 = vpop.trf.xlu0
          %v1084 = vpop.trf.xlu0
          %v1085 = vpop.trf.xlu0
          %1086 = vxpose.xlu0.c.b16.start [1/8] %v830, 128
          %1087 = vxpose.xlu0.c.b16.cont [2/8] 0, 128
          %1088 = vxpose.xlu0.c.b16.cont [3/8] 0, 128
          %1089 = vxpose.xlu0.c.b16.cont [4/8] 0, 128
          %1090 = vxpose.xlu0.c.b16.cont [5/8] 0, 128
          %1091 = vxpose.xlu0.c.b16.cont [6/8] 0, 128
          %1092 = vxpose.xlu0.c.b16.cont [7/8] 0, 128
          %1093 = vxpose.xlu0.c.b16.end [8/8] 0, 128
          %v1094 = vpop.trf.xlu0
          %v1095 = vpop.trf.xlu0
          %v1096 = vpop.trf.xlu0
          %v1097 = vpop.trf.xlu0
          %v1098 = vpop.trf.xlu0
          %v1099 = vpop.trf.xlu0
          %v1100 = vpop.trf.xlu0
          %v1101 = vpop.trf.xlu0
          %1102 = vxpose.xlu0.c.b16.start [1/8] %v782, 128
          %1103 = vxpose.xlu0.c.b16.cont [2/8] 0, 128
          %1104 = vxpose.xlu0.c.b16.cont [3/8] 0, 128
          %1105 = vxpose.xlu0.c.b16.cont [4/8] 0, 128
          %1106 = vxpose.xlu0.c.b16.cont [5/8] 0, 128
          %1107 = vxpose.xlu0.c.b16.cont [6/8] 0, 128
          %1108 = vxpose.xlu0.c.b16.cont [7/8] 0, 128
          %1109 = vxpose.xlu0.c.b16.end [8/8] 0, 128
          %v1110 = vpop.trf.xlu0
          %v1111 = vpop.trf.xlu0
          %v1112 = vpop.trf.xlu0
          %v1113 = vpop.trf.xlu0
          %v1114 = vpop.trf.xlu0
          %v1115 = vpop.trf.xlu0
          %v1116 = vpop.trf.xlu0
          %v1117 = vpop.trf.xlu0
          %1118 = vxpose.xlu0.c.b16.start [1/8] %v848, 128
          %1119 = vxpose.xlu0.c.b16.cont [2/8] 0, 128
          %1120 = vxpose.xlu0.c.b16.cont [3/8] 0, 128
          %1121 = vxpose.xlu0.c.b16.cont [4/8] 0, 128
          %1122 = vxpose.xlu0.c.b16.cont [5/8] 0, 128
          %1123 = vxpose.xlu0.c.b16.cont [6/8] 0, 128
          %1124 = vxpose.xlu0.c.b16.cont [7/8] 0, 128
          %1125 = vxpose.xlu0.c.b16.end [8/8] 0, 128
          %v1126 = vpop.trf.xlu0
          %v1127 = vpop.trf.xlu0
          %v1128 = vpop.trf.xlu0
          %v1129 = vpop.trf.xlu0
          %v1130 = vpop.trf.xlu0
          %v1131 = vpop.trf.xlu0
          %v1132 = vpop.trf.xlu0
          %v1133 = vpop.trf.xlu0
          %1134 = vxpose.xlu0.c.b16.start [1/8] %v773, 128
          %1135 = vxpose.xlu0.c.b16.cont [2/8] 0, 128
          %1136 = vxpose.xlu0.c.b16.cont [3/8] 0, 128
          %1137 = vxpose.xlu0.c.b16.cont [4/8] 0, 128
          %1138 = vxpose.xlu0.c.b16.cont [5/8] 0, 128
          %1139 = vxpose.xlu0.c.b16.cont [6/8] 0, 128
          %1140 = vxpose.xlu0.c.b16.cont [7/8] 0, 128
          %1141 = vxpose.xlu0.c.b16.end [8/8] 0, 128
          %v1142 = vpop.trf.xlu0
          %v1143 = vpop.trf.xlu0
          %v1144 = vpop.trf.xlu0
          %v1145 = vpop.trf.xlu0
          %v1146 = vpop.trf.xlu0
          %v1147 = vpop.trf.xlu0
          %v1148 = vpop.trf.xlu0
          %v1149 = vpop.trf.xlu0
          %1150 = vxpose.xlu0.c.b16.start [1/8] %v839, 128
          %1151 = vxpose.xlu0.c.b16.cont [2/8] 0, 128
          %1152 = vxpose.xlu0.c.b16.cont [3/8] 0, 128
          %1153 = vxpose.xlu0.c.b16.cont [4/8] 0, 128
          %1154 = vxpose.xlu0.c.b16.cont [5/8] 0, 128
          %1155 = vxpose.xlu0.c.b16.cont [6/8] 0, 128
          %1156 = vxpose.xlu0.c.b16.cont [7/8] 0, 128
          %1157 = vxpose.xlu0.c.b16.end [8/8] 0, 128
          %v1158 = vpop.trf.xlu0
          %v1159 = vpop.trf.xlu0
          %v1160 = vpop.trf.xlu0
          %v1161 = vpop.trf.xlu0
          %v1162 = vpop.trf.xlu0
          %v1163 = vpop.trf.xlu0
          %v1164 = vpop.trf.xlu0
          %v1165 = vpop.trf.xlu0
          %1166 = vxpose.xlu0.c.b16.start [1/8] %v783, 128
          %1167 = vxpose.xlu0.c.b16.cont [2/8] 0, 128
          %1168 = vxpose.xlu0.c.b16.cont [3/8] 0, 128
          %1169 = vxpose.xlu0.c.b16.cont [4/8] 0, 128
          %1170 = vxpose.xlu0.c.b16.cont [5/8] 0, 128
          %1171 = vxpose.xlu0.c.b16.cont [6/8] 0, 128
          %1172 = vxpose.xlu0.c.b16.cont [7/8] 0, 128
          %1173 = vxpose.xlu0.c.b16.end [8/8] 0, 128
          %v1174 = vpop.trf.xlu0
          %v1175 = vpop.trf.xlu0
          %v1176 = vpop.trf.xlu0
          %v1177 = vpop.trf.xlu0
          %v1178 = vpop.trf.xlu0
          %v1179 = vpop.trf.xlu0
          %v1180 = vpop.trf.xlu0
          %v1181 = vpop.trf.xlu0
          %1182 = vxpose.xlu0.c.b16.start [1/8] %v849, 128
          %1183 = vxpose.xlu0.c.b16.cont [2/8] 0, 128
          %1184 = vxpose.xlu0.c.b16.cont [3/8] 0, 128
          %1185 = vxpose.xlu0.c.b16.cont [4/8] 0, 128
          %1186 = vxpose.xlu0.c.b16.cont [5/8] 0, 128
          %1187 = vxpose.xlu0.c.b16.cont [6/8] 0, 128
          %1188 = vxpose.xlu0.c.b16.cont [7/8] 0, 128
          %1189 = vxpose.xlu0.c.b16.end [8/8] 0, 128
          %v1190 = vpop.trf.xlu0
          %v1191 = vpop.trf.xlu0
          %v1192 = vpop.trf.xlu0
          %v1193 = vpop.trf.xlu0
          %v1194 = vpop.trf.xlu0
          %v1195 = vpop.trf.xlu0
          %v1196 = vpop.trf.xlu0
          %v1197 = vpop.trf.xlu0
          %1198 = vxpose.xlu0.c.b16.start [1/8] %v780, 128
          %1199 = vxpose.xlu0.c.b16.cont [2/8] 0, 128
          %1200 = vxpose.xlu0.c.b16.cont [3/8] 0, 128
          %1201 = vxpose.xlu0.c.b16.cont [4/8] 0, 128
          %1202 = vxpose.xlu0.c.b16.cont [5/8] 0, 128
          %1203 = vxpose.xlu0.c.b16.cont [6/8] 0, 128
          %1204 = vxpose.xlu0.c.b16.cont [7/8] 0, 128
          %1205 = vxpose.xlu0.c.b16.end [8/8] 0, 128
          %v1206 = vpop.trf.xlu0
          %v1207 = vpop.trf.xlu0
          %v1208 = vpop.trf.xlu0
          %v1209 = vpop.trf.xlu0
          %v1210 = vpop.trf.xlu0
          %v1211 = vpop.trf.xlu0
          %v1212 = vpop.trf.xlu0
          %v1213 = vpop.trf.xlu0
          %1214 = vxpose.xlu0.c.b16.start [1/8] %v846, 128
          %1215 = vxpose.xlu0.c.b16.cont [2/8] 0, 128
          %1216 = vxpose.xlu0.c.b16.cont [3/8] 0, 128
          %1217 = vxpose.xlu0.c.b16.cont [4/8] 0, 128
          %1218 = vxpose.xlu0.c.b16.cont [5/8] 0, 128
          %1219 = vxpose.xlu0.c.b16.cont [6/8] 0, 128
          %1220 = vxpose.xlu0.c.b16.cont [7/8] 0, 128
          %1221 = vxpose.xlu0.c.b16.end [8/8] 0, 128
          %v1222 = vpop.trf.xlu0
          %v1223 = vpop.trf.xlu0
          %v1224 = vpop.trf.xlu0
          %v1225 = vpop.trf.xlu0
          %v1226 = vpop.trf.xlu0
          %v1227 = vpop.trf.xlu0
          %v1228 = vpop.trf.xlu0
          %v1229 = vpop.trf.xlu0
          %1230 = vxpose.xlu0.c.b16.start [1/8] %v784, 128
          %1231 = vxpose.xlu0.c.b16.cont [2/8] 0, 128
          %1232 = vxpose.xlu0.c.b16.cont [3/8] 0, 128
          %1233 = vxpose.xlu0.c.b16.cont [4/8] 0, 128
          %1234 = vxpose.xlu0.c.b16.cont [5/8] 0, 128
          %1235 = vxpose.xlu0.c.b16.cont [6/8] 0, 128
          %1236 = vxpose.xlu0.c.b16.cont [7/8] 0, 128
          %1237 = vxpose.xlu0.c.b16.end [8/8] 0, 128
          %v1238 = vpop.trf.xlu0
          %v1239 = vpop.trf.xlu0
          %v1240 = vpop.trf.xlu0
          %v1241 = vpop.trf.xlu0
          %v1242 = vpop.trf.xlu0
          %v1243 = vpop.trf.xlu0
          %v1244 = vpop.trf.xlu0
          %v1245 = vpop.trf.xlu0
          %1246 = vxpose.xlu0.c.b16.start [1/8] %v850, 128
          %1247 = vxpose.xlu0.c.b16.cont [2/8] 0, 128
          %1248 = vxpose.xlu0.c.b16.cont [3/8] 0, 128
          %1249 = vxpose.xlu0.c.b16.cont [4/8] 0, 128
          %1250 = vxpose.xlu0.c.b16.cont [5/8] 0, 128
          %1251 = vxpose.xlu0.c.b16.cont [6/8] 0, 128
          %1252 = vxpose.xlu0.c.b16.cont [7/8] 0, 128
          %1253 = vxpose.xlu0.c.b16.end [8/8] 0, 128
          %v1254 = vpop.trf.xlu0
          %v1255 = vpop.trf.xlu0
          %v1256 = vpop.trf.xlu0
          %v1257 = vpop.trf.xlu0
          %v1258 = vpop.trf.xlu0
          %v1259 = vpop.trf.xlu0
          %v1260 = vpop.trf.xlu0
          %v1261 = vpop.trf.xlu0
          %v1262 = vcombine.low %v1014, %v1078
          %v1263 = vcombine.high %v1014, %v1078
          %v1265 = vunpack.c.l.s4 1983009808
          %v1266 = vunpack.c.0.s8 %v1265
          %v1267 = vlaneseq
          %v1268 = vshrl.u32 %v1267, 7
          %v1269 = vsub.s32 %v1266, %v1268
          %v1270 = vrot.slane %v1262, %v1269
          %v1272 = vunpack.c.l.s4 1983009808
          %v1273 = vunpack.c.0.s8 %v1272
          %v1274 = vlaneseq
          %v1275 = vshrl.u32 %v1274, 7
          %v1276 = vsub.s32 %v1273, %v1275
          %v1277 = vrot.slane %v1263, %v1276
          %v1278 = vcombine.low %v1046, %v1110
          %v1279 = vcombine.high %v1046, %v1110
          %v1281 = vunpack.c.l.s4 1983009808
          %v1282 = vunpack.c.0.s8 %v1281
          %v1283 = vlaneseq
          %v1284 = vshrl.u32 %v1283, 7
          %v1285 = vsub.s32 %v1282, %v1284
          %v1286 = vrot.slane %v1278, %v1285
          %v1288 = vunpack.c.l.s4 1983009808
          %v1289 = vunpack.c.0.s8 %v1288
          %v1290 = vlaneseq
          %v1291 = vshrl.u32 %v1290, 7
          %v1292 = vsub.s32 %v1289, %v1291
          %v1293 = vrot.slane %v1279, %v1292
          %v1294 = vcombine.low %v1142, %v1206
          %v1295 = vcombine.high %v1142, %v1206
          %v1297 = vunpack.c.l.s4 1983009808
          %v1298 = vunpack.c.0.s8 %v1297
          %v1299 = vlaneseq
          %v1300 = vshrl.u32 %v1299, 7
          %v1301 = vsub.s32 %v1298, %v1300
          %v1302 = vrot.slane %v1294, %v1301
          %v1304 = vunpack.c.l.s4 1983009808
          %v1305 = vunpack.c.0.s8 %v1304
          %v1306 = vlaneseq
          %v1307 = vshrl.u32 %v1306, 7
          %v1308 = vsub.s32 %v1305, %v1307
          %v1309 = vrot.slane %v1295, %v1308
          %v1310 = vcombine.low %v1174, %v1238
          %v1311 = vcombine.high %v1174, %v1238
          %v1313 = vunpack.c.l.s4 1983009808
          %v1314 = vunpack.c.0.s8 %v1313
          %v1315 = vlaneseq
          %v1316 = vshrl.u32 %v1315, 7
          %v1317 = vsub.s32 %v1314, %v1316
          %v1318 = vrot.slane %v1310, %v1317
          %v1320 = vunpack.c.l.s4 1983009808
          %v1321 = vunpack.c.0.s8 %v1320
          %v1322 = vlaneseq
          %v1323 = vshrl.u32 %v1322, 7
          %v1324 = vsub.s32 %v1321, %v1323
          %v1325 = vrot.slane %v1311, %v1324
          %v1326 = vcombine.low %v1270, %v1286
          %v1327 = vcombine.high %v1270, %v1286
          %v1329 = vunpack.c.l.s4 1934713408
          %v1330 = vunpack.c.0.s8 %v1329
          %v1331 = vlaneseq
          %v1332 = vshrl.u32 %v1331, 7
          %v1333 = vsub.s32 %v1330, %v1332
          %v1334 = vrot.slane %v1326, %v1333
          %v1336 = vunpack.c.l.s4 1934713408
          %v1337 = vunpack.c.0.s8 %v1336
          %v1338 = vlaneseq
          %v1339 = vshrl.u32 %v1338, 7
          %v1340 = vsub.s32 %v1337, %v1339
          %v1341 = vrot.slane %v1327, %v1340
          %v1342 = vcombine.low %v1277, %v1293
          %v1343 = vcombine.high %v1277, %v1293
          %v1345 = vunpack.c.l.s4 1934713408
          %v1346 = vunpack.c.0.s8 %v1345
          %v1347 = vlaneseq
          %v1348 = vshrl.u32 %v1347, 7
          %v1349 = vsub.s32 %v1346, %v1348
          %v1350 = vrot.slane %v1342, %v1349
          %v1352 = vunpack.c.l.s4 1934713408
          %v1353 = vunpack.c.0.s8 %v1352
          %v1354 = vlaneseq
          %v1355 = vshrl.u32 %v1354, 7
          %v1356 = vsub.s32 %v1353, %v1355
          %v1357 = vrot.slane %v1343, %v1356
          %v1358 = vcombine.low %v1302, %v1318
          %v1359 = vcombine.high %v1302, %v1318
          %v1361 = vunpack.c.l.s4 1934713408
          %v1362 = vunpack.c.0.s8 %v1361
          %v1363 = vlaneseq
          %v1364 = vshrl.u32 %v1363, 7
          %v1365 = vsub.s32 %v1362, %v1364
          %v1366 = vrot.slane %v1358, %v1365
          %v1368 = vunpack.c.l.s4 1934713408
          %v1369 = vunpack.c.0.s8 %v1368
          %v1370 = vlaneseq
          %v1371 = vshrl.u32 %v1370, 7
          %v1372 = vsub.s32 %v1369, %v1371
          %v1373 = vrot.slane %v1359, %v1372
          %v1374 = vcombine.low %v1309, %v1325
          %v1375 = vcombine.high %v1309, %v1325
          %v1377 = vunpack.c.l.s4 1934713408
          %v1378 = vunpack.c.0.s8 %v1377
          %v1379 = vlaneseq
          %v1380 = vshrl.u32 %v1379, 7
          %v1381 = vsub.s32 %v1378, %v1380
          %v1382 = vrot.slane %v1374, %v1381
          %v1384 = vunpack.c.l.s4 1934713408
          %v1385 = vunpack.c.0.s8 %v1384
          %v1386 = vlaneseq
          %v1387 = vshrl.u32 %v1386, 7
          %v1388 = vsub.s32 %v1385, %v1387
          %v1389 = vrot.slane %v1375, %v1388
          %v1390 = vcombine.low %v1334, %v1366
          %v1391 = vcombine.high %v1334, %v1366
          %v1392 = vcombine.low %v1341, %v1373
          %v1393 = vcombine.high %v1341, %v1373
          %v1394 = vcombine.low %v1350, %v1382
          %v1395 = vcombine.high %v1350, %v1382
          %v1396 = vcombine.low %v1357, %v1389
          %v1397 = vcombine.high %v1357, %v1389
          %v1398 = vcombine.low %v1030, %v1094
          %v1399 = vcombine.high %v1030, %v1094
          %v1401 = vunpack.c.l.s4 1983009808
          %v1402 = vunpack.c.0.s8 %v1401
          %v1403 = vlaneseq
          %v1404 = vshrl.u32 %v1403, 7
          %v1405 = vsub.s32 %v1402, %v1404
          %v1406 = vrot.slane %v1398, %v1405
          %v1408 = vunpack.c.l.s4 1983009808
          %v1409 = vunpack.c.0.s8 %v1408
          %v1410 = vlaneseq
          %v1411 = vshrl.u32 %v1410, 7
          %v1412 = vsub.s32 %v1409, %v1411
          %v1413 = vrot.slane %v1399, %v1412
          %v1414 = vcombine.low %v1062, %v1126
          %v1415 = vcombine.high %v1062, %v1126
          %v1417 = vunpack.c.l.s4 1983009808
          %v1418 = vunpack.c.0.s8 %v1417
          %v1419 = vlaneseq
          %v1420 = vshrl.u32 %v1419, 7
          %v1421 = vsub.s32 %v1418, %v1420
          %v1422 = vrot.slane %v1414, %v1421
          %v1424 = vunpack.c.l.s4 1983009808
          %v1425 = vunpack.c.0.s8 %v1424
          %v1426 = vlaneseq
          %v1427 = vshrl.u32 %v1426, 7
          %v1428 = vsub.s32 %v1425, %v1427
          %v1429 = vrot.slane %v1415, %v1428
          %v1430 = vcombine.low %v1158, %v1222
          %v1431 = vcombine.high %v1158, %v1222
          %v1433 = vunpack.c.l.s4 1983009808
          %v1434 = vunpack.c.0.s8 %v1433
          %v1435 = vlaneseq
          %v1436 = vshrl.u32 %v1435, 7
          %v1437 = vsub.s32 %v1434, %v1436
          %v1438 = vrot.slane %v1430, %v1437
          %v1440 = vunpack.c.l.s4 1983009808
          %v1441 = vunpack.c.0.s8 %v1440
          %v1442 = vlaneseq
          %v1443 = vshrl.u32 %v1442, 7
          %v1444 = vsub.s32 %v1441, %v1443
          %v1445 = vrot.slane %v1431, %v1444
          %v1446 = vcombine.low %v1190, %v1254
          %v1447 = vcombine.high %v1190, %v1254
          %v1449 = vunpack.c.l.s4 1983009808
          %v1450 = vunpack.c.0.s8 %v1449
          %v1451 = vlaneseq
          %v1452 = vshrl.u32 %v1451, 7
          %v1453 = vsub.s32 %v1450, %v1452
          %v1454 = vrot.slane %v1446, %v1453
          %v1456 = vunpack.c.l.s4 1983009808
          %v1457 = vunpack.c.0.s8 %v1456
          %v1458 = vlaneseq
          %v1459 = vshrl.u32 %v1458, 7
          %v1460 = vsub.s32 %v1457, %v1459
          %v1461 = vrot.slane %v1447, %v1460
          %v1462 = vcombine.low %v1406, %v1422
          %v1463 = vcombine.high %v1406, %v1422
          %v1465 = vunpack.c.l.s4 1934713408
          %v1466 = vunpack.c.0.s8 %v1465
          %v1467 = vlaneseq
          %v1468 = vshrl.u32 %v1467, 7
          %v1469 = vsub.s32 %v1466, %v1468
          %v1470 = vrot.slane %v1462, %v1469
          %v1472 = vunpack.c.l.s4 1934713408
          %v1473 = vunpack.c.0.s8 %v1472
          %v1474 = vlaneseq
          %v1475 = vshrl.u32 %v1474, 7
          %v1476 = vsub.s32 %v1473, %v1475
          %v1477 = vrot.slane %v1463, %v1476
          %v1478 = vcombine.low %v1413, %v1429
          %v1479 = vcombine.high %v1413, %v1429
          %v1481 = vunpack.c.l.s4 1934713408
          %v1482 = vunpack.c.0.s8 %v1481
          %v1483 = vlaneseq
          %v1484 = vshrl.u32 %v1483, 7
          %v1485 = vsub.s32 %v1482, %v1484
          %v1486 = vrot.slane %v1478, %v1485
          %v1488 = vunpack.c.l.s4 1934713408
          %v1489 = vunpack.c.0.s8 %v1488
          %v1490 = vlaneseq
          %v1491 = vshrl.u32 %v1490, 7
          %v1492 = vsub.s32 %v1489, %v1491
          %v1493 = vrot.slane %v1479, %v1492
          %v1494 = vcombine.low %v1438, %v1454
          %v1495 = vcombine.high %v1438, %v1454
          %v1497 = vunpack.c.l.s4 1934713408
          %v1498 = vunpack.c.0.s8 %v1497
          %v1499 = vlaneseq
          %v1500 = vshrl.u32 %v1499, 7
          %v1501 = vsub.s32 %v1498, %v1500
          %v1502 = vrot.slane %v1494, %v1501
          %v1504 = vunpack.c.l.s4 1934713408
          %v1505 = vunpack.c.0.s8 %v1504
          %v1506 = vlaneseq
          %v1507 = vshrl.u32 %v1506, 7
          %v1508 = vsub.s32 %v1505, %v1507
          %v1509 = vrot.slane %v1495, %v1508
          %v1510 = vcombine.low %v1445, %v1461
          %v1511 = vcombine.high %v1445, %v1461
          %v1513 = vunpack.c.l.s4 1934713408
          %v1514 = vunpack.c.0.s8 %v1513
          %v1515 = vlaneseq
          %v1516 = vshrl.u32 %v1515, 7
          %v1517 = vsub.s32 %v1514, %v1516
          %v1518 = vrot.slane %v1510, %v1517
          %v1520 = vunpack.c.l.s4 1934713408
          %v1521 = vunpack.c.0.s8 %v1520
          %v1522 = vlaneseq
          %v1523 = vshrl.u32 %v1522, 7
          %v1524 = vsub.s32 %v1521, %v1523
          %v1525 = vrot.slane %v1511, %v1524
          %v1526 = vcombine.low %v1470, %v1502
          %v1527 = vcombine.high %v1470, %v1502
          %v1528 = vcombine.low %v1477, %v1509
          %v1529 = vcombine.high %v1477, %v1509
          %v1530 = vcombine.low %v1486, %v1518
          %v1531 = vcombine.high %v1486, %v1518
          %v1532 = vcombine.low %v1493, %v1525
          %v1533 = vcombine.high %v1493, %v1525
          %v1534 = vcombine.low %v1015, %v1079
          %v1535 = vcombine.high %v1015, %v1079
          %v1537 = vunpack.c.l.s4 1983009808
          %v1538 = vunpack.c.0.s8 %v1537
          %v1539 = vlaneseq
          %v1540 = vshrl.u32 %v1539, 7
          %v1541 = vsub.s32 %v1538, %v1540
          %v1542 = vrot.slane %v1534, %v1541
          %v1544 = vunpack.c.l.s4 1983009808
          %v1545 = vunpack.c.0.s8 %v1544
          %v1546 = vlaneseq
          %v1547 = vshrl.u32 %v1546, 7
          %v1548 = vsub.s32 %v1545, %v1547
          %v1549 = vrot.slane %v1535, %v1548
          %v1550 = vcombine.low %v1047, %v1111
          %v1551 = vcombine.high %v1047, %v1111
          %v1553 = vunpack.c.l.s4 1983009808
          %v1554 = vunpack.c.0.s8 %v1553
          %v1555 = vlaneseq
          %v1556 = vshrl.u32 %v1555, 7
          %v1557 = vsub.s32 %v1554, %v1556
          %v1558 = vrot.slane %v1550, %v1557
          %v1560 = vunpack.c.l.s4 1983009808
          %v1561 = vunpack.c.0.s8 %v1560
          %v1562 = vlaneseq
          %v1563 = vshrl.u32 %v1562, 7
          %v1564 = vsub.s32 %v1561, %v1563
          %v1565 = vrot.slane %v1551, %v1564
          %v1566 = vcombine.low %v1143, %v1207
          %v1567 = vcombine.high %v1143, %v1207
          %v1569 = vunpack.c.l.s4 1983009808
          %v1570 = vunpack.c.0.s8 %v1569
          %v1571 = vlaneseq
          %v1572 = vshrl.u32 %v1571, 7
          %v1573 = vsub.s32 %v1570, %v1572
          %v1574 = vrot.slane %v1566, %v1573
          %v1576 = vunpack.c.l.s4 1983009808
          %v1577 = vunpack.c.0.s8 %v1576
          %v1578 = vlaneseq
          %v1579 = vshrl.u32 %v1578, 7
          %v1580 = vsub.s32 %v1577, %v1579
          %v1581 = vrot.slane %v1567, %v1580
          %v1582 = vcombine.low %v1175, %v1239
          %v1583 = vcombine.high %v1175, %v1239
          %v1585 = vunpack.c.l.s4 1983009808
          %v1586 = vunpack.c.0.s8 %v1585
          %v1587 = vlaneseq
          %v1588 = vshrl.u32 %v1587, 7
          %v1589 = vsub.s32 %v1586, %v1588
          %v1590 = vrot.slane %v1582, %v1589
          %v1592 = vunpack.c.l.s4 1983009808
          %v1593 = vunpack.c.0.s8 %v1592
          %v1594 = vlaneseq
          %v1595 = vshrl.u32 %v1594, 7
          %v1596 = vsub.s32 %v1593, %v1595
          %v1597 = vrot.slane %v1583, %v1596
          %v1598 = vcombine.low %v1542, %v1558
          %v1599 = vcombine.high %v1542, %v1558
          %v1601 = vunpack.c.l.s4 1934713408
          %v1602 = vunpack.c.0.s8 %v1601
          %v1603 = vlaneseq
          %v1604 = vshrl.u32 %v1603, 7
          %v1605 = vsub.s32 %v1602, %v1604
          %v1606 = vrot.slane %v1598, %v1605
          %v1608 = vunpack.c.l.s4 1934713408
          %v1609 = vunpack.c.0.s8 %v1608
          %v1610 = vlaneseq
          %v1611 = vshrl.u32 %v1610, 7
          %v1612 = vsub.s32 %v1609, %v1611
          %v1613 = vrot.slane %v1599, %v1612
          %v1614 = vcombine.low %v1549, %v1565
          %v1615 = vcombine.high %v1549, %v1565
          %v1617 = vunpack.c.l.s4 1934713408
          %v1618 = vunpack.c.0.s8 %v1617
          %v1619 = vlaneseq
          %v1620 = vshrl.u32 %v1619, 7
          %v1621 = vsub.s32 %v1618, %v1620
          %v1622 = vrot.slane %v1614, %v1621
          %v1624 = vunpack.c.l.s4 1934713408
          %v1625 = vunpack.c.0.s8 %v1624
          %v1626 = vlaneseq
          %v1627 = vshrl.u32 %v1626, 7
          %v1628 = vsub.s32 %v1625, %v1627
          %v1629 = vrot.slane %v1615, %v1628
          %v1630 = vcombine.low %v1574, %v1590
          %v1631 = vcombine.high %v1574, %v1590
          %v1633 = vunpack.c.l.s4 1934713408
          %v1634 = vunpack.c.0.s8 %v1633
          %v1635 = vlaneseq
          %v1636 = vshrl.u32 %v1635, 7
          %v1637 = vsub.s32 %v1634, %v1636
          %v1638 = vrot.slane %v1630, %v1637
          %v1640 = vunpack.c.l.s4 1934713408
          %v1641 = vunpack.c.0.s8 %v1640
          %v1642 = vlaneseq
          %v1643 = vshrl.u32 %v1642, 7
          %v1644 = vsub.s32 %v1641, %v1643
          %v1645 = vrot.slane %v1631, %v1644
          %v1646 = vcombine.low %v1581, %v1597
          %v1647 = vcombine.high %v1581, %v1597
          %v1649 = vunpack.c.l.s4 1934713408
          %v1650 = vunpack.c.0.s8 %v1649
          %v1651 = vlaneseq
          %v1652 = vshrl.u32 %v1651, 7
          %v1653 = vsub.s32 %v1650, %v1652
          %v1654 = vrot.slane %v1646, %v1653
          %v1656 = vunpack.c.l.s4 1934713408
          %v1657 = vunpack.c.0.s8 %v1656
          %v1658 = vlaneseq
          %v1659 = vshrl.u32 %v1658, 7
          %v1660 = vsub.s32 %v1657, %v1659
          %v1661 = vrot.slane %v1647, %v1660
          %v1662 = vcombine.low %v1606, %v1638
          %v1663 = vcombine.high %v1606, %v1638
          %v1664 = vcombine.low %v1613, %v1645
          %v1665 = vcombine.high %v1613, %v1645
          %v1666 = vcombine.low %v1622, %v1654
          %v1667 = vcombine.high %v1622, %v1654
          %v1668 = vcombine.low %v1629, %v1661
          %v1669 = vcombine.high %v1629, %v1661
          %v1670 = vcombine.low %v1031, %v1095
          %v1671 = vcombine.high %v1031, %v1095
          %v1673 = vunpack.c.l.s4 1983009808
          %v1674 = vunpack.c.0.s8 %v1673
          %v1675 = vlaneseq
          %v1676 = vshrl.u32 %v1675, 7
          %v1677 = vsub.s32 %v1674, %v1676
          %v1678 = vrot.slane %v1670, %v1677
          %v1680 = vunpack.c.l.s4 1983009808
          %v1681 = vunpack.c.0.s8 %v1680
          %v1682 = vlaneseq
          %v1683 = vshrl.u32 %v1682, 7
          %v1684 = vsub.s32 %v1681, %v1683
          %v1685 = vrot.slane %v1671, %v1684
          %v1686 = vcombine.low %v1063, %v1127
          %v1687 = vcombine.high %v1063, %v1127
          %v1689 = vunpack.c.l.s4 1983009808
          %v1690 = vunpack.c.0.s8 %v1689
          %v1691 = vlaneseq
          %v1692 = vshrl.u32 %v1691, 7
          %v1693 = vsub.s32 %v1690, %v1692
          %v1694 = vrot.slane %v1686, %v1693
          %v1696 = vunpack.c.l.s4 1983009808
          %v1697 = vunpack.c.0.s8 %v1696
          %v1698 = vlaneseq
          %v1699 = vshrl.u32 %v1698, 7
          %v1700 = vsub.s32 %v1697, %v1699
          %v1701 = vrot.slane %v1687, %v1700
          %v1702 = vcombine.low %v1159, %v1223
          %v1703 = vcombine.high %v1159, %v1223
          %v1705 = vunpack.c.l.s4 1983009808
          %v1706 = vunpack.c.0.s8 %v1705
          %v1707 = vlaneseq
          %v1708 = vshrl.u32 %v1707, 7
          %v1709 = vsub.s32 %v1706, %v1708
          %v1710 = vrot.slane %v1702, %v1709
          %v1712 = vunpack.c.l.s4 1983009808
          %v1713 = vunpack.c.0.s8 %v1712
          %v1714 = vlaneseq
          %v1715 = vshrl.u32 %v1714, 7
          %v1716 = vsub.s32 %v1713, %v1715
          %v1717 = vrot.slane %v1703, %v1716
          %v1718 = vcombine.low %v1191, %v1255
          %v1719 = vcombine.high %v1191, %v1255
          %v1721 = vunpack.c.l.s4 1983009808
          %v1722 = vunpack.c.0.s8 %v1721
          %v1723 = vlaneseq
          %v1724 = vshrl.u32 %v1723, 7
          %v1725 = vsub.s32 %v1722, %v1724
          %v1726 = vrot.slane %v1718, %v1725
          %v1728 = vunpack.c.l.s4 1983009808
          %v1729 = vunpack.c.0.s8 %v1728
          %v1730 = vlaneseq
          %v1731 = vshrl.u32 %v1730, 7
          %v1732 = vsub.s32 %v1729, %v1731
          %v1733 = vrot.slane %v1719, %v1732
          %v1734 = vcombine.low %v1678, %v1694
          %v1735 = vcombine.high %v1678, %v1694
          %v1737 = vunpack.c.l.s4 1934713408
          %v1738 = vunpack.c.0.s8 %v1737
          %v1739 = vlaneseq
          %v1740 = vshrl.u32 %v1739, 7
          %v1741 = vsub.s32 %v1738, %v1740
          %v1742 = vrot.slane %v1734, %v1741
          %v1744 = vunpack.c.l.s4 1934713408
          %v1745 = vunpack.c.0.s8 %v1744
          %v1746 = vlaneseq
          %v1747 = vshrl.u32 %v1746, 7
          %v1748 = vsub.s32 %v1745, %v1747
          %v1749 = vrot.slane %v1735, %v1748
          %v1750 = vcombine.low %v1685, %v1701
          %v1751 = vcombine.high %v1685, %v1701
          %v1753 = vunpack.c.l.s4 1934713408
          %v1754 = vunpack.c.0.s8 %v1753
          %v1755 = vlaneseq
          %v1756 = vshrl.u32 %v1755, 7
          %v1757 = vsub.s32 %v1754, %v1756
          %v1758 = vrot.slane %v1750, %v1757
          %v1760 = vunpack.c.l.s4 1934713408
          %v1761 = vunpack.c.0.s8 %v1760
          %v1762 = vlaneseq
          %v1763 = vshrl.u32 %v1762, 7
          %v1764 = vsub.s32 %v1761, %v1763
          %v1765 = vrot.slane %v1751, %v1764
          %v1766 = vcombine.low %v1710, %v1726
          %v1767 = vcombine.high %v1710, %v1726
          %v1769 = vunpack.c.l.s4 1934713408
          %v1770 = vunpack.c.0.s8 %v1769
          %v1771 = vlaneseq
          %v1772 = vshrl.u32 %v1771, 7
          %v1773 = vsub.s32 %v1770, %v1772
          %v1774 = vrot.slane %v1766, %v1773
          %v1776 = vunpack.c.l.s4 1934713408
          %v1777 = vunpack.c.0.s8 %v1776
          %v1778 = vlaneseq
          %v1779 = vshrl.u32 %v1778, 7
          %v1780 = vsub.s32 %v1777, %v1779
          %v1781 = vrot.slane %v1767, %v1780
          %v1782 = vcombine.low %v1717, %v1733
          %v1783 = vcombine.high %v1717, %v1733
          %v1785 = vunpack.c.l.s4 1934713408
          %v1786 = vunpack.c.0.s8 %v1785
          %v1787 = vlaneseq
          %v1788 = vshrl.u32 %v1787, 7
          %v1789 = vsub.s32 %v1786, %v1788
          %v1790 = vrot.slane %v1782, %v1789
          %v1792 = vunpack.c.l.s4 1934713408
          %v1793 = vunpack.c.0.s8 %v1792
          %v1794 = vlaneseq
          %v1795 = vshrl.u32 %v1794, 7
          %v1796 = vsub.s32 %v1793, %v1795
          %v1797 = vrot.slane %v1783, %v1796
          %v1798 = vcombine.low %v1742, %v1774
          %v1799 = vcombine.high %v1742, %v1774
          %v1800 = vcombine.low %v1749, %v1781
          %v1801 = vcombine.high %v1749, %v1781
          %v1802 = vcombine.low %v1758, %v1790
          %v1803 = vcombine.high %v1758, %v1790
          %v1804 = vcombine.low %v1765, %v1797
          %v1805 = vcombine.high %v1765, %v1797
          %v1808 = vpack.i.b16 %v1526, %v1390
          %v1810 = vshrl.u32 %v1390, 16
          %v1811 = vshrl.u32 %v1526, 16
          %v1812 = vpack.i.b16 %v1811, %v1810
          %v1816 = vpack.i.b16 %v1527, %v1391
          %v1818 = vshrl.u32 %v1391, 16
          %v1819 = vshrl.u32 %v1527, 16
          %v1820 = vpack.i.b16 %v1819, %v1818
          %v1824 = vpack.i.b16 %v1528, %v1392
          %v1826 = vshrl.u32 %v1392, 16
          %v1827 = vshrl.u32 %v1528, 16
          %v1828 = vpack.i.b16 %v1827, %v1826
          %v1832 = vpack.i.b16 %v1529, %v1393
          %v1834 = vshrl.u32 %v1393, 16
          %v1835 = vshrl.u32 %v1529, 16
          %v1836 = vpack.i.b16 %v1835, %v1834
          %v1840 = vpack.i.b16 %v1530, %v1394
          %v1842 = vshrl.u32 %v1394, 16
          %v1843 = vshrl.u32 %v1530, 16
          %v1844 = vpack.i.b16 %v1843, %v1842
          %v1848 = vpack.i.b16 %v1531, %v1395
          %v1850 = vshrl.u32 %v1395, 16
          %v1851 = vshrl.u32 %v1531, 16
          %v1852 = vpack.i.b16 %v1851, %v1850
          %v1856 = vpack.i.b16 %v1532, %v1396
          %v1858 = vshrl.u32 %v1396, 16
          %v1859 = vshrl.u32 %v1532, 16
          %v1860 = vpack.i.b16 %v1859, %v1858
          %v1864 = vpack.i.b16 %v1533, %v1397
          %v1866 = vshrl.u32 %v1397, 16
          %v1867 = vshrl.u32 %v1533, 16
          %v1868 = vpack.i.b16 %v1867, %v1866
          %v1872 = vpack.i.b16 %v1798, %v1662
          %v1874 = vshrl.u32 %v1662, 16
          %v1875 = vshrl.u32 %v1798, 16
          %v1876 = vpack.i.b16 %v1875, %v1874
          %v1880 = vpack.i.b16 %v1799, %v1663
          %v1882 = vshrl.u32 %v1663, 16
          %v1883 = vshrl.u32 %v1799, 16
          %v1884 = vpack.i.b16 %v1883, %v1882
          %v1888 = vpack.i.b16 %v1800, %v1664
          %v1890 = vshrl.u32 %v1664, 16
          %v1891 = vshrl.u32 %v1800, 16
          %v1892 = vpack.i.b16 %v1891, %v1890
          %v1896 = vpack.i.b16 %v1801, %v1665
          %v1898 = vshrl.u32 %v1665, 16
          %v1899 = vshrl.u32 %v1801, 16
          %v1900 = vpack.i.b16 %v1899, %v1898
          %v1904 = vpack.i.b16 %v1802, %v1666
          %v1906 = vshrl.u32 %v1666, 16
          %v1907 = vshrl.u32 %v1802, 16
          %v1908 = vpack.i.b16 %v1907, %v1906
          %v1912 = vpack.i.b16 %v1803, %v1667
          %v1914 = vshrl.u32 %v1667, 16
          %v1915 = vshrl.u32 %v1803, 16
          %v1916 = vpack.i.b16 %v1915, %v1914
          %v1920 = vpack.i.b16 %v1804, %v1668
          %v1922 = vshrl.u32 %v1668, 16
          %v1923 = vshrl.u32 %v1804, 16
          %v1924 = vpack.i.b16 %v1923, %v1922
          %v1928 = vpack.i.b16 %v1805, %v1669
          %v1930 = vshrl.u32 %v1669, 16
          %v1931 = vshrl.u32 %v1805, 16
          %v1932 = vpack.i.b16 %v1931, %v1930
          %1934 = vxpose.xlu0.c.b16.start [1/8] %v1808, 128
          %1935 = vxpose.xlu0.c.b16.cont [2/8] 0, 128
          %1936 = vxpose.xlu0.c.b16.cont [3/8] 0, 128
          %1937 = vxpose.xlu0.c.b16.cont [4/8] 0, 128
          %1938 = vxpose.xlu0.c.b16.cont [5/8] 0, 128
          %1939 = vxpose.xlu0.c.b16.cont [6/8] 0, 128
          %1940 = vxpose.xlu0.c.b16.cont [7/8] 0, 128
          %1941 = vxpose.xlu0.c.b16.end [8/8] 0, 128
          %v1942 = vpop.trf.xlu0
          %v1943 = vpop.trf.xlu0
          %v1944 = vpop.trf.xlu0
          %v1945 = vpop.trf.xlu0
          %v1946 = vpop.trf.xlu0
          %v1947 = vpop.trf.xlu0
          %v1948 = vpop.trf.xlu0
          %v1949 = vpop.trf.xlu0
          %1950 = vxpose.xlu0.c.b16.start [1/8] %v1812, 128
          %1951 = vxpose.xlu0.c.b16.cont [2/8] 0, 128
          %1952 = vxpose.xlu0.c.b16.cont [3/8] 0, 128
          %1953 = vxpose.xlu0.c.b16.cont [4/8] 0, 128
          %1954 = vxpose.xlu0.c.b16.cont [5/8] 0, 128
          %1955 = vxpose.xlu0.c.b16.cont [6/8] 0, 128
          %1956 = vxpose.xlu0.c.b16.cont [7/8] 0, 128
          %1957 = vxpose.xlu0.c.b16.end [8/8] 0, 128
          %v1958 = vpop.trf.xlu0
          %v1959 = vpop.trf.xlu0
          %v1960 = vpop.trf.xlu0
          %v1961 = vpop.trf.xlu0
          %v1962 = vpop.trf.xlu0
          %v1963 = vpop.trf.xlu0
          %v1964 = vpop.trf.xlu0
          %v1965 = vpop.trf.xlu0
          %1966 = vxpose.xlu0.c.b16.start [1/8] %v1816, 128
          %1967 = vxpose.xlu0.c.b16.cont [2/8] 0, 128
          %1968 = vxpose.xlu0.c.b16.cont [3/8] 0, 128
          %1969 = vxpose.xlu0.c.b16.cont [4/8] 0, 128
          %1970 = vxpose.xlu0.c.b16.cont [5/8] 0, 128
          %1971 = vxpose.xlu0.c.b16.cont [6/8] 0, 128
          %1972 = vxpose.xlu0.c.b16.cont [7/8] 0, 128
          %1973 = vxpose.xlu0.c.b16.end [8/8] 0, 128
          %v1974 = vpop.trf.xlu0
          %v1975 = vpop.trf.xlu0
          %v1976 = vpop.trf.xlu0
          %v1977 = vpop.trf.xlu0
          %v1978 = vpop.trf.xlu0
          %v1979 = vpop.trf.xlu0
          %v1980 = vpop.trf.xlu0
          %v1981 = vpop.trf.xlu0
          %1982 = vxpose.xlu0.c.b16.start [1/8] %v1820, 128
          %1983 = vxpose.xlu0.c.b16.cont [2/8] 0, 128
          %1984 = vxpose.xlu0.c.b16.cont [3/8] 0, 128
          %1985 = vxpose.xlu0.c.b16.cont [4/8] 0, 128
          %1986 = vxpose.xlu0.c.b16.cont [5/8] 0, 128
          %1987 = vxpose.xlu0.c.b16.cont [6/8] 0, 128
          %1988 = vxpose.xlu0.c.b16.cont [7/8] 0, 128
          %1989 = vxpose.xlu0.c.b16.end [8/8] 0, 128
          %v1990 = vpop.trf.xlu0
          %v1991 = vpop.trf.xlu0
          %v1992 = vpop.trf.xlu0
          %v1993 = vpop.trf.xlu0
          %v1994 = vpop.trf.xlu0
          %v1995 = vpop.trf.xlu0
          %v1996 = vpop.trf.xlu0
          %v1997 = vpop.trf.xlu0
          %1998 = vxpose.xlu0.c.b16.start [1/8] %v1824, 128
          %1999 = vxpose.xlu0.c.b16.cont [2/8] 0, 128
          %2000 = vxpose.xlu0.c.b16.cont [3/8] 0, 128
          %2001 = vxpose.xlu0.c.b16.cont [4/8] 0, 128
          %2002 = vxpose.xlu0.c.b16.cont [5/8] 0, 128
          %2003 = vxpose.xlu0.c.b16.cont [6/8] 0, 128
          %2004 = vxpose.xlu0.c.b16.cont [7/8] 0, 128
          %2005 = vxpose.xlu0.c.b16.end [8/8] 0, 128
          %v2006 = vpop.trf.xlu0
          %v2007 = vpop.trf.xlu0
          %v2008 = vpop.trf.xlu0
          %v2009 = vpop.trf.xlu0
          %v2010 = vpop.trf.xlu0
          %v2011 = vpop.trf.xlu0
          %v2012 = vpop.trf.xlu0
          %v2013 = vpop.trf.xlu0
          %2014 = vxpose.xlu0.c.b16.start [1/8] %v1828, 128
          %2015 = vxpose.xlu0.c.b16.cont [2/8] 0, 128
          %2016 = vxpose.xlu0.c.b16.cont [3/8] 0, 128
          %2017 = vxpose.xlu0.c.b16.cont [4/8] 0, 128
          %2018 = vxpose.xlu0.c.b16.cont [5/8] 0, 128
          %2019 = vxpose.xlu0.c.b16.cont [6/8] 0, 128
          %2020 = vxpose.xlu0.c.b16.cont [7/8] 0, 128
          %2021 = vxpose.xlu0.c.b16.end [8/8] 0, 128
          %v2022 = vpop.trf.xlu0
          %v2023 = vpop.trf.xlu0
          %v2024 = vpop.trf.xlu0
          %v2025 = vpop.trf.xlu0
          %v2026 = vpop.trf.xlu0
          %v2027 = vpop.trf.xlu0
          %v2028 = vpop.trf.xlu0
          %v2029 = vpop.trf.xlu0
          %2030 = vxpose.xlu0.c.b16.start [1/8] %v1832, 128
          %2031 = vxpose.xlu0.c.b16.cont [2/8] 0, 128
          %2032 = vxpose.xlu0.c.b16.cont [3/8] 0, 128
          %2033 = vxpose.xlu0.c.b16.cont [4/8] 0, 128
          %2034 = vxpose.xlu0.c.b16.cont [5/8] 0, 128
          %2035 = vxpose.xlu0.c.b16.cont [6/8] 0, 128
          %2036 = vxpose.xlu0.c.b16.cont [7/8] 0, 128
          %2037 = vxpose.xlu0.c.b16.end [8/8] 0, 128
          %v2038 = vpop.trf.xlu0
          %v2039 = vpop.trf.xlu0
          %v2040 = vpop.trf.xlu0
          %v2041 = vpop.trf.xlu0
          %v2042 = vpop.trf.xlu0
          %v2043 = vpop.trf.xlu0
          %v2044 = vpop.trf.xlu0
          %v2045 = vpop.trf.xlu0
          %2046 = vxpose.xlu0.c.b16.start [1/8] %v1836, 128
          %2047 = vxpose.xlu0.c.b16.cont [2/8] 0, 128
          %2048 = vxpose.xlu0.c.b16.cont [3/8] 0, 128
          %2049 = vxpose.xlu0.c.b16.cont [4/8] 0, 128
          %2050 = vxpose.xlu0.c.b16.cont [5/8] 0, 128
          %2051 = vxpose.xlu0.c.b16.cont [6/8] 0, 128
          %2052 = vxpose.xlu0.c.b16.cont [7/8] 0, 128
          %2053 = vxpose.xlu0.c.b16.end [8/8] 0, 128
          %v2054 = vpop.trf.xlu0
          %v2055 = vpop.trf.xlu0
          %v2056 = vpop.trf.xlu0
          %v2057 = vpop.trf.xlu0
          %v2058 = vpop.trf.xlu0
          %v2059 = vpop.trf.xlu0
          %v2060 = vpop.trf.xlu0
          %v2061 = vpop.trf.xlu0
          %2062 = vxpose.xlu0.c.b16.start [1/8] %v1840, 128
          %2063 = vxpose.xlu0.c.b16.cont [2/8] 0, 128
          %2064 = vxpose.xlu0.c.b16.cont [3/8] 0, 128
          %2065 = vxpose.xlu0.c.b16.cont [4/8] 0, 128
          %2066 = vxpose.xlu0.c.b16.cont [5/8] 0, 128
          %2067 = vxpose.xlu0.c.b16.cont [6/8] 0, 128
          %2068 = vxpose.xlu0.c.b16.cont [7/8] 0, 128
          %2069 = vxpose.xlu0.c.b16.end [8/8] 0, 128
          %v2070 = vpop.trf.xlu0
          %v2071 = vpop.trf.xlu0
          %v2072 = vpop.trf.xlu0
          %v2073 = vpop.trf.xlu0
          %v2074 = vpop.trf.xlu0
          %v2075 = vpop.trf.xlu0
          %v2076 = vpop.trf.xlu0
          %v2077 = vpop.trf.xlu0
          %2078 = vxpose.xlu0.c.b16.start [1/8] %v1844, 128
          %2079 = vxpose.xlu0.c.b16.cont [2/8] 0, 128
          %2080 = vxpose.xlu0.c.b16.cont [3/8] 0, 128
          %2081 = vxpose.xlu0.c.b16.cont [4/8] 0, 128
          %2082 = vxpose.xlu0.c.b16.cont [5/8] 0, 128
          %2083 = vxpose.xlu0.c.b16.cont [6/8] 0, 128
          %2084 = vxpose.xlu0.c.b16.cont [7/8] 0, 128
          %2085 = vxpose.xlu0.c.b16.end [8/8] 0, 128
          %v2086 = vpop.trf.xlu0
          %v2087 = vpop.trf.xlu0
          %v2088 = vpop.trf.xlu0
          %v2089 = vpop.trf.xlu0
          %v2090 = vpop.trf.xlu0
          %v2091 = vpop.trf.xlu0
          %v2092 = vpop.trf.xlu0
          %v2093 = vpop.trf.xlu0
          %2094 = vxpose.xlu0.c.b16.start [1/8] %v1848, 128
          %2095 = vxpose.xlu0.c.b16.cont [2/8] 0, 128
          %2096 = vxpose.xlu0.c.b16.cont [3/8] 0, 128
          %2097 = vxpose.xlu0.c.b16.cont [4/8] 0, 128
          %2098 = vxpose.xlu0.c.b16.cont [5/8] 0, 128
          %2099 = vxpose.xlu0.c.b16.cont [6/8] 0, 128
          %2100 = vxpose.xlu0.c.b16.cont [7/8] 0, 128
          %2101 = vxpose.xlu0.c.b16.end [8/8] 0, 128
          %v2102 = vpop.trf.xlu0
          %v2103 = vpop.trf.xlu0
          %v2104 = vpop.trf.xlu0
          %v2105 = vpop.trf.xlu0
          %v2106 = vpop.trf.xlu0
          %v2107 = vpop.trf.xlu0
          %v2108 = vpop.trf.xlu0
          %v2109 = vpop.trf.xlu0
          %2110 = vxpose.xlu0.c.b16.start [1/8] %v1852, 128
          %2111 = vxpose.xlu0.c.b16.cont [2/8] 0, 128
          %2112 = vxpose.xlu0.c.b16.cont [3/8] 0, 128
          %2113 = vxpose.xlu0.c.b16.cont [4/8] 0, 128
          %2114 = vxpose.xlu0.c.b16.cont [5/8] 0, 128
          %2115 = vxpose.xlu0.c.b16.cont [6/8] 0, 128
          %2116 = vxpose.xlu0.c.b16.cont [7/8] 0, 128
          %2117 = vxpose.xlu0.c.b16.end [8/8] 0, 128
          %v2118 = vpop.trf.xlu0
          %v2119 = vpop.trf.xlu0
          %v2120 = vpop.trf.xlu0
          %v2121 = vpop.trf.xlu0
          %v2122 = vpop.trf.xlu0
          %v2123 = vpop.trf.xlu0
          %v2124 = vpop.trf.xlu0
          %v2125 = vpop.trf.xlu0
          %2126 = vxpose.xlu0.c.b16.start [1/8] %v1856, 128
          %2127 = vxpose.xlu0.c.b16.cont [2/8] 0, 128
          %2128 = vxpose.xlu0.c.b16.cont [3/8] 0, 128
          %2129 = vxpose.xlu0.c.b16.cont [4/8] 0, 128
          %2130 = vxpose.xlu0.c.b16.cont [5/8] 0, 128
          %2131 = vxpose.xlu0.c.b16.cont [6/8] 0, 128
          %2132 = vxpose.xlu0.c.b16.cont [7/8] 0, 128
          %2133 = vxpose.xlu0.c.b16.end [8/8] 0, 128
          %v2134 = vpop.trf.xlu0
          %v2135 = vpop.trf.xlu0
          %v2136 = vpop.trf.xlu0
          %v2137 = vpop.trf.xlu0
          %v2138 = vpop.trf.xlu0
          %v2139 = vpop.trf.xlu0
          %v2140 = vpop.trf.xlu0
          %v2141 = vpop.trf.xlu0
          %2142 = vxpose.xlu0.c.b16.start [1/8] %v1860, 128
          %2143 = vxpose.xlu0.c.b16.cont [2/8] 0, 128
          %2144 = vxpose.xlu0.c.b16.cont [3/8] 0, 128
          %2145 = vxpose.xlu0.c.b16.cont [4/8] 0, 128
          %2146 = vxpose.xlu0.c.b16.cont [5/8] 0, 128
          %2147 = vxpose.xlu0.c.b16.cont [6/8] 0, 128
          %2148 = vxpose.xlu0.c.b16.cont [7/8] 0, 128
          %2149 = vxpose.xlu0.c.b16.end [8/8] 0, 128
          %v2150 = vpop.trf.xlu0
          %v2151 = vpop.trf.xlu0
          %v2152 = vpop.trf.xlu0
          %v2153 = vpop.trf.xlu0
          %v2154 = vpop.trf.xlu0
          %v2155 = vpop.trf.xlu0
          %v2156 = vpop.trf.xlu0
          %v2157 = vpop.trf.xlu0
          %2158 = vxpose.xlu0.c.b16.start [1/8] %v1864, 128
          %2159 = vxpose.xlu0.c.b16.cont [2/8] 0, 128
          %2160 = vxpose.xlu0.c.b16.cont [3/8] 0, 128
          %2161 = vxpose.xlu0.c.b16.cont [4/8] 0, 128
          %2162 = vxpose.xlu0.c.b16.cont [5/8] 0, 128
          %2163 = vxpose.xlu0.c.b16.cont [6/8] 0, 128
          %2164 = vxpose.xlu0.c.b16.cont [7/8] 0, 128
          %2165 = vxpose.xlu0.c.b16.end [8/8] 0, 128
          %v2166 = vpop.trf.xlu0
          %v2167 = vpop.trf.xlu0
          %v2168 = vpop.trf.xlu0
          %v2169 = vpop.trf.xlu0
          %v2170 = vpop.trf.xlu0
          %v2171 = vpop.trf.xlu0
          %v2172 = vpop.trf.xlu0
          %v2173 = vpop.trf.xlu0
          %2174 = vxpose.xlu0.c.b16.start [1/8] %v1868, 128
          %2175 = vxpose.xlu0.c.b16.cont [2/8] 0, 128
          %2176 = vxpose.xlu0.c.b16.cont [3/8] 0, 128
          %2177 = vxpose.xlu0.c.b16.cont [4/8] 0, 128
          %2178 = vxpose.xlu0.c.b16.cont [5/8] 0, 128
          %2179 = vxpose.xlu0.c.b16.cont [6/8] 0, 128
          %2180 = vxpose.xlu0.c.b16.cont [7/8] 0, 128
          %2181 = vxpose.xlu0.c.b16.end [8/8] 0, 128
          %v2182 = vpop.trf.xlu0
          %v2183 = vpop.trf.xlu0
          %v2184 = vpop.trf.xlu0
          %v2185 = vpop.trf.xlu0
          %v2186 = vpop.trf.xlu0
          %v2187 = vpop.trf.xlu0
          %v2188 = vpop.trf.xlu0
          %v2189 = vpop.trf.xlu0
          %2190 = vxpose.xlu0.c.b16.start [1/8] %v1872, 128
          %2191 = vxpose.xlu0.c.b16.cont [2/8] 0, 128
          %2192 = vxpose.xlu0.c.b16.cont [3/8] 0, 128
          %2193 = vxpose.xlu0.c.b16.cont [4/8] 0, 128
          %2194 = vxpose.xlu0.c.b16.cont [5/8] 0, 128
          %2195 = vxpose.xlu0.c.b16.cont [6/8] 0, 128
          %2196 = vxpose.xlu0.c.b16.cont [7/8] 0, 128
          %2197 = vxpose.xlu0.c.b16.end [8/8] 0, 128
          %v2198 = vpop.trf.xlu0
          %v2199 = vpop.trf.xlu0
          %v2200 = vpop.trf.xlu0
          %v2201 = vpop.trf.xlu0
          %v2202 = vpop.trf.xlu0
          %v2203 = vpop.trf.xlu0
          %v2204 = vpop.trf.xlu0
          %v2205 = vpop.trf.xlu0
          %2206 = vxpose.xlu0.c.b16.start [1/8] %v1876, 128
          %2207 = vxpose.xlu0.c.b16.cont [2/8] 0, 128
          %2208 = vxpose.xlu0.c.b16.cont [3/8] 0, 128
          %2209 = vxpose.xlu0.c.b16.cont [4/8] 0, 128
          %2210 = vxpose.xlu0.c.b16.cont [5/8] 0, 128
          %2211 = vxpose.xlu0.c.b16.cont [6/8] 0, 128
          %2212 = vxpose.xlu0.c.b16.cont [7/8] 0, 128
          %2213 = vxpose.xlu0.c.b16.end [8/8] 0, 128
          %v2214 = vpop.trf.xlu0
          %v2215 = vpop.trf.xlu0
          %v2216 = vpop.trf.xlu0
          %v2217 = vpop.trf.xlu0
          %v2218 = vpop.trf.xlu0
          %v2219 = vpop.trf.xlu0
          %v2220 = vpop.trf.xlu0
          %v2221 = vpop.trf.xlu0
          %2222 = vxpose.xlu0.c.b16.start [1/8] %v1880, 128
          %2223 = vxpose.xlu0.c.b16.cont [2/8] 0, 128
          %2224 = vxpose.xlu0.c.b16.cont [3/8] 0, 128
          %2225 = vxpose.xlu0.c.b16.cont [4/8] 0, 128
          %2226 = vxpose.xlu0.c.b16.cont [5/8] 0, 128
          %2227 = vxpose.xlu0.c.b16.cont [6/8] 0, 128
          %2228 = vxpose.xlu0.c.b16.cont [7/8] 0, 128
          %2229 = vxpose.xlu0.c.b16.end [8/8] 0, 128
          %v2230 = vpop.trf.xlu0
          %v2231 = vpop.trf.xlu0
          %v2232 = vpop.trf.xlu0
          %v2233 = vpop.trf.xlu0
          %v2234 = vpop.trf.xlu0
          %v2235 = vpop.trf.xlu0
          %v2236 = vpop.trf.xlu0
          %v2237 = vpop.trf.xlu0
          %2238 = vxpose.xlu0.c.b16.start [1/8] %v1884, 128
          %2239 = vxpose.xlu0.c.b16.cont [2/8] 0, 128
          %2240 = vxpose.xlu0.c.b16.cont [3/8] 0, 128
          %2241 = vxpose.xlu0.c.b16.cont [4/8] 0, 128
          %2242 = vxpose.xlu0.c.b16.cont [5/8] 0, 128
          %2243 = vxpose.xlu0.c.b16.cont [6/8] 0, 128
          %2244 = vxpose.xlu0.c.b16.cont [7/8] 0, 128
          %2245 = vxpose.xlu0.c.b16.end [8/8] 0, 128
          %v2246 = vpop.trf.xlu0
          %v2247 = vpop.trf.xlu0
          %v2248 = vpop.trf.xlu0
          %v2249 = vpop.trf.xlu0
          %v2250 = vpop.trf.xlu0
          %v2251 = vpop.trf.xlu0
          %v2252 = vpop.trf.xlu0
          %v2253 = vpop.trf.xlu0
          %2254 = vxpose.xlu0.c.b16.start [1/8] %v1888, 128
          %2255 = vxpose.xlu0.c.b16.cont [2/8] 0, 128
          %2256 = vxpose.xlu0.c.b16.cont [3/8] 0, 128
          %2257 = vxpose.xlu0.c.b16.cont [4/8] 0, 128
          %2258 = vxpose.xlu0.c.b16.cont [5/8] 0, 128
          %2259 = vxpose.xlu0.c.b16.cont [6/8] 0, 128
          %2260 = vxpose.xlu0.c.b16.cont [7/8] 0, 128
          %2261 = vxpose.xlu0.c.b16.end [8/8] 0, 128
          %v2262 = vpop.trf.xlu0
          %v2263 = vpop.trf.xlu0
          %v2264 = vpop.trf.xlu0
          %v2265 = vpop.trf.xlu0
          %v2266 = vpop.trf.xlu0
          %v2267 = vpop.trf.xlu0
          %v2268 = vpop.trf.xlu0
          %v2269 = vpop.trf.xlu0
          %2270 = vxpose.xlu0.c.b16.start [1/8] %v1892, 128
          %2271 = vxpose.xlu0.c.b16.cont [2/8] 0, 128
          %2272 = vxpose.xlu0.c.b16.cont [3/8] 0, 128
          %2273 = vxpose.xlu0.c.b16.cont [4/8] 0, 128
          %2274 = vxpose.xlu0.c.b16.cont [5/8] 0, 128
          %2275 = vxpose.xlu0.c.b16.cont [6/8] 0, 128
          %2276 = vxpose.xlu0.c.b16.cont [7/8] 0, 128
          %2277 = vxpose.xlu0.c.b16.end [8/8] 0, 128
          %v2278 = vpop.trf.xlu0
          %v2279 = vpop.trf.xlu0
          %v2280 = vpop.trf.xlu0
          %v2281 = vpop.trf.xlu0
          %v2282 = vpop.trf.xlu0
          %v2283 = vpop.trf.xlu0
          %v2284 = vpop.trf.xlu0
          %v2285 = vpop.trf.xlu0
          %2286 = vxpose.xlu0.c.b16.start [1/8] %v1896, 128
          %2287 = vxpose.xlu0.c.b16.cont [2/8] 0, 128
          %2288 = vxpose.xlu0.c.b16.cont [3/8] 0, 128
          %2289 = vxpose.xlu0.c.b16.cont [4/8] 0, 128
          %2290 = vxpose.xlu0.c.b16.cont [5/8] 0, 128
          %2291 = vxpose.xlu0.c.b16.cont [6/8] 0, 128
          %2292 = vxpose.xlu0.c.b16.cont [7/8] 0, 128
          %2293 = vxpose.xlu0.c.b16.end [8/8] 0, 128
          %v2294 = vpop.trf.xlu0
          %v2295 = vpop.trf.xlu0
          %v2296 = vpop.trf.xlu0
          %v2297 = vpop.trf.xlu0
          %v2298 = vpop.trf.xlu0
          %v2299 = vpop.trf.xlu0
          %v2300 = vpop.trf.xlu0
          %v2301 = vpop.trf.xlu0
          %2302 = vxpose.xlu0.c.b16.start [1/8] %v1900, 128
          %2303 = vxpose.xlu0.c.b16.cont [2/8] 0, 128
          %2304 = vxpose.xlu0.c.b16.cont [3/8] 0, 128
          %2305 = vxpose.xlu0.c.b16.cont [4/8] 0, 128
          %2306 = vxpose.xlu0.c.b16.cont [5/8] 0, 128
          %2307 = vxpose.xlu0.c.b16.cont [6/8] 0, 128
          %2308 = vxpose.xlu0.c.b16.cont [7/8] 0, 128
          %2309 = vxpose.xlu0.c.b16.end [8/8] 0, 128
          %v2310 = vpop.trf.xlu0
          %v2311 = vpop.trf.xlu0
          %v2312 = vpop.trf.xlu0
          %v2313 = vpop.trf.xlu0
          %v2314 = vpop.trf.xlu0
          %v2315 = vpop.trf.xlu0
          %v2316 = vpop.trf.xlu0
          %v2317 = vpop.trf.xlu0
          %2318 = vxpose.xlu0.c.b16.start [1/8] %v1904, 128
          %2319 = vxpose.xlu0.c.b16.cont [2/8] 0, 128
          %2320 = vxpose.xlu0.c.b16.cont [3/8] 0, 128
          %2321 = vxpose.xlu0.c.b16.cont [4/8] 0, 128
          %2322 = vxpose.xlu0.c.b16.cont [5/8] 0, 128
          %2323 = vxpose.xlu0.c.b16.cont [6/8] 0, 128
          %2324 = vxpose.xlu0.c.b16.cont [7/8] 0, 128
          %2325 = vxpose.xlu0.c.b16.end [8/8] 0, 128
          %v2326 = vpop.trf.xlu0
          %v2327 = vpop.trf.xlu0
          %v2328 = vpop.trf.xlu0
          %v2329 = vpop.trf.xlu0
          %v2330 = vpop.trf.xlu0
          %v2331 = vpop.trf.xlu0
          %v2332 = vpop.trf.xlu0
          %v2333 = vpop.trf.xlu0
          %2334 = vxpose.xlu0.c.b16.start [1/8] %v1908, 128
          %2335 = vxpose.xlu0.c.b16.cont [2/8] 0, 128
          %2336 = vxpose.xlu0.c.b16.cont [3/8] 0, 128
          %2337 = vxpose.xlu0.c.b16.cont [4/8] 0, 128
          %2338 = vxpose.xlu0.c.b16.cont [5/8] 0, 128
          %2339 = vxpose.xlu0.c.b16.cont [6/8] 0, 128
          %2340 = vxpose.xlu0.c.b16.cont [7/8] 0, 128
          %2341 = vxpose.xlu0.c.b16.end [8/8] 0, 128
          %v2342 = vpop.trf.xlu0
          %v2343 = vpop.trf.xlu0
          %v2344 = vpop.trf.xlu0
          %v2345 = vpop.trf.xlu0
          %v2346 = vpop.trf.xlu0
          %v2347 = vpop.trf.xlu0
          %v2348 = vpop.trf.xlu0
          %v2349 = vpop.trf.xlu0
          %2350 = vxpose.xlu0.c.b16.start [1/8] %v1912, 128
          %2351 = vxpose.xlu0.c.b16.cont [2/8] 0, 128
          %2352 = vxpose.xlu0.c.b16.cont [3/8] 0, 128
          %2353 = vxpose.xlu0.c.b16.cont [4/8] 0, 128
          %2354 = vxpose.xlu0.c.b16.cont [5/8] 0, 128
          %2355 = vxpose.xlu0.c.b16.cont [6/8] 0, 128
          %2356 = vxpose.xlu0.c.b16.cont [7/8] 0, 128
          %2357 = vxpose.xlu0.c.b16.end [8/8] 0, 128
          %v2358 = vpop.trf.xlu0
          %v2359 = vpop.trf.xlu0
          %v2360 = vpop.trf.xlu0
          %v2361 = vpop.trf.xlu0
          %v2362 = vpop.trf.xlu0
          %v2363 = vpop.trf.xlu0
          %v2364 = vpop.trf.xlu0
          %v2365 = vpop.trf.xlu0
          %2366 = vxpose.xlu0.c.b16.start [1/8] %v1916, 128
          %2367 = vxpose.xlu0.c.b16.cont [2/8] 0, 128
          %2368 = vxpose.xlu0.c.b16.cont [3/8] 0, 128
          %2369 = vxpose.xlu0.c.b16.cont [4/8] 0, 128
          %2370 = vxpose.xlu0.c.b16.cont [5/8] 0, 128
          %2371 = vxpose.xlu0.c.b16.cont [6/8] 0, 128
          %2372 = vxpose.xlu0.c.b16.cont [7/8] 0, 128
          %2373 = vxpose.xlu0.c.b16.end [8/8] 0, 128
          %v2374 = vpop.trf.xlu0
          %v2375 = vpop.trf.xlu0
          %v2376 = vpop.trf.xlu0
          %v2377 = vpop.trf.xlu0
          %v2378 = vpop.trf.xlu0
          %v2379 = vpop.trf.xlu0
          %v2380 = vpop.trf.xlu0
          %v2381 = vpop.trf.xlu0
          %2382 = vxpose.xlu0.c.b16.start [1/8] %v1920, 128
          %2383 = vxpose.xlu0.c.b16.cont [2/8] 0, 128
          %2384 = vxpose.xlu0.c.b16.cont [3/8] 0, 128
          %2385 = vxpose.xlu0.c.b16.cont [4/8] 0, 128
          %2386 = vxpose.xlu0.c.b16.cont [5/8] 0, 128
          %2387 = vxpose.xlu0.c.b16.cont [6/8] 0, 128
          %2388 = vxpose.xlu0.c.b16.cont [7/8] 0, 128
          %2389 = vxpose.xlu0.c.b16.end [8/8] 0, 128
          %v2390 = vpop.trf.xlu0
          %v2391 = vpop.trf.xlu0
          %v2392 = vpop.trf.xlu0
          %v2393 = vpop.trf.xlu0
          %v2394 = vpop.trf.xlu0
          %v2395 = vpop.trf.xlu0
          %v2396 = vpop.trf.xlu0
          %v2397 = vpop.trf.xlu0
          %2398 = vxpose.xlu0.c.b16.start [1/8] %v1924, 128
          %2399 = vxpose.xlu0.c.b16.cont [2/8] 0, 128
          %2400 = vxpose.xlu0.c.b16.cont [3/8] 0, 128
          %2401 = vxpose.xlu0.c.b16.cont [4/8] 0, 128
          %2402 = vxpose.xlu0.c.b16.cont [5/8] 0, 128
          %2403 = vxpose.xlu0.c.b16.cont [6/8] 0, 128
          %2404 = vxpose.xlu0.c.b16.cont [7/8] 0, 128
          %2405 = vxpose.xlu0.c.b16.end [8/8] 0, 128
          %v2406 = vpop.trf.xlu0
          %v2407 = vpop.trf.xlu0
          %v2408 = vpop.trf.xlu0
          %v2409 = vpop.trf.xlu0
          %v2410 = vpop.trf.xlu0
          %v2411 = vpop.trf.xlu0
          %v2412 = vpop.trf.xlu0
          %v2413 = vpop.trf.xlu0
          %2414 = vxpose.xlu0.c.b16.start [1/8] %v1928, 128
          %2415 = vxpose.xlu0.c.b16.cont [2/8] 0, 128
          %2416 = vxpose.xlu0.c.b16.cont [3/8] 0, 128
          %2417 = vxpose.xlu0.c.b16.cont [4/8] 0, 128
          %2418 = vxpose.xlu0.c.b16.cont [5/8] 0, 128
          %2419 = vxpose.xlu0.c.b16.cont [6/8] 0, 128
          %2420 = vxpose.xlu0.c.b16.cont [7/8] 0, 128
          %2421 = vxpose.xlu0.c.b16.end [8/8] 0, 128
          %v2422 = vpop.trf.xlu0
          %v2423 = vpop.trf.xlu0
          %v2424 = vpop.trf.xlu0
          %v2425 = vpop.trf.xlu0
          %v2426 = vpop.trf.xlu0
          %v2427 = vpop.trf.xlu0
          %v2428 = vpop.trf.xlu0
          %v2429 = vpop.trf.xlu0
          %2430 = vxpose.xlu0.c.b16.start [1/8] %v1932, 128
          %2431 = vxpose.xlu0.c.b16.cont [2/8] 0, 128
          %2432 = vxpose.xlu0.c.b16.cont [3/8] 0, 128
          %2433 = vxpose.xlu0.c.b16.cont [4/8] 0, 128
          %2434 = vxpose.xlu0.c.b16.cont [5/8] 0, 128
          %2435 = vxpose.xlu0.c.b16.cont [6/8] 0, 128
          %2436 = vxpose.xlu0.c.b16.cont [7/8] 0, 128
          %2437 = vxpose.xlu0.c.b16.end [8/8] 0, 128
          %v2438 = vpop.trf.xlu0
          %v2439 = vpop.trf.xlu0
          %v2440 = vpop.trf.xlu0
          %v2441 = vpop.trf.xlu0
          %v2442 = vpop.trf.xlu0
          %v2443 = vpop.trf.xlu0
          %v2444 = vpop.trf.xlu0
          %v2445 = vpop.trf.xlu0
          %v2446 = vcombine.low %v1942, %v2006
          %v2448 = vunpack.c.l.s4 1983009808
          %v2449 = vunpack.c.0.s8 %v2448
          %v2450 = vlaneseq
          %v2451 = vshrl.u32 %v2450, 7
          %v2452 = vsub.s32 %v2449, %v2451
          %v2453 = vrot.slane %v2446, %v2452
          %v2454 = vcombine.low %v1974, %v2038
          %v2456 = vunpack.c.l.s4 1983009808
          %v2457 = vunpack.c.0.s8 %v2456
          %v2458 = vlaneseq
          %v2459 = vshrl.u32 %v2458, 7
          %v2460 = vsub.s32 %v2457, %v2459
          %v2461 = vrot.slane %v2454, %v2460
          %v2462 = vcombine.low %v2070, %v2134
          %v2464 = vunpack.c.l.s4 1983009808
          %v2465 = vunpack.c.0.s8 %v2464
          %v2466 = vlaneseq
          %v2467 = vshrl.u32 %v2466, 7
          %v2468 = vsub.s32 %v2465, %v2467
          %v2469 = vrot.slane %v2462, %v2468
          %v2470 = vcombine.low %v2102, %v2166
          %v2472 = vunpack.c.l.s4 1983009808
          %v2473 = vunpack.c.0.s8 %v2472
          %v2474 = vlaneseq
          %v2475 = vshrl.u32 %v2474, 7
          %v2476 = vsub.s32 %v2473, %v2475
          %v2477 = vrot.slane %v2470, %v2476
          %v2478 = vcombine.low %v2453, %v2461
          %v2480 = vunpack.c.l.s4 1934713408
          %v2481 = vunpack.c.0.s8 %v2480
          %v2482 = vlaneseq
          %v2483 = vshrl.u32 %v2482, 7
          %v2484 = vsub.s32 %v2481, %v2483
          %v2485 = vrot.slane %v2478, %v2484
          %v2486 = vcombine.low %v2469, %v2477
          %v2488 = vunpack.c.l.s4 1934713408
          %v2489 = vunpack.c.0.s8 %v2488
          %v2490 = vlaneseq
          %v2491 = vshrl.u32 %v2490, 7
          %v2492 = vsub.s32 %v2489, %v2491
          %v2493 = vrot.slane %v2486, %v2492
          %v2494 = vcombine.low %v2485, %v2493
          %v2495 = vcombine.high %v2485, %v2493
          %v2496 = vcombine.low %v1958, %v2022
          %v2498 = vunpack.c.l.s4 1983009808
          %v2499 = vunpack.c.0.s8 %v2498
          %v2500 = vlaneseq
          %v2501 = vshrl.u32 %v2500, 7
          %v2502 = vsub.s32 %v2499, %v2501
          %v2503 = vrot.slane %v2496, %v2502
          %v2504 = vcombine.low %v1990, %v2054
          %v2506 = vunpack.c.l.s4 1983009808
          %v2507 = vunpack.c.0.s8 %v2506
          %v2508 = vlaneseq
          %v2509 = vshrl.u32 %v2508, 7
          %v2510 = vsub.s32 %v2507, %v2509
          %v2511 = vrot.slane %v2504, %v2510
          %v2512 = vcombine.low %v2086, %v2150
          %v2514 = vunpack.c.l.s4 1983009808
          %v2515 = vunpack.c.0.s8 %v2514
          %v2516 = vlaneseq
          %v2517 = vshrl.u32 %v2516, 7
          %v2518 = vsub.s32 %v2515, %v2517
          %v2519 = vrot.slane %v2512, %v2518
          %v2520 = vcombine.low %v2118, %v2182
          %v2522 = vunpack.c.l.s4 1983009808
          %v2523 = vunpack.c.0.s8 %v2522
          %v2524 = vlaneseq
          %v2525 = vshrl.u32 %v2524, 7
          %v2526 = vsub.s32 %v2523, %v2525
          %v2527 = vrot.slane %v2520, %v2526
          %v2528 = vcombine.low %v2503, %v2511
          %v2530 = vunpack.c.l.s4 1934713408
          %v2531 = vunpack.c.0.s8 %v2530
          %v2532 = vlaneseq
          %v2533 = vshrl.u32 %v2532, 7
          %v2534 = vsub.s32 %v2531, %v2533
          %v2535 = vrot.slane %v2528, %v2534
          %v2536 = vcombine.low %v2519, %v2527
          %v2538 = vunpack.c.l.s4 1934713408
          %v2539 = vunpack.c.0.s8 %v2538
          %v2540 = vlaneseq
          %v2541 = vshrl.u32 %v2540, 7
          %v2542 = vsub.s32 %v2539, %v2541
          %v2543 = vrot.slane %v2536, %v2542
          %v2544 = vcombine.low %v2535, %v2543
          %v2545 = vcombine.high %v2535, %v2543
          %v2546 = vcombine.low %v2198, %v2262
          %v2548 = vunpack.c.l.s4 1983009808
          %v2549 = vunpack.c.0.s8 %v2548
          %v2550 = vlaneseq
          %v2551 = vshrl.u32 %v2550, 7
          %v2552 = vsub.s32 %v2549, %v2551
          %v2553 = vrot.slane %v2546, %v2552
          %v2554 = vcombine.low %v2230, %v2294
          %v2556 = vunpack.c.l.s4 1983009808
          %v2557 = vunpack.c.0.s8 %v2556
          %v2558 = vlaneseq
          %v2559 = vshrl.u32 %v2558, 7
          %v2560 = vsub.s32 %v2557, %v2559
          %v2561 = vrot.slane %v2554, %v2560
          %v2562 = vcombine.low %v2326, %v2390
          %v2564 = vunpack.c.l.s4 1983009808
          %v2565 = vunpack.c.0.s8 %v2564
          %v2566 = vlaneseq
          %v2567 = vshrl.u32 %v2566, 7
          %v2568 = vsub.s32 %v2565, %v2567
          %v2569 = vrot.slane %v2562, %v2568
          %v2570 = vcombine.low %v2358, %v2422
          %v2572 = vunpack.c.l.s4 1983009808
          %v2573 = vunpack.c.0.s8 %v2572
          %v2574 = vlaneseq
          %v2575 = vshrl.u32 %v2574, 7
          %v2576 = vsub.s32 %v2573, %v2575
          %v2577 = vrot.slane %v2570, %v2576
          %v2578 = vcombine.low %v2553, %v2561
          %v2580 = vunpack.c.l.s4 1934713408
          %v2581 = vunpack.c.0.s8 %v2580
          %v2582 = vlaneseq
          %v2583 = vshrl.u32 %v2582, 7
          %v2584 = vsub.s32 %v2581, %v2583
          %v2585 = vrot.slane %v2578, %v2584
          %v2586 = vcombine.low %v2569, %v2577
          %v2588 = vunpack.c.l.s4 1934713408
          %v2589 = vunpack.c.0.s8 %v2588
          %v2590 = vlaneseq
          %v2591 = vshrl.u32 %v2590, 7
          %v2592 = vsub.s32 %v2589, %v2591
          %v2593 = vrot.slane %v2586, %v2592
          %v2594 = vcombine.low %v2585, %v2593
          %v2595 = vcombine.high %v2585, %v2593
          %v2596 = vcombine.low %v2214, %v2278
          %v2598 = vunpack.c.l.s4 1983009808
          %v2599 = vunpack.c.0.s8 %v2598
          %v2600 = vlaneseq
          %v2601 = vshrl.u32 %v2600, 7
          %v2602 = vsub.s32 %v2599, %v2601
          %v2603 = vrot.slane %v2596, %v2602
          %v2604 = vcombine.low %v2246, %v2310
          %v2606 = vunpack.c.l.s4 1983009808
          %v2607 = vunpack.c.0.s8 %v2606
          %v2608 = vlaneseq
          %v2609 = vshrl.u32 %v2608, 7
          %v2610 = vsub.s32 %v2607, %v2609
          %v2611 = vrot.slane %v2604, %v2610
          %v2612 = vcombine.low %v2342, %v2406
          %v2614 = vunpack.c.l.s4 1983009808
          %v2615 = vunpack.c.0.s8 %v2614
          %v2616 = vlaneseq
          %v2617 = vshrl.u32 %v2616, 7
          %v2618 = vsub.s32 %v2615, %v2617
          %v2619 = vrot.slane %v2612, %v2618
          %v2620 = vcombine.low %v2374, %v2438
          %v2622 = vunpack.c.l.s4 1983009808
          %v2623 = vunpack.c.0.s8 %v2622
          %v2624 = vlaneseq
          %v2625 = vshrl.u32 %v2624, 7
          %v2626 = vsub.s32 %v2623, %v2625
          %v2627 = vrot.slane %v2620, %v2626
          %v2628 = vcombine.low %v2603, %v2611
          %v2630 = vunpack.c.l.s4 1934713408
          %v2631 = vunpack.c.0.s8 %v2630
          %v2632 = vlaneseq
          %v2633 = vshrl.u32 %v2632, 7
          %v2634 = vsub.s32 %v2631, %v2633
          %v2635 = vrot.slane %v2628, %v2634
          %v2636 = vcombine.low %v2619, %v2627
          %v2638 = vunpack.c.l.s4 1934713408
          %v2639 = vunpack.c.0.s8 %v2638
          %v2640 = vlaneseq
          %v2641 = vshrl.u32 %v2640, 7
          %v2642 = vsub.s32 %v2639, %v2641
          %v2643 = vrot.slane %v2636, %v2642
          %v2644 = vcombine.low %v2635, %v2643
          %v2645 = vcombine.high %v2635, %v2643
          %v2648 = vpack.i.b16 %v2544, %v2494
          %v2650 = vshrl.u32 %v2494, 16
          %v2651 = vshrl.u32 %v2544, 16
          %v2652 = vpack.i.b16 %v2651, %v2650
          %v2656 = vpack.i.b16 %v2545, %v2495
          %v2658 = vshrl.u32 %v2495, 16
          %v2659 = vshrl.u32 %v2545, 16
          %v2660 = vpack.i.b16 %v2659, %v2658
          %v2664 = vpack.i.b16 %v2644, %v2594
          %v2666 = vshrl.u32 %v2594, 16
          %v2667 = vshrl.u32 %v2644, 16
          %v2668 = vpack.i.b16 %v2667, %v2666
          %v2672 = vpack.i.b16 %v2645, %v2595
          %v2674 = vshrl.u32 %v2595, 16
          %v2675 = vshrl.u32 %v2645, 16
          %v2676 = vpack.i.b16 %v2675, %v2674
          %vm2678 = vcmask 130048
          %2679 = vst.msk [vmem:[#allocation2] sm:$0xff] %vm2678, %v2648
          %2680 = vst.msk [vmem:[#allocation2 + $0x8] sm:$0xff] %vm2678, %v2664
          %2681 = vst.msk [vmem:[#allocation2 + $0x10] sm:$0xff] %vm2678, %v2652
          %2682 = vst.msk [vmem:[#allocation2 + $0x18] sm:$0xff] %vm2678, %v2668
          %2683 = vst.msk [vmem:[#allocation2 + $0x20] sm:$0xff] %vm2678, %v2656
          %2684 = vst.msk [vmem:[#allocation2 + $0x28] sm:$0xff] %vm2678, %v2672
          %2685 = vst.msk [vmem:[#allocation2 + $0x30] sm:$0xff] %vm2678, %v2660
          %2686 = vst.msk [vmem:[#allocation2 + $0x38] sm:$0xff] %vm2678, %v2676
          %v2687 = vcombine.low %v912, %v919
          %v2689 = vunpack.c.l.s4 1983009808
          %v2690 = vunpack.c.0.s8 %v2689
          %v2691 = vlaneseq
          %v2692 = vshrl.u32 %v2691, 7
          %v2693 = vsub.s32 %v2690, %v2692
          %v2694 = vrot.slane %v2687, %v2693
          %v2695 = vcombine.low %v936, %v937
          %v2697 = vunpack.c.l.s4 1983009808
          %v2698 = vunpack.c.0.s8 %v2697
          %v2699 = vlaneseq
          %v2700 = vshrl.u32 %v2699, 7
          %v2701 = vsub.s32 %v2698, %v2700
          %v2702 = vrot.slane %v2695, %v2701
          %v2703 = vcombine.low %v928, %v935
          %v2705 = vunpack.c.l.s4 1983009808
          %v2706 = vunpack.c.0.s8 %v2705
          %v2707 = vlaneseq
          %v2708 = vshrl.u32 %v2707, 7
          %v2709 = vsub.s32 %v2706, %v2708
          %v2710 = vrot.slane %v2703, %v2709
          %v2711 = vcombine.low %v938, %v939
          %v2713 = vunpack.c.l.s4 1983009808
          %v2714 = vunpack.c.0.s8 %v2713
          %v2715 = vlaneseq
          %v2716 = vshrl.u32 %v2715, 7
          %v2717 = vsub.s32 %v2714, %v2716
          %v2718 = vrot.slane %v2711, %v2717
          %v2719 = vcombine.low %v2694, %v2702
          %v2721 = vunpack.c.l.s4 1934713408
          %v2722 = vunpack.c.0.s8 %v2721
          %v2723 = vlaneseq
          %v2724 = vshrl.u32 %v2723, 7
          %v2725 = vsub.s32 %v2722, %v2724
          %v2726 = vrot.slane %v2719, %v2725
          %v2727 = vcombine.low %v2710, %v2718
          %v2729 = vunpack.c.l.s4 1934713408
          %v2730 = vunpack.c.0.s8 %v2729
          %v2731 = vlaneseq
          %v2732 = vshrl.u32 %v2731, 7
          %v2733 = vsub.s32 %v2730, %v2732
          %v2734 = vrot.slane %v2727, %v2733
          %v2735 = vcombine.low %v2726, %v2734
          %v2736 = vcombine.high %v2726, %v2734
          %v2737 = vcombine.low %v978, %v985
          %v2739 = vunpack.c.l.s4 1983009808
          %v2740 = vunpack.c.0.s8 %v2739
          %v2741 = vlaneseq
          %v2742 = vshrl.u32 %v2741, 7
          %v2743 = vsub.s32 %v2740, %v2742
          %v2744 = vrot.slane %v2737, %v2743
          %v2745 = vcombine.low %v1002, %v1003
          %v2747 = vunpack.c.l.s4 1983009808
          %v2748 = vunpack.c.0.s8 %v2747
          %v2749 = vlaneseq
          %v2750 = vshrl.u32 %v2749, 7
          %v2751 = vsub.s32 %v2748, %v2750
          %v2752 = vrot.slane %v2745, %v2751
          %v2753 = vcombine.low %v994, %v1001
          %v2755 = vunpack.c.l.s4 1983009808
          %v2756 = vunpack.c.0.s8 %v2755
          %v2757 = vlaneseq
          %v2758 = vshrl.u32 %v2757, 7
          %v2759 = vsub.s32 %v2756, %v2758
          %v2760 = vrot.slane %v2753, %v2759
          %v2761 = vcombine.low %v1004, %v1005
          %v2763 = vunpack.c.l.s4 1983009808
          %v2764 = vunpack.c.0.s8 %v2763
          %v2765 = vlaneseq
          %v2766 = vshrl.u32 %v2765, 7
          %v2767 = vsub.s32 %v2764, %v2766
          %v2768 = vrot.slane %v2761, %v2767
          %v2769 = vcombine.low %v2744, %v2752
          %v2771 = vunpack.c.l.s4 1934713408
          %v2772 = vunpack.c.0.s8 %v2771
          %v2773 = vlaneseq
          %v2774 = vshrl.u32 %v2773, 7
          %v2775 = vsub.s32 %v2772, %v2774
          %v2776 = vrot.slane %v2769, %v2775
          %v2777 = vcombine.low %v2760, %v2768
          %v2779 = vunpack.c.l.s4 1934713408
          %v2780 = vunpack.c.0.s8 %v2779
          %v2781 = vlaneseq
          %v2782 = vshrl.u32 %v2781, 7
          %v2783 = vsub.s32 %v2780, %v2782
          %v2784 = vrot.slane %v2777, %v2783
          %v2785 = vcombine.low %v2776, %v2784
          %v2786 = vcombine.high %v2776, %v2784
          %v2789 = vpack.i.b16 %v2785, %v2735
          %v2791 = vshrl.u32 %v2735, 16
          %v2792 = vshrl.u32 %v2785, 16
          %v2793 = vpack.i.b16 %v2792, %v2791
          %v2797 = vpack.i.b16 %v2786, %v2736
          %v2799 = vshrl.u32 %v2736, 16
          %v2800 = vshrl.u32 %v2786, 16
          %v2801 = vpack.i.b16 %v2800, %v2799
          %vm2803 = vcmask 261120
          %2804 = vst.msk [vmem:[#allocation3] sm:$0xff] %vm2803, %v2789
          %2805 = vst.msk [vmem:[#allocation3 + $0x8] sm:$0xff] %vm2803, %v2793
          %2806 = vst.msk [vmem:[#allocation3 + $0x10] sm:$0xff] %vm2803, %v2797
          %2807 = vst.msk [vmem:[#allocation3 + $0x18] sm:$0xff] %vm2803, %v2801
        $region68: #{tpu_custom_call.1} parent=47 // pred_fallthru
          _
        %v2808 = vld [vmem:[#allocation7] sm:$0xf]
        %v2809 = vld [vmem:[#allocation7 + $0x4] sm:$0xf]
        %v2810 = vld [vmem:[#allocation7 + $0x8] sm:$0xf]
        %v2811 = vld [vmem:[#allocation7 + $0xc] sm:$0xf]
        %v2812 = vld [vmem:[#allocation7 + $0x10] sm:$0xf]
        %v2813 = vld [vmem:[#allocation7 + $0x14] sm:$0xf]
        %v2814 = vld [vmem:[#allocation7 + $0x18] sm:$0xf]
        %v2815 = vld [vmem:[#allocation7 + $0x1c] sm:$0xf]
        %v2816 = vld [vmem:[#allocation7 + $0x20] sm:$0xf]
        %v2817 = vld [vmem:[#allocation7 + $0x24] sm:$0xf]
        %v2818 = vld [vmem:[#allocation7 + $0x28] sm:$0xf]
        %v2819 = vld [vmem:[#allocation7 + $0x2c] sm:$0xf]
        %v2820 = vld [vmem:[#allocation7 + $0x30] sm:$0xf]
        %v2821 = vld [vmem:[#allocation7 + $0x34] sm:$0xf]
        %v2822 = vld [vmem:[#allocation7 + $0x38] sm:$0xf]
        %v2823 = vld [vmem:[#allocation7 + $0x3c] sm:$0xf]
        %v2824 = vld [vmem:[%s2] sm:$0x1]
        %v2826 = vlaneseq
        %v2827 = vshrl.u32 %v2826, 7
        %v2828 = vsub.s32 0, %v2827
        %v2829 = vrot.slane %v2824, %v2828
        %v2847 = vunpack.c.l.b16 %v2808
        %v2848 = vunpack.c.l.b16 %v2809
        %v2849 = vunpack.c.l.b16 %v2810
        %v2850 = vunpack.c.l.b16 %v2811
        %v2851 = vunpack.c.l.b16 %v2812
        %v2852 = vunpack.c.l.b16 %v2813
        %v2853 = vunpack.c.l.b16 %v2814
        %v2854 = vunpack.c.l.b16 %v2815
        %v2855 = vunpack.c.l.b16 %v2816
        %v2856 = vunpack.c.l.b16 %v2817
        %v2857 = vunpack.c.l.b16 %v2818
        %v2858 = vunpack.c.l.b16 %v2819
        %v2859 = vunpack.c.l.b16 %v2820
        %v2860 = vunpack.c.l.b16 %v2821
        %v2861 = vunpack.c.l.b16 %v2822
        %v2862 = vunpack.c.l.b16 %v2823
        %v2863 = vpack.c.b16 %v2848, %v2847
        %v2864 = vpack.c.b16 %v2850, %v2849
        %v2865 = vpack.c.b16 %v2852, %v2851
        %v2866 = vpack.c.b16 %v2854, %v2853
        %v2867 = vpack.c.b16 %v2856, %v2855
        %v2868 = vpack.c.b16 %v2858, %v2857
        %v2869 = vpack.c.b16 %v2860, %v2859
        %v2870 = vpack.c.b16 %v2862, %v2861
        %2879 = vmatprep.subr.bf16.mxu0 0
        %2880 = vmatpush1.bf16.msra.mxu0 %v2863
        %2881 = vmatprep.subr.bf16.mxu0 0
        %2882 = vmatpush1.bf16.msra.mxu0 %v2864
        %2883 = vmatprep.subr.bf16.mxu0 0
        %2884 = vmatpush1.bf16.msra.mxu0 %v2865
        %2885 = vmatprep.subr.bf16.mxu0 0
        %2886 = vmatpush1.bf16.msra.mxu0 %v2866
        %2887 = vmatprep.subr.bf16.mxu0 0
        %2888 = vmatpush1.bf16.msra.mxu0 %v2867
        %2889 = vmatprep.subr.bf16.mxu0 0
        %2890 = vmatpush1.bf16.msra.mxu0 %v2868
        %2891 = vmatprep.subr.bf16.mxu0 0
        %2892 = vmatpush1.bf16.msra.mxu0 %v2869
        %2893 = vmatprep.subr.bf16.mxu0 0
        %2894 = vmatpush1.bf16.msra.mxu0 %v2870
        %2895 = vmatprep.subr.bf16.mxu0 0
        %2896 = vmatpush1.bf16.msra.mxu0 0
        %2897 = vmatprep.subr.bf16.mxu0 0
        %2898 = vmatpush1.bf16.msra.mxu0 0
        %2899 = vmatprep.subr.bf16.mxu0 0
        %2900 = vmatpush1.bf16.msra.mxu0 0
        %2901 = vmatprep.subr.bf16.mxu0 0
        %2902 = vmatpush1.bf16.msra.mxu0 0
        %2903 = vmatprep.subr.bf16.mxu0 0
        %2904 = vmatpush1.bf16.msra.mxu0 0
        %2905 = vmatprep.subr.bf16.mxu0 0
        %2906 = vmatpush1.bf16.msra.mxu0 0
        %2907 = vmatprep.subr.bf16.mxu0 0
        %2908 = vmatpush1.bf16.msra.mxu0 0
        %2909 = vmatprep.subr.bf16.mxu0 0
        %2910 = vmatpush1.bf16.msra.mxu0 0
        %2911 = vmatprep.mubr.bf16.mxu0 0
        %2912 = vmatmul.mubr.bf16.gmra.mrb[0].mxu0 %v432
        %v2913 = vpop.f32.mrb[0].mxu0
        %v2914 = vadd.f32 %v2829, %v2913
        %v2915 = vpop.f32.mrb[0].mxu0
        %v2916 = vpop.f32.mrb[0].mxu0
        %v2917 = vadd.f32 %v2829, %v2916
        %v2918 = vpop.f32.mrb[0].mxu0
        %2919 = vdwg.mxu0
        %v2920 = vmul.f32 %v2914, 0.17677669
        %v2921 = vmul.f32 %v2917, 0.17677669
        %v2922 = vpack.c.bf16 %v2921, %v2920
        %2924 = vrot.lane.b32.xlu0 %v2922, 96
        %v2925 = vpop.permute.xlu0 %2924
        %2926 = vrot.lane.b32.xlu0 %v2922, 64
        %v2927 = vpop.permute.xlu0 %2926
        %2928 = vrot.lane.b32.xlu0 %v2922, 32
        %v2929 = vpop.permute.xlu0 %2928
        %v2932 = vpack.i.b16 %v2925, %v2922
        %v2934 = vshrl.u32 %v2922, 16
        %v2935 = vshrl.u32 %v2925, 16
        %v2936 = vpack.i.b16 %v2935, %v2934
        %v2940 = vpack.i.b16 %v2929, %v2927
        %v2942 = vshrl.u32 %v2927, 16
        %v2943 = vshrl.u32 %v2929, 16
        %v2944 = vpack.i.b16 %v2943, %v2942
        %v2947 = vpack.i.b16 0, 0
        %v2949 = vshrl.u32 0, 16
        %v2950 = vpack.i.b16 %v2949, %v2949
        %v2952 = vcombine.high %v2932, %v2947
        %v2954 = vunpack.c.l.s4 1983009808
        %v2955 = vunpack.c.0.s8 %v2954
        %v2956 = vlaneseq
        %v2957 = vshrl.u32 %v2956, 7
        %v2958 = vsub.s32 %v2955, %v2957
        %v2959 = vrot.slane %v2932, %v2958
        %v2961 = vunpack.c.l.s4 1983009808
        %v2962 = vunpack.c.0.s8 %v2961
        %v2963 = vlaneseq
        %v2964 = vshrl.u32 %v2963, 7
        %v2965 = vsub.s32 %v2962, %v2964
        %v2966 = vrot.slane %v2952, %v2965
        %v2967 = vcombine.high %v2940, %v2947
        %v2969 = vunpack.c.l.s4 1983009808
        %v2970 = vunpack.c.0.s8 %v2969
        %v2971 = vlaneseq
        %v2972 = vshrl.u32 %v2971, 7
        %v2973 = vsub.s32 %v2970, %v2972
        %v2974 = vrot.slane %v2940, %v2973
        %v2976 = vunpack.c.l.s4 1983009808
        %v2977 = vunpack.c.0.s8 %v2976
        %v2978 = vlaneseq
        %v2979 = vshrl.u32 %v2978, 7
        %v2980 = vsub.s32 %v2977, %v2979
        %v2981 = vrot.slane %v2967, %v2980
        %v2982 = vcombine.low %v2959, %v2974
        %v2983 = vcombine.high %v2959, %v2974
        %v2985 = vunpack.c.l.s4 1934713408
        %v2986 = vunpack.c.0.s8 %v2985
        %v2987 = vlaneseq
        %v2988 = vshrl.u32 %v2987, 7
        %v2989 = vsub.s32 %v2986, %v2988
        %v2990 = vrot.slane %v2982, %v2989
        %v2992 = vunpack.c.l.s4 1934713408
        %v2993 = vunpack.c.0.s8 %v2992
        %v2994 = vlaneseq
        %v2995 = vshrl.u32 %v2994, 7
        %v2996 = vsub.s32 %v2993, %v2995
        %v2997 = vrot.slane %v2983, %v2996
        %v2998 = vcombine.low %v2966, %v2981
        %v2999 = vcombine.high %v2966, %v2981
        %v3001 = vunpack.c.l.s4 1934713408
        %v3002 = vunpack.c.0.s8 %v3001
        %v3003 = vlaneseq
        %v3004 = vshrl.u32 %v3003, 7
        %v3005 = vsub.s32 %v3002, %v3004
        %v3006 = vrot.slane %v2998, %v3005
        %v3008 = vunpack.c.l.s4 1934713408
        %v3009 = vunpack.c.0.s8 %v3008
        %v3010 = vlaneseq
        %v3011 = vshrl.u32 %v3010, 7
        %v3012 = vsub.s32 %v3009, %v3011
        %v3013 = vrot.slane %v2999, %v3012
        %v3014 = vcombine.high %v2990, 0
        %v3015 = vcombine.high %v2997, 0
        %v3016 = vcombine.high %v3006, 0
        %v3017 = vcombine.high %v3013, 0
        %v3018 = vcombine.high %v2936, %v2950
        %v3020 = vunpack.c.l.s4 1983009808
        %v3021 = vunpack.c.0.s8 %v3020
        %v3022 = vlaneseq
        %v3023 = vshrl.u32 %v3022, 7
        %v3024 = vsub.s32 %v3021, %v3023
        %v3025 = vrot.slane %v2936, %v3024
        %v3027 = vunpack.c.l.s4 1983009808
        %v3028 = vunpack.c.0.s8 %v3027
        %v3029 = vlaneseq
        %v3030 = vshrl.u32 %v3029, 7
        %v3031 = vsub.s32 %v3028, %v3030
        %v3032 = vrot.slane %v3018, %v3031
        %v3033 = vcombine.high %v2944, %v2950
        %v3035 = vunpack.c.l.s4 1983009808
        %v3036 = vunpack.c.0.s8 %v3035
        %v3037 = vlaneseq
        %v3038 = vshrl.u32 %v3037, 7
        %v3039 = vsub.s32 %v3036, %v3038
        %v3040 = vrot.slane %v2944, %v3039
        %v3042 = vunpack.c.l.s4 1983009808
        %v3043 = vunpack.c.0.s8 %v3042
        %v3044 = vlaneseq
        %v3045 = vshrl.u32 %v3044, 7
        %v3046 = vsub.s32 %v3043, %v3045
        %v3047 = vrot.slane %v3033, %v3046
        %v3048 = vcombine.low %v3025, %v3040
        %v3049 = vcombine.high %v3025, %v3040
        %v3051 = vunpack.c.l.s4 1934713408
        %v3052 = vunpack.c.0.s8 %v3051
        %v3053 = vlaneseq
        %v3054 = vshrl.u32 %v3053, 7
        %v3055 = vsub.s32 %v3052, %v3054
        %v3056 = vrot.slane %v3048, %v3055
        %v3058 = vunpack.c.l.s4 1934713408
        %v3059 = vunpack.c.0.s8 %v3058
        %v3060 = vlaneseq
        %v3061 = vshrl.u32 %v3060, 7
        %v3062 = vsub.s32 %v3059, %v3061
        %v3063 = vrot.slane %v3049, %v3062
        %v3064 = vcombine.low %v3032, %v3047
        %v3065 = vcombine.high %v3032, %v3047
        %v3067 = vunpack.c.l.s4 1934713408
        %v3068 = vunpack.c.0.s8 %v3067
        %v3069 = vlaneseq
        %v3070 = vshrl.u32 %v3069, 7
        %v3071 = vsub.s32 %v3068, %v3070
        %v3072 = vrot.slane %v3064, %v3071
        %v3074 = vunpack.c.l.s4 1934713408
        %v3075 = vunpack.c.0.s8 %v3074
        %v3076 = vlaneseq
        %v3077 = vshrl.u32 %v3076, 7
        %v3078 = vsub.s32 %v3075, %v3077
        %v3079 = vrot.slane %v3065, %v3078
        %v3080 = vcombine.high %v3056, 0
        %v3081 = vcombine.high %v3063, 0
        %v3082 = vcombine.high %v3072, 0
        %v3083 = vcombine.high %v3079, 0
        %v3084 = vcombine.low %v2990, %v2997
        %v3086 = vunpack.c.l.s4 1983009808
        %v3087 = vunpack.c.0.s8 %v3086
        %v3088 = vlaneseq
        %v3089 = vshrl.u32 %v3088, 7
        %v3090 = vsub.s32 %v3087, %v3089
        %v3091 = vrot.slane %v3084, %v3090
        %v3092 = vcombine.low %v3014, %v3015
        %v3094 = vunpack.c.l.s4 1983009808
        %v3095 = vunpack.c.0.s8 %v3094
        %v3096 = vlaneseq
        %v3097 = vshrl.u32 %v3096, 7
        %v3098 = vsub.s32 %v3095, %v3097
        %v3099 = vrot.slane %v3092, %v3098
        %v3100 = vcombine.low %v3006, %v3013
        %v3102 = vunpack.c.l.s4 1983009808
        %v3103 = vunpack.c.0.s8 %v3102
        %v3104 = vlaneseq
        %v3105 = vshrl.u32 %v3104, 7
        %v3106 = vsub.s32 %v3103, %v3105
        %v3107 = vrot.slane %v3100, %v3106
        %v3108 = vcombine.low %v3016, %v3017
        %v3110 = vunpack.c.l.s4 1983009808
        %v3111 = vunpack.c.0.s8 %v3110
        %v3112 = vlaneseq
        %v3113 = vshrl.u32 %v3112, 7
        %v3114 = vsub.s32 %v3111, %v3113
        %v3115 = vrot.slane %v3108, %v3114
        %v3116 = vcombine.low %v3091, %v3099
        %v3118 = vunpack.c.l.s4 1934713408
        %v3119 = vunpack.c.0.s8 %v3118
        %v3120 = vlaneseq
        %v3121 = vshrl.u32 %v3120, 7
        %v3122 = vsub.s32 %v3119, %v3121
        %v3123 = vrot.slane %v3116, %v3122
        %v3124 = vcombine.low %v3107, %v3115
        %v3126 = vunpack.c.l.s4 1934713408
        %v3127 = vunpack.c.0.s8 %v3126
        %v3128 = vlaneseq
        %v3129 = vshrl.u32 %v3128, 7
        %v3130 = vsub.s32 %v3127, %v3129
        %v3131 = vrot.slane %v3124, %v3130
        %v3132 = vcombine.low %v3123, %v3131
        %v3133 = vcombine.high %v3123, %v3131
        %v3134 = vcombine.low %v3056, %v3063
        %v3136 = vunpack.c.l.s4 1983009808
        %v3137 = vunpack.c.0.s8 %v3136
        %v3138 = vlaneseq
        %v3139 = vshrl.u32 %v3138, 7
        %v3140 = vsub.s32 %v3137, %v3139
        %v3141 = vrot.slane %v3134, %v3140
        %v3142 = vcombine.low %v3080, %v3081
        %v3144 = vunpack.c.l.s4 1983009808
        %v3145 = vunpack.c.0.s8 %v3144
        %v3146 = vlaneseq
        %v3147 = vshrl.u32 %v3146, 7
        %v3148 = vsub.s32 %v3145, %v3147
        %v3149 = vrot.slane %v3142, %v3148
        %v3150 = vcombine.low %v3072, %v3079
        %v3152 = vunpack.c.l.s4 1983009808
        %v3153 = vunpack.c.0.s8 %v3152
        %v3154 = vlaneseq
        %v3155 = vshrl.u32 %v3154, 7
        %v3156 = vsub.s32 %v3153, %v3155
        %v3157 = vrot.slane %v3150, %v3156
        %v3158 = vcombine.low %v3082, %v3083
        %v3160 = vunpack.c.l.s4 1983009808
        %v3161 = vunpack.c.0.s8 %v3160
        %v3162 = vlaneseq
        %v3163 = vshrl.u32 %v3162, 7
        %v3164 = vsub.s32 %v3161, %v3163
        %v3165 = vrot.slane %v3158, %v3164
        %v3166 = vcombine.low %v3141, %v3149
        %v3168 = vunpack.c.l.s4 1934713408
        %v3169 = vunpack.c.0.s8 %v3168
        %v3170 = vlaneseq
        %v3171 = vshrl.u32 %v3170, 7
        %v3172 = vsub.s32 %v3169, %v3171
        %v3173 = vrot.slane %v3166, %v3172
        %v3174 = vcombine.low %v3157, %v3165
        %v3176 = vunpack.c.l.s4 1934713408
        %v3177 = vunpack.c.0.s8 %v3176
        %v3178 = vlaneseq
        %v3179 = vshrl.u32 %v3178, 7
        %v3180 = vsub.s32 %v3177, %v3179
        %v3181 = vrot.slane %v3174, %v3180
        %v3182 = vcombine.low %v3173, %v3181
        %v3183 = vcombine.high %v3173, %v3181
        %v3186 = vpack.i.b16 %v3182, %v3132
        %v3187 = vshrl.u32 %v3132, 16
        %v3188 = vshrl.u32 %v3182, 16
        %v3189 = vpack.i.b16 %v3188, %v3187
        %v3192 = vpack.i.b16 %v3183, %v3133
        %v3193 = vshrl.u32 %v3133, 16
        %v3194 = vshrl.u32 %v3183, 16
        %v3195 = vpack.i.b16 %v3194, %v3193
        %v3196 = vld [vmem:[#allocation2] sm:$0xff]
        %v3197 = vld [vmem:[#allocation2 + $0x8] sm:$0xff]
        %v3198 = vld [vmem:[#allocation2 + $0x10] sm:$0xff]
        %v3199 = vld [vmem:[#allocation2 + $0x18] sm:$0xff]
        %v3200 = vld [vmem:[#allocation2 + $0x20] sm:$0xff]
        %v3201 = vld [vmem:[#allocation2 + $0x28] sm:$0xff]
        %v3202 = vld [vmem:[#allocation2 + $0x30] sm:$0xff]
        %v3203 = vld [vmem:[#allocation2 + $0x38] sm:$0xff]
        %vm3204 = vcmask 261120
        %v3206 = vsel %vm3204, %v3186, 0
        %3208 = vmatprep.subr.bf16.mxu0 0
        %3209 = vmatpush1.bf16.msra.mxu0 %v3196
        %3210 = vmatprep.subr.bf16.mxu0 0
        %3211 = vmatpush1.bf16.msra.mxu0 %v3197
        %3212 = vmatprep.subr.bf16.mxu0 0
        %3213 = vmatpush1.bf16.msra.mxu0 0
        %3214 = vmatprep.subr.bf16.mxu0 0
        %3215 = vmatpush1.bf16.msra.mxu0 0
        %3216 = vmatprep.subr.bf16.mxu0 0
        %3217 = vmatpush1.bf16.msra.mxu0 0
        %3218 = vmatprep.subr.bf16.mxu0 0
        %3219 = vmatpush1.bf16.msra.mxu0 0
        %3220 = vmatprep.subr.bf16.mxu0 0
        %3221 = vmatpush1.bf16.msra.mxu0 0
        %3222 = vmatprep.subr.bf16.mxu0 0
        %3223 = vmatpush1.bf16.msra.mxu0 0
        %3224 = vmatprep.subr.bf16.mxu0 0
        %3225 = vmatpush1.bf16.msra.mxu0 0
        %3226 = vmatprep.subr.bf16.mxu0 0
        %3227 = vmatpush1.bf16.msra.mxu0 0
        %3228 = vmatprep.subr.bf16.mxu0 0
        %3229 = vmatpush1.bf16.msra.mxu0 0
        %3230 = vmatprep.subr.bf16.mxu0 0
        %3231 = vmatpush1.bf16.msra.mxu0 0
        %3232 = vmatprep.subr.bf16.mxu0 0
        %3233 = vmatpush1.bf16.msra.mxu0 0
        %3234 = vmatprep.subr.bf16.mxu0 0
        %3235 = vmatpush1.bf16.msra.mxu0 0
        %3236 = vmatprep.subr.bf16.mxu0 0
        %3237 = vmatpush1.bf16.msra.mxu0 0
        %3238 = vmatprep.subr.bf16.mxu0 0
        %3239 = vmatpush1.bf16.msra.mxu0 0
        %3240 = vmatprep.mubr.bf16.mxu0 0
        %3241 = vmatmul.mubr.bf16.gmra.mrb[0].mxu0 %v3206
        %v3242 = vpop.f32.mrb[0].mxu0
        %v3243 = vadd.f32 0.0, %v3242
        %v3244 = vpop.f32.mrb[0].mxu0
        %v3245 = vpop.f32.mrb[0].mxu0
        %v3246 = vadd.f32 0.0, %v3245
        %v3247 = vpop.f32.mrb[0].mxu0
        %3248 = vdwg.mxu0
        %v3250 = vsel %vm3204, %v3189, 0
        %3252 = vmatprep.subr.bf16.mxu0 0
        %3253 = vmatpush1.bf16.msra.mxu0 %v3198
        %3254 = vmatprep.subr.bf16.mxu0 0
        %3255 = vmatpush1.bf16.msra.mxu0 %v3199
        %3256 = vmatprep.subr.bf16.mxu0 0
        %3257 = vmatpush1.bf16.msra.mxu0 0
        %3258 = vmatprep.subr.bf16.mxu0 0
        %3259 = vmatpush1.bf16.msra.mxu0 0
        %3260 = vmatprep.subr.bf16.mxu0 0
        %3261 = vmatpush1.bf16.msra.mxu0 0
        %3262 = vmatprep.subr.bf16.mxu0 0
        %3263 = vmatpush1.bf16.msra.mxu0 0
        %3264 = vmatprep.subr.bf16.mxu0 0
        %3265 = vmatpush1.bf16.msra.mxu0 0
        %3266 = vmatprep.subr.bf16.mxu0 0
        %3267 = vmatpush1.bf16.msra.mxu0 0
        %3268 = vmatprep.subr.bf16.mxu0 0
        %3269 = vmatpush1.bf16.msra.mxu0 0
        %3270 = vmatprep.subr.bf16.mxu0 0
        %3271 = vmatpush1.bf16.msra.mxu0 0
        %3272 = vmatprep.subr.bf16.mxu0 0
        %3273 = vmatpush1.bf16.msra.mxu0 0
        %3274 = vmatprep.subr.bf16.mxu0 0
        %3275 = vmatpush1.bf16.msra.mxu0 0
        %3276 = vmatprep.subr.bf16.mxu0 0
        %3277 = vmatpush1.bf16.msra.mxu0 0
        %3278 = vmatprep.subr.bf16.mxu0 0
        %3279 = vmatpush1.bf16.msra.mxu0 0
        %3280 = vmatprep.subr.bf16.mxu0 0
        %3281 = vmatpush1.bf16.msra.mxu0 0
        %3282 = vmatprep.subr.bf16.mxu0 0
        %3283 = vmatpush1.bf16.msra.mxu0 0
        %3284 = vmatprep.mubr.bf16.mxu0 0
        %3285 = vmatmul.mubr.bf16.gmra.mrb[0].mxu0 %v3250
        %v3286 = vpop.f32.mrb[0].mxu0
        %v3287 = vadd.f32 0.0, %v3286
        %v3288 = vpop.f32.mrb[0].mxu0
        %v3289 = vpop.f32.mrb[0].mxu0
        %v3290 = vadd.f32 0.0, %v3289
        %v3291 = vpop.f32.mrb[0].mxu0
        %3292 = vdwg.mxu0
        %v3294 = vsel %vm3204, %v3192, 0
        %3296 = vmatprep.subr.bf16.mxu0 0
        %3297 = vmatpush1.bf16.msra.mxu0 %v3200
        %3298 = vmatprep.subr.bf16.mxu0 0
        %3299 = vmatpush1.bf16.msra.mxu0 %v3201
        %3300 = vmatprep.subr.bf16.mxu0 0
        %3301 = vmatpush1.bf16.msra.mxu0 0
        %3302 = vmatprep.subr.bf16.mxu0 0
        %3303 = vmatpush1.bf16.msra.mxu0 0
        %3304 = vmatprep.subr.bf16.mxu0 0
        %3305 = vmatpush1.bf16.msra.mxu0 0
        %3306 = vmatprep.subr.bf16.mxu0 0
        %3307 = vmatpush1.bf16.msra.mxu0 0
        %3308 = vmatprep.subr.bf16.mxu0 0
        %3309 = vmatpush1.bf16.msra.mxu0 0
        %3310 = vmatprep.subr.bf16.mxu0 0
        %3311 = vmatpush1.bf16.msra.mxu0 0
        %3312 = vmatprep.subr.bf16.mxu0 0
        %3313 = vmatpush1.bf16.msra.mxu0 0
        %3314 = vmatprep.subr.bf16.mxu0 0
        %3315 = vmatpush1.bf16.msra.mxu0 0
        %3316 = vmatprep.subr.bf16.mxu0 0
        %3317 = vmatpush1.bf16.msra.mxu0 0
        %3318 = vmatprep.subr.bf16.mxu0 0
        %3319 = vmatpush1.bf16.msra.mxu0 0
        %3320 = vmatprep.subr.bf16.mxu0 0
        %3321 = vmatpush1.bf16.msra.mxu0 0
        %3322 = vmatprep.subr.bf16.mxu0 0
        %3323 = vmatpush1.bf16.msra.mxu0 0
        %3324 = vmatprep.subr.bf16.mxu0 0
        %3325 = vmatpush1.bf16.msra.mxu0 0
        %3326 = vmatprep.subr.bf16.mxu0 0
        %3327 = vmatpush1.bf16.msra.mxu0 0
        %3328 = vmatprep.mubr.bf16.mxu0 0
        %3329 = vmatmul.mubr.bf16.gmra.mrb[0].mxu0 %v3294
        %v3330 = vpop.f32.mrb[0].mxu0
        %v3331 = vadd.f32 0.0, %v3330
        %v3332 = vpop.f32.mrb[0].mxu0
        %v3333 = vpop.f32.mrb[0].mxu0
        %v3334 = vadd.f32 0.0, %v3333
        %v3335 = vpop.f32.mrb[0].mxu0
        %3336 = vdwg.mxu0
        %v3338 = vsel %vm3204, %v3195, 0
        %3340 = vmatprep.subr.bf16.mxu0 0
        %3341 = vmatpush1.bf16.msra.mxu0 %v3202
        %3342 = vmatprep.subr.bf16.mxu0 0
        %3343 = vmatpush1.bf16.msra.mxu0 %v3203
        %3344 = vmatprep.subr.bf16.mxu0 0
        %3345 = vmatpush1.bf16.msra.mxu0 0
        %3346 = vmatprep.subr.bf16.mxu0 0
        %3347 = vmatpush1.bf16.msra.mxu0 0
        %3348 = vmatprep.subr.bf16.mxu0 0
        %3349 = vmatpush1.bf16.msra.mxu0 0
        %3350 = vmatprep.subr.bf16.mxu0 0
        %3351 = vmatpush1.bf16.msra.mxu0 0
        %3352 = vmatprep.subr.bf16.mxu0 0
        %3353 = vmatpush1.bf16.msra.mxu0 0
        %3354 = vmatprep.subr.bf16.mxu0 0
        %3355 = vmatpush1.bf16.msra.mxu0 0
        %3356 = vmatprep.subr.bf16.mxu0 0
        %3357 = vmatpush1.bf16.msra.mxu0 0
        %3358 = vmatprep.subr.bf16.mxu0 0
        %3359 = vmatpush1.bf16.msra.mxu0 0
        %3360 = vmatprep.subr.bf16.mxu0 0
        %3361 = vmatpush1.bf16.msra.mxu0 0
        %3362 = vmatprep.subr.bf16.mxu0 0
        %3363 = vmatpush1.bf16.msra.mxu0 0
        %3364 = vmatprep.subr.bf16.mxu0 0
        %3365 = vmatpush1.bf16.msra.mxu0 0
        %3366 = vmatprep.subr.bf16.mxu0 0
        %3367 = vmatpush1.bf16.msra.mxu0 0
        %3368 = vmatprep.subr.bf16.mxu0 0
        %3369 = vmatpush1.bf16.msra.mxu0 0
        %3370 = vmatprep.subr.bf16.mxu0 0
        %3371 = vmatpush1.bf16.msra.mxu0 0
        %3372 = vmatprep.mubr.bf16.mxu0 0
        %3373 = vmatmul.mubr.bf16.gmra.mrb[0].mxu0 %v3338
        %v3374 = vpop.f32.mrb[0].mxu0
        %v3375 = vadd.f32 0.0, %v3374
        %v3376 = vpop.f32.mrb[0].mxu0
        %v3377 = vpop.f32.mrb[0].mxu0
        %v3378 = vadd.f32 0.0, %v3377
        %v3379 = vpop.f32.mrb[0].mxu0
        %3380 = vdwg.mxu0
        %vm3381 = vcmask 130048
        %v3382 = vsel %vm3381, %v3243, -inf
        %3383 = vmax.xlane.f32.xlu0 %v3382
        %v3384 = vpop.xlane.xlu0 %3383
        %v3385 = vsel %vm3381, %v3246, -inf
        %3386 = vmax.xlane.f32.xlu0 %v3385
        %v3387 = vpop.xlane.xlu0 %3386
        %v3388 = vsel %vm3381, %v3287, -inf
        %3389 = vmax.xlane.f32.xlu0 %v3388
        %v3390 = vpop.xlane.xlu0 %3389
        %v3391 = vsel %vm3381, %v3290, -inf
        %3392 = vmax.xlane.f32.xlu0 %v3391
        %v3393 = vpop.xlane.xlu0 %3392
        %v3394 = vsel %vm3381, %v3331, -inf
        %3395 = vmax.xlane.f32.xlu0 %v3394
        %v3396 = vpop.xlane.xlu0 %3395
        %v3397 = vsel %vm3381, %v3334, -inf
        %3398 = vmax.xlane.f32.xlu0 %v3397
        %v3399 = vpop.xlane.xlu0 %3398
        %v3400 = vsel %vm3381, %v3375, -inf
        %3401 = vmax.xlane.f32.xlu0 %v3400
        %v3402 = vpop.xlane.xlu0 %3401
        %v3403 = vsel %vm3381, %v3378, -inf
        %3404 = vmax.xlane.f32.xlu0 %v3403
        %v3405 = vpop.xlane.xlu0 %3404
        %v3406 = vsub.f32 %v3243, %v3384
        %v3407 = vsub.f32 %v3246, %v3387
        %v3408 = vsub.f32 %v3287, %v3390
        %v3409 = vsub.f32 %v3290, %v3393
        %v3410 = vsub.f32 %v3331, %v3396
        %v3411 = vsub.f32 %v3334, %v3399
        %v3412 = vsub.f32 %v3375, %v3402
        %v3413 = vsub.f32 %v3378, %v3405
        %v3414 = vmul.f32 %v3406, 1.442695
        %v3415 = vpow.pop %v3414
        %v3416 = vmul.f32 %v3407, 1.442695
        %v3417 = vpow.pop %v3416
        %v3418 = vmul.f32 %v3408, 1.442695
        %v3419 = vpow.pop %v3418
        %v3420 = vmul.f32 %v3409, 1.442695
        %v3421 = vpow.pop %v3420
        %v3422 = vmul.f32 %v3410, 1.442695
        %v3423 = vpow.pop %v3422
        %v3424 = vmul.f32 %v3411, 1.442695
        %v3425 = vpow.pop %v3424
        %v3426 = vmul.f32 %v3412, 1.442695
        %v3427 = vpow.pop %v3426
        %v3428 = vmul.f32 %v3413, 1.442695
        %v3429 = vpow.pop %v3428
        %v3430 = vsel %vm3381, %v3415, 0.0
        %3431 = vadd.xlane.f32.xlu0 %v3430
        %v3432 = vpop.xlane.xlu0 %3431
        %v3433 = vsel %vm3381, %v3417, 0.0
        %3434 = vadd.xlane.f32.xlu0 %v3433
        %v3435 = vpop.xlane.xlu0 %3434
        %v3436 = vsel %vm3381, %v3419, 0.0
        %3437 = vadd.xlane.f32.xlu0 %v3436
        %v3438 = vpop.xlane.xlu0 %3437
        %v3439 = vsel %vm3381, %v3421, 0.0
        %3440 = vadd.xlane.f32.xlu0 %v3439
        %v3441 = vpop.xlane.xlu0 %3440
        %v3442 = vsel %vm3381, %v3423, 0.0
        %3443 = vadd.xlane.f32.xlu0 %v3442
        %v3444 = vpop.xlane.xlu0 %3443
        %v3445 = vsel %vm3381, %v3425, 0.0
        %3446 = vadd.xlane.f32.xlu0 %v3445
        %v3447 = vpop.xlane.xlu0 %3446
        %v3448 = vsel %vm3381, %v3427, 0.0
        %3449 = vadd.xlane.f32.xlu0 %v3448
        %v3450 = vpop.xlane.xlu0 %3449
        %v3451 = vsel %vm3381, %v3429, 0.0
        %3452 = vadd.xlane.f32.xlu0 %v3451
        %v3453 = vpop.xlane.xlu0 %3452
        %v3454 = vrcp.pop %v3432
        %v3455 = vrcp.pop %v3435
        %v3456 = vrcp.pop %v3438
        %v3457 = vrcp.pop %v3441
        %v3458 = vrcp.pop %v3444
        %v3459 = vrcp.pop %v3447
        %v3460 = vrcp.pop %v3450
        %v3461 = vrcp.pop %v3453
        %v3462 = vpack.c.bf16 %v3417, %v3415
        %v3463 = vpack.c.bf16 %v3421, %v3419
        %v3464 = vpack.c.bf16 %v3425, %v3423
        %v3465 = vpack.c.bf16 %v3429, %v3427
        %v3466 = vld [vmem:[#allocation3] sm:$0xff]
        %v3467 = vld [vmem:[#allocation3 + $0x8] sm:$0xff]
        %v3468 = vld [vmem:[#allocation3 + $0x10] sm:$0xff]
        %v3469 = vld [vmem:[#allocation3 + $0x18] sm:$0xff]
        %v3471 = vsel %vm3381, %v3462, 0
        %3473 = vmatprep.subr.bf16.mxu0 0
        %3474 = vmatpush1.bf16.msra.mxu0 %v3466
        %3475 = vmatprep.subr.bf16.mxu0 0
        %3476 = vmatpush1.bf16.msra.mxu0 0
        %3477 = vmatprep.subr.bf16.mxu0 0
        %3478 = vmatpush1.bf16.msra.mxu0 0
        %3479 = vmatprep.subr.bf16.mxu0 0
        %3480 = vmatpush1.bf16.msra.mxu0 0
        %3481 = vmatprep.subr.bf16.mxu0 0
        %3482 = vmatpush1.bf16.msra.mxu0 0
        %3483 = vmatprep.subr.bf16.mxu0 0
        %3484 = vmatpush1.bf16.msra.mxu0 0
        %3485 = vmatprep.subr.bf16.mxu0 0
        %3486 = vmatpush1.bf16.msra.mxu0 0
        %3487 = vmatprep.subr.bf16.mxu0 0
        %3488 = vmatpush1.bf16.msra.mxu0 0
        %3489 = vmatprep.subr.bf16.mxu0 0
        %3490 = vmatpush1.bf16.msra.mxu0 0
        %3491 = vmatprep.subr.bf16.mxu0 0
        %3492 = vmatpush1.bf16.msra.mxu0 0
        %3493 = vmatprep.subr.bf16.mxu0 0
        %3494 = vmatpush1.bf16.msra.mxu0 0
        %3495 = vmatprep.subr.bf16.mxu0 0
        %3496 = vmatpush1.bf16.msra.mxu0 0
        %3497 = vmatprep.subr.bf16.mxu0 0
        %3498 = vmatpush1.bf16.msra.mxu0 0
        %3499 = vmatprep.subr.bf16.mxu0 0
        %3500 = vmatpush1.bf16.msra.mxu0 0
        %3501 = vmatprep.subr.bf16.mxu0 0
        %3502 = vmatpush1.bf16.msra.mxu0 0
        %3503 = vmatprep.subr.bf16.mxu0 0
        %3504 = vmatpush1.bf16.msra.mxu0 0
        %3505 = vmatprep.mubr.bf16.mxu0 0
        %3506 = vmatmul.mubr.bf16.gmra.mrb[0].mxu0 %v3471
        %v3507 = vpop.f32.mrb[0].mxu0
        %v3508 = vadd.f32 0.0, %v3507
        %v3509 = vpop.f32.mrb[0].mxu0
        %v3510 = vpop.f32.mrb[0].mxu0
        %v3511 = vadd.f32 0.0, %v3510
        %v3512 = vpop.f32.mrb[0].mxu0
        %3513 = vdwg.mxu0
        %v3515 = vsel %vm3381, %v3463, 0
        %3517 = vmatprep.subr.bf16.mxu0 0
        %3518 = vmatpush1.bf16.msra.mxu0 %v3467
        %3519 = vmatprep.subr.bf16.mxu0 0
        %3520 = vmatpush1.bf16.msra.mxu0 0
        %3521 = vmatprep.subr.bf16.mxu0 0
        %3522 = vmatpush1.bf16.msra.mxu0 0
        %3523 = vmatprep.subr.bf16.mxu0 0
        %3524 = vmatpush1.bf16.msra.mxu0 0
        %3525 = vmatprep.subr.bf16.mxu0 0
        %3526 = vmatpush1.bf16.msra.mxu0 0
        %3527 = vmatprep.subr.bf16.mxu0 0
        %3528 = vmatpush1.bf16.msra.mxu0 0
        %3529 = vmatprep.subr.bf16.mxu0 0
        %3530 = vmatpush1.bf16.msra.mxu0 0
        %3531 = vmatprep.subr.bf16.mxu0 0
        %3532 = vmatpush1.bf16.msra.mxu0 0
        %3533 = vmatprep.subr.bf16.mxu0 0
        %3534 = vmatpush1.bf16.msra.mxu0 0
        %3535 = vmatprep.subr.bf16.mxu0 0
        %3536 = vmatpush1.bf16.msra.mxu0 0
        %3537 = vmatprep.subr.bf16.mxu0 0
        %3538 = vmatpush1.bf16.msra.mxu0 0
        %3539 = vmatprep.subr.bf16.mxu0 0
        %3540 = vmatpush1.bf16.msra.mxu0 0
        %3541 = vmatprep.subr.bf16.mxu0 0
        %3542 = vmatpush1.bf16.msra.mxu0 0
        %3543 = vmatprep.subr.bf16.mxu0 0
        %3544 = vmatpush1.bf16.msra.mxu0 0
        %3545 = vmatprep.subr.bf16.mxu0 0
        %3546 = vmatpush1.bf16.msra.mxu0 0
        %3547 = vmatprep.subr.bf16.mxu0 0
        %3548 = vmatpush1.bf16.msra.mxu0 0
        %3549 = vmatprep.mubr.bf16.mxu0 0
        %3550 = vmatmul.mubr.bf16.gmra.mrb[0].mxu0 %v3515
        %v3551 = vpop.f32.mrb[0].mxu0
        %v3552 = vadd.f32 0.0, %v3551
        %v3553 = vpop.f32.mrb[0].mxu0
        %v3554 = vpop.f32.mrb[0].mxu0
        %v3555 = vadd.f32 0.0, %v3554
        %v3556 = vpop.f32.mrb[0].mxu0
        %3557 = vdwg.mxu0
        %v3559 = vsel %vm3381, %v3464, 0
        %3561 = vmatprep.subr.bf16.mxu0 0
        %3562 = vmatpush1.bf16.msra.mxu0 %v3468
        %3563 = vmatprep.subr.bf16.mxu0 0
        %3564 = vmatpush1.bf16.msra.mxu0 0
        %3565 = vmatprep.subr.bf16.mxu0 0
        %3566 = vmatpush1.bf16.msra.mxu0 0
        %3567 = vmatprep.subr.bf16.mxu0 0
        %3568 = vmatpush1.bf16.msra.mxu0 0
        %3569 = vmatprep.subr.bf16.mxu0 0
        %3570 = vmatpush1.bf16.msra.mxu0 0
        %3571 = vmatprep.subr.bf16.mxu0 0
        %3572 = vmatpush1.bf16.msra.mxu0 0
        %3573 = vmatprep.subr.bf16.mxu0 0
        %3574 = vmatpush1.bf16.msra.mxu0 0
        %3575 = vmatprep.subr.bf16.mxu0 0
        %3576 = vmatpush1.bf16.msra.mxu0 0
        %3577 = vmatprep.subr.bf16.mxu0 0
        %3578 = vmatpush1.bf16.msra.mxu0 0
        %3579 = vmatprep.subr.bf16.mxu0 0
        %3580 = vmatpush1.bf16.msra.mxu0 0
        %3581 = vmatprep.subr.bf16.mxu0 0
        %3582 = vmatpush1.bf16.msra.mxu0 0
        %3583 = vmatprep.subr.bf16.mxu0 0
        %3584 = vmatpush1.bf16.msra.mxu0 0
        %3585 = vmatprep.subr.bf16.mxu0 0
        %3586 = vmatpush1.bf16.msra.mxu0 0
        %3587 = vmatprep.subr.bf16.mxu0 0
        %3588 = vmatpush1.bf16.msra.mxu0 0
        %3589 = vmatprep.subr.bf16.mxu0 0
        %3590 = vmatpush1.bf16.msra.mxu0 0
        %3591 = vmatprep.subr.bf16.mxu0 0
        %3592 = vmatpush1.bf16.msra.mxu0 0
        %3593 = vmatprep.mubr.bf16.mxu0 0
        %3594 = vmatmul.mubr.bf16.gmra.mrb[0].mxu0 %v3559
        %v3595 = vpop.f32.mrb[0].mxu0
        %v3596 = vadd.f32 0.0, %v3595
        %v3597 = vpop.f32.mrb[0].mxu0
        %v3598 = vpop.f32.mrb[0].mxu0
        %v3599 = vadd.f32 0.0, %v3598
        %v3600 = vpop.f32.mrb[0].mxu0
        %3601 = vdwg.mxu0
        %v3603 = vsel %vm3381, %v3465, 0
        %3605 = vmatprep.subr.bf16.mxu0 0
        %3606 = vmatpush1.bf16.msra.mxu0 %v3469
        %3607 = vmatprep.subr.bf16.mxu0 0
        %3608 = vmatpush1.bf16.msra.mxu0 0
        %3609 = vmatprep.subr.bf16.mxu0 0
        %3610 = vmatpush1.bf16.msra.mxu0 0
        %3611 = vmatprep.subr.bf16.mxu0 0
        %3612 = vmatpush1.bf16.msra.mxu0 0
        %3613 = vmatprep.subr.bf16.mxu0 0
        %3614 = vmatpush1.bf16.msra.mxu0 0
        %3615 = vmatprep.subr.bf16.mxu0 0
        %3616 = vmatpush1.bf16.msra.mxu0 0
        %3617 = vmatprep.subr.bf16.mxu0 0
        %3618 = vmatpush1.bf16.msra.mxu0 0
        %3619 = vmatprep.subr.bf16.mxu0 0
        %3620 = vmatpush1.bf16.msra.mxu0 0
        %3621 = vmatprep.subr.bf16.mxu0 0
        %3622 = vmatpush1.bf16.msra.mxu0 0
        %3623 = vmatprep.subr.bf16.mxu0 0
        %3624 = vmatpush1.bf16.msra.mxu0 0
        %3625 = vmatprep.subr.bf16.mxu0 0
        %3626 = vmatpush1.bf16.msra.mxu0 0
        %3627 = vmatprep.subr.bf16.mxu0 0
        %3628 = vmatpush1.bf16.msra.mxu0 0
        %3629 = vmatprep.subr.bf16.mxu0 0
        %3630 = vmatpush1.bf16.msra.mxu0 0
        %3631 = vmatprep.subr.bf16.mxu0 0
        %3632 = vmatpush1.bf16.msra.mxu0 0
        %3633 = vmatprep.subr.bf16.mxu0 0
        %3634 = vmatpush1.bf16.msra.mxu0 0
        %3635 = vmatprep.subr.bf16.mxu0 0
        %3636 = vmatpush1.bf16.msra.mxu0 0
        %3637 = vmatprep.mubr.bf16.mxu0 0
        %3638 = vmatmul.mubr.bf16.gmra.mrb[0].mxu0 %v3603
        %v3639 = vpop.f32.mrb[0].mxu0
        %v3640 = vadd.f32 0.0, %v3639
        %v3641 = vpop.f32.mrb[0].mxu0
        %v3642 = vpop.f32.mrb[0].mxu0
        %v3643 = vadd.f32 0.0, %v3642
        %v3644 = vpop.f32.mrb[0].mxu0
        %3645 = vdwg.mxu0
        %v3646 = vmul.f32 %v3508, %v3454
        %v3647 = vmul.f32 %v3511, %v3455
        %v3648 = vmul.f32 %v3552, %v3456
        %v3649 = vmul.f32 %v3555, %v3457
        %v3650 = vmul.f32 %v3596, %v3458
        %v3651 = vmul.f32 %v3599, %v3459
        %v3652 = vmul.f32 %v3640, %v3460
        %v3653 = vmul.f32 %v3643, %v3461
        %v3654 = vcombine.low %v3646, %v3650
        %v3655 = vcombine.high %v3646, %v3650
        %v3657 = vunpack.c.l.s4 1983009808
        %v3658 = vunpack.c.0.s8 %v3657
        %v3659 = vlaneseq
        %v3660 = vshrl.u32 %v3659, 7
        %v3661 = vsub.s32 %v3658, %v3660
        %v3662 = vrot.slane %v3654, %v3661
        %v3664 = vunpack.c.l.s4 1983009808
        %v3665 = vunpack.c.0.s8 %v3664
        %v3666 = vlaneseq
        %v3667 = vshrl.u32 %v3666, 7
        %v3668 = vsub.s32 %v3665, %v3667
        %v3669 = vrot.slane %v3655, %v3668
        %v3670 = vcombine.low %v3648, %v3652
        %v3671 = vcombine.high %v3648, %v3652
        %v3673 = vunpack.c.l.s4 1983009808
        %v3674 = vunpack.c.0.s8 %v3673
        %v3675 = vlaneseq
        %v3676 = vshrl.u32 %v3675, 7
        %v3677 = vsub.s32 %v3674, %v3676
        %v3678 = vrot.slane %v3670, %v3677
        %v3680 = vunpack.c.l.s4 1983009808
        %v3681 = vunpack.c.0.s8 %v3680
        %v3682 = vlaneseq
        %v3683 = vshrl.u32 %v3682, 7
        %v3684 = vsub.s32 %v3681, %v3683
        %v3685 = vrot.slane %v3671, %v3684
        %v3686 = vcombine.low %v3662, %v3678
        %v3687 = vcombine.high %v3662, %v3678
        %v3689 = vunpack.c.l.s4 1934713408
        %v3690 = vunpack.c.0.s8 %v3689
        %v3691 = vlaneseq
        %v3692 = vshrl.u32 %v3691, 7
        %v3693 = vsub.s32 %v3690, %v3692
        %v3694 = vrot.slane %v3686, %v3693
        %v3696 = vunpack.c.l.s4 1934713408
        %v3697 = vunpack.c.0.s8 %v3696
        %v3698 = vlaneseq
        %v3699 = vshrl.u32 %v3698, 7
        %v3700 = vsub.s32 %v3697, %v3699
        %v3701 = vrot.slane %v3687, %v3700
        %v3702 = vcombine.low %v3669, %v3685
        %v3703 = vcombine.high %v3669, %v3685
        %v3705 = vunpack.c.l.s4 1934713408
        %v3706 = vunpack.c.0.s8 %v3705
        %v3707 = vlaneseq
        %v3708 = vshrl.u32 %v3707, 7
        %v3709 = vsub.s32 %v3706, %v3708
        %v3710 = vrot.slane %v3702, %v3709
        %v3712 = vunpack.c.l.s4 1934713408
        %v3713 = vunpack.c.0.s8 %v3712
        %v3714 = vlaneseq
        %v3715 = vshrl.u32 %v3714, 7
        %v3716 = vsub.s32 %v3713, %v3715
        %v3717 = vrot.slane %v3703, %v3716
        %v3718 = vcombine.high %v3694, 0.0
        %v3719 = vcombine.high %v3701, 0.0
        %v3720 = vcombine.high %v3710, 0.0
        %v3721 = vcombine.high %v3717, 0.0
        %v3722 = vcombine.low %v3647, %v3651
        %v3723 = vcombine.high %v3647, %v3651
        %v3725 = vunpack.c.l.s4 1983009808
        %v3726 = vunpack.c.0.s8 %v3725
        %v3727 = vlaneseq
        %v3728 = vshrl.u32 %v3727, 7
        %v3729 = vsub.s32 %v3726, %v3728
        %v3730 = vrot.slane %v3722, %v3729
        %v3732 = vunpack.c.l.s4 1983009808
        %v3733 = vunpack.c.0.s8 %v3732
        %v3734 = vlaneseq
        %v3735 = vshrl.u32 %v3734, 7
        %v3736 = vsub.s32 %v3733, %v3735
        %v3737 = vrot.slane %v3723, %v3736
        %v3738 = vcombine.low %v3649, %v3653
        %v3739 = vcombine.high %v3649, %v3653
        %v3741 = vunpack.c.l.s4 1983009808
        %v3742 = vunpack.c.0.s8 %v3741
        %v3743 = vlaneseq
        %v3744 = vshrl.u32 %v3743, 7
        %v3745 = vsub.s32 %v3742, %v3744
        %v3746 = vrot.slane %v3738, %v3745
        %v3748 = vunpack.c.l.s4 1983009808
        %v3749 = vunpack.c.0.s8 %v3748
        %v3750 = vlaneseq
        %v3751 = vshrl.u32 %v3750, 7
        %v3752 = vsub.s32 %v3749, %v3751
        %v3753 = vrot.slane %v3739, %v3752
        %v3754 = vcombine.low %v3730, %v3746
        %v3755 = vcombine.high %v3730, %v3746
        %v3757 = vunpack.c.l.s4 1934713408
        %v3758 = vunpack.c.0.s8 %v3757
        %v3759 = vlaneseq
        %v3760 = vshrl.u32 %v3759, 7
        %v3761 = vsub.s32 %v3758, %v3760
        %v3762 = vrot.slane %v3754, %v3761
        %v3764 = vunpack.c.l.s4 1934713408
        %v3765 = vunpack.c.0.s8 %v3764
        %v3766 = vlaneseq
        %v3767 = vshrl.u32 %v3766, 7
        %v3768 = vsub.s32 %v3765, %v3767
        %v3769 = vrot.slane %v3755, %v3768
        %v3770 = vcombine.low %v3737, %v3753
        %v3771 = vcombine.high %v3737, %v3753
        %v3773 = vunpack.c.l.s4 1934713408
        %v3774 = vunpack.c.0.s8 %v3773
        %v3775 = vlaneseq
        %v3776 = vshrl.u32 %v3775, 7
        %v3777 = vsub.s32 %v3774, %v3776
        %v3778 = vrot.slane %v3770, %v3777
        %v3780 = vunpack.c.l.s4 1934713408
        %v3781 = vunpack.c.0.s8 %v3780
        %v3782 = vlaneseq
        %v3783 = vshrl.u32 %v3782, 7
        %v3784 = vsub.s32 %v3781, %v3783
        %v3785 = vrot.slane %v3771, %v3784
        %v3786 = vcombine.high %v3762, 0.0
        %v3787 = vcombine.high %v3769, 0.0
        %v3788 = vcombine.high %v3778, 0.0
        %v3789 = vcombine.high %v3785, 0.0
        %v3790 = vcombine.low %v3694, %v3701
        %v3792 = vunpack.c.l.s4 1983009808
        %v3793 = vunpack.c.0.s8 %v3792
        %v3794 = vlaneseq
        %v3795 = vshrl.u32 %v3794, 7
        %v3796 = vsub.s32 %v3793, %v3795
        %v3797 = vrot.slane %v3790, %v3796
        %v3798 = vcombine.low %v3718, %v3719
        %v3800 = vunpack.c.l.s4 1983009808
        %v3801 = vunpack.c.0.s8 %v3800
        %v3802 = vlaneseq
        %v3803 = vshrl.u32 %v3802, 7
        %v3804 = vsub.s32 %v3801, %v3803
        %v3805 = vrot.slane %v3798, %v3804
        %v3806 = vcombine.low %v3710, %v3717
        %v3808 = vunpack.c.l.s4 1983009808
        %v3809 = vunpack.c.0.s8 %v3808
        %v3810 = vlaneseq
        %v3811 = vshrl.u32 %v3810, 7
        %v3812 = vsub.s32 %v3809, %v3811
        %v3813 = vrot.slane %v3806, %v3812
        %v3814 = vcombine.low %v3720, %v3721
        %v3816 = vunpack.c.l.s4 1983009808
        %v3817 = vunpack.c.0.s8 %v3816
        %v3818 = vlaneseq
        %v3819 = vshrl.u32 %v3818, 7
        %v3820 = vsub.s32 %v3817, %v3819
        %v3821 = vrot.slane %v3814, %v3820
        %v3822 = vcombine.low %v3797, %v3805
        %v3823 = vcombine.high %v3797, %v3805
        %v3825 = vunpack.c.l.s4 1934713408
        %v3826 = vunpack.c.0.s8 %v3825
        %v3827 = vlaneseq
        %v3828 = vshrl.u32 %v3827, 7
        %v3829 = vsub.s32 %v3826, %v3828
        %v3830 = vrot.slane %v3822, %v3829
        %v3832 = vunpack.c.l.s4 1934713408
        %v3833 = vunpack.c.0.s8 %v3832
        %v3834 = vlaneseq
        %v3835 = vshrl.u32 %v3834, 7
        %v3836 = vsub.s32 %v3833, %v3835
        %v3837 = vrot.slane %v3823, %v3836
        %v3838 = vcombine.low %v3813, %v3821
        %v3839 = vcombine.high %v3813, %v3821
        %v3841 = vunpack.c.l.s4 1934713408
        %v3842 = vunpack.c.0.s8 %v3841
        %v3843 = vlaneseq
        %v3844 = vshrl.u32 %v3843, 7
        %v3845 = vsub.s32 %v3842, %v3844
        %v3846 = vrot.slane %v3838, %v3845
        %v3848 = vunpack.c.l.s4 1934713408
        %v3849 = vunpack.c.0.s8 %v3848
        %v3850 = vlaneseq
        %v3851 = vshrl.u32 %v3850, 7
        %v3852 = vsub.s32 %v3849, %v3851
        %v3853 = vrot.slane %v3839, %v3852
        %v3854 = vcombine.low %v3830, %v3846
        %v3855 = vcombine.high %v3830, %v3846
        %v3856 = vcombine.low %v3837, %v3853
        %v3857 = vcombine.high %v3837, %v3853
        %v3858 = vcombine.low %v3762, %v3769
        %v3860 = vunpack.c.l.s4 1983009808
        %v3861 = vunpack.c.0.s8 %v3860
        %v3862 = vlaneseq
        %v3863 = vshrl.u32 %v3862, 7
        %v3864 = vsub.s32 %v3861, %v3863
        %v3865 = vrot.slane %v3858, %v3864
        %v3866 = vcombine.low %v3786, %v3787
        %v3868 = vunpack.c.l.s4 1983009808
        %v3869 = vunpack.c.0.s8 %v3868
        %v3870 = vlaneseq
        %v3871 = vshrl.u32 %v3870, 7
        %v3872 = vsub.s32 %v3869, %v3871
        %v3873 = vrot.slane %v3866, %v3872
        %v3874 = vcombine.low %v3778, %v3785
        %v3876 = vunpack.c.l.s4 1983009808
        %v3877 = vunpack.c.0.s8 %v3876
        %v3878 = vlaneseq
        %v3879 = vshrl.u32 %v3878, 7
        %v3880 = vsub.s32 %v3877, %v3879
        %v3881 = vrot.slane %v3874, %v3880
        %v3882 = vcombine.low %v3788, %v3789
        %v3884 = vunpack.c.l.s4 1983009808
        %v3885 = vunpack.c.0.s8 %v3884
        %v3886 = vlaneseq
        %v3887 = vshrl.u32 %v3886, 7
        %v3888 = vsub.s32 %v3885, %v3887
        %v3889 = vrot.slane %v3882, %v3888
        %v3890 = vcombine.low %v3865, %v3873
        %v3891 = vcombine.high %v3865, %v3873
        %v3893 = vunpack.c.l.s4 1934713408
        %v3894 = vunpack.c.0.s8 %v3893
        %v3895 = vlaneseq
        %v3896 = vshrl.u32 %v3895, 7
        %v3897 = vsub.s32 %v3894, %v3896
        %v3898 = vrot.slane %v3890, %v3897
        %v3900 = vunpack.c.l.s4 1934713408
        %v3901 = vunpack.c.0.s8 %v3900
        %v3902 = vlaneseq
        %v3903 = vshrl.u32 %v3902, 7
        %v3904 = vsub.s32 %v3901, %v3903
        %v3905 = vrot.slane %v3891, %v3904
        %v3906 = vcombine.low %v3881, %v3889
        %v3907 = vcombine.high %v3881, %v3889
        %v3909 = vunpack.c.l.s4 1934713408
        %v3910 = vunpack.c.0.s8 %v3909
        %v3911 = vlaneseq
        %v3912 = vshrl.u32 %v3911, 7
        %v3913 = vsub.s32 %v3910, %v3912
        %v3914 = vrot.slane %v3906, %v3913
        %v3916 = vunpack.c.l.s4 1934713408
        %v3917 = vunpack.c.0.s8 %v3916
        %v3918 = vlaneseq
        %v3919 = vshrl.u32 %v3918, 7
        %v3920 = vsub.s32 %v3917, %v3919
        %v3921 = vrot.slane %v3907, %v3920
        %v3922 = vcombine.low %v3898, %v3914
        %v3923 = vcombine.high %v3898, %v3914
        %v3924 = vcombine.low %v3905, %v3921
        %v3925 = vcombine.high %v3905, %v3921
        %3928 = vrot.lane.b32.xlu0 %v3855, 32
        %v3929 = vpop.permute.xlu0 %3928
        %3930 = vrot.lane.b32.xlu0 %v3923, 32
        %v3931 = vpop.permute.xlu0 %3930
        %3936 = vrot.lane.b32.xlu0 %v3856, 64
        %v3937 = vpop.permute.xlu0 %3936
        %3938 = vrot.lane.b32.xlu0 %v3924, 64
        %v3939 = vpop.permute.xlu0 %3938
        %3944 = vrot.lane.b32.xlu0 %v3857, 96
        %v3945 = vpop.permute.xlu0 %3944
        %3946 = vrot.lane.b32.xlu0 %v3925, 96
        %v3947 = vpop.permute.xlu0 %3946
        %v3950 = vsel %vm3204, %v3854, %v3929
        %v3951 = vsel %vm3204, %v3922, %v3931
        %vm3952 = vcmask 523264
        %v3953 = vsel %vm3952, %v3950, %v3937
        %v3954 = vsel %vm3952, %v3951, %v3939
        %vm3955 = vcmask 785408
        %v3956 = vsel %vm3955, %v3953, %v3945
        %v3957 = vsel %vm3955, %v3954, %v3947
        %3958 = vst [vmem:[%s394] sm:$0xff] %v3956
        %3959 = vst [vmem:[%s394 + $0x8] sm:$0xff] %v3957
        %s3960 = sand.u32 %s205, 1
        %s3961 = scalar_lea.sflag [#allocation6], %s3960
        %s3962 = sand.u32 %s205, 1
        %s3963 = smul.addr %s3962, 16
        %s3964 = scalar_lea.vmem [#allocation12], %s3963
        %s3965 = sand.u32 %s233, 1
        %s3966 = scalar_lea.sflag [#allocation14], %s3965
        %s3967 = sand.u32 %s233, 1
        %s3968 = smul.addr %s3967, 16
        %s3969 = scalar_lea.vmem [#allocation13], %s3968
        // Predicated region
        $region69: #{tpu_custom_call.1} parent=47 // pred_check
          %p3970 = pneg %p215
        $region70: #{tpu_custom_call.1} parent=47 // pred_check_branch
          %3972 = sbr.rel (%p3970) target = $region72
        $region71: #{tpu_custom_call.1} parent=47 // pred_region
          %s3973 = smul.u32 2, %s36
          %s3975 = ssub.s32 256, 256
          %3976 = vsyncadd %s3961, %s3975
          %s3977 = smul.addr %s35, 2
          %s3978 = sadd.s32 %s3973, %s3977
          %s3979 = smul.addr %s3978, 128
          %s3980 = scalar_lea.hbm %s7, %s3979
          %s3981 = sshll.u32 %s3964, 4
          %s3982 = int_to_ptr.vmem [resolvable:$true] %s3981
          %3987 = dma.vmem_to_hbm [thread:$0]  %s3982, 256, %s3980, %s3961, 128, 128, 8
        $region72: #{tpu_custom_call.1} parent=47 // pred_fallthru
          _
        // Predicated region
        $region73: #{tpu_custom_call.1} parent=47 // pred_check
          %p3988 = pneg %p243
        $region74: #{tpu_custom_call.1} parent=47 // pred_check_branch
          %3990 = sbr.rel (%p3988) target = $region76
        $region75: #{tpu_custom_call.1} parent=47 // pred_region
          %s3991 = smul.u32 2, %s36
          %s3993 = ssub.s32 256, 256
          %3994 = vsyncadd %s3966, %s3993
          %s3995 = smul.addr %s35, 2
          %s3996 = sadd.s32 %s3991, %s3995
          %s3997 = smul.addr %s3996, 128
          %s3998 = scalar_lea.hbm %s8, %s3997
          %s3999 = sshll.u32 %s3969, 4
          %s4000 = int_to_ptr.vmem [resolvable:$true] %s3999
          %4005 = dma.vmem_to_hbm [thread:$0]  %s4000, 256, %s3998, %s3966, 128, 128, 8
        $region76: #{tpu_custom_call.1} parent=47 // pred_fallthru
          _
      $region48: #{tpu_custom_call.1} parent=5 // pred_fallthru
        _
      %p4006 = scmp.le.s32.totalorder 2, %s26
      // Predicated region
      $region77: #{tpu_custom_call.1} parent=5 // pred_check
        %p4007 = pneg %p4006
      $region78: #{tpu_custom_call.1} parent=5 // pred_check_branch
        %4009 = sbr.rel (%p4007) target = $region80
      $region79: #{tpu_custom_call.1} parent=5 // pred_region
        %s4010 = ssub.s32 %s26, 2
        // Predicated region
        $region81: #{tpu_custom_call.1} parent=79 // pred_check
          %p4011 = pneg %p221
        $region82: #{tpu_custom_call.1} parent=79 // pred_check_branch
          %4013 = sbr.rel (%p4011) target = $region84
        $region83: #{tpu_custom_call.1} parent=79 // pred_region
          %s4014 = sand.u32 %s206, 1
          %s4015 = scalar_lea.sflag [#allocation6], %s4014
          %s4016 = sand.u32 %s206, 1
          %s4017 = smul.addr %s4016, 16
          %s4018 = scalar_lea.vmem [#allocation12], %s4017
          %4019 = dma.done %s4015, 256
        $region84: #{tpu_custom_call.1} parent=79 // pred_fallthru
          _
        // Predicated region
        $region85: #{tpu_custom_call.1} parent=79 // pred_check
          %p4020 = pneg %p249
        $region86: #{tpu_custom_call.1} parent=79 // pred_check_branch
          %4022 = sbr.rel (%p4020) target = $region88
        $region87: #{tpu_custom_call.1} parent=79 // pred_region
          %s4023 = sand.u32 %s234, 1
          %s4024 = scalar_lea.sflag [#allocation14], %s4023
          %s4025 = sand.u32 %s234, 1
          %s4026 = smul.addr %s4025, 16
          %s4027 = scalar_lea.vmem [#allocation13], %s4026
          %4028 = dma.done %s4024, 256
        $region88: #{tpu_custom_call.1} parent=79 // pred_fallthru
          _
      $region80: #{tpu_custom_call.1} parent=5 // pred_fallthru
        _
    $region6: #{tpu_custom_call.1} parent=1 // loop_footer
      %s30 = sadd.s32 1, %s26
    $region7: #{tpu_custom_call.1} parent=1 // loop_footer_branch
      %25 = sbr.rel target = $region3
    $region8: #{tpu_custom_call.1} parent=1 // loop_exit
      _
    %4029 = vsyncpa [#allocation5], 1
    %s4030 = scalar_lea.sflag [#allocation5], 1
    %4031 = vsyncpa %s4030, 1
    %4032 = vsyncpa [#allocation8], 1
    %4033 = vsyncpa [#allocation11], 1
    %4034 = vsyncpa [#allocation6], 1
    %s4035 = scalar_lea.sflag [#allocation6], 1
    %4036 = vsyncpa %s4035, 1
    %4037 = vsyncpa [#allocation14], 1
    %s4038 = scalar_lea.sflag [#allocation14], 1
    %4039 = vsyncpa %s4038, 1

// kernel: tpu_custom_call.1
$region0: #{tpu_custom_call.1}
  #allocation0 [shape = 'u32[]', space=smem, size = 0x4, offset = 0x4, fixed_abs, tag = 'smem constant byte address 0x4 - core index']
  #allocation1 [shape = 'u32[144,128]{1,0:T(1,128)}', space=vmem, size = 0x12000, scoped, tag = 'internal scratch']
  #allocation2 [shape = 'bf16[4,32,16]{2,1,0:T(16,128)(2,1)}', space=vmem, size = 0x8000, scoped, tag = 'scratch operand']
  #allocation3 [shape = 'bf16[4,16,32]{2,1,0:T(16,128)(2,1)}', space=vmem, size = 0x4000, scoped, tag = 'scratch operand']
  %s0 = inlined_call_operand.hbm [shape: bf16[2,16,128], index: 0, kind: input, shape index: {}]
  %s1 = inlined_call_operand.hbm [shape: bf16[128,128], index: 1, kind: input, shape index: {}]
  %s2 = inlined_call_operand.vmem [shape: f32[1,128], index: 2, kind: input, shape index: {}]
  %s3 = inlined_call_operand.hbm [shape: bf16[128,256], index: 3, kind: input, shape index: {}]
  %s4 = inlined_call_operand.vmem [shape: f32[1,256], index: 4, kind: input, shape index: {}]
  %s5 = inlined_call_operand.hbm [shape: bf16[128,128], index: 5, kind: input, shape index: {}]
  %s6 = inlined_call_operand.vmem [shape: f32[1,128], index: 6, kind: input, shape index: {}]
  %s7 = inlined_call_operand.hbm [shape: f32[2,16,128], index: 7, kind: output, shape index: {0}]
  %s8 = inlined_call_operand.hbm [shape: f32[2,16,128], index: 8, kind: output, shape index: {1}]
  %9 = xla_tuple %s7, %s8
  %s10 = sld [smem:[#allocation0]]
  $region89: #{tpu_custom_call.1} parent=0
    _
  %s12 = ssub.s32 1, %s10
  %s13 = scalar_select 0, %s12, %s10
  $region1: #{tpu_custom_call.1} parent=0
    #allocation4 [shape = 'u8[8192]{0}', space=vmem, size = 0x2000, scoped, tag = 'input window, operand 0']
    #allocation5 [shape = 's32[2]{0}', space=sflag, size = 0x8, scoped, tag = 'scoped memory for tpu_custom_call.1']
    #allocation6 [shape = 's32[2]{0}', space=sflag, size = 0x8, scoped, tag = 'scoped memory for tpu_custom_call.1']
    #allocation7 [shape = 'u8[32768]{0}', space=vmem, size = 0x8000, scoped, tag = 'input window, operand 1, single buffered']
    #allocation8 [shape = 's32[1]{0}', space=sflag, size = 0x4, scoped, tag = 'scoped memory for tpu_custom_call.1']
    #allocation9 [shape = 'u8[65536]{0}', space=vmem, size = 0x10000, scoped, tag = 'input window, operand 3, single buffered']
    #allocation10 [shape = 'u8[32768]{0}', space=vmem, size = 0x8000, scoped, tag = 'input window, operand 5, single buffered']
    #allocation11 [shape = 's32[1]{0}', space=sflag, size = 0x4, scoped, tag = 'scoped memory for tpu_custom_call.1']
    #allocation12 [shape = 'u8[16384]{0}', space=vmem, size = 0x4000, scoped, tag = 'output window, operand 0']
    #allocation13 [shape = 'u8[16384]{0}', space=vmem, size = 0x4000, scoped, tag = 'output window, operand 1']
    #allocation14 [shape = 's32[2]{0}', space=sflag, size = 0x8, scoped, tag = 'scoped memory for tpu_custom_call.1']
    %14 = vsyncpa [#allocation5], 0
    %s15 = scalar_lea.sflag [#allocation5], 1
    %16 = vsyncpa %s15, 0
    %17 = vsyncpa [#allocation8], 0
    %18 = vsyncpa [#allocation11], 0
    %19 = vsyncpa [#allocation6], 0
    %s20 = scalar_lea.sflag [#allocation6], 1
    %21 = vsyncpa %s20, 0
    %22 = vsyncpa [#allocation14], 0
    %s23 = scalar_lea.sflag [#allocation14], 1
    %24 = vsyncpa %s23, 0
    loop: start=0, step=1, limit=4
    $region2: #{tpu_custom_call.1} parent=1 // loop_pre_header
      _
    $region3: #{tpu_custom_call.1} parent=1 // loop_header
      %s26 = sphi 0, %s30
      %p27 = scmp.ge.s32.totalorder %s26, 4
      %s33 = sphi 0, %s45
      %s34 = sphi 0, %s41
      %s35 = sphi 0, %s33
      %s36 = sphi 0, %s34
      %s37 = sphi 0, %s35
      %s38 = sphi 0, %s36
      %s48 = sphi 0, %s50
      %s51 = sphi 0, %s48
      %s52 = sphi 0, %s51
      %s68 = sphi 0, %s52
      %s72 = sphi 0, %s72
      %s74 = sphi 0, %s72
      %s75 = sphi 0, %s74
      %s89 = sphi 0, %s75
      %s93 = sphi 0, %s93
      %s95 = sphi 0, %s93
      %s96 = sphi 0, %s95
      %s110 = sphi 0, %s96
      %s114 = sphi 0, %s114
      %s116 = sphi 0, %s114
      %s117 = sphi 0, %s116
      %s131 = sphi 0, %s117
      %s135 = sphi 0, %s135
      %s137 = sphi 0, %s135
      %s138 = sphi 0, %s137
      %s152 = sphi 0, %s138
      %s156 = sphi 0, %s156
      %s158 = sphi 0, %s156
      %s159 = sphi 0, %s158
      %s173 = sphi 0, %s159
      %s177 = sphi 0, %s177
      %s179 = sphi 0, %s177
      %s180 = sphi 0, %s179
      %s194 = sphi 0, %s180
      %s202 = sphi 0, %s204
      %s205 = sphi 0, %s202
      %s206 = sphi 0, %s205
      %s222 = sphi 0, %s206
      %s230 = sphi 0, %s232
      %s233 = sphi 0, %s230
      %s234 = sphi 0, %s233
      %s250 = sphi 0, %s234
    $region4: #{tpu_custom_call.1} parent=1 // loop_header_branch
      %29 = sbr.rel (%p27) target = $region8
    $region5: #{tpu_custom_call.1} parent=1 // loop_body
      %s31 = ssub.s32 %s26, 1
      %s32 = ssub.s32 %s26, 2
      %s39 = sadd.s32 1, %s34
      %p40 = scmp.ge.s32.totalorder %s39, 1
      %s41 = scalar_select %p40, 0, %s39
      %s42 = sadd.s32 1, %s33
      %s43 = scalar_select %p40, %s42, %s33
      %p44 = scmp.ge.s32.totalorder %s43, 2
      %s45 = scalar_select %p44, 0, %s43
      %s46 = ssub.s32 %s33, %s45
      %p47 = scmp.eq.s32.totalorder %s46, 0
      %s49 = sadd.s32 %s48, 1
      %s50 = scalar_select %p47, %s48, %s49
      %p53 = pneg %p47
      %p54 = scmp.eq.s32.totalorder %s26, 1
      %p55 = por %p53, %p54
      %p56 = scmp.ne.s32.totalorder %s48, %s51
      %p57 = scmp.eq.s32.totalorder %s26, 0
      %p58 = por %p56, %p57
      %p59 = scmp.ne.s32.totalorder %s48, %s51
      %p60 = scmp.eq.s32.totalorder %s31, 1
      %p61 = por %p59, %p60
      %p62 = scmp.ne.s32.totalorder %s51, %s52
      %p63 = scmp.eq.s32.totalorder %s31, 0
      %p64 = por %p62, %p63
      %p65 = scmp.ne.s32.totalorder %s51, %s52
      %p66 = scmp.eq.s32.totalorder %s32, 1
      %p67 = por %p65, %p66
      %p69 = scmp.ne.s32.totalorder %s52, %s68
      %p70 = scmp.eq.s32.totalorder %s32, 0
      %p71 = por %p69, %p70
      %s73 = sadd.s32 %s72, 1
      %p76 = scmp.eq.s32.totalorder %s26, 1
      %p77 = scmp.ne.s32.totalorder %s72, %s74
      %p78 = scmp.eq.s32.totalorder %s26, 0
      %p79 = por %p77, %p78
      %p80 = scmp.ne.s32.totalorder %s72, %s74
      %p81 = scmp.eq.s32.totalorder %s31, 1
      %p82 = por %p80, %p81
      %p83 = scmp.ne.s32.totalorder %s74, %s75
      %p84 = scmp.eq.s32.totalorder %s31, 0
      %p85 = por %p83, %p84
      %p86 = scmp.ne.s32.totalorder %s74, %s75
      %p87 = scmp.eq.s32.totalorder %s32, 1
      %p88 = por %p86, %p87
      %p90 = scmp.ne.s32.totalorder %s75, %s89
      %p91 = scmp.eq.s32.totalorder %s32, 0
      %p92 = por %p90, %p91
      %s94 = sadd.s32 %s93, 1
      %p97 = scmp.eq.s32.totalorder %s26, 1
      %p98 = scmp.ne.s32.totalorder %s93, %s95
      %p99 = scmp.eq.s32.totalorder %s26, 0
      %p100 = por %p98, %p99
      %p101 = scmp.ne.s32.totalorder %s93, %s95
      %p102 = scmp.eq.s32.totalorder %s31, 1
      %p103 = por %p101, %p102
      %p104 = scmp.ne.s32.totalorder %s95, %s96
      %p105 = scmp.eq.s32.totalorder %s31, 0
      %p106 = por %p104, %p105
      %p107 = scmp.ne.s32.totalorder %s95, %s96
      %p108 = scmp.eq.s32.totalorder %s32, 1
      %p109 = por %p107, %p108
      %p111 = scmp.ne.s32.totalorder %s96, %s110
      %p112 = scmp.eq.s32.totalorder %s32, 0
      %p113 = por %p111, %p112
      %s115 = sadd.s32 %s114, 1
      %p118 = scmp.eq.s32.totalorder %s26, 1
      %p119 = scmp.ne.s32.totalorder %s114, %s116
      %p120 = scmp.eq.s32.totalorder %s26, 0
      %p121 = por %p119, %p120
      %p122 = scmp.ne.s32.totalorder %s114, %s116
      %p123 = scmp.eq.s32.totalorder %s31, 1
      %p124 = por %p122, %p123
      %p125 = scmp.ne.s32.totalorder %s116, %s117
      %p126 = scmp.eq.s32.totalorder %s31, 0
      %p127 = por %p125, %p126
      %p128 = scmp.ne.s32.totalorder %s116, %s117
      %p129 = scmp.eq.s32.totalorder %s32, 1
      %p130 = por %p128, %p129
      %p132 = scmp.ne.s32.totalorder %s117, %s131
      %p133 = scmp.eq.s32.totalorder %s32, 0
      %p134 = por %p132, %p133
      %s136 = sadd.s32 %s135, 1
      %p139 = scmp.eq.s32.totalorder %s26, 1
      %p140 = scmp.ne.s32.totalorder %s135, %s137
      %p141 = scmp.eq.s32.totalorder %s26, 0
      %p142 = por %p140, %p141
      %p143 = scmp.ne.s32.totalorder %s135, %s137
      %p144 = scmp.eq.s32.totalorder %s31, 1
      %p145 = por %p143, %p144
      %p146 = scmp.ne.s32.totalorder %s137, %s138
      %p147 = scmp.eq.s32.totalorder %s31, 0
      %p148 = por %p146, %p147
      %p149 = scmp.ne.s32.totalorder %s137, %s138
      %p150 = scmp.eq.s32.totalorder %s32, 1
      %p151 = por %p149, %p150
      %p153 = scmp.ne.s32.totalorder %s138, %s152
      %p154 = scmp.eq.s32.totalorder %s32, 0
      %p155 = por %p153, %p154
      %s157 = sadd.s32 %s156, 1
      %p160 = scmp.eq.s32.totalorder %s26, 1
      %p161 = scmp.ne.s32.totalorder %s156, %s158
      %p162 = scmp.eq.s32.totalorder %s26, 0
      %p163 = por %p161, %p162
      %p164 = scmp.ne.s32.totalorder %s156, %s158
      %p165 = scmp.eq.s32.totalorder %s31, 1
      %p166 = por %p164, %p165
      %p167 = scmp.ne.s32.totalorder %s158, %s159
      %p168 = scmp.eq.s32.totalorder %s31, 0
      %p169 = por %p167, %p168
      %p170 = scmp.ne.s32.totalorder %s158, %s159
      %p171 = scmp.eq.s32.totalorder %s32, 1
      %p172 = por %p170, %p171
      %p174 = scmp.ne.s32.totalorder %s159, %s173
      %p175 = scmp.eq.s32.totalorder %s32, 0
      %p176 = por %p174, %p175
      %s178 = sadd.s32 %s177, 1
      %p181 = scmp.eq.s32.totalorder %s26, 1
      %p182 = scmp.ne.s32.totalorder %s177, %s179
      %p183 = scmp.eq.s32.totalorder %s26, 0
      %p184 = por %p182, %p183
      %p185 = scmp.ne.s32.totalorder %s177, %s179
      %p186 = scmp.eq.s32.totalorder %s31, 1
      %p187 = por %p185, %p186
      %p188 = scmp.ne.s32.totalorder %s179, %s180
      %p189 = scmp.eq.s32.totalorder %s31, 0
      %p190 = por %p188, %p189
      %p191 = scmp.ne.s32.totalorder %s179, %s180
      %p192 = scmp.eq.s32.totalorder %s32, 1
      %p193 = por %p191, %p192
      %p195 = scmp.ne.s32.totalorder %s180, %s194
      %p196 = scmp.eq.s32.totalorder %s32, 0
      %p197 = por %p195, %p196
      %s198 = ssub.s32 %s33, %s45
      %s199 = ssub.s32 %s34, %s41
      %s200 = sor.u32 %s198, %s199
      %p201 = scmp.eq.s32.totalorder %s200, 0
      %s203 = sadd.s32 %s202, 1
      %s204 = scalar_select %p201, %s202, %s203
      %p207 = pneg %p201
      %p208 = scmp.eq.s32.totalorder %s26, 1
      %p209 = por %p207, %p208
      %p210 = scmp.ne.s32.totalorder %s202, %s205
      %p211 = scmp.eq.s32.totalorder %s26, 0
      %p212 = por %p210, %p211
      %p213 = scmp.ne.s32.totalorder %s202, %s205
      %p214 = scmp.eq.s32.totalorder %s31, 1
      %p215 = por %p213, %p214
      %p216 = scmp.ne.s32.totalorder %s205, %s206
      %p217 = scmp.eq.s32.totalorder %s31, 0
      %p218 = por %p216, %p217
      %p219 = scmp.ne.s32.totalorder %s205, %s206
      %p220 = scmp.eq.s32.totalorder %s32, 1
      %p221 = por %p219, %p220
      %p223 = scmp.ne.s32.totalorder %s206, %s222
      %p224 = scmp.eq.s32.totalorder %s32, 0
      %p225 = por %p223, %p224
      %s226 = ssub.s32 %s33, %s45
      %s227 = ssub.s32 %s34, %s41
      %s228 = sor.u32 %s226, %s227
      %p229 = scmp.eq.s32.totalorder %s228, 0
      %s231 = sadd.s32 %s230, 1
      %s232 = scalar_select %p229, %s230, %s231
      %p235 = pneg %p229
      %p236 = scmp.eq.s32.totalorder %s26, 1
      %p237 = por %p235, %p236
      %p238 = scmp.ne.s32.totalorder %s230, %s233
      %p239 = scmp.eq.s32.totalorder %s26, 0
      %p240 = por %p238, %p239
      %p241 = scmp.ne.s32.totalorder %s230, %s233
      %p242 = scmp.eq.s32.totalorder %s31, 1
      %p243 = por %p241, %p242
      %p244 = scmp.ne.s32.totalorder %s233, %s234
      %p245 = scmp.eq.s32.totalorder %s31, 0
      %p246 = por %p244, %p245
      %p247 = scmp.ne.s32.totalorder %s233, %s234
      %p248 = scmp.eq.s32.totalorder %s32, 1
      %p249 = por %p247, %p248
      %p251 = scmp.ne.s32.totalorder %s234, %s250
      %p252 = scmp.eq.s32.totalorder %s32, 0
      %p253 = por %p251, %p252
      %p254 = scmp.le.s32.totalorder 1, %s26
      %p255 = scmp.lt.s32.totalorder %s26, 3
      %p256 = pnand %p254, %p255
      %p257 = pneg %p256
      // Predicated region
      $region9: #{tpu_custom_call.1} parent=5 // pred_check
        _
      $region10: #{tpu_custom_call.1} parent=5 // pred_check_branch
        %259 = sbr.rel (%p256) target = $region12
      $region11: #{tpu_custom_call.1} parent=5 // pred_region
        %s260 = ssub.s32 %s26, 1
        // Predicated region
        $region13: #{tpu_custom_call.1} parent=11 // pred_check
          %p261 = pneg %p85
        $region14: #{tpu_custom_call.1} parent=11 // pred_check_branch
          %263 = sbr.rel (%p261) target = $region16
        $region15: #{tpu_custom_call.1} parent=11 // pred_region
          %s265 = ssub.s32 1024, 1024
          %266 = vsyncadd [#allocation8], %s265
          %s267 = sshll.u32 [#allocation7], 4
          %s268 = int_to_ptr.vmem [resolvable:$true] %s267
          %273 = dma.hbm_to_vmem [thread:$0]  %s1, 1024, %s268, [#allocation8], 64, 64, 4
        $region16: #{tpu_custom_call.1} parent=11 // pred_fallthru
          _
        // Predicated region
        $region17: #{tpu_custom_call.1} parent=11 // pred_check
          %p274 = pneg %p106
        $region18: #{tpu_custom_call.1} parent=11 // pred_check_branch
          %276 = sbr.rel (%p274) target = $region20
        $region19: #{tpu_custom_call.1} parent=11 // pred_region
          _
        $region20: #{tpu_custom_call.1} parent=11 // pred_fallthru
          _
        // Predicated region
        $region21: #{tpu_custom_call.1} parent=11 // pred_check
          %p277 = pneg %p127
        $region22: #{tpu_custom_call.1} parent=11 // pred_check_branch
          %279 = sbr.rel (%p277) target = $region24
        $region23: #{tpu_custom_call.1} parent=11 // pred_region
          %s281 = ssub.s32 2048, 2048
          %282 = vsyncadd [#allocation8], %s281
          %s283 = sshll.u32 [#allocation9], 4
          %s284 = int_to_ptr.vmem [resolvable:$true] %s283
          %289 = dma.hbm_to_vmem [thread:$0]  %s3, 2048, %s284, [#allocation8], 128, 128, 8
        $region24: #{tpu_custom_call.1} parent=11 // pred_fallthru
          _
        // Predicated region
        $region25: #{tpu_custom_call.1} parent=11 // pred_check
          %p290 = pneg %p148
        $region26: #{tpu_custom_call.1} parent=11 // pred_check_branch
          %292 = sbr.rel (%p290) target = $region28
        $region27: #{tpu_custom_call.1} parent=11 // pred_region
          _
        $region28: #{tpu_custom_call.1} parent=11 // pred_fallthru
          _
        // Predicated region
        $region29: #{tpu_custom_call.1} parent=11 // pred_check
          %p293 = pneg %p169
        $region30: #{tpu_custom_call.1} parent=11 // pred_check_branch
          %295 = sbr.rel (%p293) target = $region32
        $region31: #{tpu_custom_call.1} parent=11 // pred_region
          %s297 = ssub.s32 1024, 1024
          %298 = vsyncadd [#allocation11], %s297
          %s299 = sshll.u32 [#allocation10], 4
          %s300 = int_to_ptr.vmem [resolvable:$true] %s299
          %305 = dma.hbm_to_vmem [thread:$0]  %s5, 1024, %s300, [#allocation11], 64, 64, 4
        $region32: #{tpu_custom_call.1} parent=11 // pred_fallthru
          _
        // Predicated region
        $region33: #{tpu_custom_call.1} parent=11 // pred_check
          %p306 = pneg %p190
        $region34: #{tpu_custom_call.1} parent=11 // pred_check_branch
          %308 = sbr.rel (%p306) target = $region36
        $region35: #{tpu_custom_call.1} parent=11 // pred_region
          _
        $region36: #{tpu_custom_call.1} parent=11 // pred_fallthru
          _
      $region12: #{tpu_custom_call.1} parent=5 // pred_fallthru
        _
      %p309 = scmp.lt.s32.totalorder %s26, 2
      // Predicated region
      $region37: #{tpu_custom_call.1} parent=5 // pred_check
        %p310 = pneg %p309
      $region38: #{tpu_custom_call.1} parent=5 // pred_check_branch
        %312 = sbr.rel (%p310) target = $region40
      $region39: #{tpu_custom_call.1} parent=5 // pred_region
        // Predicated region
        $region41: #{tpu_custom_call.1} parent=39 // pred_check
          %p313 = pneg %p58
        $region42: #{tpu_custom_call.1} parent=39 // pred_check_branch
          %315 = sbr.rel (%p313) target = $region44
        $region43: #{tpu_custom_call.1} parent=39 // pred_region
          %s316 = sand.u32 %s48, 1
          %s317 = scalar_lea.sflag [#allocation5], %s316
          %s318 = sand.u32 %s48, 1
          %s319 = smul.addr %s318, 8
          %s320 = scalar_lea.vmem [#allocation4], %s319
          %s322 = ssub.s32 128, 128
          %323 = vsyncadd %s317, %s322
          %s324 = smul.addr %s33, 2
          %s325 = smul.addr %s324, 64
          %s326 = scalar_lea.hbm %s0, %s325
          %s327 = sshll.u32 %s320, 4
          %s328 = int_to_ptr.vmem [resolvable:$true] %s327
          %333 = dma.hbm_to_vmem [thread:$0]  %s326, 128, %s328, %s317, 64, 64, 4
        $region44: #{tpu_custom_call.1} parent=39 // pred_fallthru
          _
      $region40: #{tpu_custom_call.1} parent=5 // pred_fallthru
        _
      %p334 = scmp.le.s32.totalorder 1, %s26
      %p335 = scmp.lt.s32.totalorder %s26, 3
      %p336 = pnand %p334, %p335
      %p337 = pneg %p336
      // Predicated region
      $region45: #{tpu_custom_call.1} parent=5 // pred_check
        _
      $region46: #{tpu_custom_call.1} parent=5 // pred_check_branch
        %339 = sbr.rel (%p336) target = $region48
      $region47: #{tpu_custom_call.1} parent=5 // pred_region
        %s340 = ssub.s32 %s26, 1
        %s341 = sand.u32 %s51, 1
        %s342 = scalar_lea.sflag [#allocation5], %s341
        %s343 = sand.u32 %s51, 1
        %s344 = smul.addr %s343, 8
        %s345 = scalar_lea.vmem [#allocation4], %s344
        // Predicated region
        $region49: #{tpu_custom_call.1} parent=47 // pred_check
          %p346 = pneg %p64
        $region50: #{tpu_custom_call.1} parent=47 // pred_check_branch
          %348 = sbr.rel (%p346) target = $region52
        $region51: #{tpu_custom_call.1} parent=47 // pred_region
          %349 = dma.done %s342, 128
        $region52: #{tpu_custom_call.1} parent=47 // pred_fallthru
          _
        // Predicated region
        $region53: #{tpu_custom_call.1} parent=47 // pred_check
          %p350 = pneg %p85
        $region54: #{tpu_custom_call.1} parent=47 // pred_check_branch
          %352 = sbr.rel (%p350) target = $region56
        $region55: #{tpu_custom_call.1} parent=47 // pred_region
          %353 = dma.done [#allocation8], 1024
        $region56: #{tpu_custom_call.1} parent=47 // pred_fallthru
          _
        // Predicated region
        $region57: #{tpu_custom_call.1} parent=47 // pred_check
          %p354 = pneg %p127
        $region58: #{tpu_custom_call.1} parent=47 // pred_check_branch
          %356 = sbr.rel (%p354) target = $region60
        $region59: #{tpu_custom_call.1} parent=47 // pred_region
          %357 = dma.done [#allocation8], 2048
        $region60: #{tpu_custom_call.1} parent=47 // pred_fallthru
          _
        // Predicated region
        $region61: #{tpu_custom_call.1} parent=47 // pred_check
          %p358 = pneg %p169
        $region62: #{tpu_custom_call.1} parent=47 // pred_check_branch
          %360 = sbr.rel (%p358) target = $region64
        $region63: #{tpu_custom_call.1} parent=47 // pred_region
          %361 = dma.done [#allocation11], 1024
        $region64: #{tpu_custom_call.1} parent=47 // pred_fallthru
          _
        %s362 = sand.u32 %s51, 1
        %s363 = scalar_lea.sflag [#allocation5], %s362
        %s364 = sand.u32 %s51, 1
        %s365 = smul.addr %s364, 8
        %s366 = scalar_lea.vmem [#allocation4], %s365
        %p367 = pneg %p64
        %p368 = pneg %p61
        %p369 = pneg %p85
        %p370 = pneg %p82
        %p371 = pneg %p106
        %p372 = pneg %p103
        %p373 = pneg %p127
        %p374 = pneg %p124
        %p375 = pneg %p148
        %p376 = pneg %p145
        %p377 = pneg %p169
        %p378 = pneg %p166
        %p379 = pneg %p190
        %p380 = pneg %p187
        %p381 = pneg %p218
        %p382 = pneg %p215
        %s383 = sand.u32 %s205, 1
        %s384 = scalar_lea.sflag [#allocation6], %s383
        %s385 = sand.u32 %s205, 1
        %s386 = smul.addr %s385, 16
        %s387 = scalar_lea.vmem [#allocation12], %s386
        %p388 = pneg %p246
        %p389 = pneg %p243
        %s390 = sand.u32 %s233, 1
        %s391 = scalar_lea.sflag [#allocation14], %s390
        %s392 = sand.u32 %s233, 1
        %s393 = smul.addr %s392, 16
        %s394 = scalar_lea.vmem [#allocation13], %s393
        %s395 = smul.u32 2, %s36
        %s396 = smul.u32 2, %s36
        %s398 = smul.u32 %s36, 16
        %s399 = sshra.s32 %s398, 3
        %s400 = sand.u32 %s398, 7
        %s401 = smul.addr %s399, 4
        %s402 = scalar_lea.vmem %s345, %s401 [#allocation4]
        %v403 = vld [vmem:[%s402] sm:$0xf]
        %v404 = vld [vmem:[%s402 + $0x4] sm:$0xf]
        %v405 = vld [vmem:[#allocation10] sm:$0xf]
        %v406 = vld [vmem:[#allocation10 + $0x4] sm:$0xf]
        %v407 = vld [vmem:[#allocation10 + $0x8] sm:$0xf]
        %v408 = vld [vmem:[#allocation10 + $0xc] sm:$0xf]
        %v409 = vld [vmem:[#allocation10 + $0x10] sm:$0xf]
        %v410 = vld [vmem:[#allocation10 + $0x14] sm:$0xf]
        %v411 = vld [vmem:[#allocation10 + $0x18] sm:$0xf]
        %v412 = vld [vmem:[#allocation10 + $0x1c] sm:$0xf]
        %v413 = vld [vmem:[#allocation10 + $0x20] sm:$0xf]
        %v414 = vld [vmem:[#allocation10 + $0x24] sm:$0xf]
        %v415 = vld [vmem:[#allocation10 + $0x28] sm:$0xf]
        %v416 = vld [vmem:[#allocation10 + $0x2c] sm:$0xf]
        %v417 = vld [vmem:[#allocation10 + $0x30] sm:$0xf]
        %v418 = vld [vmem:[#allocation10 + $0x34] sm:$0xf]
        %v419 = vld [vmem:[#allocation10 + $0x38] sm:$0xf]
        %v420 = vld [vmem:[#allocation10 + $0x3c] sm:$0xf]
        %v421 = vld [vmem:[%s6] sm:$0x1]
        %v423 = vlaneseq
        %v424 = vshrl.u32 %v423, 7
        %v425 = vsub.s32 0, %v424
        %v426 = vrot.slane %v421, %v425
        %v430 = vunpack.c.l.b16 %v403
        %v431 = vunpack.c.l.b16 %v404
        %v432 = vpack.c.b16 %v431, %v430
        %v450 = vunpack.c.l.b16 %v405
        %v451 = vunpack.c.l.b16 %v406
        %v452 = vunpack.c.l.b16 %v407
        %v453 = vunpack.c.l.b16 %v408
        %v454 = vunpack.c.l.b16 %v409
        %v455 = vunpack.c.l.b16 %v410
        %v456 = vunpack.c.l.b16 %v411
        %v457 = vunpack.c.l.b16 %v412
        %v458 = vunpack.c.l.b16 %v413
        %v459 = vunpack.c.l.b16 %v414
        %v460 = vunpack.c.l.b16 %v415
        %v461 = vunpack.c.l.b16 %v416
        %v462 = vunpack.c.l.b16 %v417
        %v463 = vunpack.c.l.b16 %v418
        %v464 = vunpack.c.l.b16 %v419
        %v465 = vunpack.c.l.b16 %v420
        %v466 = vpack.c.b16 %v451, %v450
        %v467 = vpack.c.b16 %v453, %v452
        %v468 = vpack.c.b16 %v455, %v454
        %v469 = vpack.c.b16 %v457, %v456
        %v470 = vpack.c.b16 %v459, %v458
        %v471 = vpack.c.b16 %v461, %v460
        %v472 = vpack.c.b16 %v463, %v462
        %v473 = vpack.c.b16 %v465, %v464
        %482 = vmatprep.subr.bf16.mxu0 0
        %483 = vmatpush1.bf16.msra.mxu0 %v466
        %484 = vmatprep.subr.bf16.mxu0 0
        %485 = vmatpush1.bf16.msra.mxu0 %v467
        %486 = vmatprep.subr.bf16.mxu0 0
        %487 = vmatpush1.bf16.msra.mxu0 %v468
        %488 = vmatprep.subr.bf16.mxu0 0
        %489 = vmatpush1.bf16.msra.mxu0 %v469
        %490 = vmatprep.subr.bf16.mxu0 0
        %491 = vmatpush1.bf16.msra.mxu0 %v470
        %492 = vmatprep.subr.bf16.mxu0 0
        %493 = vmatpush1.bf16.msra.mxu0 %v471
        %494 = vmatprep.subr.bf16.mxu0 0
        %495 = vmatpush1.bf16.msra.mxu0 %v472
        %496 = vmatprep.subr.bf16.mxu0 0
        %497 = vmatpush1.bf16.msra.mxu0 %v473
        %498 = vmatprep.subr.bf16.mxu0 0
        %499 = vmatpush1.bf16.msra.mxu0 0
        %500 = vmatprep.subr.bf16.mxu0 0
        %501 = vmatpush1.bf16.msra.mxu0 0
        %502 = vmatprep.subr.bf16.mxu0 0
        %503 = vmatpush1.bf16.msra.mxu0 0
        %504 = vmatprep.subr.bf16.mxu0 0
        %505 = vmatpush1.bf16.msra.mxu0 0
        %506 = vmatprep.subr.bf16.mxu0 0
        %507 = vmatpush1.bf16.msra.mxu0 0
        %508 = vmatprep.subr.bf16.mxu0 0
        %509 = vmatpush1.bf16.msra.mxu0 0
        %510 = vmatprep.subr.bf16.mxu0 0
        %511 = vmatpush1.bf16.msra.mxu0 0
        %512 = vmatprep.subr.bf16.mxu0 0
        %513 = vmatpush1.bf16.msra.mxu0 0
        %514 = vmatprep.mubr.bf16.mxu0 0
        %515 = vmatmul.mubr.bf16.gmra.mrb[0].mxu0 %v432
        %v516 = vpop.f32.mrb[0].mxu0
        %v517 = vadd.f32 %v426, %v516
        %v518 = vpop.f32.mrb[0].mxu0
        %v519 = vpop.f32.mrb[0].mxu0
        %v520 = vadd.f32 %v426, %v519
        %v521 = vpop.f32.mrb[0].mxu0
        %522 = vdwg.mxu0
        %523 = vst [vmem:[%s387] sm:$0xff] %v517
        %524 = vst [vmem:[%s387 + $0x8] sm:$0xff] %v520
        %p525 = scmp.eq.s32.totalorder %s36, 0
        // Predicated region
        $region65: #{tpu_custom_call.1} parent=47 // pred_check
          %p526 = pneg %p525
        $region66: #{tpu_custom_call.1} parent=47 // pred_check_branch
          %528 = sbr.rel (%p526) target = $region68
        $region67: #{tpu_custom_call.1} parent=47 // pred_region
          %v529 = vld [vmem:[%s345] sm:$0xf]
          %v530 = vld [vmem:[%s345 + $0x4] sm:$0xf]
          %v531 = vld [vmem:[#allocation9] sm:$0xff]
          %v532 = vld [vmem:[#allocation9 + $0x8] sm:$0xff]
          %v533 = vld [vmem:[#allocation9 + $0x10] sm:$0xff]
          %v534 = vld [vmem:[#allocation9 + $0x18] sm:$0xff]
          %v535 = vld [vmem:[#allocation9 + $0x20] sm:$0xff]
          %v536 = vld [vmem:[#allocation9 + $0x28] sm:$0xff]
          %v537 = vld [vmem:[#allocation9 + $0x30] sm:$0xff]
          %v538 = vld [vmem:[#allocation9 + $0x38] sm:$0xff]
          %v539 = vld [vmem:[#allocation9 + $0x40] sm:$0xff]
          %v540 = vld [vmem:[#allocation9 + $0x48] sm:$0xff]
          %v541 = vld [vmem:[#allocation9 + $0x50] sm:$0xff]
          %v542 = vld [vmem:[#allocation9 + $0x58] sm:$0xff]
          %v543 = vld [vmem:[#allocation9 + $0x60] sm:$0xff]
          %v544 = vld [vmem:[#allocation9 + $0x68] sm:$0xff]
          %v545 = vld [vmem:[#allocation9 + $0x70] sm:$0xff]
          %v546 = vld [vmem:[#allocation9 + $0x78] sm:$0xff]
          %v547 = vld [vmem:[%s4] sm:$0x3]
          %v549 = vlaneseq
          %v550 = vshrl.u32 %v549, 7
          %v551 = vsub.s32 0, %v550
          %v552 = vrot.slane %v547, %v551
          %v553 = vlaneseq
          %v554 = vshrl.u32 %v553, 7
          %v555 = vsub.s32 1, %v554
          %v556 = vrot.slane %v547, %v555
          %v561 = vunpack.c.l.b16 %v529
          %v562 = vunpack.c.l.b16 %v530
          %v563 = vpack.c.b16 %v562, %v561
          %v581 = vunpack.c.l.b16 %v531
          %v582 = vunpack.c.h.b16 %v531
          %v583 = vunpack.c.l.b16 %v532
          %v584 = vunpack.c.h.b16 %v532
          %v585 = vunpack.c.l.b16 %v533
          %v586 = vunpack.c.h.b16 %v533
          %v587 = vunpack.c.l.b16 %v534
          %v588 = vunpack.c.h.b16 %v534
          %v589 = vunpack.c.l.b16 %v535
          %v590 = vunpack.c.h.b16 %v535
          %v591 = vunpack.c.l.b16 %v536
          %v592 = vunpack.c.h.b16 %v536
          %v593 = vunpack.c.l.b16 %v537
          %v594 = vunpack.c.h.b16 %v537
          %v595 = vunpack.c.l.b16 %v538
          %v596 = vunpack.c.h.b16 %v538
          %v597 = vunpack.c.l.b16 %v539
          %v598 = vunpack.c.h.b16 %v539
          %v599 = vunpack.c.l.b16 %v540
          %v600 = vunpack.c.h.b16 %v540
          %v601 = vunpack.c.l.b16 %v541
          %v602 = vunpack.c.h.b16 %v541
          %v603 = vunpack.c.l.b16 %v542
          %v604 = vunpack.c.h.b16 %v542
          %v605 = vunpack.c.l.b16 %v543
          %v606 = vunpack.c.h.b16 %v543
          %v607 = vunpack.c.l.b16 %v544
          %v608 = vunpack.c.h.b16 %v544
          %v609 = vunpack.c.l.b16 %v545
          %v610 = vunpack.c.h.b16 %v545
          %v611 = vunpack.c.l.b16 %v546
          %v612 = vunpack.c.h.b16 %v546
          %v613 = vpack.c.b16 %v583, %v581
          %v614 = vpack.c.b16 %v584, %v582
          %v615 = vpack.c.b16 %v587, %v585
          %v616 = vpack.c.b16 %v588, %v586
          %v617 = vpack.c.b16 %v591, %v589
          %v618 = vpack.c.b16 %v592, %v590
          %v619 = vpack.c.b16 %v595, %v593
          %v620 = vpack.c.b16 %v596, %v594
          %v621 = vpack.c.b16 %v599, %v597
          %v622 = vpack.c.b16 %v600, %v598
          %v623 = vpack.c.b16 %v603, %v601
          %v624 = vpack.c.b16 %v604, %v602
          %v625 = vpack.c.b16 %v607, %v605
          %v626 = vpack.c.b16 %v608, %v606
          %v627 = vpack.c.b16 %v611, %v609
          %v628 = vpack.c.b16 %v612, %v610
          %645 = vmatprep.subr.bf16.mxu0 %v614
          %646 = vmatpush1.bf16.msra.mxu0 %v613
          %647 = vmatprep.subr.bf16.mxu0 %v616
          %648 = vmatpush1.bf16.msra.mxu0 %v615
          %649 = vmatprep.subr.bf16.mxu0 %v618
          %650 = vmatpush1.bf16.msra.mxu0 %v617
          %651 = vmatprep.subr.bf16.mxu0 %v620
          %652 = vmatpush1.bf16.msra.mxu0 %v619
          %653 = vmatprep.subr.bf16.mxu0 %v622
          %654 = vmatpush1.bf16.msra.mxu0 %v621
          %655 = vmatprep.subr.bf16.mxu0 %v624
          %656 = vmatpush1.bf16.msra.mxu0 %v623
          %657 = vmatprep.subr.bf16.mxu0 %v626
          %658 = vmatpush1.bf16.msra.mxu0 %v625
          %659 = vmatprep.subr.bf16.mxu0 %v628
          %660 = vmatpush1.bf16.msra.mxu0 %v627
          %661 = vmatprep.subr.bf16.mxu0 0
          %662 = vmatpush1.bf16.msra.mxu0 0
          %663 = vmatprep.subr.bf16.mxu0 0
          %664 = vmatpush1.bf16.msra.mxu0 0
          %665 = vmatprep.subr.bf16.mxu0 0
          %666 = vmatpush1.bf16.msra.mxu0 0
          %667 = vmatprep.subr.bf16.mxu0 0
          %668 = vmatpush1.bf16.msra.mxu0 0
          %669 = vmatprep.subr.bf16.mxu0 0
          %670 = vmatpush1.bf16.msra.mxu0 0
          %671 = vmatprep.subr.bf16.mxu0 0
          %672 = vmatpush1.bf16.msra.mxu0 0
          %673 = vmatprep.subr.bf16.mxu0 0
          %674 = vmatpush1.bf16.msra.mxu0 0
          %675 = vmatprep.subr.bf16.mxu0 0
          %676 = vmatpush1.bf16.msra.mxu0 0
          %677 = vmatprep.mubr.bf16.mxu0 0
          %678 = vmatmul.mubr.bf16.gmra.mrb[0].mxu0 %v563
          %v679 = vpop.f32.mrb[0].mxu0
          %v680 = vadd.f32 %v552, %v679
          %v681 = vpop.f32.mrb[0].mxu0
          %v682 = vadd.f32 %v556, %v681
          %v683 = vpop.f32.mrb[0].mxu0
          %v684 = vadd.f32 %v552, %v683
          %v685 = vpop.f32.mrb[0].mxu0
          %v686 = vadd.f32 %v556, %v685
          %687 = vdwg.mxu0
          %v688 = vpack.c.bf16 %v684, %v680
          %v689 = vpack.c.bf16 %v686, %v682
          %691 = vrot.lane.b32.xlu0 %v688, 96
          %v692 = vpop.permute.xlu0 %691
          %693 = vrot.lane.b32.xlu0 %v688, 64
          %v694 = vpop.permute.xlu0 %693
          %695 = vrot.lane.b32.xlu0 %v688, 32
          %v696 = vpop.permute.xlu0 %695
          %v699 = vpack.i.b16 %v692, %v688
          %v701 = vshrl.u32 %v688, 16
          %v702 = vshrl.u32 %v692, 16
          %v703 = vpack.i.b16 %v702, %v701
          %v707 = vpack.i.b16 %v696, %v694
          %v709 = vshrl.u32 %v694, 16
          %v710 = vshrl.u32 %v696, 16
          %v711 = vpack.i.b16 %v710, %v709
          %v714 = vpack.i.b16 0, 0
          %v716 = vshrl.u32 0, 16
          %v717 = vpack.i.b16 %v716, %v716
          %v719 = vcombine.high %v699, %v714
          %v721 = vunpack.c.l.s4 1983009808
          %v722 = vunpack.c.0.s8 %v721
          %v723 = vlaneseq
          %v724 = vshrl.u32 %v723, 7
          %v725 = vsub.s32 %v722, %v724
          %v726 = vrot.slane %v699, %v725
          %v728 = vunpack.c.l.s4 1983009808
          %v729 = vunpack.c.0.s8 %v728
          %v730 = vlaneseq
          %v731 = vshrl.u32 %v730, 7
          %v732 = vsub.s32 %v729, %v731
          %v733 = vrot.slane %v719, %v732
          %v734 = vcombine.high %v707, %v714
          %v736 = vunpack.c.l.s4 1983009808
          %v737 = vunpack.c.0.s8 %v736
          %v738 = vlaneseq
          %v739 = vshrl.u32 %v738, 7
          %v740 = vsub.s32 %v737, %v739
          %v741 = vrot.slane %v707, %v740
          %v743 = vunpack.c.l.s4 1983009808
          %v744 = vunpack.c.0.s8 %v743
          %v745 = vlaneseq
          %v746 = vshrl.u32 %v745, 7
          %v747 = vsub.s32 %v744, %v746
          %v748 = vrot.slane %v734, %v747
          %v749 = vcombine.low %v726, %v741
          %v750 = vcombine.high %v726, %v741
          %v752 = vunpack.c.l.s4 1934713408
          %v753 = vunpack.c.0.s8 %v752
          %v754 = vlaneseq
          %v755 = vshrl.u32 %v754, 7
          %v756 = vsub.s32 %v753, %v755
          %v757 = vrot.slane %v749, %v756
          %v759 = vunpack.c.l.s4 1934713408
          %v760 = vunpack.c.0.s8 %v759
          %v761 = vlaneseq
          %v762 = vshrl.u32 %v761, 7
          %v763 = vsub.s32 %v760, %v762
          %v764 = vrot.slane %v750, %v763
          %v765 = vcombine.low %v733, %v748
          %v766 = vcombine.high %v733, %v748
          %v768 = vunpack.c.l.s4 1934713408
          %v769 = vunpack.c.0.s8 %v768
          %v770 = vlaneseq
          %v771 = vshrl.u32 %v770, 7
          %v772 = vsub.s32 %v769, %v771
          %v773 = vrot.slane %v765, %v772
          %v775 = vunpack.c.l.s4 1934713408
          %v776 = vunpack.c.0.s8 %v775
          %v777 = vlaneseq
          %v778 = vshrl.u32 %v777, 7
          %v779 = vsub.s32 %v776, %v778
          %v780 = vrot.slane %v766, %v779
          %v781 = vcombine.high %v757, 0
          %v782 = vcombine.high %v764, 0
          %v783 = vcombine.high %v773, 0
          %v784 = vcombine.high %v780, 0
          %v785 = vcombine.high %v703, %v717
          %v787 = vunpack.c.l.s4 1983009808
          %v788 = vunpack.c.0.s8 %v787
          %v789 = vlaneseq
          %v790 = vshrl.u32 %v789, 7
          %v791 = vsub.s32 %v788, %v790
          %v792 = vrot.slane %v703, %v791
          %v794 = vunpack.c.l.s4 1983009808
          %v795 = vunpack.c.0.s8 %v794
          %v796 = vlaneseq
          %v797 = vshrl.u32 %v796, 7
          %v798 = vsub.s32 %v795, %v797
          %v799 = vrot.slane %v785, %v798
          %v800 = vcombine.high %v711, %v717
          %v802 = vunpack.c.l.s4 1983009808
          %v803 = vunpack.c.0.s8 %v802
          %v804 = vlaneseq
          %v805 = vshrl.u32 %v804, 7
          %v806 = vsub.s32 %v803, %v805
          %v807 = vrot.slane %v711, %v806
          %v809 = vunpack.c.l.s4 1983009808
          %v810 = vunpack.c.0.s8 %v809
          %v811 = vlaneseq
          %v812 = vshrl.u32 %v811, 7
          %v813 = vsub.s32 %v810, %v812
          %v814 = vrot.slane %v800, %v813
          %v815 = vcombine.low %v792, %v807
          %v816 = vcombine.high %v792, %v807
          %v818 = vunpack.c.l.s4 1934713408
          %v819 = vunpack.c.0.s8 %v818
          %v820 = vlaneseq
          %v821 = vshrl.u32 %v820, 7
          %v822 = vsub.s32 %v819, %v821
          %v823 = vrot.slane %v815, %v822
          %v825 = vunpack.c.l.s4 1934713408
          %v826 = vunpack.c.0.s8 %v825
          %v827 = vlaneseq
          %v828 = vshrl.u32 %v827, 7
          %v829 = vsub.s32 %v826, %v828
          %v830 = vrot.slane %v816, %v829
          %v831 = vcombine.low %v799, %v814
          %v832 = vcombine.high %v799, %v814
          %v834 = vunpack.c.l.s4 1934713408
          %v835 = vunpack.c.0.s8 %v834
          %v836 = vlaneseq
          %v837 = vshrl.u32 %v836, 7
          %v838 = vsub.s32 %v835, %v837
          %v839 = vrot.slane %v831, %v838
          %v841 = vunpack.c.l.s4 1934713408
          %v842 = vunpack.c.0.s8 %v841
          %v843 = vlaneseq
          %v844 = vshrl.u32 %v843, 7
          %v845 = vsub.s32 %v842, %v844
          %v846 = vrot.slane %v832, %v845
          %v847 = vcombine.high %v823, 0
          %v848 = vcombine.high %v830, 0
          %v849 = vcombine.high %v839, 0
          %v850 = vcombine.high %v846, 0
          %852 = vrot.lane.b32.xlu0 %v689, 96
          %v853 = vpop.permute.xlu0 %852
          %854 = vrot.lane.b32.xlu0 %v689, 64
          %v855 = vpop.permute.xlu0 %854
          %856 = vrot.lane.b32.xlu0 %v689, 32
          %v857 = vpop.permute.xlu0 %856
          %v860 = vpack.i.b16 %v853, %v689
          %v862 = vshrl.u32 %v689, 16
          %v863 = vshrl.u32 %v853, 16
          %v864 = vpack.i.b16 %v863, %v862
          %v868 = vpack.i.b16 %v857, %v855
          %v870 = vshrl.u32 %v855, 16
          %v871 = vshrl.u32 %v857, 16
          %v872 = vpack.i.b16 %v871, %v870
          %v874 = vcombine.high %v860, %v714
          %v876 = vunpack.c.l.s4 1983009808
          %v877 = vunpack.c.0.s8 %v876
          %v878 = vlaneseq
          %v879 = vshrl.u32 %v878, 7
          %v880 = vsub.s32 %v877, %v879
          %v881 = vrot.slane %v860, %v880
          %v883 = vunpack.c.l.s4 1983009808
          %v884 = vunpack.c.0.s8 %v883
          %v885 = vlaneseq
          %v886 = vshrl.u32 %v885, 7
          %v887 = vsub.s32 %v884, %v886
          %v888 = vrot.slane %v874, %v887
          %v889 = vcombine.high %v868, %v714
          %v891 = vunpack.c.l.s4 1983009808
          %v892 = vunpack.c.0.s8 %v891
          %v893 = vlaneseq
          %v894 = vshrl.u32 %v893, 7
          %v895 = vsub.s32 %v892, %v894
          %v896 = vrot.slane %v868, %v895
          %v898 = vunpack.c.l.s4 1983009808
          %v899 = vunpack.c.0.s8 %v898
          %v900 = vlaneseq
          %v901 = vshrl.u32 %v900, 7
          %v902 = vsub.s32 %v899, %v901
          %v903 = vrot.slane %v889, %v902
          %v904 = vcombine.low %v881, %v896
          %v905 = vcombine.high %v881, %v896
          %v907 = vunpack.c.l.s4 1934713408
          %v908 = vunpack.c.0.s8 %v907
          %v909 = vlaneseq
          %v910 = vshrl.u32 %v909, 7
          %v911 = vsub.s32 %v908, %v910
          %v912 = vrot.slane %v904, %v911
          %v914 = vunpack.c.l.s4 1934713408
          %v915 = vunpack.c.0.s8 %v914
          %v916 = vlaneseq
          %v917 = vshrl.u32 %v916, 7
          %v918 = vsub.s32 %v915, %v917
          %v919 = vrot.slane %v905, %v918
          %v920 = vcombine.low %v888, %v903
          %v921 = vcombine.high %v888, %v903
          %v923 = vunpack.c.l.s4 1934713408
          %v924 = vunpack.c.0.s8 %v923
          %v925 = vlaneseq
          %v926 = vshrl.u32 %v925, 7
          %v927 = vsub.s32 %v924, %v926
          %v928 = vrot.slane %v920, %v927
          %v930 = vunpack.c.l.s4 1934713408
          %v931 = vunpack.c.0.s8 %v930
          %v932 = vlaneseq
          %v933 = vshrl.u32 %v932, 7
          %v934 = vsub.s32 %v931, %v933
          %v935 = vrot.slane %v921, %v934
          %v936 = vcombine.high %v912, 0
          %v937 = vcombine.high %v919, 0
          %v938 = vcombine.high %v928, 0
          %v939 = vcombine.high %v935, 0
          %v940 = vcombine.high %v864, %v717
          %v942 = vunpack.c.l.s4 1983009808
          %v943 = vunpack.c.0.s8 %v942
          %v944 = vlaneseq
          %v945 = vshrl.u32 %v944, 7
          %v946 = vsub.s32 %v943, %v945
          %v947 = vrot.slane %v864, %v946
          %v949 = vunpack.c.l.s4 1983009808
          %v950 = vunpack.c.0.s8 %v949
          %v951 = vlaneseq
          %v952 = vshrl.u32 %v951, 7
          %v953 = vsub.s32 %v950, %v952
          %v954 = vrot.slane %v940, %v953
          %v955 = vcombine.high %v872, %v717
          %v957 = vunpack.c.l.s4 1983009808
          %v958 = vunpack.c.0.s8 %v957
          %v959 = vlaneseq
          %v960 = vshrl.u32 %v959, 7
          %v961 = vsub.s32 %v958, %v960
          %v962 = vrot.slane %v872, %v961
          %v964 = vunpack.c.l.s4 1983009808
          %v965 = vunpack.c.0.s8 %v964
          %v966 = vlaneseq
          %v967 = vshrl.u32 %v966, 7
          %v968 = vsub.s32 %v965, %v967
          %v969 = vrot.slane %v955, %v968
          %v970 = vcombine.low %v947, %v962
          %v971 = vcombine.high %v947, %v962
          %v973 = vunpack.c.l.s4 1934713408
          %v974 = vunpack.c.0.s8 %v973
          %v975 = vlaneseq
          %v976 = vshrl.u32 %v975, 7
          %v977 = vsub.s32 %v974, %v976
          %v978 = vrot.slane %v970, %v977
          %v980 = vunpack.c.l.s4 1934713408
          %v981 = vunpack.c.0.s8 %v980
          %v982 = vlaneseq
          %v983 = vshrl.u32 %v982, 7
          %v984 = vsub.s32 %v981, %v983
          %v985 = vrot.slane %v971, %v984
          %v986 = vcombine.low %v954, %v969
          %v987 = vcombine.high %v954, %v969
          %v989 = vunpack.c.l.s4 1934713408
          %v990 = vunpack.c.0.s8 %v989
          %v991 = vlaneseq
          %v992 = vshrl.u32 %v991, 7
          %v993 = vsub.s32 %v990, %v992
          %v994 = vrot.slane %v986, %v993
          %v996 = vunpack.c.l.s4 1934713408
          %v997 = vunpack.c.0.s8 %v996
          %v998 = vlaneseq
          %v999 = vshrl.u32 %v998, 7
          %v1000 = vsub.s32 %v997, %v999
          %v1001 = vrot.slane %v987, %v1000
          %v1002 = vcombine.high %v978, 0
          %v1003 = vcombine.high %v985, 0
          %v1004 = vcombine.high %v994, 0
          %v1005 = vcombine.high %v1001, 0
          %1006 = vxpose.xlu0.c.b16.start [1/8] %v757, 128
          %1007 = vxpose.xlu0.c.b16.cont [2/8] 0, 128
          %1008 = vxpose.xlu0.c.b16.cont [3/8] 0, 128
          %1009 = vxpose.xlu0.c.b16.cont [4/8] 0, 128
          %1010 = vxpose.xlu0.c.b16.cont [5/8] 0, 128
          %1011 = vxpose.xlu0.c.b16.cont [6/8] 0, 128
          %1012 = vxpose.xlu0.c.b16.cont [7/8] 0, 128
          %1013 = vxpose.xlu0.c.b16.end [8/8] 0, 128
          %v1014 = vpop.trf.xlu0
          %v1015 = vpop.trf.xlu0
          %v1016 = vpop.trf.xlu0
          %v1017 = vpop.trf.xlu0
          %v1018 = vpop.trf.xlu0
          %v1019 = vpop.trf.xlu0
          %v1020 = vpop.trf.xlu0
          %v1021 = vpop.trf.xlu0
          %1022 = vxpose.xlu0.c.b16.start [1/8] %v823, 128
          %1023 = vxpose.xlu0.c.b16.cont [2/8] 0, 128
          %1024 = vxpose.xlu0.c.b16.cont [3/8] 0, 128
          %1025 = vxpose.xlu0.c.b16.cont [4/8] 0, 128
          %1026 = vxpose.xlu0.c.b16.cont [5/8] 0, 128
          %1027 = vxpose.xlu0.c.b16.cont [6/8] 0, 128
          %1028 = vxpose.xlu0.c.b16.cont [7/8] 0, 128
          %1029 = vxpose.xlu0.c.b16.end [8/8] 0, 128
          %v1030 = vpop.trf.xlu0
          %v1031 = vpop.trf.xlu0
          %v1032 = vpop.trf.xlu0
          %v1033 = vpop.trf.xlu0
          %v1034 = vpop.trf.xlu0
          %v1035 = vpop.trf.xlu0
          %v1036 = vpop.trf.xlu0
          %v1037 = vpop.trf.xlu0
          %1038 = vxpose.xlu0.c.b16.start [1/8] %v781, 128
          %1039 = vxpose.xlu0.c.b16.cont [2/8] 0, 128
          %1040 = vxpose.xlu0.c.b16.cont [3/8] 0, 128
          %1041 = vxpose.xlu0.c.b16.cont [4/8] 0, 128
          %1042 = vxpose.xlu0.c.b16.cont [5/8] 0, 128
          %1043 = vxpose.xlu0.c.b16.cont [6/8] 0, 128
          %1044 = vxpose.xlu0.c.b16.cont [7/8] 0, 128
          %1045 = vxpose.xlu0.c.b16.end [8/8] 0, 128
          %v1046 = vpop.trf.xlu0
          %v1047 = vpop.trf.xlu0
          %v1048 = vpop.trf.xlu0
          %v1049 = vpop.trf.xlu0
          %v1050 = vpop.trf.xlu0
          %v1051 = vpop.trf.xlu0
          %v1052 = vpop.trf.xlu0
          %v1053 = vpop.trf.xlu0
          %1054 = vxpose.xlu0.c.b16.start [1/8] %v847, 128
          %1055 = vxpose.xlu0.c.b16.cont [2/8] 0, 128
          %1056 = vxpose.xlu0.c.b16.cont [3/8] 0, 128
          %1057 = vxpose.xlu0.c.b16.cont [4/8] 0, 128
          %1058 = vxpose.xlu0.c.b16.cont [5/8] 0, 128
          %1059 = vxpose.xlu0.c.b16.cont [6/8] 0, 128
          %1060 = vxpose.xlu0.c.b16.cont [7/8] 0, 128
          %1061 = vxpose.xlu0.c.b16.end [8/8] 0, 128
          %v1062 = vpop.trf.xlu0
          %v1063 = vpop.trf.xlu0
          %v1064 = vpop.trf.xlu0
          %v1065 = vpop.trf.xlu0
          %v1066 = vpop.trf.xlu0
          %v1067 = vpop.trf.xlu0
          %v1068 = vpop.trf.xlu0
          %v1069 = vpop.trf.xlu0
          %1070 = vxpose.xlu0.c.b16.start [1/8] %v764, 128
          %1071 = vxpose.xlu0.c.b16.cont [2/8] 0, 128
          %1072 = vxpose.xlu0.c.b16.cont [3/8] 0, 128
          %1073 = vxpose.xlu0.c.b16.cont [4/8] 0, 128
          %1074 = vxpose.xlu0.c.b16.cont [5/8] 0, 128
          %1075 = vxpose.xlu0.c.b16.cont [6/8] 0, 128
          %1076 = vxpose.xlu0.c.b16.cont [7/8] 0, 128
          %1077 = vxpose.xlu0.c.b16.end [8/8] 0, 128
          %v1078 = vpop.trf.xlu0
          %v1079 = vpop.trf.xlu0
          %v1080 = vpop.trf.xlu0
          %v1081 = vpop.trf.xlu0
          %v1082 = vpop.trf.xlu0
          %v1083 = vpop.trf.xlu0
          %v1084 = vpop.trf.xlu0
          %v1085 = vpop.trf.xlu0
          %1086 = vxpose.xlu0.c.b16.start [1/8] %v830, 128
          %1087 = vxpose.xlu0.c.b16.cont [2/8] 0, 128
          %1088 = vxpose.xlu0.c.b16.cont [3/8] 0, 128
          %1089 = vxpose.xlu0.c.b16.cont [4/8] 0, 128
          %1090 = vxpose.xlu0.c.b16.cont [5/8] 0, 128
          %1091 = vxpose.xlu0.c.b16.cont [6/8] 0, 128
          %1092 = vxpose.xlu0.c.b16.cont [7/8] 0, 128
          %1093 = vxpose.xlu0.c.b16.end [8/8] 0, 128
          %v1094 = vpop.trf.xlu0
          %v1095 = vpop.trf.xlu0
          %v1096 = vpop.trf.xlu0
          %v1097 = vpop.trf.xlu0
          %v1098 = vpop.trf.xlu0
          %v1099 = vpop.trf.xlu0
          %v1100 = vpop.trf.xlu0
          %v1101 = vpop.trf.xlu0
          %1102 = vxpose.xlu0.c.b16.start [1/8] %v782, 128
          %1103 = vxpose.xlu0.c.b16.cont [2/8] 0, 128
          %1104 = vxpose.xlu0.c.b16.cont [3/8] 0, 128
          %1105 = vxpose.xlu0.c.b16.cont [4/8] 0, 128
          %1106 = vxpose.xlu0.c.b16.cont [5/8] 0, 128
          %1107 = vxpose.xlu0.c.b16.cont [6/8] 0, 128
          %1108 = vxpose.xlu0.c.b16.cont [7/8] 0, 128
          %1109 = vxpose.xlu0.c.b16.end [8/8] 0, 128
          %v1110 = vpop.trf.xlu0
          %v1111 = vpop.trf.xlu0
          %v1112 = vpop.trf.xlu0
          %v1113 = vpop.trf.xlu0
          %v1114 = vpop.trf.xlu0
          %v1115 = vpop.trf.xlu0
          %v1116 = vpop.trf.xlu0
          %v1117 = vpop.trf.xlu0
          %1118 = vxpose.xlu0.c.b16.start [1/8] %v848, 128
          %1119 = vxpose.xlu0.c.b16.cont [2/8] 0, 128
          %1120 = vxpose.xlu0.c.b16.cont [3/8] 0, 128
          %1121 = vxpose.xlu0.c.b16.cont [4/8] 0, 128
          %1122 = vxpose.xlu0.c.b16.cont [5/8] 0, 128
          %1123 = vxpose.xlu0.c.b16.cont [6/8] 0, 128
          %1124 = vxpose.xlu0.c.b16.cont [7/8] 0, 128
          %1125 = vxpose.xlu0.c.b16.end [8/8] 0, 128
          %v1126 = vpop.trf.xlu0
          %v1127 = vpop.trf.xlu0
          %v1128 = vpop.trf.xlu0
          %v1129 = vpop.trf.xlu0
          %v1130 = vpop.trf.xlu0
          %v1131 = vpop.trf.xlu0
          %v1132 = vpop.trf.xlu0
          %v1133 = vpop.trf.xlu0
          %1134 = vxpose.xlu0.c.b16.start [1/8] %v773, 128
          %1135 = vxpose.xlu0.c.b16.cont [2/8] 0, 128
          %1136 = vxpose.xlu0.c.b16.cont [3/8] 0, 128
          %1137 = vxpose.xlu0.c.b16.cont [4/8] 0, 128
          %1138 = vxpose.xlu0.c.b16.cont [5/8] 0, 128
          %1139 = vxpose.xlu0.c.b16.cont [6/8] 0, 128
          %1140 = vxpose.xlu0.c.b16.cont [7/8] 0, 128
          %1141 = vxpose.xlu0.c.b16.end [8/8] 0, 128
          %v1142 = vpop.trf.xlu0
          %v1143 = vpop.trf.xlu0
          %v1144 = vpop.trf.xlu0
          %v1145 = vpop.trf.xlu0
          %v1146 = vpop.trf.xlu0
          %v1147 = vpop.trf.xlu0
          %v1148 = vpop.trf.xlu0
          %v1149 = vpop.trf.xlu0
          %1150 = vxpose.xlu0.c.b16.start [1/8] %v839, 128
          %1151 = vxpose.xlu0.c.b16.cont [2/8] 0, 128
          %1152 = vxpose.xlu0.c.b16.cont [3/8] 0, 128
          %1153 = vxpose.xlu0.c.b16.cont [4/8] 0, 128
          %1154 = vxpose.xlu0.c.b16.cont [5/8] 0, 128
          %1155 = vxpose.xlu0.c.b16.cont [6/8] 0, 128
          %1156 = vxpose.xlu0.c.b16.cont [7/8] 0, 128
          %1157 = vxpose.xlu0.c.b16.end [8/8] 0, 128
          %v1158 = vpop.trf.xlu0
          %v1159 = vpop.trf.xlu0
          %v1160 = vpop.trf.xlu0
          %v1161 = vpop.trf.xlu0
          %v1162 = vpop.trf.xlu0
          %v1163 = vpop.trf.xlu0
          %v1164 = vpop.trf.xlu0
          %v1165 = vpop.trf.xlu0
          %1166 = vxpose.xlu0.c.b16.start [1/8] %v783, 128
          %1167 = vxpose.xlu0.c.b16.cont [2/8] 0, 128
          %1168 = vxpose.xlu0.c.b16.cont [3/8] 0, 128
          %1169 = vxpose.xlu0.c.b16.cont [4/8] 0, 128
          %1170 = vxpose.xlu0.c.b16.cont [5/8] 0, 128
          %1171 = vxpose.xlu0.c.b16.cont [6/8] 0, 128
          %1172 = vxpose.xlu0.c.b16.cont [7/8] 0, 128
          %1173 = vxpose.xlu0.c.b16.end [8/8] 0, 128
          %v1174 = vpop.trf.xlu0
          %v1175 = vpop.trf.xlu0
          %v1176 = vpop.trf.xlu0
          %v1177 = vpop.trf.xlu0
          %v1178 = vpop.trf.xlu0
          %v1179 = vpop.trf.xlu0
          %v1180 = vpop.trf.xlu0
          %v1181 = vpop.trf.xlu0
          %1182 = vxpose.xlu0.c.b16.start [1/8] %v849, 128
          %1183 = vxpose.xlu0.c.b16.cont [2/8] 0, 128
          %1184 = vxpose.xlu0.c.b16.cont [3/8] 0, 128
          %1185 = vxpose.xlu0.c.b16.cont [4/8] 0, 128
          %1186 = vxpose.xlu0.c.b16.cont [5/8] 0, 128
          %1187 = vxpose.xlu0.c.b16.cont [6/8] 0, 128
          %1188 = vxpose.xlu0.c.b16.cont [7/8] 0, 128
          %1189 = vxpose.xlu0.c.b16.end [8/8] 0, 128
          %v1190 = vpop.trf.xlu0
          %v1191 = vpop.trf.xlu0
          %v1192 = vpop.trf.xlu0
          %v1193 = vpop.trf.xlu0
          %v1194 = vpop.trf.xlu0
          %v1195 = vpop.trf.xlu0
          %v1196 = vpop.trf.xlu0
          %v1197 = vpop.trf.xlu0
          %1198 = vxpose.xlu0.c.b16.start [1/8] %v780, 128
          %1199 = vxpose.xlu0.c.b16.cont [2/8] 0, 128
          %1200 = vxpose.xlu0.c.b16.cont [3/8] 0, 128
          %1201 = vxpose.xlu0.c.b16.cont [4/8] 0, 128
          %1202 = vxpose.xlu0.c.b16.cont [5/8] 0, 128
          %1203 = vxpose.xlu0.c.b16.cont [6/8] 0, 128
          %1204 = vxpose.xlu0.c.b16.cont [7/8] 0, 128
          %1205 = vxpose.xlu0.c.b16.end [8/8] 0, 128
          %v1206 = vpop.trf.xlu0
          %v1207 = vpop.trf.xlu0
          %v1208 = vpop.trf.xlu0
          %v1209 = vpop.trf.xlu0
          %v1210 = vpop.trf.xlu0
          %v1211 = vpop.trf.xlu0
          %v1212 = vpop.trf.xlu0
          %v1213 = vpop.trf.xlu0
          %1214 = vxpose.xlu0.c.b16.start [1/8] %v846, 128
          %1215 = vxpose.xlu0.c.b16.cont [2/8] 0, 128
          %1216 = vxpose.xlu0.c.b16.cont [3/8] 0, 128
          %1217 = vxpose.xlu0.c.b16.cont [4/8] 0, 128
          %1218 = vxpose.xlu0.c.b16.cont [5/8] 0, 128
          %1219 = vxpose.xlu0.c.b16.cont [6/8] 0, 128
          %1220 = vxpose.xlu0.c.b16.cont [7/8] 0, 128
          %1221 = vxpose.xlu0.c.b16.end [8/8] 0, 128
          %v1222 = vpop.trf.xlu0
          %v1223 = vpop.trf.xlu0
          %v1224 = vpop.trf.xlu0
          %v1225 = vpop.trf.xlu0
          %v1226 = vpop.trf.xlu0
          %v1227 = vpop.trf.xlu0
          %v1228 = vpop.trf.xlu0
          %v1229 = vpop.trf.xlu0
          %1230 = vxpose.xlu0.c.b16.start [1/8] %v784, 128
          %1231 = vxpose.xlu0.c.b16.cont [2/8] 0, 128
          %1232 = vxpose.xlu0.c.b16.cont [3/8] 0, 128
          %1233 = vxpose.xlu0.c.b16.cont [4/8] 0, 128
          %1234 = vxpose.xlu0.c.b16.cont [5/8] 0, 128
          %1235 = vxpose.xlu0.c.b16.cont [6/8] 0, 128
          %1236 = vxpose.xlu0.c.b16.cont [7/8] 0, 128
          %1237 = vxpose.xlu0.c.b16.end [8/8] 0, 128
          %v1238 = vpop.trf.xlu0
          %v1239 = vpop.trf.xlu0
          %v1240 = vpop.trf.xlu0
          %v1241 = vpop.trf.xlu0
          %v1242 = vpop.trf.xlu0
          %v1243 = vpop.trf.xlu0
          %v1244 = vpop.trf.xlu0
          %v1245 = vpop.trf.xlu0
          %1246 = vxpose.xlu0.c.b16.start [1/8] %v850, 128
          %1247 = vxpose.xlu0.c.b16.cont [2/8] 0, 128
          %1248 = vxpose.xlu0.c.b16.cont [3/8] 0, 128
          %1249 = vxpose.xlu0.c.b16.cont [4/8] 0, 128
          %1250 = vxpose.xlu0.c.b16.cont [5/8] 0, 128
          %1251 = vxpose.xlu0.c.b16.cont [6/8] 0, 128
          %1252 = vxpose.xlu0.c.b16.cont [7/8] 0, 128
          %1253 = vxpose.xlu0.c.b16.end [8/8] 0, 128
          %v1254 = vpop.trf.xlu0
          %v1255 = vpop.trf.xlu0
          %v1256 = vpop.trf.xlu0
          %v1257 = vpop.trf.xlu0
          %v1258 = vpop.trf.xlu0
          %v1259 = vpop.trf.xlu0
          %v1260 = vpop.trf.xlu0
          %v1261 = vpop.trf.xlu0
          %v1262 = vcombine.low %v1014, %v1078
          %v1263 = vcombine.high %v1014, %v1078
          %v1265 = vunpack.c.l.s4 1983009808
          %v1266 = vunpack.c.0.s8 %v1265
          %v1267 = vlaneseq
          %v1268 = vshrl.u32 %v1267, 7
          %v1269 = vsub.s32 %v1266, %v1268
          %v1270 = vrot.slane %v1262, %v1269
          %v1272 = vunpack.c.l.s4 1983009808
          %v1273 = vunpack.c.0.s8 %v1272
          %v1274 = vlaneseq
          %v1275 = vshrl.u32 %v1274, 7
          %v1276 = vsub.s32 %v1273, %v1275
          %v1277 = vrot.slane %v1263, %v1276
          %v1278 = vcombine.low %v1046, %v1110
          %v1279 = vcombine.high %v1046, %v1110
          %v1281 = vunpack.c.l.s4 1983009808
          %v1282 = vunpack.c.0.s8 %v1281
          %v1283 = vlaneseq
          %v1284 = vshrl.u32 %v1283, 7
          %v1285 = vsub.s32 %v1282, %v1284
          %v1286 = vrot.slane %v1278, %v1285
          %v1288 = vunpack.c.l.s4 1983009808
          %v1289 = vunpack.c.0.s8 %v1288
          %v1290 = vlaneseq
          %v1291 = vshrl.u32 %v1290, 7
          %v1292 = vsub.s32 %v1289, %v1291
          %v1293 = vrot.slane %v1279, %v1292
          %v1294 = vcombine.low %v1142, %v1206
          %v1295 = vcombine.high %v1142, %v1206
          %v1297 = vunpack.c.l.s4 1983009808
          %v1298 = vunpack.c.0.s8 %v1297
          %v1299 = vlaneseq
          %v1300 = vshrl.u32 %v1299, 7
          %v1301 = vsub.s32 %v1298, %v1300
          %v1302 = vrot.slane %v1294, %v1301
          %v1304 = vunpack.c.l.s4 1983009808
          %v1305 = vunpack.c.0.s8 %v1304
          %v1306 = vlaneseq
          %v1307 = vshrl.u32 %v1306, 7
          %v1308 = vsub.s32 %v1305, %v1307
          %v1309 = vrot.slane %v1295, %v1308
          %v1310 = vcombine.low %v1174, %v1238
          %v1311 = vcombine.high %v1174, %v1238
          %v1313 = vunpack.c.l.s4 1983009808
          %v1314 = vunpack.c.0.s8 %v1313
          %v1315 = vlaneseq
          %v1316 = vshrl.u32 %v1315, 7
          %v1317 = vsub.s32 %v1314, %v1316
          %v1318 = vrot.slane %v1310, %v1317
          %v1320 = vunpack.c.l.s4 1983009808
          %v1321 = vunpack.c.0.s8 %v1320
          %v1322 = vlaneseq
          %v1323 = vshrl.u32 %v1322, 7
          %v1324 = vsub.s32 %v1321, %v1323
          %v1325 = vrot.slane %v1311, %v1324
          %v1326 = vcombine.low %v1270, %v1286
          %v1327 = vcombine.high %v1270, %v1286
          %v1329 = vunpack.c.l.s4 1934713408
          %v1330 = vunpack.c.0.s8 %v1329
          %v1331 = vlaneseq
          %v1332 = vshrl.u32 %v1331, 7
          %v1333 = vsub.s32 %v1330, %v1332
          %v1334 = vrot.slane %v1326, %v1333
          %v1336 = vunpack.c.l.s4 1934713408
          %v1337 = vunpack.c.0.s8 %v1336
          %v1338 = vlaneseq
          %v1339 = vshrl.u32 %v1338, 7
          %v1340 = vsub.s32 %v1337, %v1339
          %v1341 = vrot.slane %v1327, %v1340
          %v1342 = vcombine.low %v1277, %v1293
          %v1343 = vcombine.high %v1277, %v1293
          %v1345 = vunpack.c.l.s4 1934713408
          %v1346 = vunpack.c.0.s8 %v1345
          %v1347 = vlaneseq
          %v1348 = vshrl.u32 %v1347, 7
          %v1349 = vsub.s32 %v1346, %v1348
          %v1350 = vrot.slane %v1342, %v1349
          %v1352 = vunpack.c.l.s4 1934713408
          %v1353 = vunpack.c.0.s8 %v1352
          %v1354 = vlaneseq
          %v1355 = vshrl.u32 %v1354, 7
          %v1356 = vsub.s32 %v1353, %v1355
          %v1357 = vrot.slane %v1343, %v1356
          %v1358 = vcombine.low %v1302, %v1318
          %v1359 = vcombine.high %v1302, %v1318
          %v1361 = vunpack.c.l.s4 1934713408
          %v1362 = vunpack.c.0.s8 %v1361
          %v1363 = vlaneseq
          %v1364 = vshrl.u32 %v1363, 7
          %v1365 = vsub.s32 %v1362, %v1364
          %v1366 = vrot.slane %v1358, %v1365
          %v1368 = vunpack.c.l.s4 1934713408
          %v1369 = vunpack.c.0.s8 %v1368
          %v1370 = vlaneseq
          %v1371 = vshrl.u32 %v1370, 7
          %v1372 = vsub.s32 %v1369, %v1371
          %v1373 = vrot.slane %v1359, %v1372
          %v1374 = vcombine.low %v1309, %v1325
          %v1375 = vcombine.high %v1309, %v1325
          %v1377 = vunpack.c.l.s4 1934713408
          %v1378 = vunpack.c.0.s8 %v1377
          %v1379 = vlaneseq
          %v1380 = vshrl.u32 %v1379, 7
          %v1381 = vsub.s32 %v1378, %v1380
          %v1382 = vrot.slane %v1374, %v1381
          %v1384 = vunpack.c.l.s4 1934713408
          %v1385 = vunpack.c.0.s8 %v1384
          %v1386 = vlaneseq
          %v1387 = vshrl.u32 %v1386, 7
          %v1388 = vsub.s32 %v1385, %v1387
          %v1389 = vrot.slane %v1375, %v1388
          %v1390 = vcombine.low %v1334, %v1366
          %v1391 = vcombine.high %v1334, %v1366
          %v1392 = vcombine.low %v1341, %v1373
          %v1393 = vcombine.high %v1341, %v1373
          %v1394 = vcombine.low %v1350, %v1382
          %v1395 = vcombine.high %v1350, %v1382
          %v1396 = vcombine.low %v1357, %v1389
          %v1397 = vcombine.high %v1357, %v1389
          %v1398 = vcombine.low %v1030, %v1094
          %v1399 = vcombine.high %v1030, %v1094
          %v1401 = vunpack.c.l.s4 1983009808
          %v1402 = vunpack.c.0.s8 %v1401
          %v1403 = vlaneseq
          %v1404 = vshrl.u32 %v1403, 7
          %v1405 = vsub.s32 %v1402, %v1404
          %v1406 = vrot.slane %v1398, %v1405
          %v1408 = vunpack.c.l.s4 1983009808
          %v1409 = vunpack.c.0.s8 %v1408
          %v1410 = vlaneseq
          %v1411 = vshrl.u32 %v1410, 7
          %v1412 = vsub.s32 %v1409, %v1411
          %v1413 = vrot.slane %v1399, %v1412
          %v1414 = vcombine.low %v1062, %v1126
          %v1415 = vcombine.high %v1062, %v1126
          %v1417 = vunpack.c.l.s4 1983009808
          %v1418 = vunpack.c.0.s8 %v1417
          %v1419 = vlaneseq
          %v1420 = vshrl.u32 %v1419, 7
          %v1421 = vsub.s32 %v1418, %v1420
          %v1422 = vrot.slane %v1414, %v1421
          %v1424 = vunpack.c.l.s4 1983009808
          %v1425 = vunpack.c.0.s8 %v1424
          %v1426 = vlaneseq
          %v1427 = vshrl.u32 %v1426, 7
          %v1428 = vsub.s32 %v1425, %v1427
          %v1429 = vrot.slane %v1415, %v1428
          %v1430 = vcombine.low %v1158, %v1222
          %v1431 = vcombine.high %v1158, %v1222
          %v1433 = vunpack.c.l.s4 1983009808
          %v1434 = vunpack.c.0.s8 %v1433
          %v1435 = vlaneseq
          %v1436 = vshrl.u32 %v1435, 7
          %v1437 = vsub.s32 %v1434, %v1436
          %v1438 = vrot.slane %v1430, %v1437
          %v1440 = vunpack.c.l.s4 1983009808
          %v1441 = vunpack.c.0.s8 %v1440
          %v1442 = vlaneseq
          %v1443 = vshrl.u32 %v1442, 7
          %v1444 = vsub.s32 %v1441, %v1443
          %v1445 = vrot.slane %v1431, %v1444
          %v1446 = vcombine.low %v1190, %v1254
          %v1447 = vcombine.high %v1190, %v1254
          %v1449 = vunpack.c.l.s4 1983009808
          %v1450 = vunpack.c.0.s8 %v1449
          %v1451 = vlaneseq
          %v1452 = vshrl.u32 %v1451, 7
          %v1453 = vsub.s32 %v1450, %v1452
          %v1454 = vrot.slane %v1446, %v1453
          %v1456 = vunpack.c.l.s4 1983009808
          %v1457 = vunpack.c.0.s8 %v1456
          %v1458 = vlaneseq
          %v1459 = vshrl.u32 %v1458, 7
          %v1460 = vsub.s32 %v1457, %v1459
          %v1461 = vrot.slane %v1447, %v1460
          %v1462 = vcombine.low %v1406, %v1422
          %v1463 = vcombine.high %v1406, %v1422
          %v1465 = vunpack.c.l.s4 1934713408
          %v1466 = vunpack.c.0.s8 %v1465
          %v1467 = vlaneseq
          %v1468 = vshrl.u32 %v1467, 7
          %v1469 = vsub.s32 %v1466, %v1468
          %v1470 = vrot.slane %v1462, %v1469
          %v1472 = vunpack.c.l.s4 1934713408
          %v1473 = vunpack.c.0.s8 %v1472
          %v1474 = vlaneseq
          %v1475 = vshrl.u32 %v1474, 7
          %v1476 = vsub.s32 %v1473, %v1475
          %v1477 = vrot.slane %v1463, %v1476
          %v1478 = vcombine.low %v1413, %v1429
          %v1479 = vcombine.high %v1413, %v1429
          %v1481 = vunpack.c.l.s4 1934713408
          %v1482 = vunpack.c.0.s8 %v1481
          %v1483 = vlaneseq
          %v1484 = vshrl.u32 %v1483, 7
          %v1485 = vsub.s32 %v1482, %v1484
          %v1486 = vrot.slane %v1478, %v1485
          %v1488 = vunpack.c.l.s4 1934713408
          %v1489 = vunpack.c.0.s8 %v1488
          %v1490 = vlaneseq
          %v1491 = vshrl.u32 %v1490, 7
          %v1492 = vsub.s32 %v1489, %v1491
          %v1493 = vrot.slane %v1479, %v1492
          %v1494 = vcombine.low %v1438, %v1454
          %v1495 = vcombine.high %v1438, %v1454
          %v1497 = vunpack.c.l.s4 1934713408
          %v1498 = vunpack.c.0.s8 %v1497
          %v1499 = vlaneseq
          %v1500 = vshrl.u32 %v1499, 7
          %v1501 = vsub.s32 %v1498, %v1500
          %v1502 = vrot.slane %v1494, %v1501
          %v1504 = vunpack.c.l.s4 1934713408
          %v1505 = vunpack.c.0.s8 %v1504
          %v1506 = vlaneseq
          %v1507 = vshrl.u32 %v1506, 7
          %v1508 = vsub.s32 %v1505, %v1507
          %v1509 = vrot.slane %v1495, %v1508
          %v1510 = vcombine.low %v1445, %v1461
          %v1511 = vcombine.high %v1445, %v1461
          %v1513 = vunpack.c.l.s4 1934713408
          %v1514 = vunpack.c.0.s8 %v1513
          %v1515 = vlaneseq
          %v1516 = vshrl.u32 %v1515, 7
          %v1517 = vsub.s32 %v1514, %v1516
          %v1518 = vrot.slane %v1510, %v1517
          %v1520 = vunpack.c.l.s4 1934713408
          %v1521 = vunpack.c.0.s8 %v1520
          %v1522 = vlaneseq
          %v1523 = vshrl.u32 %v1522, 7
          %v1524 = vsub.s32 %v1521, %v1523
          %v1525 = vrot.slane %v1511, %v1524
          %v1526 = vcombine.low %v1470, %v1502
          %v1527 = vcombine.high %v1470, %v1502
          %v1528 = vcombine.low %v1477, %v1509
          %v1529 = vcombine.high %v1477, %v1509
          %v1530 = vcombine.low %v1486, %v1518
          %v1531 = vcombine.high %v1486, %v1518
          %v1532 = vcombine.low %v1493, %v1525
          %v1533 = vcombine.high %v1493, %v1525
          %v1534 = vcombine.low %v1015, %v1079
          %v1535 = vcombine.high %v1015, %v1079
          %v1537 = vunpack.c.l.s4 1983009808
          %v1538 = vunpack.c.0.s8 %v1537
          %v1539 = vlaneseq
          %v1540 = vshrl.u32 %v1539, 7
          %v1541 = vsub.s32 %v1538, %v1540
          %v1542 = vrot.slane %v1534, %v1541
          %v1544 = vunpack.c.l.s4 1983009808
          %v1545 = vunpack.c.0.s8 %v1544
          %v1546 = vlaneseq
          %v1547 = vshrl.u32 %v1546, 7
          %v1548 = vsub.s32 %v1545, %v1547
          %v1549 = vrot.slane %v1535, %v1548
          %v1550 = vcombine.low %v1047, %v1111
          %v1551 = vcombine.high %v1047, %v1111
          %v1553 = vunpack.c.l.s4 1983009808
          %v1554 = vunpack.c.0.s8 %v1553
          %v1555 = vlaneseq
          %v1556 = vshrl.u32 %v1555, 7
          %v1557 = vsub.s32 %v1554, %v1556
          %v1558 = vrot.slane %v1550, %v1557
          %v1560 = vunpack.c.l.s4 1983009808
          %v1561 = vunpack.c.0.s8 %v1560
          %v1562 = vlaneseq
          %v1563 = vshrl.u32 %v1562, 7
          %v1564 = vsub.s32 %v1561, %v1563
          %v1565 = vrot.slane %v1551, %v1564
          %v1566 = vcombine.low %v1143, %v1207
          %v1567 = vcombine.high %v1143, %v1207
          %v1569 = vunpack.c.l.s4 1983009808
          %v1570 = vunpack.c.0.s8 %v1569
          %v1571 = vlaneseq
          %v1572 = vshrl.u32 %v1571, 7
          %v1573 = vsub.s32 %v1570, %v1572
          %v1574 = vrot.slane %v1566, %v1573
          %v1576 = vunpack.c.l.s4 1983009808
          %v1577 = vunpack.c.0.s8 %v1576
          %v1578 = vlaneseq
          %v1579 = vshrl.u32 %v1578, 7
          %v1580 = vsub.s32 %v1577, %v1579
          %v1581 = vrot.slane %v1567, %v1580
          %v1582 = vcombine.low %v1175, %v1239
          %v1583 = vcombine.high %v1175, %v1239
          %v1585 = vunpack.c.l.s4 1983009808
          %v1586 = vunpack.c.0.s8 %v1585
          %v1587 = vlaneseq
          %v1588 = vshrl.u32 %v1587, 7
          %v1589 = vsub.s32 %v1586, %v1588
          %v1590 = vrot.slane %v1582, %v1589
          %v1592 = vunpack.c.l.s4 1983009808
          %v1593 = vunpack.c.0.s8 %v1592
          %v1594 = vlaneseq
          %v1595 = vshrl.u32 %v1594, 7
          %v1596 = vsub.s32 %v1593, %v1595
          %v1597 = vrot.slane %v1583, %v1596
          %v1598 = vcombine.low %v1542, %v1558
          %v1599 = vcombine.high %v1542, %v1558
          %v1601 = vunpack.c.l.s4 1934713408
          %v1602 = vunpack.c.0.s8 %v1601
          %v1603 = vlaneseq
          %v1604 = vshrl.u32 %v1603, 7
          %v1605 = vsub.s32 %v1602, %v1604
          %v1606 = vrot.slane %v1598, %v1605
          %v1608 = vunpack.c.l.s4 1934713408
          %v1609 = vunpack.c.0.s8 %v1608
          %v1610 = vlaneseq
          %v1611 = vshrl.u32 %v1610, 7
          %v1612 = vsub.s32 %v1609, %v1611
          %v1613 = vrot.slane %v1599, %v1612
          %v1614 = vcombine.low %v1549, %v1565
          %v1615 = vcombine.high %v1549, %v1565
          %v1617 = vunpack.c.l.s4 1934713408
          %v1618 = vunpack.c.0.s8 %v1617
          %v1619 = vlaneseq
          %v1620 = vshrl.u32 %v1619, 7
          %v1621 = vsub.s32 %v1618, %v1620
          %v1622 = vrot.slane %v1614, %v1621
          %v1624 = vunpack.c.l.s4 1934713408
          %v1625 = vunpack.c.0.s8 %v1624
          %v1626 = vlaneseq
          %v1627 = vshrl.u32 %v1626, 7
          %v1628 = vsub.s32 %v1625, %v1627
          %v1629 = vrot.slane %v1615, %v1628
          %v1630 = vcombine.low %v1574, %v1590
          %v1631 = vcombine.high %v1574, %v1590
          %v1633 = vunpack.c.l.s4 1934713408
          %v1634 = vunpack.c.0.s8 %v1633
          %v1635 = vlaneseq
          %v1636 = vshrl.u32 %v1635, 7
          %v1637 = vsub.s32 %v1634, %v1636
          %v1638 = vrot.slane %v1630, %v1637
          %v1640 = vunpack.c.l.s4 1934713408
          %v1641 = vunpack.c.0.s8 %v1640
          %v1642 = vlaneseq
          %v1643 = vshrl.u32 %v1642, 7
          %v1644 = vsub.s32 %v1641, %v1643
          %v1645 = vrot.slane %v1631, %v1644
          %v1646 = vcombine.low %v1581, %v1597
          %v1647 = vcombine.high %v1581, %v1597
          %v1649 = vunpack.c.l.s4 1934713408
          %v1650 = vunpack.c.0.s8 %v1649
          %v1651 = vlaneseq
          %v1652 = vshrl.u32 %v1651, 7
          %v1653 = vsub.s32 %v1650, %v1652
          %v1654 = vrot.slane %v1646, %v1653
          %v1656 = vunpack.c.l.s4 1934713408
          %v1657 = vunpack.c.0.s8 %v1656
          %v1658 = vlaneseq
          %v1659 = vshrl.u32 %v1658, 7
          %v1660 = vsub.s32 %v1657, %v1659
          %v1661 = vrot.slane %v1647, %v1660
          %v1662 = vcombine.low %v1606, %v1638
          %v1663 = vcombine.high %v1606, %v1638
          %v1664 = vcombine.low %v1613, %v1645
          %v1665 = vcombine.high %v1613, %v1645
          %v1666 = vcombine.low %v1622, %v1654
          %v1667 = vcombine.high %v1622, %v1654
          %v1668 = vcombine.low %v1629, %v1661
          %v1669 = vcombine.high %v1629, %v1661
          %v1670 = vcombine.low %v1031, %v1095
          %v1671 = vcombine.high %v1031, %v1095
          %v1673 = vunpack.c.l.s4 1983009808
          %v1674 = vunpack.c.0.s8 %v1673
          %v1675 = vlaneseq
          %v1676 = vshrl.u32 %v1675, 7
          %v1677 = vsub.s32 %v1674, %v1676
          %v1678 = vrot.slane %v1670, %v1677
          %v1680 = vunpack.c.l.s4 1983009808
          %v1681 = vunpack.c.0.s8 %v1680
          %v1682 = vlaneseq
          %v1683 = vshrl.u32 %v1682, 7
          %v1684 = vsub.s32 %v1681, %v1683
          %v1685 = vrot.slane %v1671, %v1684
          %v1686 = vcombine.low %v1063, %v1127
          %v1687 = vcombine.high %v1063, %v1127
          %v1689 = vunpack.c.l.s4 1983009808
          %v1690 = vunpack.c.0.s8 %v1689
          %v1691 = vlaneseq
          %v1692 = vshrl.u32 %v1691, 7
          %v1693 = vsub.s32 %v1690, %v1692
          %v1694 = vrot.slane %v1686, %v1693
          %v1696 = vunpack.c.l.s4 1983009808
          %v1697 = vunpack.c.0.s8 %v1696
          %v1698 = vlaneseq
          %v1699 = vshrl.u32 %v1698, 7
          %v1700 = vsub.s32 %v1697, %v1699
          %v1701 = vrot.slane %v1687, %v1700
          %v1702 = vcombine.low %v1159, %v1223
          %v1703 = vcombine.high %v1159, %v1223
          %v1705 = vunpack.c.l.s4 1983009808
          %v1706 = vunpack.c.0.s8 %v1705
          %v1707 = vlaneseq
          %v1708 = vshrl.u32 %v1707, 7
          %v1709 = vsub.s32 %v1706, %v1708
          %v1710 = vrot.slane %v1702, %v1709
          %v1712 = vunpack.c.l.s4 1983009808
          %v1713 = vunpack.c.0.s8 %v1712
          %v1714 = vlaneseq
          %v1715 = vshrl.u32 %v1714, 7
          %v1716 = vsub.s32 %v1713, %v1715
          %v1717 = vrot.slane %v1703, %v1716
          %v1718 = vcombine.low %v1191, %v1255
          %v1719 = vcombine.high %v1191, %v1255
          %v1721 = vunpack.c.l.s4 1983009808
          %v1722 = vunpack.c.0.s8 %v1721
          %v1723 = vlaneseq
          %v1724 = vshrl.u32 %v1723, 7
          %v1725 = vsub.s32 %v1722, %v1724
          %v1726 = vrot.slane %v1718, %v1725
          %v1728 = vunpack.c.l.s4 1983009808
          %v1729 = vunpack.c.0.s8 %v1728
          %v1730 = vlaneseq
          %v1731 = vshrl.u32 %v1730, 7
          %v1732 = vsub.s32 %v1729, %v1731
          %v1733 = vrot.slane %v1719, %v1732
          %v1734 = vcombine.low %v1678, %v1694
          %v1735 = vcombine.high %v1678, %v1694
          %v1737 = vunpack.c.l.s4 1934713408
          %v1738 = vunpack.c.0.s8 %v1737
          %v1739 = vlaneseq
          %v1740 = vshrl.u32 %v1739, 7
          %v1741 = vsub.s32 %v1738, %v1740
          %v1742 = vrot.slane %v1734, %v1741
          %v1744 = vunpack.c.l.s4 1934713408
          %v1745 = vunpack.c.0.s8 %v1744
          %v1746 = vlaneseq
          %v1747 = vshrl.u32 %v1746, 7
          %v1748 = vsub.s32 %v1745, %v1747
          %v1749 = vrot.slane %v1735, %v1748
          %v1750 = vcombine.low %v1685, %v1701
          %v1751 = vcombine.high %v1685, %v1701
          %v1753 = vunpack.c.l.s4 1934713408
          %v1754 = vunpack.c.0.s8 %v1753
          %v1755 = vlaneseq
          %v1756 = vshrl.u32 %v1755, 7
          %v1757 = vsub.s32 %v1754, %v1756
          %v1758 = vrot.slane %v1750, %v1757
          %v1760 = vunpack.c.l.s4 1934713408
          %v1761 = vunpack.c.0.s8 %v1760
          %v1762 = vlaneseq
          %v1763 = vshrl.u32 %v1762, 7
          %v1764 = vsub.s32 %v1761, %v1763
          %v1765 = vrot.slane %v1751, %v1764
          %v1766 = vcombine.low %v1710, %v1726
          %v1767 = vcombine.high %v1710, %v1726
          %v1769 = vunpack.c.l.s4 1934713408
          %v1770 = vunpack.c.0.s8 %v1769
          %v1771 = vlaneseq
          %v1772 = vshrl.u32 %v1771, 7
          %v1773 = vsub.s32 %v1770, %v1772
          %v1774 = vrot.slane %v1766, %v1773
          %v1776 = vunpack.c.l.s4 1934713408
          %v1777 = vunpack.c.0.s8 %v1776
          %v1778 = vlaneseq
          %v1779 = vshrl.u32 %v1778, 7
          %v1780 = vsub.s32 %v1777, %v1779
          %v1781 = vrot.slane %v1767, %v1780
          %v1782 = vcombine.low %v1717, %v1733
          %v1783 = vcombine.high %v1717, %v1733
          %v1785 = vunpack.c.l.s4 1934713408
          %v1786 = vunpack.c.0.s8 %v1785
          %v1787 = vlaneseq
          %v1788 = vshrl.u32 %v1787, 7
          %v1789 = vsub.s32 %v1786, %v1788
          %v1790 = vrot.slane %v1782, %v1789
          %v1792 = vunpack.c.l.s4 1934713408
          %v1793 = vunpack.c.0.s8 %v1792
          %v1794 = vlaneseq
          %v1795 = vshrl.u32 %v1794, 7
          %v1796 = vsub.s32 %v1793, %v1795
          %v1797 = vrot.slane %v1783, %v1796
          %v1798 = vcombine.low %v1742, %v1774
          %v1799 = vcombine.high %v1742, %v1774
          %v1800 = vcombine.low %v1749, %v1781
          %v1801 = vcombine.high %v1749, %v1781
          %v1802 = vcombine.low %v1758, %v1790
          %v1803 = vcombine.high %v1758, %v1790
          %v1804 = vcombine.low %v1765, %v1797
          %v1805 = vcombine.high %v1765, %v1797
          %v1808 = vpack.i.b16 %v1526, %v1390
          %v1810 = vshrl.u32 %v1390, 16
          %v1811 = vshrl.u32 %v1526, 16
          %v1812 = vpack.i.b16 %v1811, %v1810
          %v1816 = vpack.i.b16 %v1527, %v1391
          %v1818 = vshrl.u32 %v1391, 16
          %v1819 = vshrl.u32 %v1527, 16
          %v1820 = vpack.i.b16 %v1819, %v1818
          %v1824 = vpack.i.b16 %v1528, %v1392
          %v1826 = vshrl.u32 %v1392, 16
          %v1827 = vshrl.u32 %v1528, 16
          %v1828 = vpack.i.b16 %v1827, %v1826
          %v1832 = vpack.i.b16 %v1529, %v1393
          %v1834 = vshrl.u32 %v1393, 16
          %v1835 = vshrl.u32 %v1529, 16
          %v1836 = vpack.i.b16 %v1835, %v1834
          %v1840 = vpack.i.b16 %v1530, %v1394
          %v1842 = vshrl.u32 %v1394, 16
          %v1843 = vshrl.u32 %v1530, 16
          %v1844 = vpack.i.b16 %v1843, %v1842
          %v1848 = vpack.i.b16 %v1531, %v1395
          %v1850 = vshrl.u32 %v1395, 16
          %v1851 = vshrl.u32 %v1531, 16
          %v1852 = vpack.i.b16 %v1851, %v1850
          %v1856 = vpack.i.b16 %v1532, %v1396
          %v1858 = vshrl.u32 %v1396, 16
          %v1859 = vshrl.u32 %v1532, 16
          %v1860 = vpack.i.b16 %v1859, %v1858
          %v1864 = vpack.i.b16 %v1533, %v1397
          %v1866 = vshrl.u32 %v1397, 16
          %v1867 = vshrl.u32 %v1533, 16
          %v1868 = vpack.i.b16 %v1867, %v1866
          %v1872 = vpack.i.b16 %v1798, %v1662
          %v1874 = vshrl.u32 %v1662, 16
          %v1875 = vshrl.u32 %v1798, 16
          %v1876 = vpack.i.b16 %v1875, %v1874
          %v1880 = vpack.i.b16 %v1799, %v1663
          %v1882 = vshrl.u32 %v1663, 16
          %v1883 = vshrl.u32 %v1799, 16
          %v1884 = vpack.i.b16 %v1883, %v1882
          %v1888 = vpack.i.b16 %v1800, %v1664
          %v1890 = vshrl.u32 %v1664, 16
          %v1891 = vshrl.u32 %v1800, 16
          %v1892 = vpack.i.b16 %v1891, %v1890
          %v1896 = vpack.i.b16 %v1801, %v1665
          %v1898 = vshrl.u32 %v1665, 16
          %v1899 = vshrl.u32 %v1801, 16
          %v1900 = vpack.i.b16 %v1899, %v1898
          %v1904 = vpack.i.b16 %v1802, %v1666
          %v1906 = vshrl.u32 %v1666, 16
          %v1907 = vshrl.u32 %v1802, 16
          %v1908 = vpack.i.b16 %v1907, %v1906
          %v1912 = vpack.i.b16 %v1803, %v1667
          %v1914 = vshrl.u32 %v1667, 16
          %v1915 = vshrl.u32 %v1803, 16
          %v1916 = vpack.i.b16 %v1915, %v1914
          %v1920 = vpack.i.b16 %v1804, %v1668
          %v1922 = vshrl.u32 %v1668, 16
          %v1923 = vshrl.u32 %v1804, 16
          %v1924 = vpack.i.b16 %v1923, %v1922
          %v1928 = vpack.i.b16 %v1805, %v1669
          %v1930 = vshrl.u32 %v1669, 16
          %v1931 = vshrl.u32 %v1805, 16
          %v1932 = vpack.i.b16 %v1931, %v1930
          %1934 = vxpose.xlu0.c.b16.start [1/8] %v1808, 128
          %1935 = vxpose.xlu0.c.b16.cont [2/8] 0, 128
          %1936 = vxpose.xlu0.c.b16.cont [3/8] 0, 128
          %1937 = vxpose.xlu0.c.b16.cont [4/8] 0, 128
          %1938 = vxpose.xlu0.c.b16.cont [5/8] 0, 128
          %1939 = vxpose.xlu0.c.b16.cont [6/8] 0, 128
          %1940 = vxpose.xlu0.c.b16.cont [7/8] 0, 128
          %1941 = vxpose.xlu0.c.b16.end [8/8] 0, 128
          %v1942 = vpop.trf.xlu0
          %v1943 = vpop.trf.xlu0
          %v1944 = vpop.trf.xlu0
          %v1945 = vpop.trf.xlu0
          %v1946 = vpop.trf.xlu0
          %v1947 = vpop.trf.xlu0
          %v1948 = vpop.trf.xlu0
          %v1949 = vpop.trf.xlu0
          %1950 = vxpose.xlu0.c.b16.start [1/8] %v1812, 128
          %1951 = vxpose.xlu0.c.b16.cont [2/8] 0, 128
          %1952 = vxpose.xlu0.c.b16.cont [3/8] 0, 128
          %1953 = vxpose.xlu0.c.b16.cont [4/8] 0, 128
          %1954 = vxpose.xlu0.c.b16.cont [5/8] 0, 128
          %1955 = vxpose.xlu0.c.b16.cont [6/8] 0, 128
          %1956 = vxpose.xlu0.c.b16.cont [7/8] 0, 128
          %1957 = vxpose.xlu0.c.b16.end [8/8] 0, 128
          %v1958 = vpop.trf.xlu0
          %v1959 = vpop.trf.xlu0
          %v1960 = vpop.trf.xlu0
          %v1961 = vpop.trf.xlu0
          %v1962 = vpop.trf.xlu0
          %v1963 = vpop.trf.xlu0
          %v1964 = vpop.trf.xlu0
          %v1965 = vpop.trf.xlu0
          %1966 = vxpose.xlu0.c.b16.start [1/8] %v1816, 128
          %1967 = vxpose.xlu0.c.b16.cont [2/8] 0, 128
          %1968 = vxpose.xlu0.c.b16.cont [3/8] 0, 128
          %1969 = vxpose.xlu0.c.b16.cont [4/8] 0, 128
          %1970 = vxpose.xlu0.c.b16.cont [5/8] 0, 128
          %1971 = vxpose.xlu0.c.b16.cont [6/8] 0, 128
          %1972 = vxpose.xlu0.c.b16.cont [7/8] 0, 128
          %1973 = vxpose.xlu0.c.b16.end [8/8] 0, 128
          %v1974 = vpop.trf.xlu0
          %v1975 = vpop.trf.xlu0
          %v1976 = vpop.trf.xlu0
          %v1977 = vpop.trf.xlu0
          %v1978 = vpop.trf.xlu0
          %v1979 = vpop.trf.xlu0
          %v1980 = vpop.trf.xlu0
          %v1981 = vpop.trf.xlu0
          %1982 = vxpose.xlu0.c.b16.start [1/8] %v1820, 128
          %1983 = vxpose.xlu0.c.b16.cont [2/8] 0, 128
          %1984 = vxpose.xlu0.c.b16.cont [3/8] 0, 128
          %1985 = vxpose.xlu0.c.b16.cont [4/8] 0, 128
          %1986 = vxpose.xlu0.c.b16.cont [5/8] 0, 128
          %1987 = vxpose.xlu0.c.b16.cont [6/8] 0, 128
          %1988 = vxpose.xlu0.c.b16.cont [7/8] 0, 128
          %1989 = vxpose.xlu0.c.b16.end [8/8] 0, 128
          %v1990 = vpop.trf.xlu0
          %v1991 = vpop.trf.xlu0
          %v1992 = vpop.trf.xlu0
          %v1993 = vpop.trf.xlu0
          %v1994 = vpop.trf.xlu0
          %v1995 = vpop.trf.xlu0
          %v1996 = vpop.trf.xlu0
          %v1997 = vpop.trf.xlu0
          %1998 = vxpose.xlu0.c.b16.start [1/8] %v1824, 128
          %1999 = vxpose.xlu0.c.b16.cont [2/8] 0, 128
          %2000 = vxpose.xlu0.c.b16.cont [3/8] 0, 128
          %2001 = vxpose.xlu0.c.b16.cont [4/8] 0, 128
          %2002 = vxpose.xlu0.c.b16.cont [5/8] 0, 128
          %2003 = vxpose.xlu0.c.b16.cont [6/8] 0, 128
          %2004 = vxpose.xlu0.c.b16.cont [7/8] 0, 128
          %2005 = vxpose.xlu0.c.b16.end [8/8] 0, 128
          %v2006 = vpop.trf.xlu0
          %v2007 = vpop.trf.xlu0
          %v2008 = vpop.trf.xlu0
          %v2009 = vpop.trf.xlu0
          %v2010 = vpop.trf.xlu0
          %v2011 = vpop.trf.xlu0
          %v2012 = vpop.trf.xlu0
          %v2013 = vpop.trf.xlu0
          %2014 = vxpose.xlu0.c.b16.start [1/8] %v1828, 128
          %2015 = vxpose.xlu0.c.b16.cont [2/8] 0, 128
          %2016 = vxpose.xlu0.c.b16.cont [3/8] 0, 128
          %2017 = vxpose.xlu0.c.b16.cont [4/8] 0, 128
          %2018 = vxpose.xlu0.c.b16.cont [5/8] 0, 128
          %2019 = vxpose.xlu0.c.b16.cont [6/8] 0, 128
          %2020 = vxpose.xlu0.c.b16.cont [7/8] 0, 128
          %2021 = vxpose.xlu0.c.b16.end [8/8] 0, 128
          %v2022 = vpop.trf.xlu0
          %v2023 = vpop.trf.xlu0
          %v2024 = vpop.trf.xlu0
          %v2025 = vpop.trf.xlu0
          %v2026 = vpop.trf.xlu0
          %v2027 = vpop.trf.xlu0
          %v2028 = vpop.trf.xlu0
          %v2029 = vpop.trf.xlu0
          %2030 = vxpose.xlu0.c.b16.start [1/8] %v1832, 128
          %2031 = vxpose.xlu0.c.b16.cont [2/8] 0, 128
          %2032 = vxpose.xlu0.c.b16.cont [3/8] 0, 128
          %2033 = vxpose.xlu0.c.b16.cont [4/8] 0, 128
          %2034 = vxpose.xlu0.c.b16.cont [5/8] 0, 128
          %2035 = vxpose.xlu0.c.b16.cont [6/8] 0, 128
          %2036 = vxpose.xlu0.c.b16.cont [7/8] 0, 128
          %2037 = vxpose.xlu0.c.b16.end [8/8] 0, 128
          %v2038 = vpop.trf.xlu0
          %v2039 = vpop.trf.xlu0
          %v2040 = vpop.trf.xlu0
          %v2041 = vpop.trf.xlu0
          %v2042 = vpop.trf.xlu0
          %v2043 = vpop.trf.xlu0
          %v2044 = vpop.trf.xlu0
          %v2045 = vpop.trf.xlu0
          %2046 = vxpose.xlu0.c.b16.start [1/8] %v1836, 128
          %2047 = vxpose.xlu0.c.b16.cont [2/8] 0, 128
          %2048 = vxpose.xlu0.c.b16.cont [3/8] 0, 128
          %2049 = vxpose.xlu0.c.b16.cont [4/8] 0, 128
          %2050 = vxpose.xlu0.c.b16.cont [5/8] 0, 128
          %2051 = vxpose.xlu0.c.b16.cont [6/8] 0, 128
          %2052 = vxpose.xlu0.c.b16.cont [7/8] 0, 128
          %2053 = vxpose.xlu0.c.b16.end [8/8] 0, 128
          %v2054 = vpop.trf.xlu0
          %v2055 = vpop.trf.xlu0
          %v2056 = vpop.trf.xlu0
          %v2057 = vpop.trf.xlu0
          %v2058 = vpop.trf.xlu0
          %v2059 = vpop.trf.xlu0
          %v2060 = vpop.trf.xlu0
          %v2061 = vpop.trf.xlu0
          %2062 = vxpose.xlu0.c.b16.start [1/8] %v1840, 128
          %2063 = vxpose.xlu0.c.b16.cont [2/8] 0, 128
          %2064 = vxpose.xlu0.c.b16.cont [3/8] 0, 128
          %2065 = vxpose.xlu0.c.b16.cont [4/8] 0, 128
          %2066 = vxpose.xlu0.c.b16.cont [5/8] 0, 128
          %2067 = vxpose.xlu0.c.b16.cont [6/8] 0, 128
          %2068 = vxpose.xlu0.c.b16.cont [7/8] 0, 128
          %2069 = vxpose.xlu0.c.b16.end [8/8] 0, 128
          %v2070 = vpop.trf.xlu0
          %v2071 = vpop.trf.xlu0
          %v2072 = vpop.trf.xlu0
          %v2073 = vpop.trf.xlu0
          %v2074 = vpop.trf.xlu0
          %v2075 = vpop.trf.xlu0
          %v2076 = vpop.trf.xlu0
          %v2077 = vpop.trf.xlu0
          %2078 = vxpose.xlu0.c.b16.start [1/8] %v1844, 128
          %2079 = vxpose.xlu0.c.b16.cont [2/8] 0, 128
          %2080 = vxpose.xlu0.c.b16.cont [3/8] 0, 128
          %2081 = vxpose.xlu0.c.b16.cont [4/8] 0, 128
          %2082 = vxpose.xlu0.c.b16.cont [5/8] 0, 128
          %2083 = vxpose.xlu0.c.b16.cont [6/8] 0, 128
          %2084 = vxpose.xlu0.c.b16.cont [7/8] 0, 128
          %2085 = vxpose.xlu0.c.b16.end [8/8] 0, 128
          %v2086 = vpop.trf.xlu0
          %v2087 = vpop.trf.xlu0
          %v2088 = vpop.trf.xlu0
          %v2089 = vpop.trf.xlu0
          %v2090 = vpop.trf.xlu0
          %v2091 = vpop.trf.xlu0
          %v2092 = vpop.trf.xlu0
          %v2093 = vpop.trf.xlu0
          %2094 = vxpose.xlu0.c.b16.start [1/8] %v1848, 128
          %2095 = vxpose.xlu0.c.b16.cont [2/8] 0, 128
          %2096 = vxpose.xlu0.c.b16.cont [3/8] 0, 128
          %2097 = vxpose.xlu0.c.b16.cont [4/8] 0, 128
          %2098 = vxpose.xlu0.c.b16.cont [5/8] 0, 128
          %2099 = vxpose.xlu0.c.b16.cont [6/8] 0, 128
          %2100 = vxpose.xlu0.c.b16.cont [7/8] 0, 128
          %2101 = vxpose.xlu0.c.b16.end [8/8] 0, 128
          %v2102 = vpop.trf.xlu0
          %v2103 = vpop.trf.xlu0
          %v2104 = vpop.trf.xlu0
          %v2105 = vpop.trf.xlu0
          %v2106 = vpop.trf.xlu0
          %v2107 = vpop.trf.xlu0
          %v2108 = vpop.trf.xlu0
          %v2109 = vpop.trf.xlu0
          %2110 = vxpose.xlu0.c.b16.start [1/8] %v1852, 128
          %2111 = vxpose.xlu0.c.b16.cont [2/8] 0, 128
          %2112 = vxpose.xlu0.c.b16.cont [3/8] 0, 128
          %2113 = vxpose.xlu0.c.b16.cont [4/8] 0, 128
          %2114 = vxpose.xlu0.c.b16.cont [5/8] 0, 128
          %2115 = vxpose.xlu0.c.b16.cont [6/8] 0, 128
          %2116 = vxpose.xlu0.c.b16.cont [7/8] 0, 128
          %2117 = vxpose.xlu0.c.b16.end [8/8] 0, 128
          %v2118 = vpop.trf.xlu0
          %v2119 = vpop.trf.xlu0
          %v2120 = vpop.trf.xlu0
          %v2121 = vpop.trf.xlu0
          %v2122 = vpop.trf.xlu0
          %v2123 = vpop.trf.xlu0
          %v2124 = vpop.trf.xlu0
          %v2125 = vpop.trf.xlu0
          %2126 = vxpose.xlu0.c.b16.start [1/8] %v1856, 128
          %2127 = vxpose.xlu0.c.b16.cont [2/8] 0, 128
          %2128 = vxpose.xlu0.c.b16.cont [3/8] 0, 128
          %2129 = vxpose.xlu0.c.b16.cont [4/8] 0, 128
          %2130 = vxpose.xlu0.c.b16.cont [5/8] 0, 128
          %2131 = vxpose.xlu0.c.b16.cont [6/8] 0, 128
          %2132 = vxpose.xlu0.c.b16.cont [7/8] 0, 128
          %2133 = vxpose.xlu0.c.b16.end [8/8] 0, 128
          %v2134 = vpop.trf.xlu0
          %v2135 = vpop.trf.xlu0
          %v2136 = vpop.trf.xlu0
          %v2137 = vpop.trf.xlu0
          %v2138 = vpop.trf.xlu0
          %v2139 = vpop.trf.xlu0
          %v2140 = vpop.trf.xlu0
          %v2141 = vpop.trf.xlu0
          %2142 = vxpose.xlu0.c.b16.start [1/8] %v1860, 128
          %2143 = vxpose.xlu0.c.b16.cont [2/8] 0, 128
          %2144 = vxpose.xlu0.c.b16.cont [3/8] 0, 128
          %2145 = vxpose.xlu0.c.b16.cont [4/8] 0, 128
          %2146 = vxpose.xlu0.c.b16.cont [5/8] 0, 128
          %2147 = vxpose.xlu0.c.b16.cont [6/8] 0, 128
          %2148 = vxpose.xlu0.c.b16.cont [7/8] 0, 128
          %2149 = vxpose.xlu0.c.b16.end [8/8] 0, 128
          %v2150 = vpop.trf.xlu0
          %v2151 = vpop.trf.xlu0
          %v2152 = vpop.trf.xlu0
          %v2153 = vpop.trf.xlu0
          %v2154 = vpop.trf.xlu0
          %v2155 = vpop.trf.xlu0
          %v2156 = vpop.trf.xlu0
          %v2157 = vpop.trf.xlu0
          %2158 = vxpose.xlu0.c.b16.start [1/8] %v1864, 128
          %2159 = vxpose.xlu0.c.b16.cont [2/8] 0, 128
          %2160 = vxpose.xlu0.c.b16.cont [3/8] 0, 128
          %2161 = vxpose.xlu0.c.b16.cont [4/8] 0, 128
          %2162 = vxpose.xlu0.c.b16.cont [5/8] 0, 128
          %2163 = vxpose.xlu0.c.b16.cont [6/8] 0, 128
          %2164 = vxpose.xlu0.c.b16.cont [7/8] 0, 128
          %2165 = vxpose.xlu0.c.b16.end [8/8] 0, 128
          %v2166 = vpop.trf.xlu0
          %v2167 = vpop.trf.xlu0
          %v2168 = vpop.trf.xlu0
          %v2169 = vpop.trf.xlu0
          %v2170 = vpop.trf.xlu0
          %v2171 = vpop.trf.xlu0
          %v2172 = vpop.trf.xlu0
          %v2173 = vpop.trf.xlu0
          %2174 = vxpose.xlu0.c.b16.start [1/8] %v1868, 128
          %2175 = vxpose.xlu0.c.b16.cont [2/8] 0, 128
          %2176 = vxpose.xlu0.c.b16.cont [3/8] 0, 128
          %2177 = vxpose.xlu0.c.b16.cont [4/8] 0, 128
          %2178 = vxpose.xlu0.c.b16.cont [5/8] 0, 128
          %2179 = vxpose.xlu0.c.b16.cont [6/8] 0, 128
          %2180 = vxpose.xlu0.c.b16.cont [7/8] 0, 128
          %2181 = vxpose.xlu0.c.b16.end [8/8] 0, 128
          %v2182 = vpop.trf.xlu0
          %v2183 = vpop.trf.xlu0
          %v2184 = vpop.trf.xlu0
          %v2185 = vpop.trf.xlu0
          %v2186 = vpop.trf.xlu0
          %v2187 = vpop.trf.xlu0
          %v2188 = vpop.trf.xlu0
          %v2189 = vpop.trf.xlu0
          %2190 = vxpose.xlu0.c.b16.start [1/8] %v1872, 128
          %2191 = vxpose.xlu0.c.b16.cont [2/8] 0, 128
          %2192 = vxpose.xlu0.c.b16.cont [3/8] 0, 128
          %2193 = vxpose.xlu0.c.b16.cont [4/8] 0, 128
          %2194 = vxpose.xlu0.c.b16.cont [5/8] 0, 128
          %2195 = vxpose.xlu0.c.b16.cont [6/8] 0, 128
          %2196 = vxpose.xlu0.c.b16.cont [7/8] 0, 128
          %2197 = vxpose.xlu0.c.b16.end [8/8] 0, 128
          %v2198 = vpop.trf.xlu0
          %v2199 = vpop.trf.xlu0
          %v2200 = vpop.trf.xlu0
          %v2201 = vpop.trf.xlu0
          %v2202 = vpop.trf.xlu0
          %v2203 = vpop.trf.xlu0
          %v2204 = vpop.trf.xlu0
          %v2205 = vpop.trf.xlu0
          %2206 = vxpose.xlu0.c.b16.start [1/8] %v1876, 128
          %2207 = vxpose.xlu0.c.b16.cont [2/8] 0, 128
          %2208 = vxpose.xlu0.c.b16.cont [3/8] 0, 128
          %2209 = vxpose.xlu0.c.b16.cont [4/8] 0, 128
          %2210 = vxpose.xlu0.c.b16.cont [5/8] 0, 128
          %2211 = vxpose.xlu0.c.b16.cont [6/8] 0, 128
          %2212 = vxpose.xlu0.c.b16.cont [7/8] 0, 128
          %2213 = vxpose.xlu0.c.b16.end [8/8] 0, 128
          %v2214 = vpop.trf.xlu0
          %v2215 = vpop.trf.xlu0
          %v2216 = vpop.trf.xlu0
          %v2217 = vpop.trf.xlu0
          %v2218 = vpop.trf.xlu0
          %v2219 = vpop.trf.xlu0
          %v2220 = vpop.trf.xlu0
          %v2221 = vpop.trf.xlu0
          %2222 = vxpose.xlu0.c.b16.start [1/8] %v1880, 128
          %2223 = vxpose.xlu0.c.b16.cont [2/8] 0, 128
          %2224 = vxpose.xlu0.c.b16.cont [3/8] 0, 128
          %2225 = vxpose.xlu0.c.b16.cont [4/8] 0, 128
          %2226 = vxpose.xlu0.c.b16.cont [5/8] 0, 128
          %2227 = vxpose.xlu0.c.b16.cont [6/8] 0, 128
          %2228 = vxpose.xlu0.c.b16.cont [7/8] 0, 128
          %2229 = vxpose.xlu0.c.b16.end [8/8] 0, 128
          %v2230 = vpop.trf.xlu0
          %v2231 = vpop.trf.xlu0
          %v2232 = vpop.trf.xlu0
          %v2233 = vpop.trf.xlu0
          %v2234 = vpop.trf.xlu0
          %v2235 = vpop.trf.xlu0
          %v2236 = vpop.trf.xlu0
          %v2237 = vpop.trf.xlu0
          %2238 = vxpose.xlu0.c.b16.start [1/8] %v1884, 128
          %2239 = vxpose.xlu0.c.b16.cont [2/8] 0, 128
          %2240 = vxpose.xlu0.c.b16.cont [3/8] 0, 128
          %2241 = vxpose.xlu0.c.b16.cont [4/8] 0, 128
          %2242 = vxpose.xlu0.c.b16.cont [5/8] 0, 128
          %2243 = vxpose.xlu0.c.b16.cont [6/8] 0, 128
          %2244 = vxpose.xlu0.c.b16.cont [7/8] 0, 128
          %2245 = vxpose.xlu0.c.b16.end [8/8] 0, 128
          %v2246 = vpop.trf.xlu0
          %v2247 = vpop.trf.xlu0
          %v2248 = vpop.trf.xlu0
          %v2249 = vpop.trf.xlu0
          %v2250 = vpop.trf.xlu0
          %v2251 = vpop.trf.xlu0
          %v2252 = vpop.trf.xlu0
          %v2253 = vpop.trf.xlu0
          %2254 = vxpose.xlu0.c.b16.start [1/8] %v1888, 128
          %2255 = vxpose.xlu0.c.b16.cont [2/8] 0, 128
          %2256 = vxpose.xlu0.c.b16.cont [3/8] 0, 128
          %2257 = vxpose.xlu0.c.b16.cont [4/8] 0, 128
          %2258 = vxpose.xlu0.c.b16.cont [5/8] 0, 128
          %2259 = vxpose.xlu0.c.b16.cont [6/8] 0, 128
          %2260 = vxpose.xlu0.c.b16.cont [7/8] 0, 128
          %2261 = vxpose.xlu0.c.b16.end [8/8] 0, 128
          %v2262 = vpop.trf.xlu0
          %v2263 = vpop.trf.xlu0
          %v2264 = vpop.trf.xlu0
          %v2265 = vpop.trf.xlu0
          %v2266 = vpop.trf.xlu0
          %v2267 = vpop.trf.xlu0
          %v2268 = vpop.trf.xlu0
          %v2269 = vpop.trf.xlu0
          %2270 = vxpose.xlu0.c.b16.start [1/8] %v1892, 128
          %2271 = vxpose.xlu0.c.b16.cont [2/8] 0, 128
          %2272 = vxpose.xlu0.c.b16.cont [3/8] 0, 128
          %2273 = vxpose.xlu0.c.b16.cont [4/8] 0, 128
          %2274 = vxpose.xlu0.c.b16.cont [5/8] 0, 128
          %2275 = vxpose.xlu0.c.b16.cont [6/8] 0, 128
          %2276 = vxpose.xlu0.c.b16.cont [7/8] 0, 128
          %2277 = vxpose.xlu0.c.b16.end [8/8] 0, 128
          %v2278 = vpop.trf.xlu0
          %v2279 = vpop.trf.xlu0
          %v2280 = vpop.trf.xlu0
          %v2281 = vpop.trf.xlu0
          %v2282 = vpop.trf.xlu0
          %v2283 = vpop.trf.xlu0
          %v2284 = vpop.trf.xlu0
          %v2285 = vpop.trf.xlu0
          %2286 = vxpose.xlu0.c.b16.start [1/8] %v1896, 128
          %2287 = vxpose.xlu0.c.b16.cont [2/8] 0, 128
          %2288 = vxpose.xlu0.c.b16.cont [3/8] 0, 128
          %2289 = vxpose.xlu0.c.b16.cont [4/8] 0, 128
          %2290 = vxpose.xlu0.c.b16.cont [5/8] 0, 128
          %2291 = vxpose.xlu0.c.b16.cont [6/8] 0, 128
          %2292 = vxpose.xlu0.c.b16.cont [7/8] 0, 128
          %2293 = vxpose.xlu0.c.b16.end [8/8] 0, 128
          %v2294 = vpop.trf.xlu0
          %v2295 = vpop.trf.xlu0
          %v2296 = vpop.trf.xlu0
          %v2297 = vpop.trf.xlu0
          %v2298 = vpop.trf.xlu0
          %v2299 = vpop.trf.xlu0
          %v2300 = vpop.trf.xlu0
          %v2301 = vpop.trf.xlu0
          %2302 = vxpose.xlu0.c.b16.start [1/8] %v1900, 128
          %2303 = vxpose.xlu0.c.b16.cont [2/8] 0, 128
          %2304 = vxpose.xlu0.c.b16.cont [3/8] 0, 128
          %2305 = vxpose.xlu0.c.b16.cont [4/8] 0, 128
          %2306 = vxpose.xlu0.c.b16.cont [5/8] 0, 128
          %2307 = vxpose.xlu0.c.b16.cont [6/8] 0, 128
          %2308 = vxpose.xlu0.c.b16.cont [7/8] 0, 128
          %2309 = vxpose.xlu0.c.b16.end [8/8] 0, 128
          %v2310 = vpop.trf.xlu0
          %v2311 = vpop.trf.xlu0
          %v2312 = vpop.trf.xlu0
          %v2313 = vpop.trf.xlu0
          %v2314 = vpop.trf.xlu0
          %v2315 = vpop.trf.xlu0
          %v2316 = vpop.trf.xlu0
          %v2317 = vpop.trf.xlu0
          %2318 = vxpose.xlu0.c.b16.start [1/8] %v1904, 128
          %2319 = vxpose.xlu0.c.b16.cont [2/8] 0, 128
          %2320 = vxpose.xlu0.c.b16.cont [3/8] 0, 128
          %2321 = vxpose.xlu0.c.b16.cont [4/8] 0, 128
          %2322 = vxpose.xlu0.c.b16.cont [5/8] 0, 128
          %2323 = vxpose.xlu0.c.b16.cont [6/8] 0, 128
          %2324 = vxpose.xlu0.c.b16.cont [7/8] 0, 128
          %2325 = vxpose.xlu0.c.b16.end [8/8] 0, 128
          %v2326 = vpop.trf.xlu0
          %v2327 = vpop.trf.xlu0
          %v2328 = vpop.trf.xlu0
          %v2329 = vpop.trf.xlu0
          %v2330 = vpop.trf.xlu0
          %v2331 = vpop.trf.xlu0
          %v2332 = vpop.trf.xlu0
          %v2333 = vpop.trf.xlu0
          %2334 = vxpose.xlu0.c.b16.start [1/8] %v1908, 128
          %2335 = vxpose.xlu0.c.b16.cont [2/8] 0, 128
          %2336 = vxpose.xlu0.c.b16.cont [3/8] 0, 128
          %2337 = vxpose.xlu0.c.b16.cont [4/8] 0, 128
          %2338 = vxpose.xlu0.c.b16.cont [5/8] 0, 128
          %2339 = vxpose.xlu0.c.b16.cont [6/8] 0, 128
          %2340 = vxpose.xlu0.c.b16.cont [7/8] 0, 128
          %2341 = vxpose.xlu0.c.b16.end [8/8] 0, 128
          %v2342 = vpop.trf.xlu0
          %v2343 = vpop.trf.xlu0
          %v2344 = vpop.trf.xlu0
          %v2345 = vpop.trf.xlu0
          %v2346 = vpop.trf.xlu0
          %v2347 = vpop.trf.xlu0
          %v2348 = vpop.trf.xlu0
          %v2349 = vpop.trf.xlu0
          %2350 = vxpose.xlu0.c.b16.start [1/8] %v1912, 128
          %2351 = vxpose.xlu0.c.b16.cont [2/8] 0, 128
          %2352 = vxpose.xlu0.c.b16.cont [3/8] 0, 128
          %2353 = vxpose.xlu0.c.b16.cont [4/8] 0, 128
          %2354 = vxpose.xlu0.c.b16.cont [5/8] 0, 128
          %2355 = vxpose.xlu0.c.b16.cont [6/8] 0, 128
          %2356 = vxpose.xlu0.c.b16.cont [7/8] 0, 128
          %2357 = vxpose.xlu0.c.b16.end [8/8] 0, 128
          %v2358 = vpop.trf.xlu0
          %v2359 = vpop.trf.xlu0
          %v2360 = vpop.trf.xlu0
          %v2361 = vpop.trf.xlu0
          %v2362 = vpop.trf.xlu0
          %v2363 = vpop.trf.xlu0
          %v2364 = vpop.trf.xlu0
          %v2365 = vpop.trf.xlu0
          %2366 = vxpose.xlu0.c.b16.start [1/8] %v1916, 128
          %2367 = vxpose.xlu0.c.b16.cont [2/8] 0, 128
          %2368 = vxpose.xlu0.c.b16.cont [3/8] 0, 128
          %2369 = vxpose.xlu0.c.b16.cont [4/8] 0, 128
          %2370 = vxpose.xlu0.c.b16.cont [5/8] 0, 128
          %2371 = vxpose.xlu0.c.b16.cont [6/8] 0, 128
          %2372 = vxpose.xlu0.c.b16.cont [7/8] 0, 128
          %2373 = vxpose.xlu0.c.b16.end [8/8] 0, 128
          %v2374 = vpop.trf.xlu0
          %v2375 = vpop.trf.xlu0
          %v2376 = vpop.trf.xlu0
          %v2377 = vpop.trf.xlu0
          %v2378 = vpop.trf.xlu0
          %v2379 = vpop.trf.xlu0
          %v2380 = vpop.trf.xlu0
          %v2381 = vpop.trf.xlu0
          %2382 = vxpose.xlu0.c.b16.start [1/8] %v1920, 128
          %2383 = vxpose.xlu0.c.b16.cont [2/8] 0, 128
          %2384 = vxpose.xlu0.c.b16.cont [3/8] 0, 128
          %2385 = vxpose.xlu0.c.b16.cont [4/8] 0, 128
          %2386 = vxpose.xlu0.c.b16.cont [5/8] 0, 128
          %2387 = vxpose.xlu0.c.b16.cont [6/8] 0, 128
          %2388 = vxpose.xlu0.c.b16.cont [7/8] 0, 128
          %2389 = vxpose.xlu0.c.b16.end [8/8] 0, 128
          %v2390 = vpop.trf.xlu0
          %v2391 = vpop.trf.xlu0
          %v2392 = vpop.trf.xlu0
          %v2393 = vpop.trf.xlu0
          %v2394 = vpop.trf.xlu0
          %v2395 = vpop.trf.xlu0
          %v2396 = vpop.trf.xlu0
          %v2397 = vpop.trf.xlu0
          %2398 = vxpose.xlu0.c.b16.start [1/8] %v1924, 128
          %2399 = vxpose.xlu0.c.b16.cont [2/8] 0, 128
          %2400 = vxpose.xlu0.c.b16.cont [3/8] 0, 128
          %2401 = vxpose.xlu0.c.b16.cont [4/8] 0, 128
          %2402 = vxpose.xlu0.c.b16.cont [5/8] 0, 128
          %2403 = vxpose.xlu0.c.b16.cont [6/8] 0, 128
          %2404 = vxpose.xlu0.c.b16.cont [7/8] 0, 128
          %2405 = vxpose.xlu0.c.b16.end [8/8] 0, 128
          %v2406 = vpop.trf.xlu0
          %v2407 = vpop.trf.xlu0
          %v2408 = vpop.trf.xlu0
          %v2409 = vpop.trf.xlu0
          %v2410 = vpop.trf.xlu0
          %v2411 = vpop.trf.xlu0
          %v2412 = vpop.trf.xlu0
          %v2413 = vpop.trf.xlu0
          %2414 = vxpose.xlu0.c.b16.start [1/8] %v1928, 128
          %2415 = vxpose.xlu0.c.b16.cont [2/8] 0, 128
          %2416 = vxpose.xlu0.c.b16.cont [3/8] 0, 128
          %2417 = vxpose.xlu0.c.b16.cont [4/8] 0, 128
          %2418 = vxpose.xlu0.c.b16.cont [5/8] 0, 128
          %2419 = vxpose.xlu0.c.b16.cont [6/8] 0, 128
          %2420 = vxpose.xlu0.c.b16.cont [7/8] 0, 128
          %2421 = vxpose.xlu0.c.b16.end [8/8] 0, 128
          %v2422 = vpop.trf.xlu0
          %v2423 = vpop.trf.xlu0
          %v2424 = vpop.trf.xlu0
          %v2425 = vpop.trf.xlu0
          %v2426 = vpop.trf.xlu0
          %v2427 = vpop.trf.xlu0
          %v2428 = vpop.trf.xlu0
          %v2429 = vpop.trf.xlu0
          %2430 = vxpose.xlu0.c.b16.start [1/8] %v1932, 128
          %2431 = vxpose.xlu0.c.b16.cont [2/8] 0, 128
          %2432 = vxpose.xlu0.c.b16.cont [3/8] 0, 128
          %2433 = vxpose.xlu0.c.b16.cont [4/8] 0, 128
          %2434 = vxpose.xlu0.c.b16.cont [5/8] 0, 128
          %2435 = vxpose.xlu0.c.b16.cont [6/8] 0, 128
          %2436 = vxpose.xlu0.c.b16.cont [7/8] 0, 128
          %2437 = vxpose.xlu0.c.b16.end [8/8] 0, 128
          %v2438 = vpop.trf.xlu0
          %v2439 = vpop.trf.xlu0
          %v2440 = vpop.trf.xlu0
          %v2441 = vpop.trf.xlu0
          %v2442 = vpop.trf.xlu0
          %v2443 = vpop.trf.xlu0
          %v2444 = vpop.trf.xlu0
          %v2445 = vpop.trf.xlu0
          %v2446 = vcombine.low %v1942, %v2006
          %v2448 = vunpack.c.l.s4 1983009808
          %v2449 = vunpack.c.0.s8 %v2448
          %v2450 = vlaneseq
          %v2451 = vshrl.u32 %v2450, 7
          %v2452 = vsub.s32 %v2449, %v2451
          %v2453 = vrot.slane %v2446, %v2452
          %v2454 = vcombine.low %v1974, %v2038
          %v2456 = vunpack.c.l.s4 1983009808
          %v2457 = vunpack.c.0.s8 %v2456
          %v2458 = vlaneseq
          %v2459 = vshrl.u32 %v2458, 7
          %v2460 = vsub.s32 %v2457, %v2459
          %v2461 = vrot.slane %v2454, %v2460
          %v2462 = vcombine.low %v2070, %v2134
          %v2464 = vunpack.c.l.s4 1983009808
          %v2465 = vunpack.c.0.s8 %v2464
          %v2466 = vlaneseq
          %v2467 = vshrl.u32 %v2466, 7
          %v2468 = vsub.s32 %v2465, %v2467
          %v2469 = vrot.slane %v2462, %v2468
          %v2470 = vcombine.low %v2102, %v2166
          %v2472 = vunpack.c.l.s4 1983009808
          %v2473 = vunpack.c.0.s8 %v2472
          %v2474 = vlaneseq
          %v2475 = vshrl.u32 %v2474, 7
          %v2476 = vsub.s32 %v2473, %v2475
          %v2477 = vrot.slane %v2470, %v2476
          %v2478 = vcombine.low %v2453, %v2461
          %v2480 = vunpack.c.l.s4 1934713408
          %v2481 = vunpack.c.0.s8 %v2480
          %v2482 = vlaneseq
          %v2483 = vshrl.u32 %v2482, 7
          %v2484 = vsub.s32 %v2481, %v2483
          %v2485 = vrot.slane %v2478, %v2484
          %v2486 = vcombine.low %v2469, %v2477
          %v2488 = vunpack.c.l.s4 1934713408
          %v2489 = vunpack.c.0.s8 %v2488
          %v2490 = vlaneseq
          %v2491 = vshrl.u32 %v2490, 7
          %v2492 = vsub.s32 %v2489, %v2491
          %v2493 = vrot.slane %v2486, %v2492
          %v2494 = vcombine.low %v2485, %v2493
          %v2495 = vcombine.high %v2485, %v2493
          %v2496 = vcombine.low %v1958, %v2022
          %v2498 = vunpack.c.l.s4 1983009808
          %v2499 = vunpack.c.0.s8 %v2498
          %v2500 = vlaneseq
          %v2501 = vshrl.u32 %v2500, 7
          %v2502 = vsub.s32 %v2499, %v2501
          %v2503 = vrot.slane %v2496, %v2502
          %v2504 = vcombine.low %v1990, %v2054
          %v2506 = vunpack.c.l.s4 1983009808
          %v2507 = vunpack.c.0.s8 %v2506
          %v2508 = vlaneseq
          %v2509 = vshrl.u32 %v2508, 7
          %v2510 = vsub.s32 %v2507, %v2509
          %v2511 = vrot.slane %v2504, %v2510
          %v2512 = vcombine.low %v2086, %v2150
          %v2514 = vunpack.c.l.s4 1983009808
          %v2515 = vunpack.c.0.s8 %v2514
          %v2516 = vlaneseq
          %v2517 = vshrl.u32 %v2516, 7
          %v2518 = vsub.s32 %v2515, %v2517
          %v2519 = vrot.slane %v2512, %v2518
          %v2520 = vcombine.low %v2118, %v2182
          %v2522 = vunpack.c.l.s4 1983009808
          %v2523 = vunpack.c.0.s8 %v2522
          %v2524 = vlaneseq
          %v2525 = vshrl.u32 %v2524, 7
          %v2526 = vsub.s32 %v2523, %v2525
          %v2527 = vrot.slane %v2520, %v2526
          %v2528 = vcombine.low %v2503, %v2511
          %v2530 = vunpack.c.l.s4 1934713408
          %v2531 = vunpack.c.0.s8 %v2530
          %v2532 = vlaneseq
          %v2533 = vshrl.u32 %v2532, 7
          %v2534 = vsub.s32 %v2531, %v2533
          %v2535 = vrot.slane %v2528, %v2534
          %v2536 = vcombine.low %v2519, %v2527
          %v2538 = vunpack.c.l.s4 1934713408
          %v2539 = vunpack.c.0.s8 %v2538
          %v2540 = vlaneseq
          %v2541 = vshrl.u32 %v2540, 7
          %v2542 = vsub.s32 %v2539, %v2541
          %v2543 = vrot.slane %v2536, %v2542
          %v2544 = vcombine.low %v2535, %v2543
          %v2545 = vcombine.high %v2535, %v2543
          %v2546 = vcombine.low %v2198, %v2262
          %v2548 = vunpack.c.l.s4 1983009808
          %v2549 = vunpack.c.0.s8 %v2548
          %v2550 = vlaneseq
          %v2551 = vshrl.u32 %v2550, 7
          %v2552 = vsub.s32 %v2549, %v2551
          %v2553 = vrot.slane %v2546, %v2552
          %v2554 = vcombine.low %v2230, %v2294
          %v2556 = vunpack.c.l.s4 1983009808
          %v2557 = vunpack.c.0.s8 %v2556
          %v2558 = vlaneseq
          %v2559 = vshrl.u32 %v2558, 7
          %v2560 = vsub.s32 %v2557, %v2559
          %v2561 = vrot.slane %v2554, %v2560
          %v2562 = vcombine.low %v2326, %v2390
          %v2564 = vunpack.c.l.s4 1983009808
          %v2565 = vunpack.c.0.s8 %v2564
          %v2566 = vlaneseq
          %v2567 = vshrl.u32 %v2566, 7
          %v2568 = vsub.s32 %v2565, %v2567
          %v2569 = vrot.slane %v2562, %v2568
          %v2570 = vcombine.low %v2358, %v2422
          %v2572 = vunpack.c.l.s4 1983009808
          %v2573 = vunpack.c.0.s8 %v2572
          %v2574 = vlaneseq
          %v2575 = vshrl.u32 %v2574, 7
          %v2576 = vsub.s32 %v2573, %v2575
          %v2577 = vrot.slane %v2570, %v2576
          %v2578 = vcombine.low %v2553, %v2561
          %v2580 = vunpack.c.l.s4 1934713408
          %v2581 = vunpack.c.0.s8 %v2580
          %v2582 = vlaneseq
          %v2583 = vshrl.u32 %v2582, 7
          %v2584 = vsub.s32 %v2581, %v2583
          %v2585 = vrot.slane %v2578, %v2584
          %v2586 = vcombine.low %v2569, %v2577
          %v2588 = vunpack.c.l.s4 1934713408
          %v2589 = vunpack.c.0.s8 %v2588
          %v2590 = vlaneseq
          %v2591 = vshrl.u32 %v2590, 7
          %v2592 = vsub.s32 %v2589, %v2591
          %v2593 = vrot.slane %v2586, %v2592
          %v2594 = vcombine.low %v2585, %v2593
          %v2595 = vcombine.high %v2585, %v2593
          %v2596 = vcombine.low %v2214, %v2278
          %v2598 = vunpack.c.l.s4 1983009808
          %v2599 = vunpack.c.0.s8 %v2598
          %v2600 = vlaneseq
          %v2601 = vshrl.u32 %v2600, 7
          %v2602 = vsub.s32 %v2599, %v2601
          %v2603 = vrot.slane %v2596, %v2602
          %v2604 = vcombine.low %v2246, %v2310
          %v2606 = vunpack.c.l.s4 1983009808
          %v2607 = vunpack.c.0.s8 %v2606
          %v2608 = vlaneseq
          %v2609 = vshrl.u32 %v2608, 7
          %v2610 = vsub.s32 %v2607, %v2609
          %v2611 = vrot.slane %v2604, %v2610
          %v2612 = vcombine.low %v2342, %v2406
          %v2614 = vunpack.c.l.s4 1983009808
          %v2615 = vunpack.c.0.s8 %v2614
          %v2616 = vlaneseq
          %v2617 = vshrl.u32 %v2616, 7
          %v2618 = vsub.s32 %v2615, %v2617
          %v2619 = vrot.slane %v2612, %v2618
          %v2620 = vcombine.low %v2374, %v2438
          %v2622 = vunpack.c.l.s4 1983009808
          %v2623 = vunpack.c.0.s8 %v2622
          %v2624 = vlaneseq
          %v2625 = vshrl.u32 %v2624, 7
          %v2626 = vsub.s32 %v2623, %v2625
          %v2627 = vrot.slane %v2620, %v2626
          %v2628 = vcombine.low %v2603, %v2611
          %v2630 = vunpack.c.l.s4 1934713408
          %v2631 = vunpack.c.0.s8 %v2630
          %v2632 = vlaneseq
          %v2633 = vshrl.u32 %v2632, 7
          %v2634 = vsub.s32 %v2631, %v2633
          %v2635 = vrot.slane %v2628, %v2634
          %v2636 = vcombine.low %v2619, %v2627
          %v2638 = vunpack.c.l.s4 1934713408
          %v2639 = vunpack.c.0.s8 %v2638
          %v2640 = vlaneseq
          %v2641 = vshrl.u32 %v2640, 7
          %v2642 = vsub.s32 %v2639, %v2641
          %v2643 = vrot.slane %v2636, %v2642
          %v2644 = vcombine.low %v2635, %v2643
          %v2645 = vcombine.high %v2635, %v2643
          %v2648 = vpack.i.b16 %v2544, %v2494
          %v2650 = vshrl.u32 %v2494, 16
          %v2651 = vshrl.u32 %v2544, 16
          %v2652 = vpack.i.b16 %v2651, %v2650
          %v2656 = vpack.i.b16 %v2545, %v2495
          %v2658 = vshrl.u32 %v2495, 16
          %v2659 = vshrl.u32 %v2545, 16
          %v2660 = vpack.i.b16 %v2659, %v2658
          %v2664 = vpack.i.b16 %v2644, %v2594
          %v2666 = vshrl.u32 %v2594, 16
          %v2667 = vshrl.u32 %v2644, 16
          %v2668 = vpack.i.b16 %v2667, %v2666
          %v2672 = vpack.i.b16 %v2645, %v2595
          %v2674 = vshrl.u32 %v2595, 16
          %v2675 = vshrl.u32 %v2645, 16
          %v2676 = vpack.i.b16 %v2675, %v2674
          %vm2678 = vcmask 130048
          %2679 = vst.msk [vmem:[#allocation2] sm:$0xff] %vm2678, %v2648
          %2680 = vst.msk [vmem:[#allocation2 + $0x8] sm:$0xff] %vm2678, %v2664
          %2681 = vst.msk [vmem:[#allocation2 + $0x10] sm:$0xff] %vm2678, %v2652
          %2682 = vst.msk [vmem:[#allocation2 + $0x18] sm:$0xff] %vm2678, %v2668
          %2683 = vst.msk [vmem:[#allocation2 + $0x20] sm:$0xff] %vm2678, %v2656
          %2684 = vst.msk [vmem:[#allocation2 + $0x28] sm:$0xff] %vm2678, %v2672
          %2685 = vst.msk [vmem:[#allocation2 + $0x30] sm:$0xff] %vm2678, %v2660
          %2686 = vst.msk [vmem:[#allocation2 + $0x38] sm:$0xff] %vm2678, %v2676
          %v2687 = vcombine.low %v912, %v919
          %v2689 = vunpack.c.l.s4 1983009808
          %v2690 = vunpack.c.0.s8 %v2689
          %v2691 = vlaneseq
          %v2692 = vshrl.u32 %v2691, 7
          %v2693 = vsub.s32 %v2690, %v2692
          %v2694 = vrot.slane %v2687, %v2693
          %v2695 = vcombine.low %v936, %v937
          %v2697 = vunpack.c.l.s4 1983009808
          %v2698 = vunpack.c.0.s8 %v2697
          %v2699 = vlaneseq
          %v2700 = vshrl.u32 %v2699, 7
          %v2701 = vsub.s32 %v2698, %v2700
          %v2702 = vrot.slane %v2695, %v2701
          %v2703 = vcombine.low %v928, %v935
          %v2705 = vunpack.c.l.s4 1983009808
          %v2706 = vunpack.c.0.s8 %v2705
          %v2707 = vlaneseq
          %v2708 = vshrl.u32 %v2707, 7
          %v2709 = vsub.s32 %v2706, %v2708
          %v2710 = vrot.slane %v2703, %v2709
          %v2711 = vcombine.low %v938, %v939
          %v2713 = vunpack.c.l.s4 1983009808
          %v2714 = vunpack.c.0.s8 %v2713
          %v2715 = vlaneseq
          %v2716 = vshrl.u32 %v2715, 7
          %v2717 = vsub.s32 %v2714, %v2716
          %v2718 = vrot.slane %v2711, %v2717
          %v2719 = vcombine.low %v2694, %v2702
          %v2721 = vunpack.c.l.s4 1934713408
          %v2722 = vunpack.c.0.s8 %v2721
          %v2723 = vlaneseq
          %v2724 = vshrl.u32 %v2723, 7
          %v2725 = vsub.s32 %v2722, %v2724
          %v2726 = vrot.slane %v2719, %v2725
          %v2727 = vcombine.low %v2710, %v2718
          %v2729 = vunpack.c.l.s4 1934713408
          %v2730 = vunpack.c.0.s8 %v2729
          %v2731 = vlaneseq
          %v2732 = vshrl.u32 %v2731, 7
          %v2733 = vsub.s32 %v2730, %v2732
          %v2734 = vrot.slane %v2727, %v2733
          %v2735 = vcombine.low %v2726, %v2734
          %v2736 = vcombine.high %v2726, %v2734
          %v2737 = vcombine.low %v978, %v985
          %v2739 = vunpack.c.l.s4 1983009808
          %v2740 = vunpack.c.0.s8 %v2739
          %v2741 = vlaneseq
          %v2742 = vshrl.u32 %v2741, 7
          %v2743 = vsub.s32 %v2740, %v2742
          %v2744 = vrot.slane %v2737, %v2743
          %v2745 = vcombine.low %v1002, %v1003
          %v2747 = vunpack.c.l.s4 1983009808
          %v2748 = vunpack.c.0.s8 %v2747
          %v2749 = vlaneseq
          %v2750 = vshrl.u32 %v2749, 7
          %v2751 = vsub.s32 %v2748, %v2750
          %v2752 = vrot.slane %v2745, %v2751
          %v2753 = vcombine.low %v994, %v1001
          %v2755 = vunpack.c.l.s4 1983009808
          %v2756 = vunpack.c.0.s8 %v2755
          %v2757 = vlaneseq
          %v2758 = vshrl.u32 %v2757, 7
          %v2759 = vsub.s32 %v2756, %v2758
          %v2760 = vrot.slane %v2753, %v2759
          %v2761 = vcombine.low %v1004, %v1005
          %v2763 = vunpack.c.l.s4 1983009808
          %v2764 = vunpack.c.0.s8 %v2763
          %v2765 = vlaneseq
          %v2766 = vshrl.u32 %v2765, 7
          %v2767 = vsub.s32 %v2764, %v2766
          %v2768 = vrot.slane %v2761, %v2767
          %v2769 = vcombine.low %v2744, %v2752
          %v2771 = vunpack.c.l.s4 1934713408
          %v2772 = vunpack.c.0.s8 %v2771
          %v2773 = vlaneseq
          %v2774 = vshrl.u32 %v2773, 7
          %v2775 = vsub.s32 %v2772, %v2774
          %v2776 = vrot.slane %v2769, %v2775
          %v2777 = vcombine.low %v2760, %v2768
          %v2779 = vunpack.c.l.s4 1934713408
          %v2780 = vunpack.c.0.s8 %v2779
          %v2781 = vlaneseq
          %v2782 = vshrl.u32 %v2781, 7
          %v2783 = vsub.s32 %v2780, %v2782
          %v2784 = vrot.slane %v2777, %v2783
          %v2785 = vcombine.low %v2776, %v2784
          %v2786 = vcombine.high %v2776, %v2784
          %v2789 = vpack.i.b16 %v2785, %v2735
          %v2791 = vshrl.u32 %v2735, 16
          %v2792 = vshrl.u32 %v2785, 16
          %v2793 = vpack.i.b16 %v2792, %v2791
          %v2797 = vpack.i.b16 %v2786, %v2736
          %v2799 = vshrl.u32 %v2736, 16
          %v2800 = vshrl.u32 %v2786, 16
          %v2801 = vpack.i.b16 %v2800, %v2799
          %vm2803 = vcmask 261120
          %2804 = vst.msk [vmem:[#allocation3] sm:$0xff] %vm2803, %v2789
          %2805 = vst.msk [vmem:[#allocation3 + $0x8] sm:$0xff] %vm2803, %v2793
          %2806 = vst.msk [vmem:[#allocation3 + $0x10] sm:$0xff] %vm2803, %v2797
          %2807 = vst.msk [vmem:[#allocation3 + $0x18] sm:$0xff] %vm2803, %v2801
        $region68: #{tpu_custom_call.1} parent=47 // pred_fallthru
          _
        %v2808 = vld [vmem:[#allocation7] sm:$0xf]
        %v2809 = vld [vmem:[#allocation7 + $0x4] sm:$0xf]
        %v2810 = vld [vmem:[#allocation7 + $0x8] sm:$0xf]
        %v2811 = vld [vmem:[#allocation7 + $0xc] sm:$0xf]
        %v2812 = vld [vmem:[#allocation7 + $0x10] sm:$0xf]
        %v2813 = vld [vmem:[#allocation7 + $0x14] sm:$0xf]
        %v2814 = vld [vmem:[#allocation7 + $0x18] sm:$0xf]
        %v2815 = vld [vmem:[#allocation7 + $0x1c] sm:$0xf]
        %v2816 = vld [vmem:[#allocation7 + $0x20] sm:$0xf]
        %v2817 = vld [vmem:[#allocation7 + $0x24] sm:$0xf]
        %v2818 = vld [vmem:[#allocation7 + $0x28] sm:$0xf]
        %v2819 = vld [vmem:[#allocation7 + $0x2c] sm:$0xf]
        %v2820 = vld [vmem:[#allocation7 + $0x30] sm:$0xf]
        %v2821 = vld [vmem:[#allocation7 + $0x34] sm:$0xf]
        %v2822 = vld [vmem:[#allocation7 + $0x38] sm:$0xf]
        %v2823 = vld [vmem:[#allocation7 + $0x3c] sm:$0xf]
        %v2824 = vld [vmem:[%s2] sm:$0x1]
        %v2826 = vlaneseq
        %v2827 = vshrl.u32 %v2826, 7
        %v2828 = vsub.s32 0, %v2827
        %v2829 = vrot.slane %v2824, %v2828
        %v2847 = vunpack.c.l.b16 %v2808
        %v2848 = vunpack.c.l.b16 %v2809
        %v2849 = vunpack.c.l.b16 %v2810
        %v2850 = vunpack.c.l.b16 %v2811
        %v2851 = vunpack.c.l.b16 %v2812
        %v2852 = vunpack.c.l.b16 %v2813
        %v2853 = vunpack.c.l.b16 %v2814
        %v2854 = vunpack.c.l.b16 %v2815
        %v2855 = vunpack.c.l.b16 %v2816
        %v2856 = vunpack.c.l.b16 %v2817
        %v2857 = vunpack.c.l.b16 %v2818
        %v2858 = vunpack.c.l.b16 %v2819
        %v2859 = vunpack.c.l.b16 %v2820
        %v2860 = vunpack.c.l.b16 %v2821
        %v2861 = vunpack.c.l.b16 %v2822
        %v2862 = vunpack.c.l.b16 %v2823
        %v2863 = vpack.c.b16 %v2848, %v2847
        %v2864 = vpack.c.b16 %v2850, %v2849
        %v2865 = vpack.c.b16 %v2852, %v2851
        %v2866 = vpack.c.b16 %v2854, %v2853
        %v2867 = vpack.c.b16 %v2856, %v2855
        %v2868 = vpack.c.b16 %v2858, %v2857
        %v2869 = vpack.c.b16 %v2860, %v2859
        %v2870 = vpack.c.b16 %v2862, %v2861
        %2879 = vmatprep.subr.bf16.mxu0 0
        %2880 = vmatpush1.bf16.msra.mxu0 %v2863
        %2881 = vmatprep.subr.bf16.mxu0 0
        %2882 = vmatpush1.bf16.msra.mxu0 %v2864
        %2883 = vmatprep.subr.bf16.mxu0 0
        %2884 = vmatpush1.bf16.msra.mxu0 %v2865
        %2885 = vmatprep.subr.bf16.mxu0 0
        %2886 = vmatpush1.bf16.msra.mxu0 %v2866
        %2887 = vmatprep.subr.bf16.mxu0 0
        %2888 = vmatpush1.bf16.msra.mxu0 %v2867
        %2889 = vmatprep.subr.bf16.mxu0 0
        %2890 = vmatpush1.bf16.msra.mxu0 %v2868
        %2891 = vmatprep.subr.bf16.mxu0 0
        %2892 = vmatpush1.bf16.msra.mxu0 %v2869
        %2893 = vmatprep.subr.bf16.mxu0 0
        %2894 = vmatpush1.bf16.msra.mxu0 %v2870
        %2895 = vmatprep.subr.bf16.mxu0 0
        %2896 = vmatpush1.bf16.msra.mxu0 0
        %2897 = vmatprep.subr.bf16.mxu0 0
        %2898 = vmatpush1.bf16.msra.mxu0 0
        %2899 = vmatprep.subr.bf16.mxu0 0
        %2900 = vmatpush1.bf16.msra.mxu0 0
        %2901 = vmatprep.subr.bf16.mxu0 0
        %2902 = vmatpush1.bf16.msra.mxu0 0
        %2903 = vmatprep.subr.bf16.mxu0 0
        %2904 = vmatpush1.bf16.msra.mxu0 0
        %2905 = vmatprep.subr.bf16.mxu0 0
        %2906 = vmatpush1.bf16.msra.mxu0 0
        %2907 = vmatprep.subr.bf16.mxu0 0
        %2908 = vmatpush1.bf16.msra.mxu0 0
        %2909 = vmatprep.subr.bf16.mxu0 0
        %2910 = vmatpush1.bf16.msra.mxu0 0
        %2911 = vmatprep.mubr.bf16.mxu0 0
        %2912 = vmatmul.mubr.bf16.gmra.mrb[0].mxu0 %v432
        %v2913 = vpop.f32.mrb[0].mxu0
        %v2914 = vadd.f32 %v2829, %v2913
        %v2915 = vpop.f32.mrb[0].mxu0
        %v2916 = vpop.f32.mrb[0].mxu0
        %v2917 = vadd.f32 %v2829, %v2916
        %v2918 = vpop.f32.mrb[0].mxu0
        %2919 = vdwg.mxu0
        %v2920 = vmul.f32 %v2914, 0.17677669
        %v2921 = vmul.f32 %v2917, 0.17677669
        %v2922 = vpack.c.bf16 %v2921, %v2920
        %2924 = vrot.lane.b32.xlu0 %v2922, 96
        %v2925 = vpop.permute.xlu0 %2924
        %2926 = vrot.lane.b32.xlu0 %v2922, 64
        %v2927 = vpop.permute.xlu0 %2926
        %2928 = vrot.lane.b32.xlu0 %v2922, 32
        %v2929 = vpop.permute.xlu0 %2928
        %v2932 = vpack.i.b16 %v2925, %v2922
        %v2934 = vshrl.u32 %v2922, 16
        %v2935 = vshrl.u32 %v2925, 16
        %v2936 = vpack.i.b16 %v2935, %v2934
        %v2940 = vpack.i.b16 %v2929, %v2927
        %v2942 = vshrl.u32 %v2927, 16
        %v2943 = vshrl.u32 %v2929, 16
        %v2944 = vpack.i.b16 %v2943, %v2942
        %v2947 = vpack.i.b16 0, 0
        %v2949 = vshrl.u32 0, 16
        %v2950 = vpack.i.b16 %v2949, %v2949
        %v2952 = vcombine.high %v2932, %v2947
        %v2954 = vunpack.c.l.s4 1983009808
        %v2955 = vunpack.c.0.s8 %v2954
        %v2956 = vlaneseq
        %v2957 = vshrl.u32 %v2956, 7
        %v2958 = vsub.s32 %v2955, %v2957
        %v2959 = vrot.slane %v2932, %v2958
        %v2961 = vunpack.c.l.s4 1983009808
        %v2962 = vunpack.c.0.s8 %v2961
        %v2963 = vlaneseq
        %v2964 = vshrl.u32 %v2963, 7
        %v2965 = vsub.s32 %v2962, %v2964
        %v2966 = vrot.slane %v2952, %v2965
        %v2967 = vcombine.high %v2940, %v2947
        %v2969 = vunpack.c.l.s4 1983009808
        %v2970 = vunpack.c.0.s8 %v2969
        %v2971 = vlaneseq
        %v2972 = vshrl.u32 %v2971, 7
        %v2973 = vsub.s32 %v2970, %v2972
        %v2974 = vrot.slane %v2940, %v2973
        %v2976 = vunpack.c.l.s4 1983009808
        %v2977 = vunpack.c.0.s8 %v2976
        %v2978 = vlaneseq
        %v2979 = vshrl.u32 %v2978, 7
        %v2980 = vsub.s32 %v2977, %v2979
        %v2981 = vrot.slane %v2967, %v2980
        %v2982 = vcombine.low %v2959, %v2974
        %v2983 = vcombine.high %v2959, %v2974
        %v2985 = vunpack.c.l.s4 1934713408
        %v2986 = vunpack.c.0.s8 %v2985
        %v2987 = vlaneseq
        %v2988 = vshrl.u32 %v2987, 7
        %v2989 = vsub.s32 %v2986, %v2988
        %v2990 = vrot.slane %v2982, %v2989
        %v2992 = vunpack.c.l.s4 1934713408
        %v2993 = vunpack.c.0.s8 %v2992
        %v2994 = vlaneseq
        %v2995 = vshrl.u32 %v2994, 7
        %v2996 = vsub.s32 %v2993, %v2995
        %v2997 = vrot.slane %v2983, %v2996
        %v2998 = vcombine.low %v2966, %v2981
        %v2999 = vcombine.high %v2966, %v2981
        %v3001 = vunpack.c.l.s4 1934713408
        %v3002 = vunpack.c.0.s8 %v3001
        %v3003 = vlaneseq
        %v3004 = vshrl.u32 %v3003, 7
        %v3005 = vsub.s32 %v3002, %v3004
        %v3006 = vrot.slane %v2998, %v3005
        %v3008 = vunpack.c.l.s4 1934713408
        %v3009 = vunpack.c.0.s8 %v3008
        %v3010 = vlaneseq
        %v3011 = vshrl.u32 %v3010, 7
        %v3012 = vsub.s32 %v3009, %v3011
        %v3013 = vrot.slane %v2999, %v3012
        %v3014 = vcombine.high %v2990, 0
        %v3015 = vcombine.high %v2997, 0
        %v3016 = vcombine.high %v3006, 0
        %v3017 = vcombine.high %v3013, 0
        %v3018 = vcombine.high %v2936, %v2950
        %v3020 = vunpack.c.l.s4 1983009808
        %v3021 = vunpack.c.0.s8 %v3020
        %v3022 = vlaneseq
        %v3023 = vshrl.u32 %v3022, 7
        %v3024 = vsub.s32 %v3021, %v3023
        %v3025 = vrot.slane %v2936, %v3024
        %v3027 = vunpack.c.l.s4 1983009808
        %v3028 = vunpack.c.0.s8 %v3027
        %v3029 = vlaneseq
        %v3030 = vshrl.u32 %v3029, 7
        %v3031 = vsub.s32 %v3028, %v3030
        %v3032 = vrot.slane %v3018, %v3031
        %v3033 = vcombine.high %v2944, %v2950
        %v3035 = vunpack.c.l.s4 1983009808
        %v3036 = vunpack.c.0.s8 %v3035
        %v3037 = vlaneseq
        %v3038 = vshrl.u32 %v3037, 7
        %v3039 = vsub.s32 %v3036, %v3038
        %v3040 = vrot.slane %v2944, %v3039
        %v3042 = vunpack.c.l.s4 1983009808
        %v3043 = vunpack.c.0.s8 %v3042
        %v3044 = vlaneseq
        %v3045 = vshrl.u32 %v3044, 7
        %v3046 = vsub.s32 %v3043, %v3045
        %v3047 = vrot.slane %v3033, %v3046
        %v3048 = vcombine.low %v3025, %v3040
        %v3049 = vcombine.high %v3025, %v3040
        %v3051 = vunpack.c.l.s4 1934713408
        %v3052 = vunpack.c.0.s8 %v3051
        %v3053 = vlaneseq
        %v3054 = vshrl.u32 %v3053, 7
        %v3055 = vsub.s32 %v3052, %v3054
        %v3056 = vrot.slane %v3048, %v3055
        %v3058 = vunpack.c.l.s4 1934713408
        %v3059 = vunpack.c.0.s8 %v3058
        %v3060 = vlaneseq
        %v3061 = vshrl.u32 %v3060, 7
        %v3062 = vsub.s32 %v3059, %v3061
        %v3063 = vrot.slane %v3049, %v3062
        %v3064 = vcombine.low %v3032, %v3047
        %v3065 = vcombine.high %v3032, %v3047
        %v3067 = vunpack.c.l.s4 1934713408
        %v3068 = vunpack.c.0.s8 %v3067
        %v3069 = vlaneseq
        %v3070 = vshrl.u32 %v3069, 7
        %v3071 = vsub.s32 %v3068, %v3070
        %v3072 = vrot.slane %v3064, %v3071
        %v3074 = vunpack.c.l.s4 1934713408
        %v3075 = vunpack.c.0.s8 %v3074
        %v3076 = vlaneseq
        %v3077 = vshrl.u32 %v3076, 7
        %v3078 = vsub.s32 %v3075, %v3077
        %v3079 = vrot.slane %v3065, %v3078
        %v3080 = vcombine.high %v3056, 0
        %v3081 = vcombine.high %v3063, 0
        %v3082 = vcombine.high %v3072, 0
        %v3083 = vcombine.high %v3079, 0
        %v3084 = vcombine.low %v2990, %v2997
        %v3086 = vunpack.c.l.s4 1983009808
        %v3087 = vunpack.c.0.s8 %v3086
        %v3088 = vlaneseq
        %v3089 = vshrl.u32 %v3088, 7
        %v3090 = vsub.s32 %v3087, %v3089
        %v3091 = vrot.slane %v3084, %v3090
        %v3092 = vcombine.low %v3014, %v3015
        %v3094 = vunpack.c.l.s4 1983009808
        %v3095 = vunpack.c.0.s8 %v3094
        %v3096 = vlaneseq
        %v3097 = vshrl.u32 %v3096, 7
        %v3098 = vsub.s32 %v3095, %v3097
        %v3099 = vrot.slane %v3092, %v3098
        %v3100 = vcombine.low %v3006, %v3013
        %v3102 = vunpack.c.l.s4 1983009808
        %v3103 = vunpack.c.0.s8 %v3102
        %v3104 = vlaneseq
        %v3105 = vshrl.u32 %v3104, 7
        %v3106 = vsub.s32 %v3103, %v3105
        %v3107 = vrot.slane %v3100, %v3106
        %v3108 = vcombine.low %v3016, %v3017
        %v3110 = vunpack.c.l.s4 1983009808
        %v3111 = vunpack.c.0.s8 %v3110
        %v3112 = vlaneseq
        %v3113 = vshrl.u32 %v3112, 7
        %v3114 = vsub.s32 %v3111, %v3113
        %v3115 = vrot.slane %v3108, %v3114
        %v3116 = vcombine.low %v3091, %v3099
        %v3118 = vunpack.c.l.s4 1934713408
        %v3119 = vunpack.c.0.s8 %v3118
        %v3120 = vlaneseq
        %v3121 = vshrl.u32 %v3120, 7
        %v3122 = vsub.s32 %v3119, %v3121
        %v3123 = vrot.slane %v3116, %v3122
        %v3124 = vcombine.low %v3107, %v3115
        %v3126 = vunpack.c.l.s4 1934713408
        %v3127 = vunpack.c.0.s8 %v3126
        %v3128 = vlaneseq
        %v3129 = vshrl.u32 %v3128, 7
        %v3130 = vsub.s32 %v3127, %v3129
        %v3131 = vrot.slane %v3124, %v3130
        %v3132 = vcombine.low %v3123, %v3131
        %v3133 = vcombine.high %v3123, %v3131
        %v3134 = vcombine.low %v3056, %v3063
        %v3136 = vunpack.c.l.s4 1983009808
        %v3137 = vunpack.c.0.s8 %v3136
        %v3138 = vlaneseq
        %v3139 = vshrl.u32 %v3138, 7
        %v3140 = vsub.s32 %v3137, %v3139
        %v3141 = vrot.slane %v3134, %v3140
        %v3142 = vcombine.low %v3080, %v3081
        %v3144 = vunpack.c.l.s4 1983009808
        %v3145 = vunpack.c.0.s8 %v3144
        %v3146 = vlaneseq
        %v3147 = vshrl.u32 %v3146, 7
        %v3148 = vsub.s32 %v3145, %v3147
        %v3149 = vrot.slane %v3142, %v3148
        %v3150 = vcombine.low %v3072, %v3079
        %v3152 = vunpack.c.l.s4 1983009808
        %v3153 = vunpack.c.0.s8 %v3152
        %v3154 = vlaneseq
        %v3155 = vshrl.u32 %v3154, 7
        %v3156 = vsub.s32 %v3153, %v3155
        %v3157 = vrot.slane %v3150, %v3156
        %v3158 = vcombine.low %v3082, %v3083
        %v3160 = vunpack.c.l.s4 1983009808
        %v3161 = vunpack.c.0.s8 %v3160
        %v3162 = vlaneseq
        %v3163 = vshrl.u32 %v3162, 7
        %v3164 = vsub.s32 %v3161, %v3163
        %v3165 = vrot.slane %v3158, %v3164
        %v3166 = vcombine.low %v3141, %v3149
        %v3168 = vunpack.c.l.s4 1934713408
        %v3169 = vunpack.c.0.s8 %v3168
        %v3170 = vlaneseq
        %v3171 = vshrl.u32 %v3170, 7
        %v3172 = vsub.s32 %v3169, %v3171
        %v3173 = vrot.slane %v3166, %v3172
        %v3174 = vcombine.low %v3157, %v3165
        %v3176 = vunpack.c.l.s4 1934713408
        %v3177 = vunpack.c.0.s8 %v3176
        %v3178 = vlaneseq
        %v3179 = vshrl.u32 %v3178, 7
        %v3180 = vsub.s32 %v3177, %v3179
        %v3181 = vrot.slane %v3174, %v3180
        %v3182 = vcombine.low %v3173, %v3181
        %v3183 = vcombine.high %v3173, %v3181
        %v3186 = vpack.i.b16 %v3182, %v3132
        %v3187 = vshrl.u32 %v3132, 16
        %v3188 = vshrl.u32 %v3182, 16
        %v3189 = vpack.i.b16 %v3188, %v3187
        %v3192 = vpack.i.b16 %v3183, %v3133
        %v3193 = vshrl.u32 %v3133, 16
        %v3194 = vshrl.u32 %v3183, 16
        %v3195 = vpack.i.b16 %v3194, %v3193
        %v3196 = vld [vmem:[#allocation2] sm:$0xff]
        %v3197 = vld [vmem:[#allocation2 + $0x8] sm:$0xff]
        %v3198 = vld [vmem:[#allocation2 + $0x10] sm:$0xff]
        %v3199 = vld [vmem:[#allocation2 + $0x18] sm:$0xff]
        %v3200 = vld [vmem:[#allocation2 + $0x20] sm:$0xff]
        %v3201 = vld [vmem:[#allocation2 + $0x28] sm:$0xff]
        %v3202 = vld [vmem:[#allocation2 + $0x30] sm:$0xff]
        %v3203 = vld [vmem:[#allocation2 + $0x38] sm:$0xff]
        %vm3204 = vcmask 261120
        %v3206 = vsel %vm3204, %v3186, 0
        %3208 = vmatprep.subr.bf16.mxu0 0
        %3209 = vmatpush1.bf16.msra.mxu0 %v3196
        %3210 = vmatprep.subr.bf16.mxu0 0
        %3211 = vmatpush1.bf16.msra.mxu0 %v3197
        %3212 = vmatprep.subr.bf16.mxu0 0
        %3213 = vmatpush1.bf16.msra.mxu0 0
        %3214 = vmatprep.subr.bf16.mxu0 0
        %3215 = vmatpush1.bf16.msra.mxu0 0
        %3216 = vmatprep.subr.bf16.mxu0 0
        %3217 = vmatpush1.bf16.msra.mxu0 0
        %3218 = vmatprep.subr.bf16.mxu0 0
        %3219 = vmatpush1.bf16.msra.mxu0 0
        %3220 = vmatprep.subr.bf16.mxu0 0
        %3221 = vmatpush1.bf16.msra.mxu0 0
        %3222 = vmatprep.subr.bf16.mxu0 0
        %3223 = vmatpush1.bf16.msra.mxu0 0
        %3224 = vmatprep.subr.bf16.mxu0 0
        %3225 = vmatpush1.bf16.msra.mxu0 0
        %3226 = vmatprep.subr.bf16.mxu0 0
        %3227 = vmatpush1.bf16.msra.mxu0 0
        %3228 = vmatprep.subr.bf16.mxu0 0
        %3229 = vmatpush1.bf16.msra.mxu0 0
        %3230 = vmatprep.subr.bf16.mxu0 0
        %3231 = vmatpush1.bf16.msra.mxu0 0
        %3232 = vmatprep.subr.bf16.mxu0 0
        %3233 = vmatpush1.bf16.msra.mxu0 0
        %3234 = vmatprep.subr.bf16.mxu0 0
        %3235 = vmatpush1.bf16.msra.mxu0 0
        %3236 = vmatprep.subr.bf16.mxu0 0
        %3237 = vmatpush1.bf16.msra.mxu0 0
        %3238 = vmatprep.subr.bf16.mxu0 0
        %3239 = vmatpush1.bf16.msra.mxu0 0
        %3240 = vmatprep.mubr.bf16.mxu0 0
        %3241 = vmatmul.mubr.bf16.gmra.mrb[0].mxu0 %v3206
        %v3242 = vpop.f32.mrb[0].mxu0
        %v3243 = vadd.f32 0.0, %v3242
        %v3244 = vpop.f32.mrb[0].mxu0
        %v3245 = vpop.f32.mrb[0].mxu0
        %v3246 = vadd.f32 0.0, %v3245
        %v3247 = vpop.f32.mrb[0].mxu0
        %3248 = vdwg.mxu0
        %v3250 = vsel %vm3204, %v3189, 0
        %3252 = vmatprep.subr.bf16.mxu0 0
        %3253 = vmatpush1.bf16.msra.mxu0 %v3198
        %3254 = vmatprep.subr.bf16.mxu0 0
        %3255 = vmatpush1.bf16.msra.mxu0 %v3199
        %3256 = vmatprep.subr.bf16.mxu0 0
        %3257 = vmatpush1.bf16.msra.mxu0 0
        %3258 = vmatprep.subr.bf16.mxu0 0
        %3259 = vmatpush1.bf16.msra.mxu0 0
        %3260 = vmatprep.subr.bf16.mxu0 0
        %3261 = vmatpush1.bf16.msra.mxu0 0
        %3262 = vmatprep.subr.bf16.mxu0 0
        %3263 = vmatpush1.bf16.msra.mxu0 0
        %3264 = vmatprep.subr.bf16.mxu0 0
        %3265 = vmatpush1.bf16.msra.mxu0 0
        %3266 = vmatprep.subr.bf16.mxu0 0
        %3267 = vmatpush1.bf16.msra.mxu0 0
        %3268 = vmatprep.subr.bf16.mxu0 0
        %3269 = vmatpush1.bf16.msra.mxu0 0
        %3270 = vmatprep.subr.bf16.mxu0 0
        %3271 = vmatpush1.bf16.msra.mxu0 0
        %3272 = vmatprep.subr.bf16.mxu0 0
        %3273 = vmatpush1.bf16.msra.mxu0 0
        %3274 = vmatprep.subr.bf16.mxu0 0
        %3275 = vmatpush1.bf16.msra.mxu0 0
        %3276 = vmatprep.subr.bf16.mxu0 0
        %3277 = vmatpush1.bf16.msra.mxu0 0
        %3278 = vmatprep.subr.bf16.mxu0 0
        %3279 = vmatpush1.bf16.msra.mxu0 0
        %3280 = vmatprep.subr.bf16.mxu0 0
        %3281 = vmatpush1.bf16.msra.mxu0 0
        %3282 = vmatprep.subr.bf16.mxu0 0
        %3283 = vmatpush1.bf16.msra.mxu0 0
        %3284 = vmatprep.mubr.bf16.mxu0 0
        %3285 = vmatmul.mubr.bf16.gmra.mrb[0].mxu0 %v3250
        %v3286 = vpop.f32.mrb[0].mxu0
        %v3287 = vadd.f32 0.0, %v3286
        %v3288 = vpop.f32.mrb[0].mxu0
        %v3289 = vpop.f32.mrb[0].mxu0
        %v3290 = vadd.f32 0.0, %v3289
        %v3291 = vpop.f32.mrb[0].mxu0
        %3292 = vdwg.mxu0
        %v3294 = vsel %vm3204, %v3192, 0
        %3296 = vmatprep.subr.bf16.mxu0 0
        %3297 = vmatpush1.bf16.msra.mxu0 %v3200
        %3298 = vmatprep.subr.bf16.mxu0 0
        %3299 = vmatpush1.bf16.msra.mxu0 %v3201
        %3300 = vmatprep.subr.bf16.mxu0 0
        %3301 = vmatpush1.bf16.msra.mxu0 0
        %3302 = vmatprep.subr.bf16.mxu0 0
        %3303 = vmatpush1.bf16.msra.mxu0 0
        %3304 = vmatprep.subr.bf16.mxu0 0
        %3305 = vmatpush1.bf16.msra.mxu0 0
        %3306 = vmatprep.subr.bf16.mxu0 0
        %3307 = vmatpush1.bf16.msra.mxu0 0
        %3308 = vmatprep.subr.bf16.mxu0 0
        %3309 = vmatpush1.bf16.msra.mxu0 0
        %3310 = vmatprep.subr.bf16.mxu0 0
        %3311 = vmatpush1.bf16.msra.mxu0 0
        %3312 = vmatprep.subr.bf16.mxu0 0
        %3313 = vmatpush1.bf16.msra.mxu0 0
        %3314 = vmatprep.subr.bf16.mxu0 0
        %3315 = vmatpush1.bf16.msra.mxu0 0
        %3316 = vmatprep.subr.bf16.mxu0 0
        %3317 = vmatpush1.bf16.msra.mxu0 0
        %3318 = vmatprep.subr.bf16.mxu0 0
        %3319 = vmatpush1.bf16.msra.mxu0 0
        %3320 = vmatprep.subr.bf16.mxu0 0
        %3321 = vmatpush1.bf16.msra.mxu0 0
        %3322 = vmatprep.subr.bf16.mxu0 0
        %3323 = vmatpush1.bf16.msra.mxu0 0
        %3324 = vmatprep.subr.bf16.mxu0 0
        %3325 = vmatpush1.bf16.msra.mxu0 0
        %3326 = vmatprep.subr.bf16.mxu0 0
        %3327 = vmatpush1.bf16.msra.mxu0 0
        %3328 = vmatprep.mubr.bf16.mxu0 0
        %3329 = vmatmul.mubr.bf16.gmra.mrb[0].mxu0 %v3294
        %v3330 = vpop.f32.mrb[0].mxu0
        %v3331 = vadd.f32 0.0, %v3330
        %v3332 = vpop.f32.mrb[0].mxu0
        %v3333 = vpop.f32.mrb[0].mxu0
        %v3334 = vadd.f32 0.0, %v3333
        %v3335 = vpop.f32.mrb[0].mxu0
        %3336 = vdwg.mxu0
        %v3338 = vsel %vm3204, %v3195, 0
        %3340 = vmatprep.subr.bf16.mxu0 0
        %3341 = vmatpush1.bf16.msra.mxu0 %v3202
        %3342 = vmatprep.subr.bf16.mxu0 0
        %3343 = vmatpush1.bf16.msra.mxu0 %v3203
        %3344 = vmatprep.subr.bf16.mxu0 0
        %3345 = vmatpush1.bf16.msra.mxu0 0
        %3346 = vmatprep.subr.bf16.mxu0 0
        %3347 = vmatpush1.bf16.msra.mxu0 0
        %3348 = vmatprep.subr.bf16.mxu0 0
        %3349 = vmatpush1.bf16.msra.mxu0 0
        %3350 = vmatprep.subr.bf16.mxu0 0
        %3351 = vmatpush1.bf16.msra.mxu0 0
        %3352 = vmatprep.subr.bf16.mxu0 0
        %3353 = vmatpush1.bf16.msra.mxu0 0
        %3354 = vmatprep.subr.bf16.mxu0 0
        %3355 = vmatpush1.bf16.msra.mxu0 0
        %3356 = vmatprep.subr.bf16.mxu0 0
        %3357 = vmatpush1.bf16.msra.mxu0 0
        %3358 = vmatprep.subr.bf16.mxu0 0
        %3359 = vmatpush1.bf16.msra.mxu0 0
        %3360 = vmatprep.subr.bf16.mxu0 0
        %3361 = vmatpush1.bf16.msra.mxu0 0
        %3362 = vmatprep.subr.bf16.mxu0 0
        %3363 = vmatpush1.bf16.msra.mxu0 0
        %3364 = vmatprep.subr.bf16.mxu0 0
        %3365 = vmatpush1.bf16.msra.mxu0 0
        %3366 = vmatprep.subr.bf16.mxu0 0
        %3367 = vmatpush1.bf16.msra.mxu0 0
        %3368 = vmatprep.subr.bf16.mxu0 0
        %3369 = vmatpush1.bf16.msra.mxu0 0
        %3370 = vmatprep.subr.bf16.mxu0 0
        %3371 = vmatpush1.bf16.msra.mxu0 0
        %3372 = vmatprep.mubr.bf16.mxu0 0
        %3373 = vmatmul.mubr.bf16.gmra.mrb[0].mxu0 %v3338
        %v3374 = vpop.f32.mrb[0].mxu0
        %v3375 = vadd.f32 0.0, %v3374
        %v3376 = vpop.f32.mrb[0].mxu0
        %v3377 = vpop.f32.mrb[0].mxu0
        %v3378 = vadd.f32 0.0, %v3377
        %v3379 = vpop.f32.mrb[0].mxu0
        %3380 = vdwg.mxu0
        %vm3381 = vcmask 130048
        %v3382 = vsel %vm3381, %v3243, -inf
        %3383 = vmax.xlane.f32.xlu0 %v3382
        %v3384 = vpop.xlane.xlu0 %3383
        %v3385 = vsel %vm3381, %v3246, -inf
        %3386 = vmax.xlane.f32.xlu0 %v3385
        %v3387 = vpop.xlane.xlu0 %3386
        %v3388 = vsel %vm3381, %v3287, -inf
        %3389 = vmax.xlane.f32.xlu0 %v3388
        %v3390 = vpop.xlane.xlu0 %3389
        %v3391 = vsel %vm3381, %v3290, -inf
        %3392 = vmax.xlane.f32.xlu0 %v3391
        %v3393 = vpop.xlane.xlu0 %3392
        %v3394 = vsel %vm3381, %v3331, -inf
        %3395 = vmax.xlane.f32.xlu0 %v3394
        %v3396 = vpop.xlane.xlu0 %3395
        %v3397 = vsel %vm3381, %v3334, -inf
        %3398 = vmax.xlane.f32.xlu0 %v3397
        %v3399 = vpop.xlane.xlu0 %3398
        %v3400 = vsel %vm3381, %v3375, -inf
        %3401 = vmax.xlane.f32.xlu0 %v3400
        %v3402 = vpop.xlane.xlu0 %3401
        %v3403 = vsel %vm3381, %v3378, -inf
        %3404 = vmax.xlane.f32.xlu0 %v3403
        %v3405 = vpop.xlane.xlu0 %3404
        %v3406 = vsub.f32 %v3243, %v3384
        %v3407 = vsub.f32 %v3246, %v3387
        %v3408 = vsub.f32 %v3287, %v3390
        %v3409 = vsub.f32 %v3290, %v3393
        %v3410 = vsub.f32 %v3331, %v3396
        %v3411 = vsub.f32 %v3334, %v3399
        %v3412 = vsub.f32 %v3375, %v3402
        %v3413 = vsub.f32 %v3378, %v3405
        %v3414 = vmul.f32 %v3406, 1.442695
        %v3415 = vpow.pop %v3414
        %v3416 = vmul.f32 %v3407, 1.442695
        %v3417 = vpow.pop %v3416
        %v3418 = vmul.f32 %v3408, 1.442695
        %v3419 = vpow.pop %v3418
        %v3420 = vmul.f32 %v3409, 1.442695
        %v3421 = vpow.pop %v3420
        %v3422 = vmul.f32 %v3410, 1.442695
        %v3423 = vpow.pop %v3422
        %v3424 = vmul.f32 %v3411, 1.442695
        %v3425 = vpow.pop %v3424
        %v3426 = vmul.f32 %v3412, 1.442695
        %v3427 = vpow.pop %v3426
        %v3428 = vmul.f32 %v3413, 1.442695
        %v3429 = vpow.pop %v3428
        %v3430 = vsel %vm3381, %v3415, 0.0
        %3431 = vadd.xlane.f32.xlu0 %v3430
        %v3432 = vpop.xlane.xlu0 %3431
        %v3433 = vsel %vm3381, %v3417, 0.0
        %3434 = vadd.xlane.f32.xlu0 %v3433
        %v3435 = vpop.xlane.xlu0 %3434
        %v3436 = vsel %vm3381, %v3419, 0.0
        %3437 = vadd.xlane.f32.xlu0 %v3436
        %v3438 = vpop.xlane.xlu0 %3437
        %v3439 = vsel %vm3381, %v3421, 0.0
        %3440 = vadd.xlane.f32.xlu0 %v3439
        %v3441 = vpop.xlane.xlu0 %3440
        %v3442 = vsel %vm3381, %v3423, 0.0
        %3443 = vadd.xlane.f32.xlu0 %v3442
        %v3444 = vpop.xlane.xlu0 %3443
        %v3445 = vsel %vm3381, %v3425, 0.0
        %3446 = vadd.xlane.f32.xlu0 %v3445
        %v3447 = vpop.xlane.xlu0 %3446
        %v3448 = vsel %vm3381, %v3427, 0.0
        %3449 = vadd.xlane.f32.xlu0 %v3448
        %v3450 = vpop.xlane.xlu0 %3449
        %v3451 = vsel %vm3381, %v3429, 0.0
        %3452 = vadd.xlane.f32.xlu0 %v3451
        %v3453 = vpop.xlane.xlu0 %3452
        %v3454 = vrcp.pop %v3432
        %v3455 = vrcp.pop %v3435
        %v3456 = vrcp.pop %v3438
        %v3457 = vrcp.pop %v3441
        %v3458 = vrcp.pop %v3444
        %v3459 = vrcp.pop %v3447
        %v3460 = vrcp.pop %v3450
        %v3461 = vrcp.pop %v3453
        %v3462 = vpack.c.bf16 %v3417, %v3415
        %v3463 = vpack.c.bf16 %v3421, %v3419
        %v3464 = vpack.c.bf16 %v3425, %v3423
        %v3465 = vpack.c.bf16 %v3429, %v3427
        %v3466 = vld [vmem:[#allocation3] sm:$0xff]
        %v3467 = vld [vmem:[#allocation3 + $0x8] sm:$0xff]
        %v3468 = vld [vmem:[#allocation3 + $0x10] sm:$0xff]
        %v3469 = vld [vmem:[#allocation3 + $0x18] sm:$0xff]
        %v3471 = vsel %vm3381, %v3462, 0
        %3473 = vmatprep.subr.bf16.mxu0 0
        %3474 = vmatpush1.bf16.msra.mxu0 %v3466
        %3475 = vmatprep.subr.bf16.mxu0 0
        %3476 = vmatpush1.bf16.msra.mxu0 0
        %3477 = vmatprep.subr.bf16.mxu0 0
        %3478 = vmatpush1.bf16.msra.mxu0 0
        %3479 = vmatprep.subr.bf16.mxu0 0
        %3480 = vmatpush1.bf16.msra.mxu0 0
        %3481 = vmatprep.subr.bf16.mxu0 0
        %3482 = vmatpush1.bf16.msra.mxu0 0
        %3483 = vmatprep.subr.bf16.mxu0 0
        %3484 = vmatpush1.bf16.msra.mxu0 0
        %3485 = vmatprep.subr.bf16.mxu0 0
        %3486 = vmatpush1.bf16.msra.mxu0 0
        %3487 = vmatprep.subr.bf16.mxu0 0
        %3488 = vmatpush1.bf16.msra.mxu0 0
        %3489 = vmatprep.subr.bf16.mxu0 0
        %3490 = vmatpush1.bf16.msra.mxu0 0
        %3491 = vmatprep.subr.bf16.mxu0 0
        %3492 = vmatpush1.bf16.msra.mxu0 0
        %3493 = vmatprep.subr.bf16.mxu0 0
        %3494 = vmatpush1.bf16.msra.mxu0 0
        %3495 = vmatprep.subr.bf16.mxu0 0
        %3496 = vmatpush1.bf16.msra.mxu0 0
        %3497 = vmatprep.subr.bf16.mxu0 0
        %3498 = vmatpush1.bf16.msra.mxu0 0
        %3499 = vmatprep.subr.bf16.mxu0 0
        %3500 = vmatpush1.bf16.msra.mxu0 0
        %3501 = vmatprep.subr.bf16.mxu0 0
        %3502 = vmatpush1.bf16.msra.mxu0 0
        %3503 = vmatprep.subr.bf16.mxu0 0
        %3504 = vmatpush1.bf16.msra.mxu0 0
        %3505 = vmatprep.mubr.bf16.mxu0 0
        %3506 = vmatmul.mubr.bf16.gmra.mrb[0].mxu0 %v3471
        %v3507 = vpop.f32.mrb[0].mxu0
        %v3508 = vadd.f32 0.0, %v3507
        %v3509 = vpop.f32.mrb[0].mxu0
        %v3510 = vpop.f32.mrb[0].mxu0
        %v3511 = vadd.f32 0.0, %v3510
        %v3512 = vpop.f32.mrb[0].mxu0
        %3513 = vdwg.mxu0
        %v3515 = vsel %vm3381, %v3463, 0
        %3517 = vmatprep.subr.bf16.mxu0 0
        %3518 = vmatpush1.bf16.msra.mxu0 %v3467
        %3519 = vmatprep.subr.bf16.mxu0 0
        %3520 = vmatpush1.bf16.msra.mxu0 0
        %3521 = vmatprep.subr.bf16.mxu0 0
        %3522 = vmatpush1.bf16.msra.mxu0 0
        %3523 = vmatprep.subr.bf16.mxu0 0
        %3524 = vmatpush1.bf16.msra.mxu0 0
        %3525 = vmatprep.subr.bf16.mxu0 0
        %3526 = vmatpush1.bf16.msra.mxu0 0
        %3527 = vmatprep.subr.bf16.mxu0 0
        %3528 = vmatpush1.bf16.msra.mxu0 0
        %3529 = vmatprep.subr.bf16.mxu0 0
        %3530 = vmatpush1.bf16.msra.mxu0 0
        %3531 = vmatprep.subr.bf16.mxu0 0
        %3532 = vmatpush1.bf16.msra.mxu0 0
        %3533 = vmatprep.subr.bf16.mxu0 0
        %3534 = vmatpush1.bf16.msra.mxu0 0
        %3535 = vmatprep.subr.bf16.mxu0 0
        %3536 = vmatpush1.bf16.msra.mxu0 0
        %3537 = vmatprep.subr.bf16.mxu0 0
        %3538 = vmatpush1.bf16.msra.mxu0 0
        %3539 = vmatprep.subr.bf16.mxu0 0
        %3540 = vmatpush1.bf16.msra.mxu0 0
        %3541 = vmatprep.subr.bf16.mxu0 0
        %3542 = vmatpush1.bf16.msra.mxu0 0
        %3543 = vmatprep.subr.bf16.mxu0 0
        %3544 = vmatpush1.bf16.msra.mxu0 0
        %3545 = vmatprep.subr.bf16.mxu0 0
        %3546 = vmatpush1.bf16.msra.mxu0 0
        %3547 = vmatprep.subr.bf16.mxu0 0
        %3548 = vmatpush1.bf16.msra.mxu0 0
        %3549 = vmatprep.mubr.bf16.mxu0 0
        %3550 = vmatmul.mubr.bf16.gmra.mrb[0].mxu0 %v3515
        %v3551 = vpop.f32.mrb[0].mxu0
        %v3552 = vadd.f32 0.0, %v3551
        %v3553 = vpop.f32.mrb[0].mxu0
        %v3554 = vpop.f32.mrb[0].mxu0
        %v3555 = vadd.f32 0.0, %v3554
        %v3556 = vpop.f32.mrb[0].mxu0
        %3557 = vdwg.mxu0
        %v3559 = vsel %vm3381, %v3464, 0
        %3561 = vmatprep.subr.bf16.mxu0 0
        %3562 = vmatpush1.bf16.msra.mxu0 %v3468
        %3563 = vmatprep.subr.bf16.mxu0 0
        %3564 = vmatpush1.bf16.msra.mxu0 0
        %3565 = vmatprep.subr.bf16.mxu0 0
        %3566 = vmatpush1.bf16.msra.mxu0 0
        %3567 = vmatprep.subr.bf16.mxu0 0
        %3568 = vmatpush1.bf16.msra.mxu0 0
        %3569 = vmatprep.subr.bf16.mxu0 0
        %3570 = vmatpush1.bf16.msra.mxu0 0
        %3571 = vmatprep.subr.bf16.mxu0 0
        %3572 = vmatpush1.bf16.msra.mxu0 0
        %3573 = vmatprep.subr.bf16.mxu0 0
        %3574 = vmatpush1.bf16.msra.mxu0 0
        %3575 = vmatprep.subr.bf16.mxu0 0
        %3576 = vmatpush1.bf16.msra.mxu0 0
        %3577 = vmatprep.subr.bf16.mxu0 0
        %3578 = vmatpush1.bf16.msra.mxu0 0
        %3579 = vmatprep.subr.bf16.mxu0 0
        %3580 = vmatpush1.bf16.msra.mxu0 0
        %3581 = vmatprep.subr.bf16.mxu0 0
        %3582 = vmatpush1.bf16.msra.mxu0 0
        %3583 = vmatprep.subr.bf16.mxu0 0
        %3584 = vmatpush1.bf16.msra.mxu0 0
        %3585 = vmatprep.subr.bf16.mxu0 0
        %3586 = vmatpush1.bf16.msra.mxu0 0
        %3587 = vmatprep.subr.bf16.mxu0 0
        %3588 = vmatpush1.bf16.msra.mxu0 0
        %3589 = vmatprep.subr.bf16.mxu0 0
        %3590 = vmatpush1.bf16.msra.mxu0 0
        %3591 = vmatprep.subr.bf16.mxu0 0
        %3592 = vmatpush1.bf16.msra.mxu0 0
        %3593 = vmatprep.mubr.bf16.mxu0 0
        %3594 = vmatmul.mubr.bf16.gmra.mrb[0].mxu0 %v3559
        %v3595 = vpop.f32.mrb[0].mxu0
        %v3596 = vadd.f32 0.0, %v3595
        %v3597 = vpop.f32.mrb[0].mxu0
        %v3598 = vpop.f32.mrb[0].mxu0
        %v3599 = vadd.f32 0.0, %v3598
        %v3600 = vpop.f32.mrb[0].mxu0
        %3601 = vdwg.mxu0
        %v3603 = vsel %vm3381, %v3465, 0
        %3605 = vmatprep.subr.bf16.mxu0 0
        %3606 = vmatpush1.bf16.msra.mxu0 %v3469
        %3607 = vmatprep.subr.bf16.mxu0 0
        %3608 = vmatpush1.bf16.msra.mxu0 0
        %3609 = vmatprep.subr.bf16.mxu0 0
        %3610 = vmatpush1.bf16.msra.mxu0 0
        %3611 = vmatprep.subr.bf16.mxu0 0
        %3612 = vmatpush1.bf16.msra.mxu0 0
        %3613 = vmatprep.subr.bf16.mxu0 0
        %3614 = vmatpush1.bf16.msra.mxu0 0
        %3615 = vmatprep.subr.bf16.mxu0 0
        %3616 = vmatpush1.bf16.msra.mxu0 0
        %3617 = vmatprep.subr.bf16.mxu0 0
        %3618 = vmatpush1.bf16.msra.mxu0 0
        %3619 = vmatprep.subr.bf16.mxu0 0
        %3620 = vmatpush1.bf16.msra.mxu0 0
        %3621 = vmatprep.subr.bf16.mxu0 0
        %3622 = vmatpush1.bf16.msra.mxu0 0
        %3623 = vmatprep.subr.bf16.mxu0 0
        %3624 = vmatpush1.bf16.msra.mxu0 0
        %3625 = vmatprep.subr.bf16.mxu0 0
        %3626 = vmatpush1.bf16.msra.mxu0 0
        %3627 = vmatprep.subr.bf16.mxu0 0
        %3628 = vmatpush1.bf16.msra.mxu0 0
        %3629 = vmatprep.subr.bf16.mxu0 0
        %3630 = vmatpush1.bf16.msra.mxu0 0
        %3631 = vmatprep.subr.bf16.mxu0 0
        %3632 = vmatpush1.bf16.msra.mxu0 0
        %3633 = vmatprep.subr.bf16.mxu0 0
        %3634 = vmatpush1.bf16.msra.mxu0 0
        %3635 = vmatprep.subr.bf16.mxu0 0
        %3636 = vmatpush1.bf16.msra.mxu0 0
        %3637 = vmatprep.mubr.bf16.mxu0 0
        %3638 = vmatmul.mubr.bf16.gmra.mrb[0].mxu0 %v3603
        %v3639 = vpop.f32.mrb[0].mxu0
        %v3640 = vadd.f32 0.0, %v3639
        %v3641 = vpop.f32.mrb[0].mxu0
        %v3642 = vpop.f32.mrb[0].mxu0
        %v3643 = vadd.f32 0.0, %v3642
        %v3644 = vpop.f32.mrb[0].mxu0
        %3645 = vdwg.mxu0
        %v3646 = vmul.f32 %v3508, %v3454
        %v3647 = vmul.f32 %v3511, %v3455
        %v3648 = vmul.f32 %v3552, %v3456
        %v3649 = vmul.f32 %v3555, %v3457
        %v3650 = vmul.f32 %v3596, %v3458
        %v3651 = vmul.f32 %v3599, %v3459
        %v3652 = vmul.f32 %v3640, %v3460
        %v3653 = vmul.f32 %v3643, %v3461
        %v3654 = vcombine.low %v3646, %v3650
        %v3655 = vcombine.high %v3646, %v3650
        %v3657 = vunpack.c.l.s4 1983009808
        %v3658 = vunpack.c.0.s8 %v3657
        %v3659 = vlaneseq
        %v3660 = vshrl.u32 %v3659, 7
        %v3661 = vsub.s32 %v3658, %v3660
        %v3662 = vrot.slane %v3654, %v3661
        %v3664 = vunpack.c.l.s4 1983009808
        %v3665 = vunpack.c.0.s8 %v3664
        %v3666 = vlaneseq
        %v3667 = vshrl.u32 %v3666, 7
        %v3668 = vsub.s32 %v3665, %v3667
        %v3669 = vrot.slane %v3655, %v3668
        %v3670 = vcombine.low %v3648, %v3652
        %v3671 = vcombine.high %v3648, %v3652
        %v3673 = vunpack.c.l.s4 1983009808
        %v3674 = vunpack.c.0.s8 %v3673
        %v3675 = vlaneseq
        %v3676 = vshrl.u32 %v3675, 7
        %v3677 = vsub.s32 %v3674, %v3676
        %v3678 = vrot.slane %v3670, %v3677
        %v3680 = vunpack.c.l.s4 1983009808
        %v3681 = vunpack.c.0.s8 %v3680
        %v3682 = vlaneseq
        %v3683 = vshrl.u32 %v3682, 7
        %v3684 = vsub.s32 %v3681, %v3683
        %v3685 = vrot.slane %v3671, %v3684
        %v3686 = vcombine.low %v3662, %v3678
        %v3687 = vcombine.high %v3662, %v3678
        %v3689 = vunpack.c.l.s4 1934713408
        %v3690 = vunpack.c.0.s8 %v3689
        %v3691 = vlaneseq
        %v3692 = vshrl.u32 %v3691, 7
        %v3693 = vsub.s32 %v3690, %v3692
        %v3694 = vrot.slane %v3686, %v3693
        %v3696 = vunpack.c.l.s4 1934713408
        %v3697 = vunpack.c.0.s8 %v3696
        %v3698 = vlaneseq
        %v3699 = vshrl.u32 %v3698, 7
        %v3700 = vsub.s32 %v3697, %v3699
        %v3701 = vrot.slane %v3687, %v3700
        %v3702 = vcombine.low %v3669, %v3685
        %v3703 = vcombine.high %v3669, %v3685
        %v3705 = vunpack.c.l.s4 1934713408
        %v3706 = vunpack.c.0.s8 %v3705
        %v3707 = vlaneseq
        %v3708 = vshrl.u32 %v3707, 7
        %v3709 = vsub.s32 %v3706, %v3708
        %v3710 = vrot.slane %v3702, %v3709
        %v3712 = vunpack.c.l.s4 1934713408
        %v3713 = vunpack.c.0.s8 %v3712
        %v3714 = vlaneseq
        %v3715 = vshrl.u32 %v3714, 7
        %v3716 = vsub.s32 %v3713, %v3715
        %v3717 = vrot.slane %v3703, %v3716
        %v3718 = vcombine.high %v3694, 0.0
        %v3719 = vcombine.high %v3701, 0.0
        %v3720 = vcombine.high %v3710, 0.0
        %v3721 = vcombine.high %v3717, 0.0
        %v3722 = vcombine.low %v3647, %v3651
        %v3723 = vcombine.high %v3647, %v3651
        %v3725 = vunpack.c.l.s4 1983009808
        %v3726 = vunpack.c.0.s8 %v3725
        %v3727 = vlaneseq
        %v3728 = vshrl.u32 %v3727, 7
        %v3729 = vsub.s32 %v3726, %v3728
        %v3730 = vrot.slane %v3722, %v3729
        %v3732 = vunpack.c.l.s4 1983009808
        %v3733 = vunpack.c.0.s8 %v3732
        %v3734 = vlaneseq
        %v3735 = vshrl.u32 %v3734, 7
        %v3736 = vsub.s32 %v3733, %v3735
        %v3737 = vrot.slane %v3723, %v3736
        %v3738 = vcombine.low %v3649, %v3653
        %v3739 = vcombine.high %v3649, %v3653
        %v3741 = vunpack.c.l.s4 1983009808
        %v3742 = vunpack.c.0.s8 %v3741
        %v3743 = vlaneseq
        %v3744 = vshrl.u32 %v3743, 7
        %v3745 = vsub.s32 %v3742, %v3744
        %v3746 = vrot.slane %v3738, %v3745
        %v3748 = vunpack.c.l.s4 1983009808
        %v3749 = vunpack.c.0.s8 %v3748
        %v3750 = vlaneseq
        %v3751 = vshrl.u32 %v3750, 7
        %v3752 = vsub.s32 %v3749, %v3751
        %v3753 = vrot.slane %v3739, %v3752
        %v3754 = vcombine.low %v3730, %v3746
        %v3755 = vcombine.high %v3730, %v3746
        %v3757 = vunpack.c.l.s4 1934713408
        %v3758 = vunpack.c.0.s8 %v3757
        %v3759 = vlaneseq
        %v3760 = vshrl.u32 %v3759, 7
        %v3761 = vsub.s32 %v3758, %v3760
        %v3762 = vrot.slane %v3754, %v3761
        %v3764 = vunpack.c.l.s4 1934713408
        %v3765 = vunpack.c.0.s8 %v3764
        %v3766 = vlaneseq
        %v3767 = vshrl.u32 %v3766, 7
        %v3768 = vsub.s32 %v3765, %v3767
        %v3769 = vrot.slane %v3755, %v3768
        %v3770 = vcombine.low %v3737, %v3753
        %v3771 = vcombine.high %v3737, %v3753
        %v3773 = vunpack.c.l.s4 1934713408
        %v3774 = vunpack.c.0.s8 %v3773
        %v3775 = vlaneseq
        %v3776 = vshrl.u32 %v3775, 7
        %v3777 = vsub.s32 %v3774, %v3776
        %v3778 = vrot.slane %v3770, %v3777
        %v3780 = vunpack.c.l.s4 1934713408
        %v3781 = vunpack.c.0.s8 %v3780
        %v3782 = vlaneseq
        %v3783 = vshrl.u32 %v3782, 7
        %v3784 = vsub.s32 %v3781, %v3783
        %v3785 = vrot.slane %v3771, %v3784
        %v3786 = vcombine.high %v3762, 0.0
        %v3787 = vcombine.high %v3769, 0.0
        %v3788 = vcombine.high %v3778, 0.0
        %v3789 = vcombine.high %v3785, 0.0
        %v3790 = vcombine.low %v3694, %v3701
        %v3792 = vunpack.c.l.s4 1983009808
        %v3793 = vunpack.c.0.s8 %v3792
        %v3794 = vlaneseq
        %v3795 = vshrl.u32 %v3794, 7
        %v3796 = vsub.s32 %v3793, %v3795
        %v3797 = vrot.slane %v3790, %v3796
        %v3798 = vcombine.low %v3718, %v3719
        %v3800 = vunpack.c.l.s4 1983009808
        %v3801 = vunpack.c.0.s8 %v3800
        %v3802 = vlaneseq
        %v3803 = vshrl.u32 %v3802, 7
        %v3804 = vsub.s32 %v3801, %v3803
        %v3805 = vrot.slane %v3798, %v3804
        %v3806 = vcombine.low %v3710, %v3717
        %v3808 = vunpack.c.l.s4 1983009808
        %v3809 = vunpack.c.0.s8 %v3808
        %v3810 = vlaneseq
        %v3811 = vshrl.u32 %v3810, 7
        %v3812 = vsub.s32 %v3809, %v3811
        %v3813 = vrot.slane %v3806, %v3812
        %v3814 = vcombine.low %v3720, %v3721
        %v3816 = vunpack.c.l.s4 1983009808
        %v3817 = vunpack.c.0.s8 %v3816
        %v3818 = vlaneseq
        %v3819 = vshrl.u32 %v3818, 7
        %v3820 = vsub.s32 %v3817, %v3819
        %v3821 = vrot.slane %v3814, %v3820
        %v3822 = vcombine.low %v3797, %v3805
        %v3823 = vcombine.high %v3797, %v3805
        %v3825 = vunpack.c.l.s4 1934713408
        %v3826 = vunpack.c.0.s8 %v3825
        %v3827 = vlaneseq
        %v3828 = vshrl.u32 %v3827, 7
        %v3829 = vsub.s32 %v3826, %v3828
        %v3830 = vrot.slane %v3822, %v3829
        %v3832 = vunpack.c.l.s4 1934713408
        %v3833 = vunpack.c.0.s8 %v3832
        %v3834 = vlaneseq
        %v3835 = vshrl.u32 %v3834, 7
        %v3836 = vsub.s32 %v3833, %v3835
        %v3837 = vrot.slane %v3823, %v3836
        %v3838 = vcombine.low %v3813, %v3821
        %v3839 = vcombine.high %v3813, %v3821
        %v3841 = vunpack.c.l.s4 1934713408
        %v3842 = vunpack.c.0.s8 %v3841
        %v3843 = vlaneseq
        %v3844 = vshrl.u32 %v3843, 7
        %v3845 = vsub.s32 %v3842, %v3844
        %v3846 = vrot.slane %v3838, %v3845
        %v3848 = vunpack.c.l.s4 1934713408
        %v3849 = vunpack.c.0.s8 %v3848
        %v3850 = vlaneseq
        %v3851 = vshrl.u32 %v3850, 7
        %v3852 = vsub.s32 %v3849, %v3851
        %v3853 = vrot.slane %v3839, %v3852
        %v3854 = vcombine.low %v3830, %v3846
        %v3855 = vcombine.high %v3830, %v3846
        %v3856 = vcombine.low %v3837, %v3853
        %v3857 = vcombine.high %v3837, %v3853
        %v3858 = vcombine.low %v3762, %v3769
        %v3860 = vunpack.c.l.s4 1983009808
        %v3861 = vunpack.c.0.s8 %v3860
        %v3862 = vlaneseq
        %v3863 = vshrl.u32 %v3862, 7
        %v3864 = vsub.s32 %v3861, %v3863
        %v3865 = vrot.slane %v3858, %v3864
        %v3866 = vcombine.low %v3786, %v3787
        %v3868 = vunpack.c.l.s4 1983009808
        %v3869 = vunpack.c.0.s8 %v3868
        %v3870 = vlaneseq
        %v3871 = vshrl.u32 %v3870, 7
        %v3872 = vsub.s32 %v3869, %v3871
        %v3873 = vrot.slane %v3866, %v3872
        %v3874 = vcombine.low %v3778, %v3785
        %v3876 = vunpack.c.l.s4 1983009808
        %v3877 = vunpack.c.0.s8 %v3876
        %v3878 = vlaneseq
        %v3879 = vshrl.u32 %v3878, 7
        %v3880 = vsub.s32 %v3877, %v3879
        %v3881 = vrot.slane %v3874, %v3880
        %v3882 = vcombine.low %v3788, %v3789
        %v3884 = vunpack.c.l.s4 1983009808
        %v3885 = vunpack.c.0.s8 %v3884
        %v3886 = vlaneseq
        %v3887 = vshrl.u32 %v3886, 7
        %v3888 = vsub.s32 %v3885, %v3887
        %v3889 = vrot.slane %v3882, %v3888
        %v3890 = vcombine.low %v3865, %v3873
        %v3891 = vcombine.high %v3865, %v3873
        %v3893 = vunpack.c.l.s4 1934713408
        %v3894 = vunpack.c.0.s8 %v3893
        %v3895 = vlaneseq
        %v3896 = vshrl.u32 %v3895, 7
        %v3897 = vsub.s32 %v3894, %v3896
        %v3898 = vrot.slane %v3890, %v3897
        %v3900 = vunpack.c.l.s4 1934713408
        %v3901 = vunpack.c.0.s8 %v3900
        %v3902 = vlaneseq
        %v3903 = vshrl.u32 %v3902, 7
        %v3904 = vsub.s32 %v3901, %v3903
        %v3905 = vrot.slane %v3891, %v3904
        %v3906 = vcombine.low %v3881, %v3889
        %v3907 = vcombine.high %v3881, %v3889
        %v3909 = vunpack.c.l.s4 1934713408
        %v3910 = vunpack.c.0.s8 %v3909
        %v3911 = vlaneseq
        %v3912 = vshrl.u32 %v3911, 7
        %v3913 = vsub.s32 %v3910, %v3912
        %v3914 = vrot.slane %v3906, %v3913
        %v3916 = vunpack.c.l.s4 1934713408
        %v3917 = vunpack.c.0.s8 %v3916
        %v3918 = vlaneseq
        %v3919 = vshrl.u32 %v3918, 7
        %v3920 = vsub.s32 %v3917, %v3919
        %v3921 = vrot.slane %v3907, %v3920
        %v3922 = vcombine.low %v3898, %v3914
        %v3923 = vcombine.high %v3898, %v3914
        %v3924 = vcombine.low %v3905, %v3921
        %v3925 = vcombine.high %v3905, %v3921
        %3928 = vrot.lane.b32.xlu0 %v3855, 32
        %v3929 = vpop.permute.xlu0 %3928
        %3930 = vrot.lane.b32.xlu0 %v3923, 32
        %v3931 = vpop.permute.xlu0 %3930
        %3936 = vrot.lane.b32.xlu0 %v3856, 64
        %v3937 = vpop.permute.xlu0 %3936
        %3938 = vrot.lane.b32.xlu0 %v3924, 64
        %v3939 = vpop.permute.xlu0 %3938
        %3944 = vrot.lane.b32.xlu0 %v3857, 96
        %v3945 = vpop.permute.xlu0 %3944
        %3946 = vrot.lane.b32.xlu0 %v3925, 96
        %v3947 = vpop.permute.xlu0 %3946
        %v3950 = vsel %vm3204, %v3854, %v3929
        %v3951 = vsel %vm3204, %v3922, %v3931
        %vm3952 = vcmask 523264
        %v3953 = vsel %vm3952, %v3950, %v3937
        %v3954 = vsel %vm3952, %v3951, %v3939
        %vm3955 = vcmask 785408
        %v3956 = vsel %vm3955, %v3953, %v3945
        %v3957 = vsel %vm3955, %v3954, %v3947
        %3958 = vst [vmem:[%s394] sm:$0xff] %v3956
        %3959 = vst [vmem:[%s394 + $0x8] sm:$0xff] %v3957
        %s3960 = sand.u32 %s205, 1
        %s3961 = scalar_lea.sflag [#allocation6], %s3960
        %s3962 = sand.u32 %s205, 1
        %s3963 = smul.addr %s3962, 16
        %s3964 = scalar_lea.vmem [#allocation12], %s3963
        %s3965 = sand.u32 %s233, 1
        %s3966 = scalar_lea.sflag [#allocation14], %s3965
        %s3967 = sand.u32 %s233, 1
        %s3968 = smul.addr %s3967, 16
        %s3969 = scalar_lea.vmem [#allocation13], %s3968
        // Predicated region
        $region69: #{tpu_custom_call.1} parent=47 // pred_check
          %p3970 = pneg %p215
        $region70: #{tpu_custom_call.1} parent=47 // pred_check_branch
          %3972 = sbr.rel (%p3970) target = $region72
        $region71: #{tpu_custom_call.1} parent=47 // pred_region
          %s3973 = smul.u32 2, %s36
          %s3975 = ssub.s32 256, 256
          %3976 = vsyncadd %s3961, %s3975
          %s3977 = smul.addr %s35, 2
          %s3978 = sadd.s32 %s3973, %s3977
          %s3979 = smul.addr %s3978, 128
          %s3980 = scalar_lea.hbm %s7, %s3979
          %s3981 = sshll.u32 %s3964, 4
          %s3982 = int_to_ptr.vmem [resolvable:$true] %s3981
          %3987 = dma.vmem_to_hbm [thread:$0]  %s3982, 256, %s3980, %s3961, 128, 128, 8
        $region72: #{tpu_custom_call.1} parent=47 // pred_fallthru
          _
        // Predicated region
        $region73: #{tpu_custom_call.1} parent=47 // pred_check
          %p3988 = pneg %p243
        $region74: #{tpu_custom_call.1} parent=47 // pred_check_branch
          %3990 = sbr.rel (%p3988) target = $region76
        $region75: #{tpu_custom_call.1} parent=47 // pred_region
          %s3991 = smul.u32 2, %s36
          %s3993 = ssub.s32 256, 256
          %3994 = vsyncadd %s3966, %s3993
          %s3995 = smul.addr %s35, 2
          %s3996 = sadd.s32 %s3991, %s3995
          %s3997 = smul.addr %s3996, 128
          %s3998 = scalar_lea.hbm %s8, %s3997
          %s3999 = sshll.u32 %s3969, 4
          %s4000 = int_to_ptr.vmem [resolvable:$true] %s3999
          %4005 = dma.vmem_to_hbm [thread:$0]  %s4000, 256, %s3998, %s3966, 128, 128, 8
        $region76: #{tpu_custom_call.1} parent=47 // pred_fallthru
          _
      $region48: #{tpu_custom_call.1} parent=5 // pred_fallthru
        _
      %p4006 = scmp.le.s32.totalorder 2, %s26
      // Predicated region
      $region77: #{tpu_custom_call.1} parent=5 // pred_check
        %p4007 = pneg %p4006
      $region78: #{tpu_custom_call.1} parent=5 // pred_check_branch
        %4009 = sbr.rel (%p4007) target = $region80
      $region79: #{tpu_custom_call.1} parent=5 // pred_region
        %s4010 = ssub.s32 %s26, 2
        // Predicated region
        $region81: #{tpu_custom_call.1} parent=79 // pred_check
          %p4011 = pneg %p221
        $region82: #{tpu_custom_call.1} parent=79 // pred_check_branch
          %4013 = sbr.rel (%p4011) target = $region84
        $region83: #{tpu_custom_call.1} parent=79 // pred_region
          %s4014 = sand.u32 %s206, 1
          %s4015 = scalar_lea.sflag [#allocation6], %s4014
          %s4016 = sand.u32 %s206, 1
          %s4017 = smul.addr %s4016, 16
          %s4018 = scalar_lea.vmem [#allocation12], %s4017
          %4019 = dma.done %s4015, 256
        $region84: #{tpu_custom_call.1} parent=79 // pred_fallthru
          _
        // Predicated region
        $region85: #{tpu_custom_call.1} parent=79 // pred_check
          %p4020 = pneg %p249
        $region86: #{tpu_custom_call.1} parent=79 // pred_check_branch
          %4022 = sbr.rel (%p4020) target = $region88
        $region87: #{tpu_custom_call.1} parent=79 // pred_region
          %s4023 = sand.u32 %s234, 1
          %s4024 = scalar_lea.sflag [#allocation14], %s4023
          %s4025 = sand.u32 %s234, 1
          %s4026 = smul.addr %s4025, 16
          %s4027 = scalar_lea.vmem [#allocation13], %s4026
          %4028 = dma.done %s4024, 256
        $region88: #{tpu_custom_call.1} parent=79 // pred_fallthru
          _
      $region80: #{tpu_custom_call.1} parent=5 // pred_fallthru
        _
    $region6: #{tpu_custom_call.1} parent=1 // loop_footer
      %s30 = sadd.s32 1, %s26
    $region7: #{tpu_custom_call.1} parent=1 // loop_footer_branch
      %25 = sbr.rel target = $region3
    $region8: #{tpu_custom_call.1} parent=1 // loop_exit
      _
    %4029 = vsyncpa [#allocation5], 1
    %s4030 = scalar_lea.sflag [#allocation5], 1
    %4031 = vsyncpa %s4030, 1
    %4032 = vsyncpa [#allocation8], 1
    %4033 = vsyncpa [#allocation11], 1
    %4034 = vsyncpa [#allocation6], 1
    %s4035 = scalar_lea.sflag [#allocation6], 1
    %4036 = vsyncpa %s4035, 1
    %4037 = vsyncpa [#allocation14], 1
    %s4038 = scalar_lea.sflag [#allocation14], 1
    %4039 = vsyncpa %s4038, 1

</llo_original>
